<compile_context>
chip_gen: v7x
topology: tpu7x:2x2x1
jax: 0.10.0
libtpu: 0.0.40
codegen_flags: <defaults>
</compile_context>

<pallas_src>
import numpy as np
import jax
import jax.numpy as jnp
from jax.experimental import pallas as pl
from jax.experimental.pallas import tpu as pltpu

EPS = 1e-5                   # PyTorch BatchNorm default eps
NUM_LABEL = 4                # -> fc2 out_features = 40
IN_H, IN_W = 8, 14           # input spatial size the module's fc1 implies
IN_FLAT = IN_H * IN_W        # 112 real input features
IN_PAD = 128                 # lane-dense padded input feature width (K of conv1 matmul)
M1 = 9 * 8 * 64              # conv1 Toeplitz columns: (3x3 pool cells)x(2x4 windows)x64 = 4608
G1 = 512                     # conv1 column group per pool cell: 8 windows x 64 channels
M2 = 4 * 128                 # conv2 Toeplitz columns: (2x2 pool cells)x(128-padded 2x32) = 512
G2 = 128                     # conv2 column group per pool cell (64 real + 64 zero lanes)
FEAT_PAD = 128               # padded flattened-feature width fed to fc1
OUT_PAD = 128                # padded fc1/fc2 lane widths (>= num_label*10)


def _round_up(a, b):
    return (a + b - 1) // b * b


# ------------------------------ fused kernel -----------------------------------
def _net_kernel(x_ref, wt1_ref, s1_ref, wt2_ref, s2_ref,
                wf1_ref, sf1_ref, wf2_ref, bf2_ref, o_ref):
    # x_ref:   [bt, 128]     flattened+padded input, one batch tile (f32)
    # wt1_ref: [128, 4608]   conv1 Toeplitz weight, BN folded (bf16)
    # s1_ref:  [1, 512]      conv1 shift (bias/BN folded), per pool-cell group (f32)
    # wt2_ref: [512, 512]    conv2 Toeplitz weight, BN folded, 128-padded groups (bf16)
    # s2_ref:  [1, 128]      conv2 shift, per pool-cell group (f32)
    # wf1_ref: [128, 128]    fc1 weight, BN1d folded, flatten-order permuted, padded (bf16)
    # sf1_ref: [1, 128]      fc1 shift (padded with zeros) (f32)
    # wf2_ref: [128, 128]    fc2 weight (rows/cols zero-padded) (bf16)
    # bf2_ref: [1, 128]      fc2 bias (padded) (f32)
    # o_ref:   [bt, 128]     padded logits (f32)
    wdt = wt1_ref.dtype
    x = x_ref[...].astype(wdt)                               # [bt, 128] MXU-native LHS
    s1 = s1_ref[...]                                         # [1, 512]

    # conv1 + BatchNorm2d + ReLU + MaxPool2d(3,3), group-wise over the 9 pool
    # cells so the [bt, 4608] intermediate is never materialized.
    p1 = None
    for g in range(9):
        h = jnp.dot(x, wt1_ref[:, g * G1:(g + 1) * G1],
                    preferred_element_type=jnp.float32)      # [bt, 512]
        h = jnp.maximum(h + s1, 0.0)
        p1 = h if p1 is None else jnp.maximum(p1, h)         # running pool max (f32)
    p1b = p1.astype(wdt)                                     # [bt, 512] (h,w,c) features

    # conv2 + BatchNorm2d + ReLU + MaxPool2d(2,2), group-wise over the 4 pool cells.
    s2 = s2_ref[...]                                         # [1, 128]
    p2 = None
    for g in range(4):
        h2 = jnp.dot(p1b, wt2_ref[:, g * G2:(g + 1) * G2],
                     preferred_element_type=jnp.float32)     # [bt, 128]
        h2 = jnp.maximum(h2 + s2, 0.0)
        p2 = h2 if p2 is None else jnp.maximum(p2, h2)       # [bt, 128] (64 real + 64 zero)

    # Dropout(0.2) is identity in eval mode.
    # fc1 + BatchNorm1d + ReLU (128-lane padded; padded rows/cols are zero).
    f1 = jnp.dot(p2.astype(wdt), wf1_ref[...], preferred_element_type=jnp.float32)
    f1 = jnp.maximum(f1 + sf1_ref[...], 0.0)                 # [bt, 128]

    # fc2 -> single unmasked lane-dense store of the padded logits.
    o_ref[...] = jnp.dot(f1.astype(wdt), wf2_ref[...],
                         preferred_element_type=jnp.float32) + bf2_ref[...]


def _weight_spec(block_shape, single_buffer):
    """Constant-index weight block. Single-buffered when supported (saves VMEM)."""
    if single_buffer:
        return pl.BlockSpec(block_shape, lambda i: (0, 0),
                            pipeline_mode=pl.Buffered(1))
    return pl.BlockSpec(block_shape, lambda i: (0, 0))


# -------------------------------- wrapper ---------------------------------------
def net_forward(x_nchw, params, num_label=NUM_LABEL, block_n=512):
    n = x_nchw.shape[0]
    assert tuple(x_nchw.shape[1:]) == (1, IN_H, IN_W), x_nchw.shape
    out_dim = num_label * 10

    # Batch tiling: big tiles to amortize step overhead / MXU RHS pushes, but
    # guarantee >=2 grid steps when possible so v7x's second TensorCore works.
    bt = min(block_n, _round_up(n, 8))
    n_pad = _round_up(n, bt)
    if n_pad // bt == 1 and bt >= 16:
        bt = _round_up(bt // 2, 8)
        n_pad = _round_up(n, bt)

    # Free NCHW flatten; pad batch to the tile and features 112 -> 128 lanes.
    x = x_nchw.reshape(n, IN_FLAT).astype(jnp.float32)
    x = jnp.pad(x, ((0, n_pad - n), (0, IN_PAD - IN_FLAT)))

    def run(single_buffer):
        ws = lambda shape: _weight_spec(shape, single_buffer)
        return pl.pallas_call(
            _net_kernel,
            out_shape=jax.ShapeDtypeStruct((n_pad, OUT_PAD), jnp.float32),
            grid=(n_pad // bt,),
            in_specs=[
                pl.BlockSpec((bt, IN_PAD), lambda i: (i, 0)),
                ws((IN_PAD, M1)),
                ws((1, G1)),
                ws((512, M2)),
                ws((1, G2)),
                ws((FEAT_PAD, FEAT_PAD)),
                ws((1, FEAT_PAD)),
                ws((FEAT_PAD, OUT_PAD)),
                ws((1, OUT_PAD)),
            ],
            out_specs=pl.BlockSpec((bt, OUT_PAD), lambda i: (i, 0)),
            compiler_params=pltpu.CompilerParams(
                dimension_semantics=("parallel",),
                vmem_limit_bytes=32 * 1024 * 1024),
        )(x, params["wt1"], params["s1"], params["wt2"], params["s2"],
          params["wf1"], params["sf1"], params["wf2"], params["bf2"])

    try:
        out = run(single_buffer=True)
    except Exception:
        # Fallback for jax versions that reject pipeline_mode / Buffered(1);
        # identical math, just default double-buffered weight blocks.
        out = run(single_buffer=False)

    return out[:n, None, :out_dim]                            # unsqueeze(1) + strip padding


# --------------------- host-side weight preparation (once) ----------------------
def prepare_params(raw, num_label=NUM_LABEL, weight_dtype=jnp.bfloat16):
    """Fold BatchNorms and expand convs to Toeplitz matmuls; PyTorch layouts in."""
    r = {k: np.asarray(v, np.float32) for k, v in raw.items()}
    out_dim = num_label * 10
    assert out_dim <= OUT_PAD

    # ----- conv1 (Conv2d(1,64,5,p=1) + BN2d), pooled output 2x4 -----
    sc1 = r["bn1_g"] / np.sqrt(r["bn1_v"] + EPS)                       # [64]
    w1 = np.transpose(r["conv1_w"][:, 0], (1, 2, 0)) * sc1             # [5,5,64]
    s1 = (r["conv1_b"] - r["bn1_m"]) * sc1 + r["bn1_b"]                # [64]
    wt1 = np.zeros((IN_PAD, M1), np.float32)                           # rows 112..127 stay zero
    for ph in range(2):
        for pw in range(4):
            for dh in range(3):
                for dw in range(3):
                    oh, ow = 3 * ph + dh, 3 * pw + dw
                    m0 = ((dh * 3 + dw) * 8 + (ph * 4 + pw)) * 64
                    for kh in range(5):
                        for kw in range(5):
                            ih, iw = oh + kh - 1, ow + kw - 1
                            if 0 <= ih < IN_H and 0 <= iw < IN_W:
                                wt1[ih * IN_W + iw, m0:m0 + 64] += w1[kh, kw]
    s1bc = np.tile(s1, 8)[None, :]                                     # [1, 512] (same for all 9 groups)

    # ----- conv2 (Conv2d(64,32,3,p=1) + BN2d), pooled output 1x2 -----
    sc2 = r["bn2_g"] / np.sqrt(r["bn2_v"] + EPS)                       # [32]
    w2 = np.transpose(r["conv2_w"], (2, 3, 1, 0)) * sc2                # [3,3,64,32]
    s2 = (r["conv2_b"] - r["bn2_m"]) * sc2 + r["bn2_b"]                # [32]
    wt2 = np.zeros((512, M2), np.float32)
    s2bc = np.zeros((1, G2), np.float32)                               # [1, 128] (same for all 4 groups)
    for pw2 in range(2):
        s2bc[0, pw2 * 32:pw2 * 32 + 32] = s2
    for dh2 in range(2):
        for dw2 in range(2):
            g = dh2 * 2 + dw2
            for pw2 in range(2):
                oh2, ow2 = dh2, 2 * pw2 + dw2
                m0 = g * G2 + pw2 * 32
                for kh in range(3):
                    for kw in range(3):
                        ih2, iw2 = oh2 + kh - 1, ow2 + kw - 1
                        if 0 <= ih2 < 2 and 0 <= iw2 < 4:
                            q0 = (ih2 * 4 + iw2) * 64
                            wt2[q0:q0 + 64, m0:m0 + 32] += w2[kh, kw]

    # ----- fc1 (Linear(64,16) + BatchNorm1d), padded to 128 in/out lanes -----
    # PyTorch flattens conv2 output [N,32,1,2] in (c,w) order; our features are
    # (w,c) ordered (and zero-padded to 128), so permute fc1 weight rows here.
    scf = r["bnf_g"] / np.sqrt(r["bnf_v"] + EPS)                       # [16]
    wf1 = np.zeros((FEAT_PAD, FEAT_PAD), np.float32)
    for wpos in range(2):
        for c in range(32):
            wf1[wpos * 32 + c, :16] = r["fc1_w"][:, c * 2 + wpos]
    wf1[:, :16] *= scf[None, :]
    sf1 = np.zeros((1, FEAT_PAD), np.float32)
    sf1[0, :16] = (r["fc1_b"] - r["bnf_m"]) * scf + r["bnf_b"]

    # ----- fc2 (Linear(16, num_label*10)), padded to 128x128 -----
    wf2 = np.zeros((FEAT_PAD, OUT_PAD), np.float32)
    wf2[:16, :out_dim] = r["fc2_w"].T
    bf2 = np.zeros((1, OUT_PAD), np.float32)
    bf2[0, :out_dim] = r["fc2_b"]

    weights = dict(wt1=wt1, wt2=wt2, wf1=wf1, wf2=wf2)                  # MXU operands
    shifts = dict(s1=s1bc, s2=s2bc, sf1=sf1, bf2=bf2)                   # VPU operands (keep f32)
    out = {k: jnp.asarray(v, dtype=weight_dtype) for k, v in weights.items()}
    out.update({k: jnp.asarray(v, dtype=jnp.float32) for k, v in shifts.items()})
    return out


# ------------------------ raw (PyTorch-layout) parameters -----------------------
def init_raw_params(key, num_label=NUM_LABEL):
    ks = jax.random.split(key, 20)
    u = lambda k, s, lo=-0.1, hi=0.1: jax.random.uniform(k, s, jnp.float32, lo, hi)
    out_dim = num_label * 10
    return {
        "conv1_w": u(ks[0], (64, 1, 5, 5)), "conv1_b": u(ks[1], (64,)),
        "bn1_g": u(ks[2], (64,), 0.5, 1.5), "bn1_b": u(ks[3], (64,)),
        "bn1_m": u(ks[4], (64,)), "bn1_v": u(ks[5], (64,), 0.5, 1.5),
        "conv2_w": u(ks[6], (32, 64, 3, 3)), "conv2_b": u(ks[7], (32,)),
        "bn2_g": u(ks[8], (32,), 0.5, 1.5), "bn2_b": u(ks[9], (32,)),
        "bn2_m": u(ks[10], (32,)), "bn2_v": u(ks[11], (32,), 0.5, 1.5),
        "fc1_w": u(ks[12], (16, 64)), "fc1_b": u(ks[13], (16,)),
        "bnf_g": u(ks[14], (16,), 0.5, 1.5), "bnf_b": u(ks[15], (16,)),
        "bnf_m": u(ks[16], (16,)), "bnf_v": u(ks[17], (16,), 0.5, 1.5),
        "fc2_w": u(ks[18], (out_dim, 16)), "fc2_b": u(ks[19], (out_dim,)),
    }


# -------------------- pure-JAX reference (PyTorch semantics) --------------------
def _ref_forward(x_nchw, raw, num_label=NUM_LABEL):
    hi = jax.lax.Precision.HIGHEST
    n = x_nchw.shape[0]
    x = x_nchw[:, 0].astype(jnp.float32)
    xp = jnp.pad(x, ((0, 0), (1, 1), (1, 1)))
    w1 = raw["conv1_w"][:, 0]
    y1 = jnp.zeros((n, 64, 6, 12), jnp.float32)
    for kh in range(5):
        for kw in range(5):
            y1 = y1 + xp[:, None, kh:kh + 6, kw:kw + 12] * w1[None, :, kh, kw, None, None]
    y1 = y1 + raw["conv1_b"][None, :, None, None]
    sc1 = raw["bn1_g"] / jnp.sqrt(raw["bn1_v"] + EPS)
    y1 = (y1 - raw["bn1_m"][None, :, None, None]) * sc1[None, :, None, None] \
        + raw["bn1_b"][None, :, None, None]
    y1 = jnp.maximum(y1, 0.0).reshape(n, 64, 2, 3, 4, 3).max(axis=(3, 5))
    y1p = jnp.pad(y1, ((0, 0), (0, 0), (1, 1), (1, 1)))
    y2 = jnp.zeros((n, 32, 2, 4), jnp.float32)
    for kh in range(3):
        for kw in range(3):
            y2 = y2 + jnp.einsum('ncij,oc->noij', y1p[:, :, kh:kh + 2, kw:kw + 4],
                                 raw["conv2_w"][:, :, kh, kw], precision=hi)
    y2 = y2 + raw["conv2_b"][None, :, None, None]
    sc2 = raw["bn2_g"] / jnp.sqrt(raw["bn2_v"] + EPS)
    y2 = (y2 - raw["bn2_m"][None, :, None, None]) * sc2[None, :, None, None] \
        + raw["bn2_b"][None, :, None, None]
    y2 = jnp.maximum(y2, 0.0).reshape(n, 32, 1, 2, 2, 2).max(axis=(3, 5))
    f = y2.reshape(n, -1)                                   # PyTorch (c,h,w) flatten
    h = jnp.dot(f, raw["fc1_w"].T, precision=hi) + raw["fc1_b"]
    scf = raw["bnf_g"] / jnp.sqrt(raw["bnf_v"] + EPS)
    h = jnp.maximum((h - raw["bnf_m"]) * scf + raw["bnf_b"], 0.0)
    out = jnp.dot(h, raw["fc2_w"].T, precision=hi) + raw["fc2_b"]
    return out[:, None, :]


# TODO(synk): training-mode Dropout(0.2) RNG masking and batch-statistics
# BatchNorm are intentionally not implemented (inference semantics only).

if __name__ == "__main__":
    key = jax.random.PRNGKey(0)
    k_x, k_p = jax.random.split(key)
    # Input H=8, W=14 gives the 64-dim flatten fc1 expects:
    # conv1(5,p=1)->6x12, pool3->2x4, conv2(3,p=1)->2x4, pool2->1x2, 32*1*2=64.
    x = jax.random.normal(k_x, (2, 1, IN_H, IN_W), jnp.float32)   # NCHW, like PyTorch
    raw = init_raw_params(k_p, NUM_LABEL)
    y_ref = jax.block_until_ready(_ref_forward(x, raw, NUM_LABEL))

    # 1) f32-weight run: validates the Toeplitz/BN-fold/padding structure exactly.
    params_f32 = prepare_params(raw, NUM_LABEL, weight_dtype=jnp.float32)
    y32 = jax.block_until_ready(net_forward(x, params_f32, NUM_LABEL))
    assert y32.shape == (2, 1, NUM_LABEL * 10), y32.shape
    err32 = float(jnp.max(jnp.abs(y32 - y_ref)))
    assert err32 < 2e-3, f"f32-weight max abs err vs reference: {err32}"

    # 2) Production path: bf16 weights (halved DMA, MXU-native inputs) with f32
    #    accumulation; tolerance deliberately relaxed for bf16 quantization
    #    (expected worst-case ~1e-2 through this network).
    params = prepare_params(raw, NUM_LABEL)                        # bfloat16 weights
    y = jax.block_until_ready(net_forward(x, params, NUM_LABEL))
    assert y.shape == (2, 1, NUM_LABEL * 10), y.shape
    err = float(jnp.max(jnp.abs(y - y_ref)))
    assert err < 5e-2, f"bf16-weight max abs err vs reference: {err}"

    print("KERNEL_OK")
</pallas_src>

<mosaic_0001>
module attributes {stable_mosaic.version = 11 : i64} {
  func.func @_net_kernel(%arg0: i32, %arg1: memref<8x128xf32, #tpu.memory_space<vmem>>, %arg2: memref<128x4608xf32, #tpu.memory_space<vmem>>, %arg3: memref<1x512xf32, #tpu.memory_space<vmem>>, %arg4: memref<512x512xf32, #tpu.memory_space<vmem>>, %arg5: memref<1x128xf32, #tpu.memory_space<vmem>>, %arg6: memref<128x128xf32, #tpu.memory_space<vmem>>, %arg7: memref<1x128xf32, #tpu.memory_space<vmem>>, %arg8: memref<128x128xf32, #tpu.memory_space<vmem>>, %arg9: memref<1x128xf32, #tpu.memory_space<vmem>>, %arg10: memref<8x128xf32, #tpu.memory_space<vmem>>) attributes {dimension_semantics = [#tpu.dimension_semantics<parallel>], iteration_bounds = array<i64: 1>, scalar_prefetch = 0 : i64, scratch_operands = 0 : i64, tpu.core_type = #tpu.core_type<tc>, window_params = [{transform_indices = @transform_0, window_bounds = array<i64: 8, 128>}, {pipeline_mode = #tpu.pipeline_mode<synchronous>, transform_indices = @transform_1, window_bounds = array<i64: 128, 4608>}, {pipeline_mode = #tpu.pipeline_mode<synchronous>, transform_indices = @transform_2, window_bounds = array<i64: 1, 512>}, {pipeline_mode = #tpu.pipeline_mode<synchronous>, transform_indices = @transform_3, window_bounds = array<i64: 512, 512>}, {pipeline_mode = #tpu.pipeline_mode<synchronous>, transform_indices = @transform_4, window_bounds = array<i64: 1, 128>}, {pipeline_mode = #tpu.pipeline_mode<synchronous>, transform_indices = @transform_5, window_bounds = array<i64: 128, 128>}, {pipeline_mode = #tpu.pipeline_mode<synchronous>, transform_indices = @transform_6, window_bounds = array<i64: 1, 128>}, {pipeline_mode = #tpu.pipeline_mode<synchronous>, transform_indices = @transform_7, window_bounds = array<i64: 128, 128>}, {pipeline_mode = #tpu.pipeline_mode<synchronous>, transform_indices = @transform_8, window_bounds = array<i64: 1, 128>}, {transform_indices = @transform_9, window_bounds = array<i64: 8, 128>}]} {
    %c0 = arith.constant 0 : index
    %c0_0 = arith.constant 0 : index
    %0 = vector.load %arg1[%c0, %c0_0] : memref<8x128xf32, #tpu.memory_space<vmem>>, vector<8x128xf32>
    %c0_1 = arith.constant 0 : index
    %c0_2 = arith.constant 0 : index
    %1 = vector.load %arg3[%c0_1, %c0_2] : memref<1x512xf32, #tpu.memory_space<vmem>>, vector<1x512xf32>
    %c0_3 = arith.constant 0 : index
    %c0_4 = arith.constant 0 : index
    %2 = vector.load %arg2[%c0_3, %c0_4] : memref<128x4608xf32, #tpu.memory_space<vmem>>, vector<128x512xf32>
    %cst = arith.constant dense<0.000000e+00> : vector<8x512xf32>
    %3 = tpu.matmul %0, %2, %cst {dimension_numbers = #tpu.dot_dimension_numbers<[1], [0], [0], [1], [0, 0, 1, 1], [], []>} : vector<8x128xf32>, vector<128x512xf32>, vector<8x512xf32> -> vector<8x512xf32>
    %4 = vector.broadcast %1 : vector<1x512xf32> to vector<8x512xf32>
    %5 = arith.addf %3, %4 : vector<8x512xf32>
    %cst_5 = arith.constant 0.000000e+00 : f32
    %6 = vector.broadcast %cst_5 : f32 to vector<8x512xf32>
    %7 = arith.maximumf %5, %6 : vector<8x512xf32>
    %c0_6 = arith.constant 0 : index
    %c512 = arith.constant 512 : index
    %8 = vector.load %arg2[%c0_6, %c512] : memref<128x4608xf32, #tpu.memory_space<vmem>>, vector<128x512xf32>
    %cst_7 = arith.constant dense<0.000000e+00> : vector<8x512xf32>
    %9 = tpu.matmul %0, %8, %cst_7 {dimension_numbers = #tpu.dot_dimension_numbers<[1], [0], [0], [1], [0, 0, 1, 1], [], []>} : vector<8x128xf32>, vector<128x512xf32>, vector<8x512xf32> -> vector<8x512xf32>
    %10 = vector.broadcast %1 : vector<1x512xf32> to vector<8x512xf32>
    %11 = arith.addf %9, %10 : vector<8x512xf32>
    %cst_8 = arith.constant 0.000000e+00 : f32
    %12 = vector.broadcast %cst_8 : f32 to vector<8x512xf32>
    %13 = arith.maximumf %11, %12 : vector<8x512xf32>
    %14 = arith.maximumf %7, %13 : vector<8x512xf32>
    %c0_9 = arith.constant 0 : index
    %c1024 = arith.constant 1024 : index
    %15 = vector.load %arg2[%c0_9, %c1024] : memref<128x4608xf32, #tpu.memory_space<vmem>>, vector<128x512xf32>
    %cst_10 = arith.constant dense<0.000000e+00> : vector<8x512xf32>
    %16 = tpu.matmul %0, %15, %cst_10 {dimension_numbers = #tpu.dot_dimension_numbers<[1], [0], [0], [1], [0, 0, 1, 1], [], []>} : vector<8x128xf32>, vector<128x512xf32>, vector<8x512xf32> -> vector<8x512xf32>
    %17 = vector.broadcast %1 : vector<1x512xf32> to vector<8x512xf32>
    %18 = arith.addf %16, %17 : vector<8x512xf32>
    %cst_11 = arith.constant 0.000000e+00 : f32
    %19 = vector.broadcast %cst_11 : f32 to vector<8x512xf32>
    %20 = arith.maximumf %18, %19 : vector<8x512xf32>
    %21 = arith.maximumf %14, %20 : vector<8x512xf32>
    %c0_12 = arith.constant 0 : index
    %c1536 = arith.constant 1536 : index
    %22 = vector.load %arg2[%c0_12, %c1536] : memref<128x4608xf32, #tpu.memory_space<vmem>>, vector<128x512xf32>
    %cst_13 = arith.constant dense<0.000000e+00> : vector<8x512xf32>
    %23 = tpu.matmul %0, %22, %cst_13 {dimension_numbers = #tpu.dot_dimension_numbers<[1], [0], [0], [1], [0, 0, 1, 1], [], []>} : vector<8x128xf32>, vector<128x512xf32>, vector<8x512xf32> -> vector<8x512xf32>
    %24 = vector.broadcast %1 : vector<1x512xf32> to vector<8x512xf32>
    %25 = arith.addf %23, %24 : vector<8x512xf32>
    %cst_14 = arith.constant 0.000000e+00 : f32
    %26 = vector.broadcast %cst_14 : f32 to vector<8x512xf32>
    %27 = arith.maximumf %25, %26 : vector<8x512xf32>
    %28 = arith.maximumf %21, %27 : vector<8x512xf32>
    %c0_15 = arith.constant 0 : index
    %c2048 = arith.constant 2048 : index
    %29 = vector.load %arg2[%c0_15, %c2048] : memref<128x4608xf32, #tpu.memory_space<vmem>>, vector<128x512xf32>
    %cst_16 = arith.constant dense<0.000000e+00> : vector<8x512xf32>
    %30 = tpu.matmul %0, %29, %cst_16 {dimension_numbers = #tpu.dot_dimension_numbers<[1], [0], [0], [1], [0, 0, 1, 1], [], []>} : vector<8x128xf32>, vector<128x512xf32>, vector<8x512xf32> -> vector<8x512xf32>
    %31 = vector.broadcast %1 : vector<1x512xf32> to vector<8x512xf32>
    %32 = arith.addf %30, %31 : vector<8x512xf32>
    %cst_17 = arith.constant 0.000000e+00 : f32
    %33 = vector.broadcast %cst_17 : f32 to vector<8x512xf32>
    %34 = arith.maximumf %32, %33 : vector<8x512xf32>
    %35 = arith.maximumf %28, %34 : vector<8x512xf32>
    %c0_18 = arith.constant 0 : index
    %c2560 = arith.constant 2560 : index
    %36 = vector.load %arg2[%c0_18, %c2560] : memref<128x4608xf32, #tpu.memory_space<vmem>>, vector<128x512xf32>
    %cst_19 = arith.constant dense<0.000000e+00> : vector<8x512xf32>
    %37 = tpu.matmul %0, %36, %cst_19 {dimension_numbers = #tpu.dot_dimension_numbers<[1], [0], [0], [1], [0, 0, 1, 1], [], []>} : vector<8x128xf32>, vector<128x512xf32>, vector<8x512xf32> -> vector<8x512xf32>
    %38 = vector.broadcast %1 : vector<1x512xf32> to vector<8x512xf32>
    %39 = arith.addf %37, %38 : vector<8x512xf32>
    %cst_20 = arith.constant 0.000000e+00 : f32
    %40 = vector.broadcast %cst_20 : f32 to vector<8x512xf32>
    %41 = arith.maximumf %39, %40 : vector<8x512xf32>
    %42 = arith.maximumf %35, %41 : vector<8x512xf32>
    %c0_21 = arith.constant 0 : index
    %c3072 = arith.constant 3072 : index
    %43 = vector.load %arg2[%c0_21, %c3072] : memref<128x4608xf32, #tpu.memory_space<vmem>>, vector<128x512xf32>
    %cst_22 = arith.constant dense<0.000000e+00> : vector<8x512xf32>
    %44 = tpu.matmul %0, %43, %cst_22 {dimension_numbers = #tpu.dot_dimension_numbers<[1], [0], [0], [1], [0, 0, 1, 1], [], []>} : vector<8x128xf32>, vector<128x512xf32>, vector<8x512xf32> -> vector<8x512xf32>
    %45 = vector.broadcast %1 : vector<1x512xf32> to vector<8x512xf32>
    %46 = arith.addf %44, %45 : vector<8x512xf32>
    %cst_23 = arith.constant 0.000000e+00 : f32
    %47 = vector.broadcast %cst_23 : f32 to vector<8x512xf32>
    %48 = arith.maximumf %46, %47 : vector<8x512xf32>
    %49 = arith.maximumf %42, %48 : vector<8x512xf32>
    %c0_24 = arith.constant 0 : index
    %c3584 = arith.constant 3584 : index
    %50 = vector.load %arg2[%c0_24, %c3584] : memref<128x4608xf32, #tpu.memory_space<vmem>>, vector<128x512xf32>
    %cst_25 = arith.constant dense<0.000000e+00> : vector<8x512xf32>
    %51 = tpu.matmul %0, %50, %cst_25 {dimension_numbers = #tpu.dot_dimension_numbers<[1], [0], [0], [1], [0, 0, 1, 1], [], []>} : vector<8x128xf32>, vector<128x512xf32>, vector<8x512xf32> -> vector<8x512xf32>
    %52 = vector.broadcast %1 : vector<1x512xf32> to vector<8x512xf32>
    %53 = arith.addf %51, %52 : vector<8x512xf32>
    %cst_26 = arith.constant 0.000000e+00 : f32
    %54 = vector.broadcast %cst_26 : f32 to vector<8x512xf32>
    %55 = arith.maximumf %53, %54 : vector<8x512xf32>
    %56 = arith.maximumf %49, %55 : vector<8x512xf32>
    %c0_27 = arith.constant 0 : index
    %c4096 = arith.constant 4096 : index
    %57 = vector.load %arg2[%c0_27, %c4096] : memref<128x4608xf32, #tpu.memory_space<vmem>>, vector<128x512xf32>
    %cst_28 = arith.constant dense<0.000000e+00> : vector<8x512xf32>
    %58 = tpu.matmul %0, %57, %cst_28 {dimension_numbers = #tpu.dot_dimension_numbers<[1], [0], [0], [1], [0, 0, 1, 1], [], []>} : vector<8x128xf32>, vector<128x512xf32>, vector<8x512xf32> -> vector<8x512xf32>
    %59 = vector.broadcast %1 : vector<1x512xf32> to vector<8x512xf32>
    %60 = arith.addf %58, %59 : vector<8x512xf32>
    %cst_29 = arith.constant 0.000000e+00 : f32
    %61 = vector.broadcast %cst_29 : f32 to vector<8x512xf32>
    %62 = arith.maximumf %60, %61 : vector<8x512xf32>
    %63 = arith.maximumf %56, %62 : vector<8x512xf32>
    %c0_30 = arith.constant 0 : index
    %c0_31 = arith.constant 0 : index
    %64 = vector.load %arg5[%c0_30, %c0_31] : memref<1x128xf32, #tpu.memory_space<vmem>>, vector<1x128xf32>
    %c0_32 = arith.constant 0 : index
    %c0_33 = arith.constant 0 : index
    %65 = vector.load %arg4[%c0_32, %c0_33] : memref<512x512xf32, #tpu.memory_space<vmem>>, vector<512x128xf32>
    %cst_34 = arith.constant dense<0.000000e+00> : vector<8x128xf32>
    %66 = tpu.matmul %63, %65, %cst_34 {dimension_numbers = #tpu.dot_dimension_numbers<[1], [0], [0], [1], [0, 0, 1, 1], [], []>} : vector<8x512xf32>, vector<512x128xf32>, vector<8x128xf32> -> vector<8x128xf32>
    %67 = vector.broadcast %64 : vector<1x128xf32> to vector<8x128xf32>
    %68 = arith.addf %66, %67 : vector<8x128xf32>
    %cst_35 = arith.constant 0.000000e+00 : f32
    %69 = vector.broadcast %cst_35 : f32 to vector<8x128xf32>
    %70 = arith.maximumf %68, %69 : vector<8x128xf32>
    %c0_36 = arith.constant 0 : index
    %c128 = arith.constant 128 : index
    %71 = vector.load %arg4[%c0_36, %c128] : memref<512x512xf32, #tpu.memory_space<vmem>>, vector<512x128xf32>
    %cst_37 = arith.constant dense<0.000000e+00> : vector<8x128xf32>
    %72 = tpu.matmul %63, %71, %cst_37 {dimension_numbers = #tpu.dot_dimension_numbers<[1], [0], [0], [1], [0, 0, 1, 1], [], []>} : vector<8x512xf32>, vector<512x128xf32>, vector<8x128xf32> -> vector<8x128xf32>
    %73 = vector.broadcast %64 : vector<1x128xf32> to vector<8x128xf32>
    %74 = arith.addf %72, %73 : vector<8x128xf32>
    %cst_38 = arith.constant 0.000000e+00 : f32
    %75 = vector.broadcast %cst_38 : f32 to vector<8x128xf32>
    %76 = arith.maximumf %74, %75 : vector<8x128xf32>
    %77 = arith.maximumf %70, %76 : vector<8x128xf32>
    %c0_39 = arith.constant 0 : index
    %c256 = arith.constant 256 : index
    %78 = vector.load %arg4[%c0_39, %c256] : memref<512x512xf32, #tpu.memory_space<vmem>>, vector<512x128xf32>
    %cst_40 = arith.constant dense<0.000000e+00> : vector<8x128xf32>
    %79 = tpu.matmul %63, %78, %cst_40 {dimension_numbers = #tpu.dot_dimension_numbers<[1], [0], [0], [1], [0, 0, 1, 1], [], []>} : vector<8x512xf32>, vector<512x128xf32>, vector<8x128xf32> -> vector<8x128xf32>
    %80 = vector.broadcast %64 : vector<1x128xf32> to vector<8x128xf32>
    %81 = arith.addf %79, %80 : vector<8x128xf32>
    %cst_41 = arith.constant 0.000000e+00 : f32
    %82 = vector.broadcast %cst_41 : f32 to vector<8x128xf32>
    %83 = arith.maximumf %81, %82 : vector<8x128xf32>
    %84 = arith.maximumf %77, %83 : vector<8x128xf32>
    %c0_42 = arith.constant 0 : index
    %c384 = arith.constant 384 : index
    %85 = vector.load %arg4[%c0_42, %c384] : memref<512x512xf32, #tpu.memory_space<vmem>>, vector<512x128xf32>
    %cst_43 = arith.constant dense<0.000000e+00> : vector<8x128xf32>
    %86 = tpu.matmul %63, %85, %cst_43 {dimension_numbers = #tpu.dot_dimension_numbers<[1], [0], [0], [1], [0, 0, 1, 1], [], []>} : vector<8x512xf32>, vector<512x128xf32>, vector<8x128xf32> -> vector<8x128xf32>
    %87 = vector.broadcast %64 : vector<1x128xf32> to vector<8x128xf32>
    %88 = arith.addf %86, %87 : vector<8x128xf32>
    %cst_44 = arith.constant 0.000000e+00 : f32
    %89 = vector.broadcast %cst_44 : f32 to vector<8x128xf32>
    %90 = arith.maximumf %88, %89 : vector<8x128xf32>
    %91 = arith.maximumf %84, %90 : vector<8x128xf32>
    %c0_45 = arith.constant 0 : index
    %c0_46 = arith.constant 0 : index
    %92 = vector.load %arg6[%c0_45, %c0_46] : memref<128x128xf32, #tpu.memory_space<vmem>>, vector<128x128xf32>
    %cst_47 = arith.constant dense<0.000000e+00> : vector<8x128xf32>
    %93 = tpu.matmul %91, %92, %cst_47 {dimension_numbers = #tpu.dot_dimension_numbers<[1], [0], [0], [1], [0, 0, 1, 1], [], []>} : vector<8x128xf32>, vector<128x128xf32>, vector<8x128xf32> -> vector<8x128xf32>
    %c0_48 = arith.constant 0 : index
    %c0_49 = arith.constant 0 : index
    %94 = vector.load %arg7[%c0_48, %c0_49] : memref<1x128xf32, #tpu.memory_space<vmem>>, vector<1x128xf32>
    %95 = vector.broadcast %94 : vector<1x128xf32> to vector<8x128xf32>
    %96 = arith.addf %93, %95 : vector<8x128xf32>
    %cst_50 = arith.constant 0.000000e+00 : f32
    %97 = vector.broadcast %cst_50 : f32 to vector<8x128xf32>
    %98 = arith.maximumf %96, %97 : vector<8x128xf32>
    %c0_51 = arith.constant 0 : index
    %c0_52 = arith.constant 0 : index
    %99 = vector.load %arg8[%c0_51, %c0_52] : memref<128x128xf32, #tpu.memory_space<vmem>>, vector<128x128xf32>
    %cst_53 = arith.constant dense<0.000000e+00> : vector<8x128xf32>
    %100 = tpu.matmul %98, %99, %cst_53 {dimension_numbers = #tpu.dot_dimension_numbers<[1], [0], [0], [1], [0, 0, 1, 1], [], []>} : vector<8x128xf32>, vector<128x128xf32>, vector<8x128xf32> -> vector<8x128xf32>
    %c0_54 = arith.constant 0 : index
    %c0_55 = arith.constant 0 : index
    %101 = vector.load %arg9[%c0_54, %c0_55] : memref<1x128xf32, #tpu.memory_space<vmem>>, vector<1x128xf32>
    %102 = vector.broadcast %101 : vector<1x128xf32> to vector<8x128xf32>
    %103 = arith.addf %100, %102 : vector<8x128xf32>
    %c0_56 = arith.constant 0 : index
    %c0_57 = arith.constant 0 : index
    %104 = vector.load %arg10[%c0_56, %c0_57] : memref<8x128xf32, #tpu.memory_space<vmem>>, vector<8x128xf32>
    tpu.vector_store %arg10[%c0_56, %c0_57], %103 {strides = array<i32>} : memref<8x128xf32, #tpu.memory_space<vmem>>, vector<8x128xf32>,
    return
  }
  func.func @transform_0(%arg0: i32) -> (i32, i32) {
    %c0_i32 = arith.constant 0 : i32
    %c0_i32_0 = arith.constant 0 : i32
    return %arg0, %c0_i32 : i32, i32
  }
  func.func @transform_1(%arg0: i32) -> (i32, i32) {
    %c0_i32 = arith.constant 0 : i32
    %c0_i32_0 = arith.constant 0 : i32
    %c0_i32_1 = arith.constant 0 : i32
    return %c0_i32, %c0_i32_0 : i32, i32
  }
  func.func @transform_2(%arg0: i32) -> (i32, i32) {
    %c0_i32 = arith.constant 0 : i32
    %c0_i32_0 = arith.constant 0 : i32
    %c0_i32_1 = arith.constant 0 : i32
    return %c0_i32, %c0_i32_0 : i32, i32
  }
  func.func @transform_3(%arg0: i32) -> (i32, i32) {
    %c0_i32 = arith.constant 0 : i32
    %c0_i32_0 = arith.constant 0 : i32
    %c0_i32_1 = arith.constant 0 : i32
    return %c0_i32, %c0_i32_0 : i32, i32
  }
  func.func @transform_4(%arg0: i32) -> (i32, i32) {
    %c0_i32 = arith.constant 0 : i32
    %c0_i32_0 = arith.constant 0 : i32
    %c0_i32_1 = arith.constant 0 : i32
    return %c0_i32, %c0_i32_0 : i32, i32
  }
  func.func @transform_5(%arg0: i32) -> (i32, i32) {
    %c0_i32 = arith.constant 0 : i32
    %c0_i32_0 = arith.constant 0 : i32
    %c0_i32_1 = arith.constant 0 : i32
    return %c0_i32, %c0_i32_0 : i32, i32
  }
  func.func @transform_6(%arg0: i32) -> (i32, i32) {
    %c0_i32 = arith.constant 0 : i32
    %c0_i32_0 = arith.constant 0 : i32
    %c0_i32_1 = arith.constant 0 : i32
    return %c0_i32, %c0_i32_0 : i32, i32
  }
  func.func @transform_7(%arg0: i32) -> (i32, i32) {
    %c0_i32 = arith.constant 0 : i32
    %c0_i32_0 = arith.constant 0 : i32
    %c0_i32_1 = arith.constant 0 : i32
    return %c0_i32, %c0_i32_0 : i32, i32
  }
  func.func @transform_8(%arg0: i32) -> (i32, i32) {
    %c0_i32 = arith.constant 0 : i32
    %c0_i32_0 = arith.constant 0 : i32
    %c0_i32_1 = arith.constant 0 : i32
    return %c0_i32, %c0_i32_0 : i32, i32
  }
  func.func @transform_9(%arg0: i32) -> (i32, i32) {
    %c0_i32 = arith.constant 0 : i32
    %c0_i32_0 = arith.constant 0 : i32
    return %arg0, %c0_i32 : i32, i32
  }
}

module attributes {stable_mosaic.version = 11 : i64} {
  func.func @_net_kernel(%arg0: i32, %arg1: memref<8x128xf32, #tpu.memory_space<vmem>>, %arg2: memref<128x4608xf32, #tpu.memory_space<vmem>>, %arg3: memref<1x512xf32, #tpu.memory_space<vmem>>, %arg4: memref<512x512xf32, #tpu.memory_space<vmem>>, %arg5: memref<1x128xf32, #tpu.memory_space<vmem>>, %arg6: memref<128x128xf32, #tpu.memory_space<vmem>>, %arg7: memref<1x128xf32, #tpu.memory_space<vmem>>, %arg8: memref<128x128xf32, #tpu.memory_space<vmem>>, %arg9: memref<1x128xf32, #tpu.memory_space<vmem>>, %arg10: memref<8x128xf32, #tpu.memory_space<vmem>>) attributes {dimension_semantics = [#tpu.dimension_semantics<parallel>], iteration_bounds = array<i64: 1>, scalar_prefetch = 0 : i64, scratch_operands = 0 : i64, tpu.core_type = #tpu.core_type<tc>, window_params = [{transform_indices = @transform_0, window_bounds = array<i64: 8, 128>}, {pipeline_mode = #tpu.pipeline_mode<synchronous>, transform_indices = @transform_1, window_bounds = array<i64: 128, 4608>}, {pipeline_mode = #tpu.pipeline_mode<synchronous>, transform_indices = @transform_2, window_bounds = array<i64: 1, 512>}, {pipeline_mode = #tpu.pipeline_mode<synchronous>, transform_indices = @transform_3, window_bounds = array<i64: 512, 512>}, {pipeline_mode = #tpu.pipeline_mode<synchronous>, transform_indices = @transform_4, window_bounds = array<i64: 1, 128>}, {pipeline_mode = #tpu.pipeline_mode<synchronous>, transform_indices = @transform_5, window_bounds = array<i64: 128, 128>}, {pipeline_mode = #tpu.pipeline_mode<synchronous>, transform_indices = @transform_6, window_bounds = array<i64: 1, 128>}, {pipeline_mode = #tpu.pipeline_mode<synchronous>, transform_indices = @transform_7, window_bounds = array<i64: 128, 128>}, {pipeline_mode = #tpu.pipeline_mode<synchronous>, transform_indices = @transform_8, window_bounds = array<i64: 1, 128>}, {transform_indices = @transform_9, window_bounds = array<i64: 8, 128>}]} {
    %c0 = arith.constant 0 : index
    %c0_0 = arith.constant 0 : index
    %0 = vector.load %arg1[%c0, %c0_0] : memref<8x128xf32, #tpu.memory_space<vmem>>, vector<8x128xf32>
    %c0_1 = arith.constant 0 : index
    %c0_2 = arith.constant 0 : index
    %1 = vector.load %arg3[%c0_1, %c0_2] : memref<1x512xf32, #tpu.memory_space<vmem>>, vector<1x512xf32>
    %c0_3 = arith.constant 0 : index
    %c0_4 = arith.constant 0 : index
    %2 = vector.load %arg2[%c0_3, %c0_4] : memref<128x4608xf32, #tpu.memory_space<vmem>>, vector<128x512xf32>
    %cst = arith.constant dense<0.000000e+00> : vector<8x512xf32>
    %3 = tpu.matmul %0, %2, %cst {dimension_numbers = #tpu.dot_dimension_numbers<[1], [0], [0], [1], [0, 0, 1, 1], [], []>} : vector<8x128xf32>, vector<128x512xf32>, vector<8x512xf32> -> vector<8x512xf32>
    %4 = vector.broadcast %1 : vector<1x512xf32> to vector<8x512xf32>
    %5 = arith.addf %3, %4 : vector<8x512xf32>
    %cst_5 = arith.constant 0.000000e+00 : f32
    %6 = vector.broadcast %cst_5 : f32 to vector<8x512xf32>
    %7 = arith.maximumf %5, %6 : vector<8x512xf32>
    %c0_6 = arith.constant 0 : index
    %c512 = arith.constant 512 : index
    %8 = vector.load %arg2[%c0_6, %c512] : memref<128x4608xf32, #tpu.memory_space<vmem>>, vector<128x512xf32>
    %cst_7 = arith.constant dense<0.000000e+00> : vector<8x512xf32>
    %9 = tpu.matmul %0, %8, %cst_7 {dimension_numbers = #tpu.dot_dimension_numbers<[1], [0], [0], [1], [0, 0, 1, 1], [], []>} : vector<8x128xf32>, vector<128x512xf32>, vector<8x512xf32> -> vector<8x512xf32>
    %10 = vector.broadcast %1 : vector<1x512xf32> to vector<8x512xf32>
    %11 = arith.addf %9, %10 : vector<8x512xf32>
    %cst_8 = arith.constant 0.000000e+00 : f32
    %12 = vector.broadcast %cst_8 : f32 to vector<8x512xf32>
    %13 = arith.maximumf %11, %12 : vector<8x512xf32>
    %14 = arith.maximumf %7, %13 : vector<8x512xf32>
    %c0_9 = arith.constant 0 : index
    %c1024 = arith.constant 1024 : index
    %15 = vector.load %arg2[%c0_9, %c1024] : memref<128x4608xf32, #tpu.memory_space<vmem>>, vector<128x512xf32>
    %cst_10 = arith.constant dense<0.000000e+00> : vector<8x512xf32>
    %16 = tpu.matmul %0, %15, %cst_10 {dimension_numbers = #tpu.dot_dimension_numbers<[1], [0], [0], [1], [0, 0, 1, 1], [], []>} : vector<8x128xf32>, vector<128x512xf32>, vector<8x512xf32> -> vector<8x512xf32>
    %17 = vector.broadcast %1 : vector<1x512xf32> to vector<8x512xf32>
    %18 = arith.addf %16, %17 : vector<8x512xf32>
    %cst_11 = arith.constant 0.000000e+00 : f32
    %19 = vector.broadcast %cst_11 : f32 to vector<8x512xf32>
    %20 = arith.maximumf %18, %19 : vector<8x512xf32>
    %21 = arith.maximumf %14, %20 : vector<8x512xf32>
    %c0_12 = arith.constant 0 : index
    %c1536 = arith.constant 1536 : index
    %22 = vector.load %arg2[%c0_12, %c1536] : memref<128x4608xf32, #tpu.memory_space<vmem>>, vector<128x512xf32>
    %cst_13 = arith.constant dense<0.000000e+00> : vector<8x512xf32>
    %23 = tpu.matmul %0, %22, %cst_13 {dimension_numbers = #tpu.dot_dimension_numbers<[1], [0], [0], [1], [0, 0, 1, 1], [], []>} : vector<8x128xf32>, vector<128x512xf32>, vector<8x512xf32> -> vector<8x512xf32>
    %24 = vector.broadcast %1 : vector<1x512xf32> to vector<8x512xf32>
    %25 = arith.addf %23, %24 : vector<8x512xf32>
    %cst_14 = arith.constant 0.000000e+00 : f32
    %26 = vector.broadcast %cst_14 : f32 to vector<8x512xf32>
    %27 = arith.maximumf %25, %26 : vector<8x512xf32>
    %28 = arith.maximumf %21, %27 : vector<8x512xf32>
    %c0_15 = arith.constant 0 : index
    %c2048 = arith.constant 2048 : index
    %29 = vector.load %arg2[%c0_15, %c2048] : memref<128x4608xf32, #tpu.memory_space<vmem>>, vector<128x512xf32>
    %cst_16 = arith.constant dense<0.000000e+00> : vector<8x512xf32>
    %30 = tpu.matmul %0, %29, %cst_16 {dimension_numbers = #tpu.dot_dimension_numbers<[1], [0], [0], [1], [0, 0, 1, 1], [], []>} : vector<8x128xf32>, vector<128x512xf32>, vector<8x512xf32> -> vector<8x512xf32>
    %31 = vector.broadcast %1 : vector<1x512xf32> to vector<8x512xf32>
    %32 = arith.addf %30, %31 : vector<8x512xf32>
    %cst_17 = arith.constant 0.000000e+00 : f32
    %33 = vector.broadcast %cst_17 : f32 to vector<8x512xf32>
    %34 = arith.maximumf %32, %33 : vector<8x512xf32>
    %35 = arith.maximumf %28, %34 : vector<8x512xf32>
    %c0_18 = arith.constant 0 : index
    %c2560 = arith.constant 2560 : index
    %36 = vector.load %arg2[%c0_18, %c2560] : memref<128x4608xf32, #tpu.memory_space<vmem>>, vector<128x512xf32>
    %cst_19 = arith.constant dense<0.000000e+00> : vector<8x512xf32>
    %37 = tpu.matmul %0, %36, %cst_19 {dimension_numbers = #tpu.dot_dimension_numbers<[1], [0], [0], [1], [0, 0, 1, 1], [], []>} : vector<8x128xf32>, vector<128x512xf32>, vector<8x512xf32> -> vector<8x512xf32>
    %38 = vector.broadcast %1 : vector<1x512xf32> to vector<8x512xf32>
    %39 = arith.addf %37, %38 : vector<8x512xf32>
    %cst_20 = arith.constant 0.000000e+00 : f32
    %40 = vector.broadcast %cst_20 : f32 to vector<8x512xf32>
    %41 = arith.maximumf %39, %40 : vector<8x512xf32>
    %42 = arith.maximumf %35, %41 : vector<8x512xf32>
    %c0_21 = arith.constant 0 : index
    %c3072 = arith.constant 3072 : index
    %43 = vector.load %arg2[%c0_21, %c3072] : memref<128x4608xf32, #tpu.memory_space<vmem>>, vector<128x512xf32>
    %cst_22 = arith.constant dense<0.000000e+00> : vector<8x512xf32>
    %44 = tpu.matmul %0, %43, %cst_22 {dimension_numbers = #tpu.dot_dimension_numbers<[1], [0], [0], [1], [0, 0, 1, 1], [], []>} : vector<8x128xf32>, vector<128x512xf32>, vector<8x512xf32> -> vector<8x512xf32>
    %45 = vector.broadcast %1 : vector<1x512xf32> to vector<8x512xf32>
    %46 = arith.addf %44, %45 : vector<8x512xf32>
    %cst_23 = arith.constant 0.000000e+00 : f32
    %47 = vector.broadcast %cst_23 : f32 to vector<8x512xf32>
    %48 = arith.maximumf %46, %47 : vector<8x512xf32>
    %49 = arith.maximumf %42, %48 : vector<8x512xf32>
    %c0_24 = arith.constant 0 : index
    %c3584 = arith.constant 3584 : index
    %50 = vector.load %arg2[%c0_24, %c3584] : memref<128x4608xf32, #tpu.memory_space<vmem>>, vector<128x512xf32>
    %cst_25 = arith.constant dense<0.000000e+00> : vector<8x512xf32>
    %51 = tpu.matmul %0, %50, %cst_25 {dimension_numbers = #tpu.dot_dimension_numbers<[1], [0], [0], [1], [0, 0, 1, 1], [], []>} : vector<8x128xf32>, vector<128x512xf32>, vector<8x512xf32> -> vector<8x512xf32>
    %52 = vector.broadcast %1 : vector<1x512xf32> to vector<8x512xf32>
    %53 = arith.addf %51, %52 : vector<8x512xf32>
    %cst_26 = arith.constant 0.000000e+00 : f32
    %54 = vector.broadcast %cst_26 : f32 to vector<8x512xf32>
    %55 = arith.maximumf %53, %54 : vector<8x512xf32>
    %56 = arith.maximumf %49, %55 : vector<8x512xf32>
    %c0_27 = arith.constant 0 : index
    %c4096 = arith.constant 4096 : index
    %57 = vector.load %arg2[%c0_27, %c4096] : memref<128x4608xf32, #tpu.memory_space<vmem>>, vector<128x512xf32>
    %cst_28 = arith.constant dense<0.000000e+00> : vector<8x512xf32>
    %58 = tpu.matmul %0, %57, %cst_28 {dimension_numbers = #tpu.dot_dimension_numbers<[1], [0], [0], [1], [0, 0, 1, 1], [], []>} : vector<8x128xf32>, vector<128x512xf32>, vector<8x512xf32> -> vector<8x512xf32>
    %59 = vector.broadcast %1 : vector<1x512xf32> to vector<8x512xf32>
    %60 = arith.addf %58, %59 : vector<8x512xf32>
    %cst_29 = arith.constant 0.000000e+00 : f32
    %61 = vector.broadcast %cst_29 : f32 to vector<8x512xf32>
    %62 = arith.maximumf %60, %61 : vector<8x512xf32>
    %63 = arith.maximumf %56, %62 : vector<8x512xf32>
    %c0_30 = arith.constant 0 : index
    %c0_31 = arith.constant 0 : index
    %64 = vector.load %arg5[%c0_30, %c0_31] : memref<1x128xf32, #tpu.memory_space<vmem>>, vector<1x128xf32>
    %c0_32 = arith.constant 0 : index
    %c0_33 = arith.constant 0 : index
    %65 = vector.load %arg4[%c0_32, %c0_33] : memref<512x512xf32, #tpu.memory_space<vmem>>, vector<512x128xf32>
    %cst_34 = arith.constant dense<0.000000e+00> : vector<8x128xf32>
    %66 = tpu.matmul %63, %65, %cst_34 {dimension_numbers = #tpu.dot_dimension_numbers<[1], [0], [0], [1], [0, 0, 1, 1], [], []>} : vector<8x512xf32>, vector<512x128xf32>, vector<8x128xf32> -> vector<8x128xf32>
    %67 = vector.broadcast %64 : vector<1x128xf32> to vector<8x128xf32>
    %68 = arith.addf %66, %67 : vector<8x128xf32>
    %cst_35 = arith.constant 0.000000e+00 : f32
    %69 = vector.broadcast %cst_35 : f32 to vector<8x128xf32>
    %70 = arith.maximumf %68, %69 : vector<8x128xf32>
    %c0_36 = arith.constant 0 : index
    %c128 = arith.constant 128 : index
    %71 = vector.load %arg4[%c0_36, %c128] : memref<512x512xf32, #tpu.memory_space<vmem>>, vector<512x128xf32>
    %cst_37 = arith.constant dense<0.000000e+00> : vector<8x128xf32>
    %72 = tpu.matmul %63, %71, %cst_37 {dimension_numbers = #tpu.dot_dimension_numbers<[1], [0], [0], [1], [0, 0, 1, 1], [], []>} : vector<8x512xf32>, vector<512x128xf32>, vector<8x128xf32> -> vector<8x128xf32>
    %73 = vector.broadcast %64 : vector<1x128xf32> to vector<8x128xf32>
    %74 = arith.addf %72, %73 : vector<8x128xf32>
    %cst_38 = arith.constant 0.000000e+00 : f32
    %75 = vector.broadcast %cst_38 : f32 to vector<8x128xf32>
    %76 = arith.maximumf %74, %75 : vector<8x128xf32>
    %77 = arith.maximumf %70, %76 : vector<8x128xf32>
    %c0_39 = arith.constant 0 : index
    %c256 = arith.constant 256 : index
    %78 = vector.load %arg4[%c0_39, %c256] : memref<512x512xf32, #tpu.memory_space<vmem>>, vector<512x128xf32>
    %cst_40 = arith.constant dense<0.000000e+00> : vector<8x128xf32>
    %79 = tpu.matmul %63, %78, %cst_40 {dimension_numbers = #tpu.dot_dimension_numbers<[1], [0], [0], [1], [0, 0, 1, 1], [], []>} : vector<8x512xf32>, vector<512x128xf32>, vector<8x128xf32> -> vector<8x128xf32>
    %80 = vector.broadcast %64 : vector<1x128xf32> to vector<8x128xf32>
    %81 = arith.addf %79, %80 : vector<8x128xf32>
    %cst_41 = arith.constant 0.000000e+00 : f32
    %82 = vector.broadcast %cst_41 : f32 to vector<8x128xf32>
    %83 = arith.maximumf %81, %82 : vector<8x128xf32>
    %84 = arith.maximumf %77, %83 : vector<8x128xf32>
    %c0_42 = arith.constant 0 : index
    %c384 = arith.constant 384 : index
    %85 = vector.load %arg4[%c0_42, %c384] : memref<512x512xf32, #tpu.memory_space<vmem>>, vector<512x128xf32>
    %cst_43 = arith.constant dense<0.000000e+00> : vector<8x128xf32>
    %86 = tpu.matmul %63, %85, %cst_43 {dimension_numbers = #tpu.dot_dimension_numbers<[1], [0], [0], [1], [0, 0, 1, 1], [], []>} : vector<8x512xf32>, vector<512x128xf32>, vector<8x128xf32> -> vector<8x128xf32>
    %87 = vector.broadcast %64 : vector<1x128xf32> to vector<8x128xf32>
    %88 = arith.addf %86, %87 : vector<8x128xf32>
    %cst_44 = arith.constant 0.000000e+00 : f32
    %89 = vector.broadcast %cst_44 : f32 to vector<8x128xf32>
    %90 = arith.maximumf %88, %89 : vector<8x128xf32>
    %91 = arith.maximumf %84, %90 : vector<8x128xf32>
    %c0_45 = arith.constant 0 : index
    %c0_46 = arith.constant 0 : index
    %92 = vector.load %arg6[%c0_45, %c0_46] : memref<128x128xf32, #tpu.memory_space<vmem>>, vector<128x128xf32>
    %cst_47 = arith.constant dense<0.000000e+00> : vector<8x128xf32>
    %93 = tpu.matmul %91, %92, %cst_47 {dimension_numbers = #tpu.dot_dimension_numbers<[1], [0], [0], [1], [0, 0, 1, 1], [], []>} : vector<8x128xf32>, vector<128x128xf32>, vector<8x128xf32> -> vector<8x128xf32>
    %c0_48 = arith.constant 0 : index
    %c0_49 = arith.constant 0 : index
    %94 = vector.load %arg7[%c0_48, %c0_49] : memref<1x128xf32, #tpu.memory_space<vmem>>, vector<1x128xf32>
    %95 = vector.broadcast %94 : vector<1x128xf32> to vector<8x128xf32>
    %96 = arith.addf %93, %95 : vector<8x128xf32>
    %cst_50 = arith.constant 0.000000e+00 : f32
    %97 = vector.broadcast %cst_50 : f32 to vector<8x128xf32>
    %98 = arith.maximumf %96, %97 : vector<8x128xf32>
    %c0_51 = arith.constant 0 : index
    %c0_52 = arith.constant 0 : index
    %99 = vector.load %arg8[%c0_51, %c0_52] : memref<128x128xf32, #tpu.memory_space<vmem>>, vector<128x128xf32>
    %cst_53 = arith.constant dense<0.000000e+00> : vector<8x128xf32>
    %100 = tpu.matmul %98, %99, %cst_53 {dimension_numbers = #tpu.dot_dimension_numbers<[1], [0], [0], [1], [0, 0, 1, 1], [], []>} : vector<8x128xf32>, vector<128x128xf32>, vector<8x128xf32> -> vector<8x128xf32>
    %c0_54 = arith.constant 0 : index
    %c0_55 = arith.constant 0 : index
    %101 = vector.load %arg9[%c0_54, %c0_55] : memref<1x128xf32, #tpu.memory_space<vmem>>, vector<1x128xf32>
    %102 = vector.broadcast %101 : vector<1x128xf32> to vector<8x128xf32>
    %103 = arith.addf %100, %102 : vector<8x128xf32>
    %c0_56 = arith.constant 0 : index
    %c0_57 = arith.constant 0 : index
    %104 = vector.load %arg10[%c0_56, %c0_57] : memref<8x128xf32, #tpu.memory_space<vmem>>, vector<8x128xf32>
    tpu.vector_store %arg10[%c0_56, %c0_57], %103 {strides = array<i32>} : memref<8x128xf32, #tpu.memory_space<vmem>>, vector<8x128xf32>,
    return
  }
  func.func @transform_0(%arg0: i32) -> (i32, i32) {
    %c0_i32 = arith.constant 0 : i32
    %c0_i32_0 = arith.constant 0 : i32
    return %arg0, %c0_i32 : i32, i32
  }
  func.func @transform_1(%arg0: i32) -> (i32, i32) {
    %c0_i32 = arith.constant 0 : i32
    %c0_i32_0 = arith.constant 0 : i32
    %c0_i32_1 = arith.constant 0 : i32
    return %c0_i32, %c0_i32_0 : i32, i32
  }
  func.func @transform_2(%arg0: i32) -> (i32, i32) {
    %c0_i32 = arith.constant 0 : i32
    %c0_i32_0 = arith.constant 0 : i32
    %c0_i32_1 = arith.constant 0 : i32
    return %c0_i32, %c0_i32_0 : i32, i32
  }
  func.func @transform_3(%arg0: i32) -> (i32, i32) {
    %c0_i32 = arith.constant 0 : i32
    %c0_i32_0 = arith.constant 0 : i32
    %c0_i32_1 = arith.constant 0 : i32
    return %c0_i32, %c0_i32_0 : i32, i32
  }
  func.func @transform_4(%arg0: i32) -> (i32, i32) {
    %c0_i32 = arith.constant 0 : i32
    %c0_i32_0 = arith.constant 0 : i32
    %c0_i32_1 = arith.constant 0 : i32
    return %c0_i32, %c0_i32_0 : i32, i32
  }
  func.func @transform_5(%arg0: i32) -> (i32, i32) {
    %c0_i32 = arith.constant 0 : i32
    %c0_i32_0 = arith.constant 0 : i32
    %c0_i32_1 = arith.constant 0 : i32
    return %c0_i32, %c0_i32_0 : i32, i32
  }
  func.func @transform_6(%arg0: i32) -> (i32, i32) {
    %c0_i32 = arith.constant 0 : i32
    %c0_i32_0 = arith.constant 0 : i32
    %c0_i32_1 = arith.constant 0 : i32
    return %c0_i32, %c0_i32_0 : i32, i32
  }
  func.func @transform_7(%arg0: i32) -> (i32, i32) {
    %c0_i32 = arith.constant 0 : i32
    %c0_i32_0 = arith.constant 0 : i32
    %c0_i32_1 = arith.constant 0 : i32
    return %c0_i32, %c0_i32_0 : i32, i32
  }
  func.func @transform_8(%arg0: i32) -> (i32, i32) {
    %c0_i32 = arith.constant 0 : i32
    %c0_i32_0 = arith.constant 0 : i32
    %c0_i32_1 = arith.constant 0 : i32
    return %c0_i32, %c0_i32_0 : i32, i32
  }
  func.func @transform_9(%arg0: i32) -> (i32, i32) {
    %c0_i32 = arith.constant 0 : i32
    %c0_i32_0 = arith.constant 0 : i32
    return %arg0, %c0_i32 : i32, i32
  }
}

</mosaic_0001>

<llo_original>
// kernel: tpu_custom_call.1
$region0: #{tpu_custom_call.1}
  #allocation0 [shape = 'u32[]', space=smem, size = 0x4, offset = 0x4, fixed_abs, tag = 'smem constant byte address 0x4 - core index']
  #allocation1 [shape = 'u32[144,128]{1,0:T(1,128)}', space=vmem, size = 0x12000, scoped, tag = 'internal scratch']
  %s0 = inlined_call_operand.hbm [shape: f32[8,128], index: 0, kind: input, shape index: {}]
  %s1 = inlined_call_operand.hbm [shape: f32[128,4608], index: 1, kind: input, shape index: {}]
  %s2 = inlined_call_operand.hbm [shape: f32[1,512], index: 2, kind: input, shape index: {}]
  %s3 = inlined_call_operand.hbm [shape: f32[512,512], index: 3, kind: input, shape index: {}]
  %s4 = inlined_call_operand.hbm [shape: f32[1,128], index: 4, kind: input, shape index: {}]
  %s5 = inlined_call_operand.hbm [shape: f32[128,128], index: 5, kind: input, shape index: {}]
  %s6 = inlined_call_operand.hbm [shape: f32[1,128], index: 6, kind: input, shape index: {}]
  %s7 = inlined_call_operand.hbm [shape: f32[128,128], index: 7, kind: input, shape index: {}]
  %s8 = inlined_call_operand.hbm [shape: f32[1,128], index: 8, kind: input, shape index: {}]
  %s9 = inlined_call_operand.hbm [shape: f32[8,128], index: 9, kind: output, shape index: {}]
  %s10 = sld [smem:[#allocation0]]
  $region82: #{tpu_custom_call.1} parent=0
    _
  %s12 = ssub.s32 1, %s10
  %s13 = scalar_select 0, %s12, %s10
  $region1: #{tpu_custom_call.1} parent=0
    #allocation2 [shape = 'u8[4096]{0}', space=vmem, size = 0x1000, scoped, tag = 'input window, operand 0, single buffered']
    #allocation3 [shape = 's32[1]{0}', space=sflag, size = 0x4, scoped, tag = 'scoped memory for tpu_custom_call.1']
    #allocation4 [shape = 's32[1]{0}', space=sflag, size = 0x4, scoped, tag = 'scoped memory for tpu_custom_call.1']
    #allocation5 [shape = 'u8[2359296]{0}', space=vmem, size = 0x240000, scoped, tag = 'input window, operand 1, single buffered']
    #allocation6 [shape = 's32[1]{0}', space=sflag, size = 0x4, scoped, tag = 'scoped memory for tpu_custom_call.1']
    #allocation7 [shape = 'u8[2048]{0}', space=vmem, size = 0x800, scoped, tag = 'input window, operand 2, single buffered']
    #allocation8 [shape = 'u8[1048576]{0}', space=vmem, size = 0x100000, scoped, tag = 'input window, operand 3, single buffered']
    #allocation9 [shape = 's32[1]{0}', space=sflag, size = 0x4, scoped, tag = 'scoped memory for tpu_custom_call.1']
    #allocation10 [shape = 'u8[512]{0}', space=vmem, size = 0x400, scoped, tag = 'input window, operand 4, single buffered']
    #allocation11 [shape = 'u8[65536]{0}', space=vmem, size = 0x10000, scoped, tag = 'input window, operand 5, single buffered']
    #allocation12 [shape = 's32[1]{0}', space=sflag, size = 0x4, scoped, tag = 'scoped memory for tpu_custom_call.1']
    #allocation13 [shape = 'u8[512]{0}', space=vmem, size = 0x400, scoped, tag = 'input window, operand 6, single buffered']
    #allocation14 [shape = 'u8[65536]{0}', space=vmem, size = 0x10000, scoped, tag = 'input window, operand 7, single buffered']
    #allocation15 [shape = 's32[1]{0}', space=sflag, size = 0x4, scoped, tag = 'scoped memory for tpu_custom_call.1']
    #allocation16 [shape = 'u8[512]{0}', space=vmem, size = 0x400, scoped, tag = 'input window, operand 8, single buffered']
    #allocation17 [shape = 'u8[4096]{0}', space=vmem, size = 0x1000, scoped, tag = 'output window, operand 0, single buffered']
    %14 = vsyncpa [#allocation3], 0
    %15 = vsyncpa [#allocation6], 0
    %16 = vsyncpa [#allocation9], 0
    %17 = vsyncpa [#allocation12], 0
    %18 = vsyncpa [#allocation15], 0
    %19 = vsyncpa [#allocation4], 0
    // Predicated region
    $region2: #{tpu_custom_call.1} parent=1 // pred_check
      _
    $region3: #{tpu_custom_call.1} parent=1 // pred_check_branch
      %21 = sbr.rel (0) target = $region5
    $region4: #{tpu_custom_call.1} parent=1 // pred_region
      %s23 = ssub.s32 128, 128
      %24 = vsyncadd [#allocation3], %s23
      %s26 = sshll.u32 [#allocation2], 4
      %s27 = int_to_ptr.vmem [resolvable:$true] %s26
      %29 = dma.hbm_to_vmem [thread:$0]  %s0, 128, %s27, [#allocation3]
    $region5: #{tpu_custom_call.1} parent=1 // pred_fallthru
      _
    // Predicated region
    $region6: #{tpu_custom_call.1} parent=1 // pred_check
      _
    $region7: #{tpu_custom_call.1} parent=1 // pred_check_branch
      %31 = sbr.rel (0) target = $region9
    $region8: #{tpu_custom_call.1} parent=1 // pred_region
      %s33 = ssub.s32 73728, 73728
      %34 = vsyncadd [#allocation6], %s33
      %s35 = sshll.u32 [#allocation5], 4
      %s36 = int_to_ptr.vmem [resolvable:$true] %s35
      %41 = dma.hbm_to_vmem [thread:$0]  %s1, 73728, %s36, [#allocation6], 4608, 4608, 288
    $region9: #{tpu_custom_call.1} parent=1 // pred_fallthru
      _
    // Predicated region
    $region10: #{tpu_custom_call.1} parent=1 // pred_check
      _
    $region11: #{tpu_custom_call.1} parent=1 // pred_check_branch
      %43 = sbr.rel (0) target = $region13
    $region12: #{tpu_custom_call.1} parent=1 // pred_region
      %s45 = ssub.s32 64, 64
      %46 = vsyncadd [#allocation6], %s45
      %s48 = sshll.u32 [#allocation7], 4
      %s49 = int_to_ptr.vmem [resolvable:$true] %s48
      %51 = dma.hbm_to_vmem [thread:$0]  %s2, 64, %s49, [#allocation6]
    $region13: #{tpu_custom_call.1} parent=1 // pred_fallthru
      _
    // Predicated region
    $region14: #{tpu_custom_call.1} parent=1 // pred_check
      _
    $region15: #{tpu_custom_call.1} parent=1 // pred_check_branch
      %53 = sbr.rel (0) target = $region17
    $region16: #{tpu_custom_call.1} parent=1 // pred_region
      %s55 = ssub.s32 32768, 32768
      %56 = vsyncadd [#allocation9], %s55
      %s57 = sshll.u32 [#allocation8], 4
      %s58 = int_to_ptr.vmem [resolvable:$true] %s57
      %63 = dma.hbm_to_vmem [thread:$0]  %s3, 32768, %s58, [#allocation9], 512, 512, 32
    $region17: #{tpu_custom_call.1} parent=1 // pred_fallthru
      _
    // Predicated region
    $region18: #{tpu_custom_call.1} parent=1 // pred_check
      _
    $region19: #{tpu_custom_call.1} parent=1 // pred_check_branch
      %65 = sbr.rel (0) target = $region21
    $region20: #{tpu_custom_call.1} parent=1 // pred_region
      %s67 = ssub.s32 16, 16
      %68 = vsyncadd [#allocation9], %s67
      %s70 = sshll.u32 [#allocation10], 4
      %s71 = int_to_ptr.vmem [resolvable:$true] %s70
      %73 = dma.hbm_to_vmem [thread:$0]  %s4, 16, %s71, [#allocation9]
    $region21: #{tpu_custom_call.1} parent=1 // pred_fallthru
      _
    // Predicated region
    $region22: #{tpu_custom_call.1} parent=1 // pred_check
      _
    $region23: #{tpu_custom_call.1} parent=1 // pred_check_branch
      %75 = sbr.rel (0) target = $region25
    $region24: #{tpu_custom_call.1} parent=1 // pred_region
      %s77 = ssub.s32 2048, 2048
      %78 = vsyncadd [#allocation12], %s77
      %s79 = sshll.u32 [#allocation11], 4
      %s80 = int_to_ptr.vmem [resolvable:$true] %s79
      %85 = dma.hbm_to_vmem [thread:$0]  %s5, 2048, %s80, [#allocation12], 128, 128, 8
    $region25: #{tpu_custom_call.1} parent=1 // pred_fallthru
      _
    // Predicated region
    $region26: #{tpu_custom_call.1} parent=1 // pred_check
      _
    $region27: #{tpu_custom_call.1} parent=1 // pred_check_branch
      %87 = sbr.rel (0) target = $region29
    $region28: #{tpu_custom_call.1} parent=1 // pred_region
      %s89 = ssub.s32 16, 16
      %90 = vsyncadd [#allocation12], %s89
      %s92 = sshll.u32 [#allocation13], 4
      %s93 = int_to_ptr.vmem [resolvable:$true] %s92
      %95 = dma.hbm_to_vmem [thread:$0]  %s6, 16, %s93, [#allocation12]
    $region29: #{tpu_custom_call.1} parent=1 // pred_fallthru
      _
    // Predicated region
    $region30: #{tpu_custom_call.1} parent=1 // pred_check
      _
    $region31: #{tpu_custom_call.1} parent=1 // pred_check_branch
      %97 = sbr.rel (0) target = $region33
    $region32: #{tpu_custom_call.1} parent=1 // pred_region
      %s99 = ssub.s32 2048, 2048
      %100 = vsyncadd [#allocation15], %s99
      %s101 = sshll.u32 [#allocation14], 4
      %s102 = int_to_ptr.vmem [resolvable:$true] %s101
      %107 = dma.hbm_to_vmem [thread:$0]  %s7, 2048, %s102, [#allocation15], 128, 128, 8
    $region33: #{tpu_custom_call.1} parent=1 // pred_fallthru
      _
    // Predicated region
    $region34: #{tpu_custom_call.1} parent=1 // pred_check
      _
    $region35: #{tpu_custom_call.1} parent=1 // pred_check_branch
      %109 = sbr.rel (0) target = $region37
    $region36: #{tpu_custom_call.1} parent=1 // pred_region
      %s111 = ssub.s32 16, 16
      %112 = vsyncadd [#allocation15], %s111
      %s114 = sshll.u32 [#allocation16], 4
      %s115 = int_to_ptr.vmem [resolvable:$true] %s114
      %117 = dma.hbm_to_vmem [thread:$0]  %s8, 16, %s115, [#allocation15]
    $region37: #{tpu_custom_call.1} parent=1 // pred_fallthru
      _
    // Predicated region
    $region38: #{tpu_custom_call.1} parent=1 // pred_check
      _
    $region39: #{tpu_custom_call.1} parent=1 // pred_check_branch
      %119 = sbr.rel (0) target = $region41
    $region40: #{tpu_custom_call.1} parent=1 // pred_region
      %120 = dma.done [#allocation3], 128
    $region41: #{tpu_custom_call.1} parent=1 // pred_fallthru
      _
    // Predicated region
    $region42: #{tpu_custom_call.1} parent=1 // pred_check
      _
    $region43: #{tpu_custom_call.1} parent=1 // pred_check_branch
      %122 = sbr.rel (0) target = $region45
    $region44: #{tpu_custom_call.1} parent=1 // pred_region
      %123 = dma.done [#allocation6], 73728
    $region45: #{tpu_custom_call.1} parent=1 // pred_fallthru
      _
    // Predicated region
    $region46: #{tpu_custom_call.1} parent=1 // pred_check
      _
    $region47: #{tpu_custom_call.1} parent=1 // pred_check_branch
      %125 = sbr.rel (0) target = $region49
    $region48: #{tpu_custom_call.1} parent=1 // pred_region
      %126 = dma.done [#allocation6], 64
    $region49: #{tpu_custom_call.1} parent=1 // pred_fallthru
      _
    // Predicated region
    $region50: #{tpu_custom_call.1} parent=1 // pred_check
      _
    $region51: #{tpu_custom_call.1} parent=1 // pred_check_branch
      %128 = sbr.rel (0) target = $region53
    $region52: #{tpu_custom_call.1} parent=1 // pred_region
      %129 = dma.done [#allocation9], 32768
    $region53: #{tpu_custom_call.1} parent=1 // pred_fallthru
      _
    // Predicated region
    $region54: #{tpu_custom_call.1} parent=1 // pred_check
      _
    $region55: #{tpu_custom_call.1} parent=1 // pred_check_branch
      %131 = sbr.rel (0) target = $region57
    $region56: #{tpu_custom_call.1} parent=1 // pred_region
      %132 = dma.done [#allocation9], 16
    $region57: #{tpu_custom_call.1} parent=1 // pred_fallthru
      _
    // Predicated region
    $region58: #{tpu_custom_call.1} parent=1 // pred_check
      _
    $region59: #{tpu_custom_call.1} parent=1 // pred_check_branch
      %134 = sbr.rel (0) target = $region61
    $region60: #{tpu_custom_call.1} parent=1 // pred_region
      %135 = dma.done [#allocation12], 2048
    $region61: #{tpu_custom_call.1} parent=1 // pred_fallthru
      _
    // Predicated region
    $region62: #{tpu_custom_call.1} parent=1 // pred_check
      _
    $region63: #{tpu_custom_call.1} parent=1 // pred_check_branch
      %137 = sbr.rel (0) target = $region65
    $region64: #{tpu_custom_call.1} parent=1 // pred_region
      %138 = dma.done [#allocation12], 16
    $region65: #{tpu_custom_call.1} parent=1 // pred_fallthru
      _
    // Predicated region
    $region66: #{tpu_custom_call.1} parent=1 // pred_check
      _
    $region67: #{tpu_custom_call.1} parent=1 // pred_check_branch
      %140 = sbr.rel (0) target = $region69
    $region68: #{tpu_custom_call.1} parent=1 // pred_region
      %141 = dma.done [#allocation15], 2048
    $region69: #{tpu_custom_call.1} parent=1 // pred_fallthru
      _
    // Predicated region
    $region70: #{tpu_custom_call.1} parent=1 // pred_check
      _
    $region71: #{tpu_custom_call.1} parent=1 // pred_check_branch
      %143 = sbr.rel (0) target = $region73
    $region72: #{tpu_custom_call.1} parent=1 // pred_region
      %144 = dma.done [#allocation15], 16
    $region73: #{tpu_custom_call.1} parent=1 // pred_fallthru
      _
    %v145 = vld [vmem:[#allocation2] sm:$0xff]
    %v146 = vld [vmem:[#allocation7] sm:$0xf]
    %v147 = vld [vmem:[#allocation5] sm:$0xff]
    %v148 = vld [vmem:[#allocation5 + $0x8] sm:$0xff]
    %v149 = vld [vmem:[#allocation5 + $0x10] sm:$0xff]
    %v150 = vld [vmem:[#allocation5 + $0x18] sm:$0xff]
    %v151 = vld [vmem:[#allocation5 + $0x120] sm:$0xff]
    %v152 = vld [vmem:[#allocation5 + $0x128] sm:$0xff]
    %v153 = vld [vmem:[#allocation5 + $0x130] sm:$0xff]
    %v154 = vld [vmem:[#allocation5 + $0x138] sm:$0xff]
    %v155 = vld [vmem:[#allocation5 + $0x240] sm:$0xff]
    %v156 = vld [vmem:[#allocation5 + $0x248] sm:$0xff]
    %v157 = vld [vmem:[#allocation5 + $0x250] sm:$0xff]
    %v158 = vld [vmem:[#allocation5 + $0x258] sm:$0xff]
    %v159 = vld [vmem:[#allocation5 + $0x360] sm:$0xff]
    %v160 = vld [vmem:[#allocation5 + $0x368] sm:$0xff]
    %v161 = vld [vmem:[#allocation5 + $0x370] sm:$0xff]
    %v162 = vld [vmem:[#allocation5 + $0x378] sm:$0xff]
    %v163 = vld [vmem:[#allocation5 + $0x480] sm:$0xff]
    %v164 = vld [vmem:[#allocation5 + $0x488] sm:$0xff]
    %v165 = vld [vmem:[#allocation5 + $0x490] sm:$0xff]
    %v166 = vld [vmem:[#allocation5 + $0x498] sm:$0xff]
    %v167 = vld [vmem:[#allocation5 + $0x5a0] sm:$0xff]
    %v168 = vld [vmem:[#allocation5 + $0x5a8] sm:$0xff]
    %v169 = vld [vmem:[#allocation5 + $0x5b0] sm:$0xff]
    %v170 = vld [vmem:[#allocation5 + $0x5b8] sm:$0xff]
    %v171 = vld [vmem:[#allocation5 + $0x6c0] sm:$0xff]
    %v172 = vld [vmem:[#allocation5 + $0x6c8] sm:$0xff]
    %v173 = vld [vmem:[#allocation5 + $0x6d0] sm:$0xff]
    %v174 = vld [vmem:[#allocation5 + $0x6d8] sm:$0xff]
    %v175 = vld [vmem:[#allocation5 + $0x7e0] sm:$0xff]
    %v176 = vld [vmem:[#allocation5 + $0x7e8] sm:$0xff]
    %v177 = vld [vmem:[#allocation5 + $0x7f0] sm:$0xff]
    %v178 = vld [vmem:[#allocation5 + $0x7f8] sm:$0xff]
    %v179 = vld [vmem:[#allocation5 + $0x900] sm:$0xff]
    %v180 = vld [vmem:[#allocation5 + $0x908] sm:$0xff]
    %v181 = vld [vmem:[#allocation5 + $0x910] sm:$0xff]
    %v182 = vld [vmem:[#allocation5 + $0x918] sm:$0xff]
    %v183 = vld [vmem:[#allocation5 + $0xa20] sm:$0xff]
    %v184 = vld [vmem:[#allocation5 + $0xa28] sm:$0xff]
    %v185 = vld [vmem:[#allocation5 + $0xa30] sm:$0xff]
    %v186 = vld [vmem:[#allocation5 + $0xa38] sm:$0xff]
    %v187 = vld [vmem:[#allocation5 + $0xb40] sm:$0xff]
    %v188 = vld [vmem:[#allocation5 + $0xb48] sm:$0xff]
    %v189 = vld [vmem:[#allocation5 + $0xb50] sm:$0xff]
    %v190 = vld [vmem:[#allocation5 + $0xb58] sm:$0xff]
    %v191 = vld [vmem:[#allocation5 + $0xc60] sm:$0xff]
    %v192 = vld [vmem:[#allocation5 + $0xc68] sm:$0xff]
    %v193 = vld [vmem:[#allocation5 + $0xc70] sm:$0xff]
    %v194 = vld [vmem:[#allocation5 + $0xc78] sm:$0xff]
    %v195 = vld [vmem:[#allocation5 + $0xd80] sm:$0xff]
    %v196 = vld [vmem:[#allocation5 + $0xd88] sm:$0xff]
    %v197 = vld [vmem:[#allocation5 + $0xd90] sm:$0xff]
    %v198 = vld [vmem:[#allocation5 + $0xd98] sm:$0xff]
    %v199 = vld [vmem:[#allocation5 + $0xea0] sm:$0xff]
    %v200 = vld [vmem:[#allocation5 + $0xea8] sm:$0xff]
    %v201 = vld [vmem:[#allocation5 + $0xeb0] sm:$0xff]
    %v202 = vld [vmem:[#allocation5 + $0xeb8] sm:$0xff]
    %v203 = vld [vmem:[#allocation5 + $0xfc0] sm:$0xff]
    %v204 = vld [vmem:[#allocation5 + $0xfc8] sm:$0xff]
    %v205 = vld [vmem:[#allocation5 + $0xfd0] sm:$0xff]
    %v206 = vld [vmem:[#allocation5 + $0xfd8] sm:$0xff]
    %v207 = vld [vmem:[#allocation5 + $0x10e0] sm:$0xff]
    %v208 = vld [vmem:[#allocation5 + $0x10e8] sm:$0xff]
    %v209 = vld [vmem:[#allocation5 + $0x10f0] sm:$0xff]
    %v210 = vld [vmem:[#allocation5 + $0x10f8] sm:$0xff]
    %v212 = vlaneseq
    %v213 = vshrl.u32 %v212, 7
    %v214 = vsub.s32 0, %v213
    %v215 = vrot.slane %v146, %v214
    %v216 = vlaneseq
    %v217 = vshrl.u32 %v216, 7
    %v218 = vsub.s32 1, %v217
    %v219 = vrot.slane %v146, %v218
    %v220 = vlaneseq
    %v221 = vshrl.u32 %v220, 7
    %v222 = vsub.s32 2, %v221
    %v223 = vrot.slane %v146, %v222
    %v224 = vlaneseq
    %v225 = vshrl.u32 %v224, 7
    %v226 = vsub.s32 3, %v225
    %v227 = vrot.slane %v146, %v226
    %232 = vmatprep.subr.mxu0 %v148
    %233 = vmatpush1.msra.mxu0 %v147
    %234 = vmatprep.subr.mxu0 %v152
    %235 = vmatpush1.msra.mxu0 %v151
    %236 = vmatprep.subr.mxu0 %v156
    %237 = vmatpush1.msra.mxu0 %v155
    %238 = vmatprep.subr.mxu0 %v160
    %239 = vmatpush1.msra.mxu0 %v159
    %240 = vmatprep.subr.mxu0 %v164
    %241 = vmatpush1.msra.mxu0 %v163
    %242 = vmatprep.subr.mxu0 %v168
    %243 = vmatpush1.msra.mxu0 %v167
    %244 = vmatprep.subr.mxu0 %v172
    %245 = vmatpush1.msra.mxu0 %v171
    %246 = vmatprep.subr.mxu0 %v176
    %247 = vmatpush1.msra.mxu0 %v175
    %248 = vmatprep.subr.mxu0 %v180
    %249 = vmatpush1.msra.mxu0 %v179
    %250 = vmatprep.subr.mxu0 %v184
    %251 = vmatpush1.msra.mxu0 %v183
    %252 = vmatprep.subr.mxu0 %v188
    %253 = vmatpush1.msra.mxu0 %v187
    %254 = vmatprep.subr.mxu0 %v192
    %255 = vmatpush1.msra.mxu0 %v191
    %256 = vmatprep.subr.mxu0 %v196
    %257 = vmatpush1.msra.mxu0 %v195
    %258 = vmatprep.subr.mxu0 %v200
    %259 = vmatpush1.msra.mxu0 %v199
    %260 = vmatprep.subr.mxu0 %v204
    %261 = vmatpush1.msra.mxu0 %v203
    %262 = vmatprep.subr.mxu0 %v208
    %263 = vmatpush1.msra.mxu0 %v207
    %264 = vmatprep.subr.mxu0 0.0
    %265 = vmatpush1.msra.mxu0 0.0
    %266 = vmatprep.subr.mxu0 0.0
    %267 = vmatpush1.msra.mxu0 0.0
    %268 = vmatprep.subr.mxu0 0.0
    %269 = vmatpush1.msra.mxu0 0.0
    %270 = vmatprep.subr.mxu0 0.0
    %271 = vmatpush1.msra.mxu0 0.0
    %272 = vmatprep.subr.mxu0 0.0
    %273 = vmatpush1.msra.mxu0 0.0
    %274 = vmatprep.subr.mxu0 0.0
    %275 = vmatpush1.msra.mxu0 0.0
    %276 = vmatprep.subr.mxu0 0.0
    %277 = vmatpush1.msra.mxu0 0.0
    %278 = vmatprep.subr.mxu0 0.0
    %279 = vmatpush1.msra.mxu0 0.0
    %280 = vmatprep.subr.mxu0 0.0
    %281 = vmatpush1.msra.mxu0 0.0
    %282 = vmatprep.subr.mxu0 0.0
    %283 = vmatpush1.msra.mxu0 0.0
    %284 = vmatprep.subr.mxu0 0.0
    %285 = vmatpush1.msra.mxu0 0.0
    %286 = vmatprep.subr.mxu0 0.0
    %287 = vmatpush1.msra.mxu0 0.0
    %288 = vmatprep.subr.mxu0 0.0
    %289 = vmatpush1.msra.mxu0 0.0
    %290 = vmatprep.subr.mxu0 0.0
    %291 = vmatpush1.msra.mxu0 0.0
    %292 = vmatprep.subr.mxu0 0.0
    %293 = vmatpush1.msra.mxu0 0.0
    %294 = vmatprep.subr.mxu0 0.0
    %295 = vmatpush1.msra.mxu0 0.0
    %296 = vmatprep.mubr.f32.mxu0 0.0
    %297 = vmatmul.mubr.f32.gmra.mrb[0].mxu0 %v145
    %v298 = vpop.f32.mrb[0].mxu0
    %v299 = vadd.f32 %v215, %v298
    %v300 = vpop.f32.mrb[0].mxu0
    %v301 = vadd.f32 %v219, %v300
    %302 = vdwg.mxu0
    %303 = vmatprep.subr.mxu0 %v150
    %304 = vmatpush1.msra.mxu0 %v149
    %305 = vmatprep.subr.mxu0 %v154
    %306 = vmatpush1.msra.mxu0 %v153
    %307 = vmatprep.subr.mxu0 %v158
    %308 = vmatpush1.msra.mxu0 %v157
    %309 = vmatprep.subr.mxu0 %v162
    %310 = vmatpush1.msra.mxu0 %v161
    %311 = vmatprep.subr.mxu0 %v166
    %312 = vmatpush1.msra.mxu0 %v165
    %313 = vmatprep.subr.mxu0 %v170
    %314 = vmatpush1.msra.mxu0 %v169
    %315 = vmatprep.subr.mxu0 %v174
    %316 = vmatpush1.msra.mxu0 %v173
    %317 = vmatprep.subr.mxu0 %v178
    %318 = vmatpush1.msra.mxu0 %v177
    %319 = vmatprep.subr.mxu0 %v182
    %320 = vmatpush1.msra.mxu0 %v181
    %321 = vmatprep.subr.mxu0 %v186
    %322 = vmatpush1.msra.mxu0 %v185
    %323 = vmatprep.subr.mxu0 %v190
    %324 = vmatpush1.msra.mxu0 %v189
    %325 = vmatprep.subr.mxu0 %v194
    %326 = vmatpush1.msra.mxu0 %v193
    %327 = vmatprep.subr.mxu0 %v198
    %328 = vmatpush1.msra.mxu0 %v197
    %329 = vmatprep.subr.mxu0 %v202
    %330 = vmatpush1.msra.mxu0 %v201
    %331 = vmatprep.subr.mxu0 %v206
    %332 = vmatpush1.msra.mxu0 %v205
    %333 = vmatprep.subr.mxu0 %v210
    %334 = vmatpush1.msra.mxu0 %v209
    %335 = vmatprep.subr.mxu0 0.0
    %336 = vmatpush1.msra.mxu0 0.0
    %337 = vmatprep.subr.mxu0 0.0
    %338 = vmatpush1.msra.mxu0 0.0
    %339 = vmatprep.subr.mxu0 0.0
    %340 = vmatpush1.msra.mxu0 0.0
    %341 = vmatprep.subr.mxu0 0.0
    %342 = vmatpush1.msra.mxu0 0.0
    %343 = vmatprep.subr.mxu0 0.0
    %344 = vmatpush1.msra.mxu0 0.0
    %345 = vmatprep.subr.mxu0 0.0
    %346 = vmatpush1.msra.mxu0 0.0
    %347 = vmatprep.subr.mxu0 0.0
    %348 = vmatpush1.msra.mxu0 0.0
    %349 = vmatprep.subr.mxu0 0.0
    %350 = vmatpush1.msra.mxu0 0.0
    %351 = vmatprep.subr.mxu0 0.0
    %352 = vmatpush1.msra.mxu0 0.0
    %353 = vmatprep.subr.mxu0 0.0
    %354 = vmatpush1.msra.mxu0 0.0
    %355 = vmatprep.subr.mxu0 0.0
    %356 = vmatpush1.msra.mxu0 0.0
    %357 = vmatprep.subr.mxu0 0.0
    %358 = vmatpush1.msra.mxu0 0.0
    %359 = vmatprep.subr.mxu0 0.0
    %360 = vmatpush1.msra.mxu0 0.0
    %361 = vmatprep.subr.mxu0 0.0
    %362 = vmatpush1.msra.mxu0 0.0
    %363 = vmatprep.subr.mxu0 0.0
    %364 = vmatpush1.msra.mxu0 0.0
    %365 = vmatprep.subr.mxu0 0.0
    %366 = vmatpush1.msra.mxu0 0.0
    %367 = vmatprep.mubr.f32.mxu0 0.0
    %368 = vmatmul.mubr.f32.gmra.mrb[0].mxu0 %v145
    %v369 = vpop.f32.mrb[0].mxu0
    %v370 = vadd.f32 %v223, %v369
    %v371 = vpop.f32.mrb[0].mxu0
    %v372 = vadd.f32 %v227, %v371
    %373 = vdwg.mxu0
    %v374 = vmax.f32 %v299, 0.0
    %v375 = vmax.f32 %v301, 0.0
    %v376 = vmax.f32 %v370, 0.0
    %v377 = vmax.f32 %v372, 0.0
    %v378 = vld [vmem:[#allocation5 + $0x20] sm:$0xff]
    %v379 = vld [vmem:[#allocation5 + $0x28] sm:$0xff]
    %v380 = vld [vmem:[#allocation5 + $0x30] sm:$0xff]
    %v381 = vld [vmem:[#allocation5 + $0x38] sm:$0xff]
    %v382 = vld [vmem:[#allocation5 + $0x140] sm:$0xff]
    %v383 = vld [vmem:[#allocation5 + $0x148] sm:$0xff]
    %v384 = vld [vmem:[#allocation5 + $0x150] sm:$0xff]
    %v385 = vld [vmem:[#allocation5 + $0x158] sm:$0xff]
    %v386 = vld [vmem:[#allocation5 + $0x260] sm:$0xff]
    %v387 = vld [vmem:[#allocation5 + $0x268] sm:$0xff]
    %v388 = vld [vmem:[#allocation5 + $0x270] sm:$0xff]
    %v389 = vld [vmem:[#allocation5 + $0x278] sm:$0xff]
    %v390 = vld [vmem:[#allocation5 + $0x380] sm:$0xff]
    %v391 = vld [vmem:[#allocation5 + $0x388] sm:$0xff]
    %v392 = vld [vmem:[#allocation5 + $0x390] sm:$0xff]
    %v393 = vld [vmem:[#allocation5 + $0x398] sm:$0xff]
    %v394 = vld [vmem:[#allocation5 + $0x4a0] sm:$0xff]
    %v395 = vld [vmem:[#allocation5 + $0x4a8] sm:$0xff]
    %v396 = vld [vmem:[#allocation5 + $0x4b0] sm:$0xff]
    %v397 = vld [vmem:[#allocation5 + $0x4b8] sm:$0xff]
    %v398 = vld [vmem:[#allocation5 + $0x5c0] sm:$0xff]
    %v399 = vld [vmem:[#allocation5 + $0x5c8] sm:$0xff]
    %v400 = vld [vmem:[#allocation5 + $0x5d0] sm:$0xff]
    %v401 = vld [vmem:[#allocation5 + $0x5d8] sm:$0xff]
    %v402 = vld [vmem:[#allocation5 + $0x6e0] sm:$0xff]
    %v403 = vld [vmem:[#allocation5 + $0x6e8] sm:$0xff]
    %v404 = vld [vmem:[#allocation5 + $0x6f0] sm:$0xff]
    %v405 = vld [vmem:[#allocation5 + $0x6f8] sm:$0xff]
    %v406 = vld [vmem:[#allocation5 + $0x800] sm:$0xff]
    %v407 = vld [vmem:[#allocation5 + $0x808] sm:$0xff]
    %v408 = vld [vmem:[#allocation5 + $0x810] sm:$0xff]
    %v409 = vld [vmem:[#allocation5 + $0x818] sm:$0xff]
    %v410 = vld [vmem:[#allocation5 + $0x920] sm:$0xff]
    %v411 = vld [vmem:[#allocation5 + $0x928] sm:$0xff]
    %v412 = vld [vmem:[#allocation5 + $0x930] sm:$0xff]
    %v413 = vld [vmem:[#allocation5 + $0x938] sm:$0xff]
    %v414 = vld [vmem:[#allocation5 + $0xa40] sm:$0xff]
    %v415 = vld [vmem:[#allocation5 + $0xa48] sm:$0xff]
    %v416 = vld [vmem:[#allocation5 + $0xa50] sm:$0xff]
    %v417 = vld [vmem:[#allocation5 + $0xa58] sm:$0xff]
    %v418 = vld [vmem:[#allocation5 + $0xb60] sm:$0xff]
    %v419 = vld [vmem:[#allocation5 + $0xb68] sm:$0xff]
    %v420 = vld [vmem:[#allocation5 + $0xb70] sm:$0xff]
    %v421 = vld [vmem:[#allocation5 + $0xb78] sm:$0xff]
    %v422 = vld [vmem:[#allocation5 + $0xc80] sm:$0xff]
    %v423 = vld [vmem:[#allocation5 + $0xc88] sm:$0xff]
    %v424 = vld [vmem:[#allocation5 + $0xc90] sm:$0xff]
    %v425 = vld [vmem:[#allocation5 + $0xc98] sm:$0xff]
    %v426 = vld [vmem:[#allocation5 + $0xda0] sm:$0xff]
    %v427 = vld [vmem:[#allocation5 + $0xda8] sm:$0xff]
    %v428 = vld [vmem:[#allocation5 + $0xdb0] sm:$0xff]
    %v429 = vld [vmem:[#allocation5 + $0xdb8] sm:$0xff]
    %v430 = vld [vmem:[#allocation5 + $0xec0] sm:$0xff]
    %v431 = vld [vmem:[#allocation5 + $0xec8] sm:$0xff]
    %v432 = vld [vmem:[#allocation5 + $0xed0] sm:$0xff]
    %v433 = vld [vmem:[#allocation5 + $0xed8] sm:$0xff]
    %v434 = vld [vmem:[#allocation5 + $0xfe0] sm:$0xff]
    %v435 = vld [vmem:[#allocation5 + $0xfe8] sm:$0xff]
    %v436 = vld [vmem:[#allocation5 + $0xff0] sm:$0xff]
    %v437 = vld [vmem:[#allocation5 + $0xff8] sm:$0xff]
    %v438 = vld [vmem:[#allocation5 + $0x1100] sm:$0xff]
    %v439 = vld [vmem:[#allocation5 + $0x1108] sm:$0xff]
    %v440 = vld [vmem:[#allocation5 + $0x1110] sm:$0xff]
    %v441 = vld [vmem:[#allocation5 + $0x1118] sm:$0xff]
    %442 = vmatprep.subr.mxu0 %v379
    %443 = vmatpush1.msra.mxu0 %v378
    %444 = vmatprep.subr.mxu0 %v383
    %445 = vmatpush1.msra.mxu0 %v382
    %446 = vmatprep.subr.mxu0 %v387
    %447 = vmatpush1.msra.mxu0 %v386
    %448 = vmatprep.subr.mxu0 %v391
    %449 = vmatpush1.msra.mxu0 %v390
    %450 = vmatprep.subr.mxu0 %v395
    %451 = vmatpush1.msra.mxu0 %v394
    %452 = vmatprep.subr.mxu0 %v399
    %453 = vmatpush1.msra.mxu0 %v398
    %454 = vmatprep.subr.mxu0 %v403
    %455 = vmatpush1.msra.mxu0 %v402
    %456 = vmatprep.subr.mxu0 %v407
    %457 = vmatpush1.msra.mxu0 %v406
    %458 = vmatprep.subr.mxu0 %v411
    %459 = vmatpush1.msra.mxu0 %v410
    %460 = vmatprep.subr.mxu0 %v415
    %461 = vmatpush1.msra.mxu0 %v414
    %462 = vmatprep.subr.mxu0 %v419
    %463 = vmatpush1.msra.mxu0 %v418
    %464 = vmatprep.subr.mxu0 %v423
    %465 = vmatpush1.msra.mxu0 %v422
    %466 = vmatprep.subr.mxu0 %v427
    %467 = vmatpush1.msra.mxu0 %v426
    %468 = vmatprep.subr.mxu0 %v431
    %469 = vmatpush1.msra.mxu0 %v430
    %470 = vmatprep.subr.mxu0 %v435
    %471 = vmatpush1.msra.mxu0 %v434
    %472 = vmatprep.subr.mxu0 %v439
    %473 = vmatpush1.msra.mxu0 %v438
    %474 = vmatprep.subr.mxu0 0.0
    %475 = vmatpush1.msra.mxu0 0.0
    %476 = vmatprep.subr.mxu0 0.0
    %477 = vmatpush1.msra.mxu0 0.0
    %478 = vmatprep.subr.mxu0 0.0
    %479 = vmatpush1.msra.mxu0 0.0
    %480 = vmatprep.subr.mxu0 0.0
    %481 = vmatpush1.msra.mxu0 0.0
    %482 = vmatprep.subr.mxu0 0.0
    %483 = vmatpush1.msra.mxu0 0.0
    %484 = vmatprep.subr.mxu0 0.0
    %485 = vmatpush1.msra.mxu0 0.0
    %486 = vmatprep.subr.mxu0 0.0
    %487 = vmatpush1.msra.mxu0 0.0
    %488 = vmatprep.subr.mxu0 0.0
    %489 = vmatpush1.msra.mxu0 0.0
    %490 = vmatprep.subr.mxu0 0.0
    %491 = vmatpush1.msra.mxu0 0.0
    %492 = vmatprep.subr.mxu0 0.0
    %493 = vmatpush1.msra.mxu0 0.0
    %494 = vmatprep.subr.mxu0 0.0
    %495 = vmatpush1.msra.mxu0 0.0
    %496 = vmatprep.subr.mxu0 0.0
    %497 = vmatpush1.msra.mxu0 0.0
    %498 = vmatprep.subr.mxu0 0.0
    %499 = vmatpush1.msra.mxu0 0.0
    %500 = vmatprep.subr.mxu0 0.0
    %501 = vmatpush1.msra.mxu0 0.0
    %502 = vmatprep.subr.mxu0 0.0
    %503 = vmatpush1.msra.mxu0 0.0
    %504 = vmatprep.subr.mxu0 0.0
    %505 = vmatpush1.msra.mxu0 0.0
    %506 = vmatprep.mubr.f32.mxu0 0.0
    %507 = vmatmul.mubr.f32.gmra.mrb[0].mxu0 %v145
    %v508 = vpop.f32.mrb[0].mxu0
    %v509 = vadd.f32 %v215, %v508
    %v510 = vpop.f32.mrb[0].mxu0
    %v511 = vadd.f32 %v219, %v510
    %512 = vdwg.mxu0
    %513 = vmatprep.subr.mxu0 %v381
    %514 = vmatpush1.msra.mxu0 %v380
    %515 = vmatprep.subr.mxu0 %v385
    %516 = vmatpush1.msra.mxu0 %v384
    %517 = vmatprep.subr.mxu0 %v389
    %518 = vmatpush1.msra.mxu0 %v388
    %519 = vmatprep.subr.mxu0 %v393
    %520 = vmatpush1.msra.mxu0 %v392
    %521 = vmatprep.subr.mxu0 %v397
    %522 = vmatpush1.msra.mxu0 %v396
    %523 = vmatprep.subr.mxu0 %v401
    %524 = vmatpush1.msra.mxu0 %v400
    %525 = vmatprep.subr.mxu0 %v405
    %526 = vmatpush1.msra.mxu0 %v404
    %527 = vmatprep.subr.mxu0 %v409
    %528 = vmatpush1.msra.mxu0 %v408
    %529 = vmatprep.subr.mxu0 %v413
    %530 = vmatpush1.msra.mxu0 %v412
    %531 = vmatprep.subr.mxu0 %v417
    %532 = vmatpush1.msra.mxu0 %v416
    %533 = vmatprep.subr.mxu0 %v421
    %534 = vmatpush1.msra.mxu0 %v420
    %535 = vmatprep.subr.mxu0 %v425
    %536 = vmatpush1.msra.mxu0 %v424
    %537 = vmatprep.subr.mxu0 %v429
    %538 = vmatpush1.msra.mxu0 %v428
    %539 = vmatprep.subr.mxu0 %v433
    %540 = vmatpush1.msra.mxu0 %v432
    %541 = vmatprep.subr.mxu0 %v437
    %542 = vmatpush1.msra.mxu0 %v436
    %543 = vmatprep.subr.mxu0 %v441
    %544 = vmatpush1.msra.mxu0 %v440
    %545 = vmatprep.subr.mxu0 0.0
    %546 = vmatpush1.msra.mxu0 0.0
    %547 = vmatprep.subr.mxu0 0.0
    %548 = vmatpush1.msra.mxu0 0.0
    %549 = vmatprep.subr.mxu0 0.0
    %550 = vmatpush1.msra.mxu0 0.0
    %551 = vmatprep.subr.mxu0 0.0
    %552 = vmatpush1.msra.mxu0 0.0
    %553 = vmatprep.subr.mxu0 0.0
    %554 = vmatpush1.msra.mxu0 0.0
    %555 = vmatprep.subr.mxu0 0.0
    %556 = vmatpush1.msra.mxu0 0.0
    %557 = vmatprep.subr.mxu0 0.0
    %558 = vmatpush1.msra.mxu0 0.0
    %559 = vmatprep.subr.mxu0 0.0
    %560 = vmatpush1.msra.mxu0 0.0
    %561 = vmatprep.subr.mxu0 0.0
    %562 = vmatpush1.msra.mxu0 0.0
    %563 = vmatprep.subr.mxu0 0.0
    %564 = vmatpush1.msra.mxu0 0.0
    %565 = vmatprep.subr.mxu0 0.0
    %566 = vmatpush1.msra.mxu0 0.0
    %567 = vmatprep.subr.mxu0 0.0
    %568 = vmatpush1.msra.mxu0 0.0
    %569 = vmatprep.subr.mxu0 0.0
    %570 = vmatpush1.msra.mxu0 0.0
    %571 = vmatprep.subr.mxu0 0.0
    %572 = vmatpush1.msra.mxu0 0.0
    %573 = vmatprep.subr.mxu0 0.0
    %574 = vmatpush1.msra.mxu0 0.0
    %575 = vmatprep.subr.mxu0 0.0
    %576 = vmatpush1.msra.mxu0 0.0
    %577 = vmatprep.mubr.f32.mxu0 0.0
    %578 = vmatmul.mubr.f32.gmra.mrb[0].mxu0 %v145
    %v579 = vpop.f32.mrb[0].mxu0
    %v580 = vadd.f32 %v223, %v579
    %v581 = vpop.f32.mrb[0].mxu0
    %v582 = vadd.f32 %v227, %v581
    %583 = vdwg.mxu0
    %v584 = vmax.f32 %v509, 0.0
    %v585 = vmax.f32 %v511, 0.0
    %v586 = vmax.f32 %v580, 0.0
    %v587 = vmax.f32 %v582, 0.0
    %v588 = vmax.f32 %v374, %v584
    %v589 = vmax.f32 %v375, %v585
    %v590 = vmax.f32 %v376, %v586
    %v591 = vmax.f32 %v377, %v587
    %v592 = vld [vmem:[#allocation5 + $0x40] sm:$0xff]
    %v593 = vld [vmem:[#allocation5 + $0x48] sm:$0xff]
    %v594 = vld [vmem:[#allocation5 + $0x50] sm:$0xff]
    %v595 = vld [vmem:[#allocation5 + $0x58] sm:$0xff]
    %v596 = vld [vmem:[#allocation5 + $0x160] sm:$0xff]
    %v597 = vld [vmem:[#allocation5 + $0x168] sm:$0xff]
    %v598 = vld [vmem:[#allocation5 + $0x170] sm:$0xff]
    %v599 = vld [vmem:[#allocation5 + $0x178] sm:$0xff]
    %v600 = vld [vmem:[#allocation5 + $0x280] sm:$0xff]
    %v601 = vld [vmem:[#allocation5 + $0x288] sm:$0xff]
    %v602 = vld [vmem:[#allocation5 + $0x290] sm:$0xff]
    %v603 = vld [vmem:[#allocation5 + $0x298] sm:$0xff]
    %v604 = vld [vmem:[#allocation5 + $0x3a0] sm:$0xff]
    %v605 = vld [vmem:[#allocation5 + $0x3a8] sm:$0xff]
    %v606 = vld [vmem:[#allocation5 + $0x3b0] sm:$0xff]
    %v607 = vld [vmem:[#allocation5 + $0x3b8] sm:$0xff]
    %v608 = vld [vmem:[#allocation5 + $0x4c0] sm:$0xff]
    %v609 = vld [vmem:[#allocation5 + $0x4c8] sm:$0xff]
    %v610 = vld [vmem:[#allocation5 + $0x4d0] sm:$0xff]
    %v611 = vld [vmem:[#allocation5 + $0x4d8] sm:$0xff]
    %v612 = vld [vmem:[#allocation5 + $0x5e0] sm:$0xff]
    %v613 = vld [vmem:[#allocation5 + $0x5e8] sm:$0xff]
    %v614 = vld [vmem:[#allocation5 + $0x5f0] sm:$0xff]
    %v615 = vld [vmem:[#allocation5 + $0x5f8] sm:$0xff]
    %v616 = vld [vmem:[#allocation5 + $0x700] sm:$0xff]
    %v617 = vld [vmem:[#allocation5 + $0x708] sm:$0xff]
    %v618 = vld [vmem:[#allocation5 + $0x710] sm:$0xff]
    %v619 = vld [vmem:[#allocation5 + $0x718] sm:$0xff]
    %v620 = vld [vmem:[#allocation5 + $0x820] sm:$0xff]
    %v621 = vld [vmem:[#allocation5 + $0x828] sm:$0xff]
    %v622 = vld [vmem:[#allocation5 + $0x830] sm:$0xff]
    %v623 = vld [vmem:[#allocation5 + $0x838] sm:$0xff]
    %v624 = vld [vmem:[#allocation5 + $0x940] sm:$0xff]
    %v625 = vld [vmem:[#allocation5 + $0x948] sm:$0xff]
    %v626 = vld [vmem:[#allocation5 + $0x950] sm:$0xff]
    %v627 = vld [vmem:[#allocation5 + $0x958] sm:$0xff]
    %v628 = vld [vmem:[#allocation5 + $0xa60] sm:$0xff]
    %v629 = vld [vmem:[#allocation5 + $0xa68] sm:$0xff]
    %v630 = vld [vmem:[#allocation5 + $0xa70] sm:$0xff]
    %v631 = vld [vmem:[#allocation5 + $0xa78] sm:$0xff]
    %v632 = vld [vmem:[#allocation5 + $0xb80] sm:$0xff]
    %v633 = vld [vmem:[#allocation5 + $0xb88] sm:$0xff]
    %v634 = vld [vmem:[#allocation5 + $0xb90] sm:$0xff]
    %v635 = vld [vmem:[#allocation5 + $0xb98] sm:$0xff]
    %v636 = vld [vmem:[#allocation5 + $0xca0] sm:$0xff]
    %v637 = vld [vmem:[#allocation5 + $0xca8] sm:$0xff]
    %v638 = vld [vmem:[#allocation5 + $0xcb0] sm:$0xff]
    %v639 = vld [vmem:[#allocation5 + $0xcb8] sm:$0xff]
    %v640 = vld [vmem:[#allocation5 + $0xdc0] sm:$0xff]
    %v641 = vld [vmem:[#allocation5 + $0xdc8] sm:$0xff]
    %v642 = vld [vmem:[#allocation5 + $0xdd0] sm:$0xff]
    %v643 = vld [vmem:[#allocation5 + $0xdd8] sm:$0xff]
    %v644 = vld [vmem:[#allocation5 + $0xee0] sm:$0xff]
    %v645 = vld [vmem:[#allocation5 + $0xee8] sm:$0xff]
    %v646 = vld [vmem:[#allocation5 + $0xef0] sm:$0xff]
    %v647 = vld [vmem:[#allocation5 + $0xef8] sm:$0xff]
    %v648 = vld [vmem:[#allocation5 + $0x1000] sm:$0xff]
    %v649 = vld [vmem:[#allocation5 + $0x1008] sm:$0xff]
    %v650 = vld [vmem:[#allocation5 + $0x1010] sm:$0xff]
    %v651 = vld [vmem:[#allocation5 + $0x1018] sm:$0xff]
    %v652 = vld [vmem:[#allocation5 + $0x1120] sm:$0xff]
    %v653 = vld [vmem:[#allocation5 + $0x1128] sm:$0xff]
    %v654 = vld [vmem:[#allocation5 + $0x1130] sm:$0xff]
    %v655 = vld [vmem:[#allocation5 + $0x1138] sm:$0xff]
    %656 = vmatprep.subr.mxu0 %v593
    %657 = vmatpush1.msra.mxu0 %v592
    %658 = vmatprep.subr.mxu0 %v597
    %659 = vmatpush1.msra.mxu0 %v596
    %660 = vmatprep.subr.mxu0 %v601
    %661 = vmatpush1.msra.mxu0 %v600
    %662 = vmatprep.subr.mxu0 %v605
    %663 = vmatpush1.msra.mxu0 %v604
    %664 = vmatprep.subr.mxu0 %v609
    %665 = vmatpush1.msra.mxu0 %v608
    %666 = vmatprep.subr.mxu0 %v613
    %667 = vmatpush1.msra.mxu0 %v612
    %668 = vmatprep.subr.mxu0 %v617
    %669 = vmatpush1.msra.mxu0 %v616
    %670 = vmatprep.subr.mxu0 %v621
    %671 = vmatpush1.msra.mxu0 %v620
    %672 = vmatprep.subr.mxu0 %v625
    %673 = vmatpush1.msra.mxu0 %v624
    %674 = vmatprep.subr.mxu0 %v629
    %675 = vmatpush1.msra.mxu0 %v628
    %676 = vmatprep.subr.mxu0 %v633
    %677 = vmatpush1.msra.mxu0 %v632
    %678 = vmatprep.subr.mxu0 %v637
    %679 = vmatpush1.msra.mxu0 %v636
    %680 = vmatprep.subr.mxu0 %v641
    %681 = vmatpush1.msra.mxu0 %v640
    %682 = vmatprep.subr.mxu0 %v645
    %683 = vmatpush1.msra.mxu0 %v644
    %684 = vmatprep.subr.mxu0 %v649
    %685 = vmatpush1.msra.mxu0 %v648
    %686 = vmatprep.subr.mxu0 %v653
    %687 = vmatpush1.msra.mxu0 %v652
    %688 = vmatprep.subr.mxu0 0.0
    %689 = vmatpush1.msra.mxu0 0.0
    %690 = vmatprep.subr.mxu0 0.0
    %691 = vmatpush1.msra.mxu0 0.0
    %692 = vmatprep.subr.mxu0 0.0
    %693 = vmatpush1.msra.mxu0 0.0
    %694 = vmatprep.subr.mxu0 0.0
    %695 = vmatpush1.msra.mxu0 0.0
    %696 = vmatprep.subr.mxu0 0.0
    %697 = vmatpush1.msra.mxu0 0.0
    %698 = vmatprep.subr.mxu0 0.0
    %699 = vmatpush1.msra.mxu0 0.0
    %700 = vmatprep.subr.mxu0 0.0
    %701 = vmatpush1.msra.mxu0 0.0
    %702 = vmatprep.subr.mxu0 0.0
    %703 = vmatpush1.msra.mxu0 0.0
    %704 = vmatprep.subr.mxu0 0.0
    %705 = vmatpush1.msra.mxu0 0.0
    %706 = vmatprep.subr.mxu0 0.0
    %707 = vmatpush1.msra.mxu0 0.0
    %708 = vmatprep.subr.mxu0 0.0
    %709 = vmatpush1.msra.mxu0 0.0
    %710 = vmatprep.subr.mxu0 0.0
    %711 = vmatpush1.msra.mxu0 0.0
    %712 = vmatprep.subr.mxu0 0.0
    %713 = vmatpush1.msra.mxu0 0.0
    %714 = vmatprep.subr.mxu0 0.0
    %715 = vmatpush1.msra.mxu0 0.0
    %716 = vmatprep.subr.mxu0 0.0
    %717 = vmatpush1.msra.mxu0 0.0
    %718 = vmatprep.subr.mxu0 0.0
    %719 = vmatpush1.msra.mxu0 0.0
    %720 = vmatprep.mubr.f32.mxu0 0.0
    %721 = vmatmul.mubr.f32.gmra.mrb[0].mxu0 %v145
    %v722 = vpop.f32.mrb[0].mxu0
    %v723 = vadd.f32 %v215, %v722
    %v724 = vpop.f32.mrb[0].mxu0
    %v725 = vadd.f32 %v219, %v724
    %726 = vdwg.mxu0
    %727 = vmatprep.subr.mxu0 %v595
    %728 = vmatpush1.msra.mxu0 %v594
    %729 = vmatprep.subr.mxu0 %v599
    %730 = vmatpush1.msra.mxu0 %v598
    %731 = vmatprep.subr.mxu0 %v603
    %732 = vmatpush1.msra.mxu0 %v602
    %733 = vmatprep.subr.mxu0 %v607
    %734 = vmatpush1.msra.mxu0 %v606
    %735 = vmatprep.subr.mxu0 %v611
    %736 = vmatpush1.msra.mxu0 %v610
    %737 = vmatprep.subr.mxu0 %v615
    %738 = vmatpush1.msra.mxu0 %v614
    %739 = vmatprep.subr.mxu0 %v619
    %740 = vmatpush1.msra.mxu0 %v618
    %741 = vmatprep.subr.mxu0 %v623
    %742 = vmatpush1.msra.mxu0 %v622
    %743 = vmatprep.subr.mxu0 %v627
    %744 = vmatpush1.msra.mxu0 %v626
    %745 = vmatprep.subr.mxu0 %v631
    %746 = vmatpush1.msra.mxu0 %v630
    %747 = vmatprep.subr.mxu0 %v635
    %748 = vmatpush1.msra.mxu0 %v634
    %749 = vmatprep.subr.mxu0 %v639
    %750 = vmatpush1.msra.mxu0 %v638
    %751 = vmatprep.subr.mxu0 %v643
    %752 = vmatpush1.msra.mxu0 %v642
    %753 = vmatprep.subr.mxu0 %v647
    %754 = vmatpush1.msra.mxu0 %v646
    %755 = vmatprep.subr.mxu0 %v651
    %756 = vmatpush1.msra.mxu0 %v650
    %757 = vmatprep.subr.mxu0 %v655
    %758 = vmatpush1.msra.mxu0 %v654
    %759 = vmatprep.subr.mxu0 0.0
    %760 = vmatpush1.msra.mxu0 0.0
    %761 = vmatprep.subr.mxu0 0.0
    %762 = vmatpush1.msra.mxu0 0.0
    %763 = vmatprep.subr.mxu0 0.0
    %764 = vmatpush1.msra.mxu0 0.0
    %765 = vmatprep.subr.mxu0 0.0
    %766 = vmatpush1.msra.mxu0 0.0
    %767 = vmatprep.subr.mxu0 0.0
    %768 = vmatpush1.msra.mxu0 0.0
    %769 = vmatprep.subr.mxu0 0.0
    %770 = vmatpush1.msra.mxu0 0.0
    %771 = vmatprep.subr.mxu0 0.0
    %772 = vmatpush1.msra.mxu0 0.0
    %773 = vmatprep.subr.mxu0 0.0
    %774 = vmatpush1.msra.mxu0 0.0
    %775 = vmatprep.subr.mxu0 0.0
    %776 = vmatpush1.msra.mxu0 0.0
    %777 = vmatprep.subr.mxu0 0.0
    %778 = vmatpush1.msra.mxu0 0.0
    %779 = vmatprep.subr.mxu0 0.0
    %780 = vmatpush1.msra.mxu0 0.0
    %781 = vmatprep.subr.mxu0 0.0
    %782 = vmatpush1.msra.mxu0 0.0
    %783 = vmatprep.subr.mxu0 0.0
    %784 = vmatpush1.msra.mxu0 0.0
    %785 = vmatprep.subr.mxu0 0.0
    %786 = vmatpush1.msra.mxu0 0.0
    %787 = vmatprep.subr.mxu0 0.0
    %788 = vmatpush1.msra.mxu0 0.0
    %789 = vmatprep.subr.mxu0 0.0
    %790 = vmatpush1.msra.mxu0 0.0
    %791 = vmatprep.mubr.f32.mxu0 0.0
    %792 = vmatmul.mubr.f32.gmra.mrb[0].mxu0 %v145
    %v793 = vpop.f32.mrb[0].mxu0
    %v794 = vadd.f32 %v223, %v793
    %v795 = vpop.f32.mrb[0].mxu0
    %v796 = vadd.f32 %v227, %v795
    %797 = vdwg.mxu0
    %v798 = vmax.f32 %v723, 0.0
    %v799 = vmax.f32 %v725, 0.0
    %v800 = vmax.f32 %v794, 0.0
    %v801 = vmax.f32 %v796, 0.0
    %v802 = vmax.f32 %v588, %v798
    %v803 = vmax.f32 %v589, %v799
    %v804 = vmax.f32 %v590, %v800
    %v805 = vmax.f32 %v591, %v801
    %v806 = vld [vmem:[#allocation5 + $0x60] sm:$0xff]
    %v807 = vld [vmem:[#allocation5 + $0x68] sm:$0xff]
    %v808 = vld [vmem:[#allocation5 + $0x70] sm:$0xff]
    %v809 = vld [vmem:[#allocation5 + $0x78] sm:$0xff]
    %v810 = vld [vmem:[#allocation5 + $0x180] sm:$0xff]
    %v811 = vld [vmem:[#allocation5 + $0x188] sm:$0xff]
    %v812 = vld [vmem:[#allocation5 + $0x190] sm:$0xff]
    %v813 = vld [vmem:[#allocation5 + $0x198] sm:$0xff]
    %v814 = vld [vmem:[#allocation5 + $0x2a0] sm:$0xff]
    %v815 = vld [vmem:[#allocation5 + $0x2a8] sm:$0xff]
    %v816 = vld [vmem:[#allocation5 + $0x2b0] sm:$0xff]
    %v817 = vld [vmem:[#allocation5 + $0x2b8] sm:$0xff]
    %v818 = vld [vmem:[#allocation5 + $0x3c0] sm:$0xff]
    %v819 = vld [vmem:[#allocation5 + $0x3c8] sm:$0xff]
    %v820 = vld [vmem:[#allocation5 + $0x3d0] sm:$0xff]
    %v821 = vld [vmem:[#allocation5 + $0x3d8] sm:$0xff]
    %v822 = vld [vmem:[#allocation5 + $0x4e0] sm:$0xff]
    %v823 = vld [vmem:[#allocation5 + $0x4e8] sm:$0xff]
    %v824 = vld [vmem:[#allocation5 + $0x4f0] sm:$0xff]
    %v825 = vld [vmem:[#allocation5 + $0x4f8] sm:$0xff]
    %v826 = vld [vmem:[#allocation5 + $0x600] sm:$0xff]
    %v827 = vld [vmem:[#allocation5 + $0x608] sm:$0xff]
    %v828 = vld [vmem:[#allocation5 + $0x610] sm:$0xff]
    %v829 = vld [vmem:[#allocation5 + $0x618] sm:$0xff]
    %v830 = vld [vmem:[#allocation5 + $0x720] sm:$0xff]
    %v831 = vld [vmem:[#allocation5 + $0x728] sm:$0xff]
    %v832 = vld [vmem:[#allocation5 + $0x730] sm:$0xff]
    %v833 = vld [vmem:[#allocation5 + $0x738] sm:$0xff]
    %v834 = vld [vmem:[#allocation5 + $0x840] sm:$0xff]
    %v835 = vld [vmem:[#allocation5 + $0x848] sm:$0xff]
    %v836 = vld [vmem:[#allocation5 + $0x850] sm:$0xff]
    %v837 = vld [vmem:[#allocation5 + $0x858] sm:$0xff]
    %v838 = vld [vmem:[#allocation5 + $0x960] sm:$0xff]
    %v839 = vld [vmem:[#allocation5 + $0x968] sm:$0xff]
    %v840 = vld [vmem:[#allocation5 + $0x970] sm:$0xff]
    %v841 = vld [vmem:[#allocation5 + $0x978] sm:$0xff]
    %v842 = vld [vmem:[#allocation5 + $0xa80] sm:$0xff]
    %v843 = vld [vmem:[#allocation5 + $0xa88] sm:$0xff]
    %v844 = vld [vmem:[#allocation5 + $0xa90] sm:$0xff]
    %v845 = vld [vmem:[#allocation5 + $0xa98] sm:$0xff]
    %v846 = vld [vmem:[#allocation5 + $0xba0] sm:$0xff]
    %v847 = vld [vmem:[#allocation5 + $0xba8] sm:$0xff]
    %v848 = vld [vmem:[#allocation5 + $0xbb0] sm:$0xff]
    %v849 = vld [vmem:[#allocation5 + $0xbb8] sm:$0xff]
    %v850 = vld [vmem:[#allocation5 + $0xcc0] sm:$0xff]
    %v851 = vld [vmem:[#allocation5 + $0xcc8] sm:$0xff]
    %v852 = vld [vmem:[#allocation5 + $0xcd0] sm:$0xff]
    %v853 = vld [vmem:[#allocation5 + $0xcd8] sm:$0xff]
    %v854 = vld [vmem:[#allocation5 + $0xde0] sm:$0xff]
    %v855 = vld [vmem:[#allocation5 + $0xde8] sm:$0xff]
    %v856 = vld [vmem:[#allocation5 + $0xdf0] sm:$0xff]
    %v857 = vld [vmem:[#allocation5 + $0xdf8] sm:$0xff]
    %v858 = vld [vmem:[#allocation5 + $0xf00] sm:$0xff]
    %v859 = vld [vmem:[#allocation5 + $0xf08] sm:$0xff]
    %v860 = vld [vmem:[#allocation5 + $0xf10] sm:$0xff]
    %v861 = vld [vmem:[#allocation5 + $0xf18] sm:$0xff]
    %v862 = vld [vmem:[#allocation5 + $0x1020] sm:$0xff]
    %v863 = vld [vmem:[#allocation5 + $0x1028] sm:$0xff]
    %v864 = vld [vmem:[#allocation5 + $0x1030] sm:$0xff]
    %v865 = vld [vmem:[#allocation5 + $0x1038] sm:$0xff]
    %v866 = vld [vmem:[#allocation5 + $0x1140] sm:$0xff]
    %v867 = vld [vmem:[#allocation5 + $0x1148] sm:$0xff]
    %v868 = vld [vmem:[#allocation5 + $0x1150] sm:$0xff]
    %v869 = vld [vmem:[#allocation5 + $0x1158] sm:$0xff]
    %870 = vmatprep.subr.mxu0 %v807
    %871 = vmatpush1.msra.mxu0 %v806
    %872 = vmatprep.subr.mxu0 %v811
    %873 = vmatpush1.msra.mxu0 %v810
    %874 = vmatprep.subr.mxu0 %v815
    %875 = vmatpush1.msra.mxu0 %v814
    %876 = vmatprep.subr.mxu0 %v819
    %877 = vmatpush1.msra.mxu0 %v818
    %878 = vmatprep.subr.mxu0 %v823
    %879 = vmatpush1.msra.mxu0 %v822
    %880 = vmatprep.subr.mxu0 %v827
    %881 = vmatpush1.msra.mxu0 %v826
    %882 = vmatprep.subr.mxu0 %v831
    %883 = vmatpush1.msra.mxu0 %v830
    %884 = vmatprep.subr.mxu0 %v835
    %885 = vmatpush1.msra.mxu0 %v834
    %886 = vmatprep.subr.mxu0 %v839
    %887 = vmatpush1.msra.mxu0 %v838
    %888 = vmatprep.subr.mxu0 %v843
    %889 = vmatpush1.msra.mxu0 %v842
    %890 = vmatprep.subr.mxu0 %v847
    %891 = vmatpush1.msra.mxu0 %v846
    %892 = vmatprep.subr.mxu0 %v851
    %893 = vmatpush1.msra.mxu0 %v850
    %894 = vmatprep.subr.mxu0 %v855
    %895 = vmatpush1.msra.mxu0 %v854
    %896 = vmatprep.subr.mxu0 %v859
    %897 = vmatpush1.msra.mxu0 %v858
    %898 = vmatprep.subr.mxu0 %v863
    %899 = vmatpush1.msra.mxu0 %v862
    %900 = vmatprep.subr.mxu0 %v867
    %901 = vmatpush1.msra.mxu0 %v866
    %902 = vmatprep.subr.mxu0 0.0
    %903 = vmatpush1.msra.mxu0 0.0
    %904 = vmatprep.subr.mxu0 0.0
    %905 = vmatpush1.msra.mxu0 0.0
    %906 = vmatprep.subr.mxu0 0.0
    %907 = vmatpush1.msra.mxu0 0.0
    %908 = vmatprep.subr.mxu0 0.0
    %909 = vmatpush1.msra.mxu0 0.0
    %910 = vmatprep.subr.mxu0 0.0
    %911 = vmatpush1.msra.mxu0 0.0
    %912 = vmatprep.subr.mxu0 0.0
    %913 = vmatpush1.msra.mxu0 0.0
    %914 = vmatprep.subr.mxu0 0.0
    %915 = vmatpush1.msra.mxu0 0.0
    %916 = vmatprep.subr.mxu0 0.0
    %917 = vmatpush1.msra.mxu0 0.0
    %918 = vmatprep.subr.mxu0 0.0
    %919 = vmatpush1.msra.mxu0 0.0
    %920 = vmatprep.subr.mxu0 0.0
    %921 = vmatpush1.msra.mxu0 0.0
    %922 = vmatprep.subr.mxu0 0.0
    %923 = vmatpush1.msra.mxu0 0.0
    %924 = vmatprep.subr.mxu0 0.0
    %925 = vmatpush1.msra.mxu0 0.0
    %926 = vmatprep.subr.mxu0 0.0
    %927 = vmatpush1.msra.mxu0 0.0
    %928 = vmatprep.subr.mxu0 0.0
    %929 = vmatpush1.msra.mxu0 0.0
    %930 = vmatprep.subr.mxu0 0.0
    %931 = vmatpush1.msra.mxu0 0.0
    %932 = vmatprep.subr.mxu0 0.0
    %933 = vmatpush1.msra.mxu0 0.0
    %934 = vmatprep.mubr.f32.mxu0 0.0
    %935 = vmatmul.mubr.f32.gmra.mrb[0].mxu0 %v145
    %v936 = vpop.f32.mrb[0].mxu0
    %v937 = vadd.f32 %v215, %v936
    %v938 = vpop.f32.mrb[0].mxu0
    %v939 = vadd.f32 %v219, %v938
    %940 = vdwg.mxu0
    %941 = vmatprep.subr.mxu0 %v809
    %942 = vmatpush1.msra.mxu0 %v808
    %943 = vmatprep.subr.mxu0 %v813
    %944 = vmatpush1.msra.mxu0 %v812
    %945 = vmatprep.subr.mxu0 %v817
    %946 = vmatpush1.msra.mxu0 %v816
    %947 = vmatprep.subr.mxu0 %v821
    %948 = vmatpush1.msra.mxu0 %v820
    %949 = vmatprep.subr.mxu0 %v825
    %950 = vmatpush1.msra.mxu0 %v824
    %951 = vmatprep.subr.mxu0 %v829
    %952 = vmatpush1.msra.mxu0 %v828
    %953 = vmatprep.subr.mxu0 %v833
    %954 = vmatpush1.msra.mxu0 %v832
    %955 = vmatprep.subr.mxu0 %v837
    %956 = vmatpush1.msra.mxu0 %v836
    %957 = vmatprep.subr.mxu0 %v841
    %958 = vmatpush1.msra.mxu0 %v840
    %959 = vmatprep.subr.mxu0 %v845
    %960 = vmatpush1.msra.mxu0 %v844
    %961 = vmatprep.subr.mxu0 %v849
    %962 = vmatpush1.msra.mxu0 %v848
    %963 = vmatprep.subr.mxu0 %v853
    %964 = vmatpush1.msra.mxu0 %v852
    %965 = vmatprep.subr.mxu0 %v857
    %966 = vmatpush1.msra.mxu0 %v856
    %967 = vmatprep.subr.mxu0 %v861
    %968 = vmatpush1.msra.mxu0 %v860
    %969 = vmatprep.subr.mxu0 %v865
    %970 = vmatpush1.msra.mxu0 %v864
    %971 = vmatprep.subr.mxu0 %v869
    %972 = vmatpush1.msra.mxu0 %v868
    %973 = vmatprep.subr.mxu0 0.0
    %974 = vmatpush1.msra.mxu0 0.0
    %975 = vmatprep.subr.mxu0 0.0
    %976 = vmatpush1.msra.mxu0 0.0
    %977 = vmatprep.subr.mxu0 0.0
    %978 = vmatpush1.msra.mxu0 0.0
    %979 = vmatprep.subr.mxu0 0.0
    %980 = vmatpush1.msra.mxu0 0.0
    %981 = vmatprep.subr.mxu0 0.0
    %982 = vmatpush1.msra.mxu0 0.0
    %983 = vmatprep.subr.mxu0 0.0
    %984 = vmatpush1.msra.mxu0 0.0
    %985 = vmatprep.subr.mxu0 0.0
    %986 = vmatpush1.msra.mxu0 0.0
    %987 = vmatprep.subr.mxu0 0.0
    %988 = vmatpush1.msra.mxu0 0.0
    %989 = vmatprep.subr.mxu0 0.0
    %990 = vmatpush1.msra.mxu0 0.0
    %991 = vmatprep.subr.mxu0 0.0
    %992 = vmatpush1.msra.mxu0 0.0
    %993 = vmatprep.subr.mxu0 0.0
    %994 = vmatpush1.msra.mxu0 0.0
    %995 = vmatprep.subr.mxu0 0.0
    %996 = vmatpush1.msra.mxu0 0.0
    %997 = vmatprep.subr.mxu0 0.0
    %998 = vmatpush1.msra.mxu0 0.0
    %999 = vmatprep.subr.mxu0 0.0
    %1000 = vmatpush1.msra.mxu0 0.0
    %1001 = vmatprep.subr.mxu0 0.0
    %1002 = vmatpush1.msra.mxu0 0.0
    %1003 = vmatprep.subr.mxu0 0.0
    %1004 = vmatpush1.msra.mxu0 0.0
    %1005 = vmatprep.mubr.f32.mxu0 0.0
    %1006 = vmatmul.mubr.f32.gmra.mrb[0].mxu0 %v145
    %v1007 = vpop.f32.mrb[0].mxu0
    %v1008 = vadd.f32 %v223, %v1007
    %v1009 = vpop.f32.mrb[0].mxu0
    %v1010 = vadd.f32 %v227, %v1009
    %1011 = vdwg.mxu0
    %v1012 = vmax.f32 %v937, 0.0
    %v1013 = vmax.f32 %v939, 0.0
    %v1014 = vmax.f32 %v1008, 0.0
    %v1015 = vmax.f32 %v1010, 0.0
    %v1016 = vmax.f32 %v802, %v1012
    %v1017 = vmax.f32 %v803, %v1013
    %v1018 = vmax.f32 %v804, %v1014
    %v1019 = vmax.f32 %v805, %v1015
    %v1020 = vld [vmem:[#allocation5 + $0x80] sm:$0xff]
    %v1021 = vld [vmem:[#allocation5 + $0x88] sm:$0xff]
    %v1022 = vld [vmem:[#allocation5 + $0x90] sm:$0xff]
    %v1023 = vld [vmem:[#allocation5 + $0x98] sm:$0xff]
    %v1024 = vld [vmem:[#allocation5 + $0x1a0] sm:$0xff]
    %v1025 = vld [vmem:[#allocation5 + $0x1a8] sm:$0xff]
    %v1026 = vld [vmem:[#allocation5 + $0x1b0] sm:$0xff]
    %v1027 = vld [vmem:[#allocation5 + $0x1b8] sm:$0xff]
    %v1028 = vld [vmem:[#allocation5 + $0x2c0] sm:$0xff]
    %v1029 = vld [vmem:[#allocation5 + $0x2c8] sm:$0xff]
    %v1030 = vld [vmem:[#allocation5 + $0x2d0] sm:$0xff]
    %v1031 = vld [vmem:[#allocation5 + $0x2d8] sm:$0xff]
    %v1032 = vld [vmem:[#allocation5 + $0x3e0] sm:$0xff]
    %v1033 = vld [vmem:[#allocation5 + $0x3e8] sm:$0xff]
    %v1034 = vld [vmem:[#allocation5 + $0x3f0] sm:$0xff]
    %v1035 = vld [vmem:[#allocation5 + $0x3f8] sm:$0xff]
    %v1036 = vld [vmem:[#allocation5 + $0x500] sm:$0xff]
    %v1037 = vld [vmem:[#allocation5 + $0x508] sm:$0xff]
    %v1038 = vld [vmem:[#allocation5 + $0x510] sm:$0xff]
    %v1039 = vld [vmem:[#allocation5 + $0x518] sm:$0xff]
    %v1040 = vld [vmem:[#allocation5 + $0x620] sm:$0xff]
    %v1041 = vld [vmem:[#allocation5 + $0x628] sm:$0xff]
    %v1042 = vld [vmem:[#allocation5 + $0x630] sm:$0xff]
    %v1043 = vld [vmem:[#allocation5 + $0x638] sm:$0xff]
    %v1044 = vld [vmem:[#allocation5 + $0x740] sm:$0xff]
    %v1045 = vld [vmem:[#allocation5 + $0x748] sm:$0xff]
    %v1046 = vld [vmem:[#allocation5 + $0x750] sm:$0xff]
    %v1047 = vld [vmem:[#allocation5 + $0x758] sm:$0xff]
    %v1048 = vld [vmem:[#allocation5 + $0x860] sm:$0xff]
    %v1049 = vld [vmem:[#allocation5 + $0x868] sm:$0xff]
    %v1050 = vld [vmem:[#allocation5 + $0x870] sm:$0xff]
    %v1051 = vld [vmem:[#allocation5 + $0x878] sm:$0xff]
    %v1052 = vld [vmem:[#allocation5 + $0x980] sm:$0xff]
    %v1053 = vld [vmem:[#allocation5 + $0x988] sm:$0xff]
    %v1054 = vld [vmem:[#allocation5 + $0x990] sm:$0xff]
    %v1055 = vld [vmem:[#allocation5 + $0x998] sm:$0xff]
    %v1056 = vld [vmem:[#allocation5 + $0xaa0] sm:$0xff]
    %v1057 = vld [vmem:[#allocation5 + $0xaa8] sm:$0xff]
    %v1058 = vld [vmem:[#allocation5 + $0xab0] sm:$0xff]
    %v1059 = vld [vmem:[#allocation5 + $0xab8] sm:$0xff]
    %v1060 = vld [vmem:[#allocation5 + $0xbc0] sm:$0xff]
    %v1061 = vld [vmem:[#allocation5 + $0xbc8] sm:$0xff]
    %v1062 = vld [vmem:[#allocation5 + $0xbd0] sm:$0xff]
    %v1063 = vld [vmem:[#allocation5 + $0xbd8] sm:$0xff]
    %v1064 = vld [vmem:[#allocation5 + $0xce0] sm:$0xff]
    %v1065 = vld [vmem:[#allocation5 + $0xce8] sm:$0xff]
    %v1066 = vld [vmem:[#allocation5 + $0xcf0] sm:$0xff]
    %v1067 = vld [vmem:[#allocation5 + $0xcf8] sm:$0xff]
    %v1068 = vld [vmem:[#allocation5 + $0xe00] sm:$0xff]
    %v1069 = vld [vmem:[#allocation5 + $0xe08] sm:$0xff]
    %v1070 = vld [vmem:[#allocation5 + $0xe10] sm:$0xff]
    %v1071 = vld [vmem:[#allocation5 + $0xe18] sm:$0xff]
    %v1072 = vld [vmem:[#allocation5 + $0xf20] sm:$0xff]
    %v1073 = vld [vmem:[#allocation5 + $0xf28] sm:$0xff]
    %v1074 = vld [vmem:[#allocation5 + $0xf30] sm:$0xff]
    %v1075 = vld [vmem:[#allocation5 + $0xf38] sm:$0xff]
    %v1076 = vld [vmem:[#allocation5 + $0x1040] sm:$0xff]
    %v1077 = vld [vmem:[#allocation5 + $0x1048] sm:$0xff]
    %v1078 = vld [vmem:[#allocation5 + $0x1050] sm:$0xff]
    %v1079 = vld [vmem:[#allocation5 + $0x1058] sm:$0xff]
    %v1080 = vld [vmem:[#allocation5 + $0x1160] sm:$0xff]
    %v1081 = vld [vmem:[#allocation5 + $0x1168] sm:$0xff]
    %v1082 = vld [vmem:[#allocation5 + $0x1170] sm:$0xff]
    %v1083 = vld [vmem:[#allocation5 + $0x1178] sm:$0xff]
    %1084 = vmatprep.subr.mxu0 %v1021
    %1085 = vmatpush1.msra.mxu0 %v1020
    %1086 = vmatprep.subr.mxu0 %v1025
    %1087 = vmatpush1.msra.mxu0 %v1024
    %1088 = vmatprep.subr.mxu0 %v1029
    %1089 = vmatpush1.msra.mxu0 %v1028
    %1090 = vmatprep.subr.mxu0 %v1033
    %1091 = vmatpush1.msra.mxu0 %v1032
    %1092 = vmatprep.subr.mxu0 %v1037
    %1093 = vmatpush1.msra.mxu0 %v1036
    %1094 = vmatprep.subr.mxu0 %v1041
    %1095 = vmatpush1.msra.mxu0 %v1040
    %1096 = vmatprep.subr.mxu0 %v1045
    %1097 = vmatpush1.msra.mxu0 %v1044
    %1098 = vmatprep.subr.mxu0 %v1049
    %1099 = vmatpush1.msra.mxu0 %v1048
    %1100 = vmatprep.subr.mxu0 %v1053
    %1101 = vmatpush1.msra.mxu0 %v1052
    %1102 = vmatprep.subr.mxu0 %v1057
    %1103 = vmatpush1.msra.mxu0 %v1056
    %1104 = vmatprep.subr.mxu0 %v1061
    %1105 = vmatpush1.msra.mxu0 %v1060
    %1106 = vmatprep.subr.mxu0 %v1065
    %1107 = vmatpush1.msra.mxu0 %v1064
    %1108 = vmatprep.subr.mxu0 %v1069
    %1109 = vmatpush1.msra.mxu0 %v1068
    %1110 = vmatprep.subr.mxu0 %v1073
    %1111 = vmatpush1.msra.mxu0 %v1072
    %1112 = vmatprep.subr.mxu0 %v1077
    %1113 = vmatpush1.msra.mxu0 %v1076
    %1114 = vmatprep.subr.mxu0 %v1081
    %1115 = vmatpush1.msra.mxu0 %v1080
    %1116 = vmatprep.subr.mxu0 0.0
    %1117 = vmatpush1.msra.mxu0 0.0
    %1118 = vmatprep.subr.mxu0 0.0
    %1119 = vmatpush1.msra.mxu0 0.0
    %1120 = vmatprep.subr.mxu0 0.0
    %1121 = vmatpush1.msra.mxu0 0.0
    %1122 = vmatprep.subr.mxu0 0.0
    %1123 = vmatpush1.msra.mxu0 0.0
    %1124 = vmatprep.subr.mxu0 0.0
    %1125 = vmatpush1.msra.mxu0 0.0
    %1126 = vmatprep.subr.mxu0 0.0
    %1127 = vmatpush1.msra.mxu0 0.0
    %1128 = vmatprep.subr.mxu0 0.0
    %1129 = vmatpush1.msra.mxu0 0.0
    %1130 = vmatprep.subr.mxu0 0.0
    %1131 = vmatpush1.msra.mxu0 0.0
    %1132 = vmatprep.subr.mxu0 0.0
    %1133 = vmatpush1.msra.mxu0 0.0
    %1134 = vmatprep.subr.mxu0 0.0
    %1135 = vmatpush1.msra.mxu0 0.0
    %1136 = vmatprep.subr.mxu0 0.0
    %1137 = vmatpush1.msra.mxu0 0.0
    %1138 = vmatprep.subr.mxu0 0.0
    %1139 = vmatpush1.msra.mxu0 0.0
    %1140 = vmatprep.subr.mxu0 0.0
    %1141 = vmatpush1.msra.mxu0 0.0
    %1142 = vmatprep.subr.mxu0 0.0
    %1143 = vmatpush1.msra.mxu0 0.0
    %1144 = vmatprep.subr.mxu0 0.0
    %1145 = vmatpush1.msra.mxu0 0.0
    %1146 = vmatprep.subr.mxu0 0.0
    %1147 = vmatpush1.msra.mxu0 0.0
    %1148 = vmatprep.mubr.f32.mxu0 0.0
    %1149 = vmatmul.mubr.f32.gmra.mrb[0].mxu0 %v145
    %v1150 = vpop.f32.mrb[0].mxu0
    %v1151 = vadd.f32 %v215, %v1150
    %v1152 = vpop.f32.mrb[0].mxu0
    %v1153 = vadd.f32 %v219, %v1152
    %1154 = vdwg.mxu0
    %1155 = vmatprep.subr.mxu0 %v1023
    %1156 = vmatpush1.msra.mxu0 %v1022
    %1157 = vmatprep.subr.mxu0 %v1027
    %1158 = vmatpush1.msra.mxu0 %v1026
    %1159 = vmatprep.subr.mxu0 %v1031
    %1160 = vmatpush1.msra.mxu0 %v1030
    %1161 = vmatprep.subr.mxu0 %v1035
    %1162 = vmatpush1.msra.mxu0 %v1034
    %1163 = vmatprep.subr.mxu0 %v1039
    %1164 = vmatpush1.msra.mxu0 %v1038
    %1165 = vmatprep.subr.mxu0 %v1043
    %1166 = vmatpush1.msra.mxu0 %v1042
    %1167 = vmatprep.subr.mxu0 %v1047
    %1168 = vmatpush1.msra.mxu0 %v1046
    %1169 = vmatprep.subr.mxu0 %v1051
    %1170 = vmatpush1.msra.mxu0 %v1050
    %1171 = vmatprep.subr.mxu0 %v1055
    %1172 = vmatpush1.msra.mxu0 %v1054
    %1173 = vmatprep.subr.mxu0 %v1059
    %1174 = vmatpush1.msra.mxu0 %v1058
    %1175 = vmatprep.subr.mxu0 %v1063
    %1176 = vmatpush1.msra.mxu0 %v1062
    %1177 = vmatprep.subr.mxu0 %v1067
    %1178 = vmatpush1.msra.mxu0 %v1066
    %1179 = vmatprep.subr.mxu0 %v1071
    %1180 = vmatpush1.msra.mxu0 %v1070
    %1181 = vmatprep.subr.mxu0 %v1075
    %1182 = vmatpush1.msra.mxu0 %v1074
    %1183 = vmatprep.subr.mxu0 %v1079
    %1184 = vmatpush1.msra.mxu0 %v1078
    %1185 = vmatprep.subr.mxu0 %v1083
    %1186 = vmatpush1.msra.mxu0 %v1082
    %1187 = vmatprep.subr.mxu0 0.0
    %1188 = vmatpush1.msra.mxu0 0.0
    %1189 = vmatprep.subr.mxu0 0.0
    %1190 = vmatpush1.msra.mxu0 0.0
    %1191 = vmatprep.subr.mxu0 0.0
    %1192 = vmatpush1.msra.mxu0 0.0
    %1193 = vmatprep.subr.mxu0 0.0
    %1194 = vmatpush1.msra.mxu0 0.0
    %1195 = vmatprep.subr.mxu0 0.0
    %1196 = vmatpush1.msra.mxu0 0.0
    %1197 = vmatprep.subr.mxu0 0.0
    %1198 = vmatpush1.msra.mxu0 0.0
    %1199 = vmatprep.subr.mxu0 0.0
    %1200 = vmatpush1.msra.mxu0 0.0
    %1201 = vmatprep.subr.mxu0 0.0
    %1202 = vmatpush1.msra.mxu0 0.0
    %1203 = vmatprep.subr.mxu0 0.0
    %1204 = vmatpush1.msra.mxu0 0.0
    %1205 = vmatprep.subr.mxu0 0.0
    %1206 = vmatpush1.msra.mxu0 0.0
    %1207 = vmatprep.subr.mxu0 0.0
    %1208 = vmatpush1.msra.mxu0 0.0
    %1209 = vmatprep.subr.mxu0 0.0
    %1210 = vmatpush1.msra.mxu0 0.0
    %1211 = vmatprep.subr.mxu0 0.0
    %1212 = vmatpush1.msra.mxu0 0.0
    %1213 = vmatprep.subr.mxu0 0.0
    %1214 = vmatpush1.msra.mxu0 0.0
    %1215 = vmatprep.subr.mxu0 0.0
    %1216 = vmatpush1.msra.mxu0 0.0
    %1217 = vmatprep.subr.mxu0 0.0
    %1218 = vmatpush1.msra.mxu0 0.0
    %1219 = vmatprep.mubr.f32.mxu0 0.0
    %1220 = vmatmul.mubr.f32.gmra.mrb[0].mxu0 %v145
    %v1221 = vpop.f32.mrb[0].mxu0
    %v1222 = vadd.f32 %v223, %v1221
    %v1223 = vpop.f32.mrb[0].mxu0
    %v1224 = vadd.f32 %v227, %v1223
    %1225 = vdwg.mxu0
    %v1226 = vmax.f32 %v1151, 0.0
    %v1227 = vmax.f32 %v1153, 0.0
    %v1228 = vmax.f32 %v1222, 0.0
    %v1229 = vmax.f32 %v1224, 0.0
    %v1230 = vmax.f32 %v1016, %v1226
    %v1231 = vmax.f32 %v1017, %v1227
    %v1232 = vmax.f32 %v1018, %v1228
    %v1233 = vmax.f32 %v1019, %v1229
    %v1234 = vld [vmem:[#allocation5 + $0xa0] sm:$0xff]
    %v1235 = vld [vmem:[#allocation5 + $0xa8] sm:$0xff]
    %v1236 = vld [vmem:[#allocation5 + $0xb0] sm:$0xff]
    %v1237 = vld [vmem:[#allocation5 + $0xb8] sm:$0xff]
    %v1238 = vld [vmem:[#allocation5 + $0x1c0] sm:$0xff]
    %v1239 = vld [vmem:[#allocation5 + $0x1c8] sm:$0xff]
    %v1240 = vld [vmem:[#allocation5 + $0x1d0] sm:$0xff]
    %v1241 = vld [vmem:[#allocation5 + $0x1d8] sm:$0xff]
    %v1242 = vld [vmem:[#allocation5 + $0x2e0] sm:$0xff]
    %v1243 = vld [vmem:[#allocation5 + $0x2e8] sm:$0xff]
    %v1244 = vld [vmem:[#allocation5 + $0x2f0] sm:$0xff]
    %v1245 = vld [vmem:[#allocation5 + $0x2f8] sm:$0xff]
    %v1246 = vld [vmem:[#allocation5 + $0x400] sm:$0xff]
    %v1247 = vld [vmem:[#allocation5 + $0x408] sm:$0xff]
    %v1248 = vld [vmem:[#allocation5 + $0x410] sm:$0xff]
    %v1249 = vld [vmem:[#allocation5 + $0x418] sm:$0xff]
    %v1250 = vld [vmem:[#allocation5 + $0x520] sm:$0xff]
    %v1251 = vld [vmem:[#allocation5 + $0x528] sm:$0xff]
    %v1252 = vld [vmem:[#allocation5 + $0x530] sm:$0xff]
    %v1253 = vld [vmem:[#allocation5 + $0x538] sm:$0xff]
    %v1254 = vld [vmem:[#allocation5 + $0x640] sm:$0xff]
    %v1255 = vld [vmem:[#allocation5 + $0x648] sm:$0xff]
    %v1256 = vld [vmem:[#allocation5 + $0x650] sm:$0xff]
    %v1257 = vld [vmem:[#allocation5 + $0x658] sm:$0xff]
    %v1258 = vld [vmem:[#allocation5 + $0x760] sm:$0xff]
    %v1259 = vld [vmem:[#allocation5 + $0x768] sm:$0xff]
    %v1260 = vld [vmem:[#allocation5 + $0x770] sm:$0xff]
    %v1261 = vld [vmem:[#allocation5 + $0x778] sm:$0xff]
    %v1262 = vld [vmem:[#allocation5 + $0x880] sm:$0xff]
    %v1263 = vld [vmem:[#allocation5 + $0x888] sm:$0xff]
    %v1264 = vld [vmem:[#allocation5 + $0x890] sm:$0xff]
    %v1265 = vld [vmem:[#allocation5 + $0x898] sm:$0xff]
    %v1266 = vld [vmem:[#allocation5 + $0x9a0] sm:$0xff]
    %v1267 = vld [vmem:[#allocation5 + $0x9a8] sm:$0xff]
    %v1268 = vld [vmem:[#allocation5 + $0x9b0] sm:$0xff]
    %v1269 = vld [vmem:[#allocation5 + $0x9b8] sm:$0xff]
    %v1270 = vld [vmem:[#allocation5 + $0xac0] sm:$0xff]
    %v1271 = vld [vmem:[#allocation5 + $0xac8] sm:$0xff]
    %v1272 = vld [vmem:[#allocation5 + $0xad0] sm:$0xff]
    %v1273 = vld [vmem:[#allocation5 + $0xad8] sm:$0xff]
    %v1274 = vld [vmem:[#allocation5 + $0xbe0] sm:$0xff]
    %v1275 = vld [vmem:[#allocation5 + $0xbe8] sm:$0xff]
    %v1276 = vld [vmem:[#allocation5 + $0xbf0] sm:$0xff]
    %v1277 = vld [vmem:[#allocation5 + $0xbf8] sm:$0xff]
    %v1278 = vld [vmem:[#allocation5 + $0xd00] sm:$0xff]
    %v1279 = vld [vmem:[#allocation5 + $0xd08] sm:$0xff]
    %v1280 = vld [vmem:[#allocation5 + $0xd10] sm:$0xff]
    %v1281 = vld [vmem:[#allocation5 + $0xd18] sm:$0xff]
    %v1282 = vld [vmem:[#allocation5 + $0xe20] sm:$0xff]
    %v1283 = vld [vmem:[#allocation5 + $0xe28] sm:$0xff]
    %v1284 = vld [vmem:[#allocation5 + $0xe30] sm:$0xff]
    %v1285 = vld [vmem:[#allocation5 + $0xe38] sm:$0xff]
    %v1286 = vld [vmem:[#allocation5 + $0xf40] sm:$0xff]
    %v1287 = vld [vmem:[#allocation5 + $0xf48] sm:$0xff]
    %v1288 = vld [vmem:[#allocation5 + $0xf50] sm:$0xff]
    %v1289 = vld [vmem:[#allocation5 + $0xf58] sm:$0xff]
    %v1290 = vld [vmem:[#allocation5 + $0x1060] sm:$0xff]
    %v1291 = vld [vmem:[#allocation5 + $0x1068] sm:$0xff]
    %v1292 = vld [vmem:[#allocation5 + $0x1070] sm:$0xff]
    %v1293 = vld [vmem:[#allocation5 + $0x1078] sm:$0xff]
    %v1294 = vld [vmem:[#allocation5 + $0x1180] sm:$0xff]
    %v1295 = vld [vmem:[#allocation5 + $0x1188] sm:$0xff]
    %v1296 = vld [vmem:[#allocation5 + $0x1190] sm:$0xff]
    %v1297 = vld [vmem:[#allocation5 + $0x1198] sm:$0xff]
    %1298 = vmatprep.subr.mxu0 %v1235
    %1299 = vmatpush1.msra.mxu0 %v1234
    %1300 = vmatprep.subr.mxu0 %v1239
    %1301 = vmatpush1.msra.mxu0 %v1238
    %1302 = vmatprep.subr.mxu0 %v1243
    %1303 = vmatpush1.msra.mxu0 %v1242
    %1304 = vmatprep.subr.mxu0 %v1247
    %1305 = vmatpush1.msra.mxu0 %v1246
    %1306 = vmatprep.subr.mxu0 %v1251
    %1307 = vmatpush1.msra.mxu0 %v1250
    %1308 = vmatprep.subr.mxu0 %v1255
    %1309 = vmatpush1.msra.mxu0 %v1254
    %1310 = vmatprep.subr.mxu0 %v1259
    %1311 = vmatpush1.msra.mxu0 %v1258
    %1312 = vmatprep.subr.mxu0 %v1263
    %1313 = vmatpush1.msra.mxu0 %v1262
    %1314 = vmatprep.subr.mxu0 %v1267
    %1315 = vmatpush1.msra.mxu0 %v1266
    %1316 = vmatprep.subr.mxu0 %v1271
    %1317 = vmatpush1.msra.mxu0 %v1270
    %1318 = vmatprep.subr.mxu0 %v1275
    %1319 = vmatpush1.msra.mxu0 %v1274
    %1320 = vmatprep.subr.mxu0 %v1279
    %1321 = vmatpush1.msra.mxu0 %v1278
    %1322 = vmatprep.subr.mxu0 %v1283
    %1323 = vmatpush1.msra.mxu0 %v1282
    %1324 = vmatprep.subr.mxu0 %v1287
    %1325 = vmatpush1.msra.mxu0 %v1286
    %1326 = vmatprep.subr.mxu0 %v1291
    %1327 = vmatpush1.msra.mxu0 %v1290
    %1328 = vmatprep.subr.mxu0 %v1295
    %1329 = vmatpush1.msra.mxu0 %v1294
    %1330 = vmatprep.subr.mxu0 0.0
    %1331 = vmatpush1.msra.mxu0 0.0
    %1332 = vmatprep.subr.mxu0 0.0
    %1333 = vmatpush1.msra.mxu0 0.0
    %1334 = vmatprep.subr.mxu0 0.0
    %1335 = vmatpush1.msra.mxu0 0.0
    %1336 = vmatprep.subr.mxu0 0.0
    %1337 = vmatpush1.msra.mxu0 0.0
    %1338 = vmatprep.subr.mxu0 0.0
    %1339 = vmatpush1.msra.mxu0 0.0
    %1340 = vmatprep.subr.mxu0 0.0
    %1341 = vmatpush1.msra.mxu0 0.0
    %1342 = vmatprep.subr.mxu0 0.0
    %1343 = vmatpush1.msra.mxu0 0.0
    %1344 = vmatprep.subr.mxu0 0.0
    %1345 = vmatpush1.msra.mxu0 0.0
    %1346 = vmatprep.subr.mxu0 0.0
    %1347 = vmatpush1.msra.mxu0 0.0
    %1348 = vmatprep.subr.mxu0 0.0
    %1349 = vmatpush1.msra.mxu0 0.0
    %1350 = vmatprep.subr.mxu0 0.0
    %1351 = vmatpush1.msra.mxu0 0.0
    %1352 = vmatprep.subr.mxu0 0.0
    %1353 = vmatpush1.msra.mxu0 0.0
    %1354 = vmatprep.subr.mxu0 0.0
    %1355 = vmatpush1.msra.mxu0 0.0
    %1356 = vmatprep.subr.mxu0 0.0
    %1357 = vmatpush1.msra.mxu0 0.0
    %1358 = vmatprep.subr.mxu0 0.0
    %1359 = vmatpush1.msra.mxu0 0.0
    %1360 = vmatprep.subr.mxu0 0.0
    %1361 = vmatpush1.msra.mxu0 0.0
    %1362 = vmatprep.mubr.f32.mxu0 0.0
    %1363 = vmatmul.mubr.f32.gmra.mrb[0].mxu0 %v145
    %v1364 = vpop.f32.mrb[0].mxu0
    %v1365 = vadd.f32 %v215, %v1364
    %v1366 = vpop.f32.mrb[0].mxu0
    %v1367 = vadd.f32 %v219, %v1366
    %1368 = vdwg.mxu0
    %1369 = vmatprep.subr.mxu0 %v1237
    %1370 = vmatpush1.msra.mxu0 %v1236
    %1371 = vmatprep.subr.mxu0 %v1241
    %1372 = vmatpush1.msra.mxu0 %v1240
    %1373 = vmatprep.subr.mxu0 %v1245
    %1374 = vmatpush1.msra.mxu0 %v1244
    %1375 = vmatprep.subr.mxu0 %v1249
    %1376 = vmatpush1.msra.mxu0 %v1248
    %1377 = vmatprep.subr.mxu0 %v1253
    %1378 = vmatpush1.msra.mxu0 %v1252
    %1379 = vmatprep.subr.mxu0 %v1257
    %1380 = vmatpush1.msra.mxu0 %v1256
    %1381 = vmatprep.subr.mxu0 %v1261
    %1382 = vmatpush1.msra.mxu0 %v1260
    %1383 = vmatprep.subr.mxu0 %v1265
    %1384 = vmatpush1.msra.mxu0 %v1264
    %1385 = vmatprep.subr.mxu0 %v1269
    %1386 = vmatpush1.msra.mxu0 %v1268
    %1387 = vmatprep.subr.mxu0 %v1273
    %1388 = vmatpush1.msra.mxu0 %v1272
    %1389 = vmatprep.subr.mxu0 %v1277
    %1390 = vmatpush1.msra.mxu0 %v1276
    %1391 = vmatprep.subr.mxu0 %v1281
    %1392 = vmatpush1.msra.mxu0 %v1280
    %1393 = vmatprep.subr.mxu0 %v1285
    %1394 = vmatpush1.msra.mxu0 %v1284
    %1395 = vmatprep.subr.mxu0 %v1289
    %1396 = vmatpush1.msra.mxu0 %v1288
    %1397 = vmatprep.subr.mxu0 %v1293
    %1398 = vmatpush1.msra.mxu0 %v1292
    %1399 = vmatprep.subr.mxu0 %v1297
    %1400 = vmatpush1.msra.mxu0 %v1296
    %1401 = vmatprep.subr.mxu0 0.0
    %1402 = vmatpush1.msra.mxu0 0.0
    %1403 = vmatprep.subr.mxu0 0.0
    %1404 = vmatpush1.msra.mxu0 0.0
    %1405 = vmatprep.subr.mxu0 0.0
    %1406 = vmatpush1.msra.mxu0 0.0
    %1407 = vmatprep.subr.mxu0 0.0
    %1408 = vmatpush1.msra.mxu0 0.0
    %1409 = vmatprep.subr.mxu0 0.0
    %1410 = vmatpush1.msra.mxu0 0.0
    %1411 = vmatprep.subr.mxu0 0.0
    %1412 = vmatpush1.msra.mxu0 0.0
    %1413 = vmatprep.subr.mxu0 0.0
    %1414 = vmatpush1.msra.mxu0 0.0
    %1415 = vmatprep.subr.mxu0 0.0
    %1416 = vmatpush1.msra.mxu0 0.0
    %1417 = vmatprep.subr.mxu0 0.0
    %1418 = vmatpush1.msra.mxu0 0.0
    %1419 = vmatprep.subr.mxu0 0.0
    %1420 = vmatpush1.msra.mxu0 0.0
    %1421 = vmatprep.subr.mxu0 0.0
    %1422 = vmatpush1.msra.mxu0 0.0
    %1423 = vmatprep.subr.mxu0 0.0
    %1424 = vmatpush1.msra.mxu0 0.0
    %1425 = vmatprep.subr.mxu0 0.0
    %1426 = vmatpush1.msra.mxu0 0.0
    %1427 = vmatprep.subr.mxu0 0.0
    %1428 = vmatpush1.msra.mxu0 0.0
    %1429 = vmatprep.subr.mxu0 0.0
    %1430 = vmatpush1.msra.mxu0 0.0
    %1431 = vmatprep.subr.mxu0 0.0
    %1432 = vmatpush1.msra.mxu0 0.0
    %1433 = vmatprep.mubr.f32.mxu0 0.0
    %1434 = vmatmul.mubr.f32.gmra.mrb[0].mxu0 %v145
    %v1435 = vpop.f32.mrb[0].mxu0
    %v1436 = vadd.f32 %v223, %v1435
    %v1437 = vpop.f32.mrb[0].mxu0
    %v1438 = vadd.f32 %v227, %v1437
    %1439 = vdwg.mxu0
    %v1440 = vmax.f32 %v1365, 0.0
    %v1441 = vmax.f32 %v1367, 0.0
    %v1442 = vmax.f32 %v1436, 0.0
    %v1443 = vmax.f32 %v1438, 0.0
    %v1444 = vmax.f32 %v1230, %v1440
    %v1445 = vmax.f32 %v1231, %v1441
    %v1446 = vmax.f32 %v1232, %v1442
    %v1447 = vmax.f32 %v1233, %v1443
    %v1448 = vld [vmem:[#allocation5 + $0xc0] sm:$0xff]
    %v1449 = vld [vmem:[#allocation5 + $0xc8] sm:$0xff]
    %v1450 = vld [vmem:[#allocation5 + $0xd0] sm:$0xff]
    %v1451 = vld [vmem:[#allocation5 + $0xd8] sm:$0xff]
    %v1452 = vld [vmem:[#allocation5 + $0x1e0] sm:$0xff]
    %v1453 = vld [vmem:[#allocation5 + $0x1e8] sm:$0xff]
    %v1454 = vld [vmem:[#allocation5 + $0x1f0] sm:$0xff]
    %v1455 = vld [vmem:[#allocation5 + $0x1f8] sm:$0xff]
    %v1456 = vld [vmem:[#allocation5 + $0x300] sm:$0xff]
    %v1457 = vld [vmem:[#allocation5 + $0x308] sm:$0xff]
    %v1458 = vld [vmem:[#allocation5 + $0x310] sm:$0xff]
    %v1459 = vld [vmem:[#allocation5 + $0x318] sm:$0xff]
    %v1460 = vld [vmem:[#allocation5 + $0x420] sm:$0xff]
    %v1461 = vld [vmem:[#allocation5 + $0x428] sm:$0xff]
    %v1462 = vld [vmem:[#allocation5 + $0x430] sm:$0xff]
    %v1463 = vld [vmem:[#allocation5 + $0x438] sm:$0xff]
    %v1464 = vld [vmem:[#allocation5 + $0x540] sm:$0xff]
    %v1465 = vld [vmem:[#allocation5 + $0x548] sm:$0xff]
    %v1466 = vld [vmem:[#allocation5 + $0x550] sm:$0xff]
    %v1467 = vld [vmem:[#allocation5 + $0x558] sm:$0xff]
    %v1468 = vld [vmem:[#allocation5 + $0x660] sm:$0xff]
    %v1469 = vld [vmem:[#allocation5 + $0x668] sm:$0xff]
    %v1470 = vld [vmem:[#allocation5 + $0x670] sm:$0xff]
    %v1471 = vld [vmem:[#allocation5 + $0x678] sm:$0xff]
    %v1472 = vld [vmem:[#allocation5 + $0x780] sm:$0xff]
    %v1473 = vld [vmem:[#allocation5 + $0x788] sm:$0xff]
    %v1474 = vld [vmem:[#allocation5 + $0x790] sm:$0xff]
    %v1475 = vld [vmem:[#allocation5 + $0x798] sm:$0xff]
    %v1476 = vld [vmem:[#allocation5 + $0x8a0] sm:$0xff]
    %v1477 = vld [vmem:[#allocation5 + $0x8a8] sm:$0xff]
    %v1478 = vld [vmem:[#allocation5 + $0x8b0] sm:$0xff]
    %v1479 = vld [vmem:[#allocation5 + $0x8b8] sm:$0xff]
    %v1480 = vld [vmem:[#allocation5 + $0x9c0] sm:$0xff]
    %v1481 = vld [vmem:[#allocation5 + $0x9c8] sm:$0xff]
    %v1482 = vld [vmem:[#allocation5 + $0x9d0] sm:$0xff]
    %v1483 = vld [vmem:[#allocation5 + $0x9d8] sm:$0xff]
    %v1484 = vld [vmem:[#allocation5 + $0xae0] sm:$0xff]
    %v1485 = vld [vmem:[#allocation5 + $0xae8] sm:$0xff]
    %v1486 = vld [vmem:[#allocation5 + $0xaf0] sm:$0xff]
    %v1487 = vld [vmem:[#allocation5 + $0xaf8] sm:$0xff]
    %v1488 = vld [vmem:[#allocation5 + $0xc00] sm:$0xff]
    %v1489 = vld [vmem:[#allocation5 + $0xc08] sm:$0xff]
    %v1490 = vld [vmem:[#allocation5 + $0xc10] sm:$0xff]
    %v1491 = vld [vmem:[#allocation5 + $0xc18] sm:$0xff]
    %v1492 = vld [vmem:[#allocation5 + $0xd20] sm:$0xff]
    %v1493 = vld [vmem:[#allocation5 + $0xd28] sm:$0xff]
    %v1494 = vld [vmem:[#allocation5 + $0xd30] sm:$0xff]
    %v1495 = vld [vmem:[#allocation5 + $0xd38] sm:$0xff]
    %v1496 = vld [vmem:[#allocation5 + $0xe40] sm:$0xff]
    %v1497 = vld [vmem:[#allocation5 + $0xe48] sm:$0xff]
    %v1498 = vld [vmem:[#allocation5 + $0xe50] sm:$0xff]
    %v1499 = vld [vmem:[#allocation5 + $0xe58] sm:$0xff]
    %v1500 = vld [vmem:[#allocation5 + $0xf60] sm:$0xff]
    %v1501 = vld [vmem:[#allocation5 + $0xf68] sm:$0xff]
    %v1502 = vld [vmem:[#allocation5 + $0xf70] sm:$0xff]
    %v1503 = vld [vmem:[#allocation5 + $0xf78] sm:$0xff]
    %v1504 = vld [vmem:[#allocation5 + $0x1080] sm:$0xff]
    %v1505 = vld [vmem:[#allocation5 + $0x1088] sm:$0xff]
    %v1506 = vld [vmem:[#allocation5 + $0x1090] sm:$0xff]
    %v1507 = vld [vmem:[#allocation5 + $0x1098] sm:$0xff]
    %v1508 = vld [vmem:[#allocation5 + $0x11a0] sm:$0xff]
    %v1509 = vld [vmem:[#allocation5 + $0x11a8] sm:$0xff]
    %v1510 = vld [vmem:[#allocation5 + $0x11b0] sm:$0xff]
    %v1511 = vld [vmem:[#allocation5 + $0x11b8] sm:$0xff]
    %1512 = vmatprep.subr.mxu0 %v1449
    %1513 = vmatpush1.msra.mxu0 %v1448
    %1514 = vmatprep.subr.mxu0 %v1453
    %1515 = vmatpush1.msra.mxu0 %v1452
    %1516 = vmatprep.subr.mxu0 %v1457
    %1517 = vmatpush1.msra.mxu0 %v1456
    %1518 = vmatprep.subr.mxu0 %v1461
    %1519 = vmatpush1.msra.mxu0 %v1460
    %1520 = vmatprep.subr.mxu0 %v1465
    %1521 = vmatpush1.msra.mxu0 %v1464
    %1522 = vmatprep.subr.mxu0 %v1469
    %1523 = vmatpush1.msra.mxu0 %v1468
    %1524 = vmatprep.subr.mxu0 %v1473
    %1525 = vmatpush1.msra.mxu0 %v1472
    %1526 = vmatprep.subr.mxu0 %v1477
    %1527 = vmatpush1.msra.mxu0 %v1476
    %1528 = vmatprep.subr.mxu0 %v1481
    %1529 = vmatpush1.msra.mxu0 %v1480
    %1530 = vmatprep.subr.mxu0 %v1485
    %1531 = vmatpush1.msra.mxu0 %v1484
    %1532 = vmatprep.subr.mxu0 %v1489
    %1533 = vmatpush1.msra.mxu0 %v1488
    %1534 = vmatprep.subr.mxu0 %v1493
    %1535 = vmatpush1.msra.mxu0 %v1492
    %1536 = vmatprep.subr.mxu0 %v1497
    %1537 = vmatpush1.msra.mxu0 %v1496
    %1538 = vmatprep.subr.mxu0 %v1501
    %1539 = vmatpush1.msra.mxu0 %v1500
    %1540 = vmatprep.subr.mxu0 %v1505
    %1541 = vmatpush1.msra.mxu0 %v1504
    %1542 = vmatprep.subr.mxu0 %v1509
    %1543 = vmatpush1.msra.mxu0 %v1508
    %1544 = vmatprep.subr.mxu0 0.0
    %1545 = vmatpush1.msra.mxu0 0.0
    %1546 = vmatprep.subr.mxu0 0.0
    %1547 = vmatpush1.msra.mxu0 0.0
    %1548 = vmatprep.subr.mxu0 0.0
    %1549 = vmatpush1.msra.mxu0 0.0
    %1550 = vmatprep.subr.mxu0 0.0
    %1551 = vmatpush1.msra.mxu0 0.0
    %1552 = vmatprep.subr.mxu0 0.0
    %1553 = vmatpush1.msra.mxu0 0.0
    %1554 = vmatprep.subr.mxu0 0.0
    %1555 = vmatpush1.msra.mxu0 0.0
    %1556 = vmatprep.subr.mxu0 0.0
    %1557 = vmatpush1.msra.mxu0 0.0
    %1558 = vmatprep.subr.mxu0 0.0
    %1559 = vmatpush1.msra.mxu0 0.0
    %1560 = vmatprep.subr.mxu0 0.0
    %1561 = vmatpush1.msra.mxu0 0.0
    %1562 = vmatprep.subr.mxu0 0.0
    %1563 = vmatpush1.msra.mxu0 0.0
    %1564 = vmatprep.subr.mxu0 0.0
    %1565 = vmatpush1.msra.mxu0 0.0
    %1566 = vmatprep.subr.mxu0 0.0
    %1567 = vmatpush1.msra.mxu0 0.0
    %1568 = vmatprep.subr.mxu0 0.0
    %1569 = vmatpush1.msra.mxu0 0.0
    %1570 = vmatprep.subr.mxu0 0.0
    %1571 = vmatpush1.msra.mxu0 0.0
    %1572 = vmatprep.subr.mxu0 0.0
    %1573 = vmatpush1.msra.mxu0 0.0
    %1574 = vmatprep.subr.mxu0 0.0
    %1575 = vmatpush1.msra.mxu0 0.0
    %1576 = vmatprep.mubr.f32.mxu0 0.0
    %1577 = vmatmul.mubr.f32.gmra.mrb[0].mxu0 %v145
    %v1578 = vpop.f32.mrb[0].mxu0
    %v1579 = vadd.f32 %v215, %v1578
    %v1580 = vpop.f32.mrb[0].mxu0
    %v1581 = vadd.f32 %v219, %v1580
    %1582 = vdwg.mxu0
    %1583 = vmatprep.subr.mxu0 %v1451
    %1584 = vmatpush1.msra.mxu0 %v1450
    %1585 = vmatprep.subr.mxu0 %v1455
    %1586 = vmatpush1.msra.mxu0 %v1454
    %1587 = vmatprep.subr.mxu0 %v1459
    %1588 = vmatpush1.msra.mxu0 %v1458
    %1589 = vmatprep.subr.mxu0 %v1463
    %1590 = vmatpush1.msra.mxu0 %v1462
    %1591 = vmatprep.subr.mxu0 %v1467
    %1592 = vmatpush1.msra.mxu0 %v1466
    %1593 = vmatprep.subr.mxu0 %v1471
    %1594 = vmatpush1.msra.mxu0 %v1470
    %1595 = vmatprep.subr.mxu0 %v1475
    %1596 = vmatpush1.msra.mxu0 %v1474
    %1597 = vmatprep.subr.mxu0 %v1479
    %1598 = vmatpush1.msra.mxu0 %v1478
    %1599 = vmatprep.subr.mxu0 %v1483
    %1600 = vmatpush1.msra.mxu0 %v1482
    %1601 = vmatprep.subr.mxu0 %v1487
    %1602 = vmatpush1.msra.mxu0 %v1486
    %1603 = vmatprep.subr.mxu0 %v1491
    %1604 = vmatpush1.msra.mxu0 %v1490
    %1605 = vmatprep.subr.mxu0 %v1495
    %1606 = vmatpush1.msra.mxu0 %v1494
    %1607 = vmatprep.subr.mxu0 %v1499
    %1608 = vmatpush1.msra.mxu0 %v1498
    %1609 = vmatprep.subr.mxu0 %v1503
    %1610 = vmatpush1.msra.mxu0 %v1502
    %1611 = vmatprep.subr.mxu0 %v1507
    %1612 = vmatpush1.msra.mxu0 %v1506
    %1613 = vmatprep.subr.mxu0 %v1511
    %1614 = vmatpush1.msra.mxu0 %v1510
    %1615 = vmatprep.subr.mxu0 0.0
    %1616 = vmatpush1.msra.mxu0 0.0
    %1617 = vmatprep.subr.mxu0 0.0
    %1618 = vmatpush1.msra.mxu0 0.0
    %1619 = vmatprep.subr.mxu0 0.0
    %1620 = vmatpush1.msra.mxu0 0.0
    %1621 = vmatprep.subr.mxu0 0.0
    %1622 = vmatpush1.msra.mxu0 0.0
    %1623 = vmatprep.subr.mxu0 0.0
    %1624 = vmatpush1.msra.mxu0 0.0
    %1625 = vmatprep.subr.mxu0 0.0
    %1626 = vmatpush1.msra.mxu0 0.0
    %1627 = vmatprep.subr.mxu0 0.0
    %1628 = vmatpush1.msra.mxu0 0.0
    %1629 = vmatprep.subr.mxu0 0.0
    %1630 = vmatpush1.msra.mxu0 0.0
    %1631 = vmatprep.subr.mxu0 0.0
    %1632 = vmatpush1.msra.mxu0 0.0
    %1633 = vmatprep.subr.mxu0 0.0
    %1634 = vmatpush1.msra.mxu0 0.0
    %1635 = vmatprep.subr.mxu0 0.0
    %1636 = vmatpush1.msra.mxu0 0.0
    %1637 = vmatprep.subr.mxu0 0.0
    %1638 = vmatpush1.msra.mxu0 0.0
    %1639 = vmatprep.subr.mxu0 0.0
    %1640 = vmatpush1.msra.mxu0 0.0
    %1641 = vmatprep.subr.mxu0 0.0
    %1642 = vmatpush1.msra.mxu0 0.0
    %1643 = vmatprep.subr.mxu0 0.0
    %1644 = vmatpush1.msra.mxu0 0.0
    %1645 = vmatprep.subr.mxu0 0.0
    %1646 = vmatpush1.msra.mxu0 0.0
    %1647 = vmatprep.mubr.f32.mxu0 0.0
    %1648 = vmatmul.mubr.f32.gmra.mrb[0].mxu0 %v145
    %v1649 = vpop.f32.mrb[0].mxu0
    %v1650 = vadd.f32 %v223, %v1649
    %v1651 = vpop.f32.mrb[0].mxu0
    %v1652 = vadd.f32 %v227, %v1651
    %1653 = vdwg.mxu0
    %v1654 = vmax.f32 %v1579, 0.0
    %v1655 = vmax.f32 %v1581, 0.0
    %v1656 = vmax.f32 %v1650, 0.0
    %v1657 = vmax.f32 %v1652, 0.0
    %v1658 = vmax.f32 %v1444, %v1654
    %v1659 = vmax.f32 %v1445, %v1655
    %v1660 = vmax.f32 %v1446, %v1656
    %v1661 = vmax.f32 %v1447, %v1657
    %v1662 = vld [vmem:[#allocation5 + $0xe0] sm:$0xff]
    %v1663 = vld [vmem:[#allocation5 + $0xe8] sm:$0xff]
    %v1664 = vld [vmem:[#allocation5 + $0xf0] sm:$0xff]
    %v1665 = vld [vmem:[#allocation5 + $0xf8] sm:$0xff]
    %v1666 = vld [vmem:[#allocation5 + $0x200] sm:$0xff]
    %v1667 = vld [vmem:[#allocation5 + $0x208] sm:$0xff]
    %v1668 = vld [vmem:[#allocation5 + $0x210] sm:$0xff]
    %v1669 = vld [vmem:[#allocation5 + $0x218] sm:$0xff]
    %v1670 = vld [vmem:[#allocation5 + $0x320] sm:$0xff]
    %v1671 = vld [vmem:[#allocation5 + $0x328] sm:$0xff]
    %v1672 = vld [vmem:[#allocation5 + $0x330] sm:$0xff]
    %v1673 = vld [vmem:[#allocation5 + $0x338] sm:$0xff]
    %v1674 = vld [vmem:[#allocation5 + $0x440] sm:$0xff]
    %v1675 = vld [vmem:[#allocation5 + $0x448] sm:$0xff]
    %v1676 = vld [vmem:[#allocation5 + $0x450] sm:$0xff]
    %v1677 = vld [vmem:[#allocation5 + $0x458] sm:$0xff]
    %v1678 = vld [vmem:[#allocation5 + $0x560] sm:$0xff]
    %v1679 = vld [vmem:[#allocation5 + $0x568] sm:$0xff]
    %v1680 = vld [vmem:[#allocation5 + $0x570] sm:$0xff]
    %v1681 = vld [vmem:[#allocation5 + $0x578] sm:$0xff]
    %v1682 = vld [vmem:[#allocation5 + $0x680] sm:$0xff]
    %v1683 = vld [vmem:[#allocation5 + $0x688] sm:$0xff]
    %v1684 = vld [vmem:[#allocation5 + $0x690] sm:$0xff]
    %v1685 = vld [vmem:[#allocation5 + $0x698] sm:$0xff]
    %v1686 = vld [vmem:[#allocation5 + $0x7a0] sm:$0xff]
    %v1687 = vld [vmem:[#allocation5 + $0x7a8] sm:$0xff]
    %v1688 = vld [vmem:[#allocation5 + $0x7b0] sm:$0xff]
    %v1689 = vld [vmem:[#allocation5 + $0x7b8] sm:$0xff]
    %v1690 = vld [vmem:[#allocation5 + $0x8c0] sm:$0xff]
    %v1691 = vld [vmem:[#allocation5 + $0x8c8] sm:$0xff]
    %v1692 = vld [vmem:[#allocation5 + $0x8d0] sm:$0xff]
    %v1693 = vld [vmem:[#allocation5 + $0x8d8] sm:$0xff]
    %v1694 = vld [vmem:[#allocation5 + $0x9e0] sm:$0xff]
    %v1695 = vld [vmem:[#allocation5 + $0x9e8] sm:$0xff]
    %v1696 = vld [vmem:[#allocation5 + $0x9f0] sm:$0xff]
    %v1697 = vld [vmem:[#allocation5 + $0x9f8] sm:$0xff]
    %v1698 = vld [vmem:[#allocation5 + $0xb00] sm:$0xff]
    %v1699 = vld [vmem:[#allocation5 + $0xb08] sm:$0xff]
    %v1700 = vld [vmem:[#allocation5 + $0xb10] sm:$0xff]
    %v1701 = vld [vmem:[#allocation5 + $0xb18] sm:$0xff]
    %v1702 = vld [vmem:[#allocation5 + $0xc20] sm:$0xff]
    %v1703 = vld [vmem:[#allocation5 + $0xc28] sm:$0xff]
    %v1704 = vld [vmem:[#allocation5 + $0xc30] sm:$0xff]
    %v1705 = vld [vmem:[#allocation5 + $0xc38] sm:$0xff]
    %v1706 = vld [vmem:[#allocation5 + $0xd40] sm:$0xff]
    %v1707 = vld [vmem:[#allocation5 + $0xd48] sm:$0xff]
    %v1708 = vld [vmem:[#allocation5 + $0xd50] sm:$0xff]
    %v1709 = vld [vmem:[#allocation5 + $0xd58] sm:$0xff]
    %v1710 = vld [vmem:[#allocation5 + $0xe60] sm:$0xff]
    %v1711 = vld [vmem:[#allocation5 + $0xe68] sm:$0xff]
    %v1712 = vld [vmem:[#allocation5 + $0xe70] sm:$0xff]
    %v1713 = vld [vmem:[#allocation5 + $0xe78] sm:$0xff]
    %v1714 = vld [vmem:[#allocation5 + $0xf80] sm:$0xff]
    %v1715 = vld [vmem:[#allocation5 + $0xf88] sm:$0xff]
    %v1716 = vld [vmem:[#allocation5 + $0xf90] sm:$0xff]
    %v1717 = vld [vmem:[#allocation5 + $0xf98] sm:$0xff]
    %v1718 = vld [vmem:[#allocation5 + $0x10a0] sm:$0xff]
    %v1719 = vld [vmem:[#allocation5 + $0x10a8] sm:$0xff]
    %v1720 = vld [vmem:[#allocation5 + $0x10b0] sm:$0xff]
    %v1721 = vld [vmem:[#allocation5 + $0x10b8] sm:$0xff]
    %v1722 = vld [vmem:[#allocation5 + $0x11c0] sm:$0xff]
    %v1723 = vld [vmem:[#allocation5 + $0x11c8] sm:$0xff]
    %v1724 = vld [vmem:[#allocation5 + $0x11d0] sm:$0xff]
    %v1725 = vld [vmem:[#allocation5 + $0x11d8] sm:$0xff]
    %1726 = vmatprep.subr.mxu0 %v1663
    %1727 = vmatpush1.msra.mxu0 %v1662
    %1728 = vmatprep.subr.mxu0 %v1667
    %1729 = vmatpush1.msra.mxu0 %v1666
    %1730 = vmatprep.subr.mxu0 %v1671
    %1731 = vmatpush1.msra.mxu0 %v1670
    %1732 = vmatprep.subr.mxu0 %v1675
    %1733 = vmatpush1.msra.mxu0 %v1674
    %1734 = vmatprep.subr.mxu0 %v1679
    %1735 = vmatpush1.msra.mxu0 %v1678
    %1736 = vmatprep.subr.mxu0 %v1683
    %1737 = vmatpush1.msra.mxu0 %v1682
    %1738 = vmatprep.subr.mxu0 %v1687
    %1739 = vmatpush1.msra.mxu0 %v1686
    %1740 = vmatprep.subr.mxu0 %v1691
    %1741 = vmatpush1.msra.mxu0 %v1690
    %1742 = vmatprep.subr.mxu0 %v1695
    %1743 = vmatpush1.msra.mxu0 %v1694
    %1744 = vmatprep.subr.mxu0 %v1699
    %1745 = vmatpush1.msra.mxu0 %v1698
    %1746 = vmatprep.subr.mxu0 %v1703
    %1747 = vmatpush1.msra.mxu0 %v1702
    %1748 = vmatprep.subr.mxu0 %v1707
    %1749 = vmatpush1.msra.mxu0 %v1706
    %1750 = vmatprep.subr.mxu0 %v1711
    %1751 = vmatpush1.msra.mxu0 %v1710
    %1752 = vmatprep.subr.mxu0 %v1715
    %1753 = vmatpush1.msra.mxu0 %v1714
    %1754 = vmatprep.subr.mxu0 %v1719
    %1755 = vmatpush1.msra.mxu0 %v1718
    %1756 = vmatprep.subr.mxu0 %v1723
    %1757 = vmatpush1.msra.mxu0 %v1722
    %1758 = vmatprep.subr.mxu0 0.0
    %1759 = vmatpush1.msra.mxu0 0.0
    %1760 = vmatprep.subr.mxu0 0.0
    %1761 = vmatpush1.msra.mxu0 0.0
    %1762 = vmatprep.subr.mxu0 0.0
    %1763 = vmatpush1.msra.mxu0 0.0
    %1764 = vmatprep.subr.mxu0 0.0
    %1765 = vmatpush1.msra.mxu0 0.0
    %1766 = vmatprep.subr.mxu0 0.0
    %1767 = vmatpush1.msra.mxu0 0.0
    %1768 = vmatprep.subr.mxu0 0.0
    %1769 = vmatpush1.msra.mxu0 0.0
    %1770 = vmatprep.subr.mxu0 0.0
    %1771 = vmatpush1.msra.mxu0 0.0
    %1772 = vmatprep.subr.mxu0 0.0
    %1773 = vmatpush1.msra.mxu0 0.0
    %1774 = vmatprep.subr.mxu0 0.0
    %1775 = vmatpush1.msra.mxu0 0.0
    %1776 = vmatprep.subr.mxu0 0.0
    %1777 = vmatpush1.msra.mxu0 0.0
    %1778 = vmatprep.subr.mxu0 0.0
    %1779 = vmatpush1.msra.mxu0 0.0
    %1780 = vmatprep.subr.mxu0 0.0
    %1781 = vmatpush1.msra.mxu0 0.0
    %1782 = vmatprep.subr.mxu0 0.0
    %1783 = vmatpush1.msra.mxu0 0.0
    %1784 = vmatprep.subr.mxu0 0.0
    %1785 = vmatpush1.msra.mxu0 0.0
    %1786 = vmatprep.subr.mxu0 0.0
    %1787 = vmatpush1.msra.mxu0 0.0
    %1788 = vmatprep.subr.mxu0 0.0
    %1789 = vmatpush1.msra.mxu0 0.0
    %1790 = vmatprep.mubr.f32.mxu0 0.0
    %1791 = vmatmul.mubr.f32.gmra.mrb[0].mxu0 %v145
    %v1792 = vpop.f32.mrb[0].mxu0
    %v1793 = vadd.f32 %v215, %v1792
    %v1794 = vpop.f32.mrb[0].mxu0
    %v1795 = vadd.f32 %v219, %v1794
    %1796 = vdwg.mxu0
    %1797 = vmatprep.subr.mxu0 %v1665
    %1798 = vmatpush1.msra.mxu0 %v1664
    %1799 = vmatprep.subr.mxu0 %v1669
    %1800 = vmatpush1.msra.mxu0 %v1668
    %1801 = vmatprep.subr.mxu0 %v1673
    %1802 = vmatpush1.msra.mxu0 %v1672
    %1803 = vmatprep.subr.mxu0 %v1677
    %1804 = vmatpush1.msra.mxu0 %v1676
    %1805 = vmatprep.subr.mxu0 %v1681
    %1806 = vmatpush1.msra.mxu0 %v1680
    %1807 = vmatprep.subr.mxu0 %v1685
    %1808 = vmatpush1.msra.mxu0 %v1684
    %1809 = vmatprep.subr.mxu0 %v1689
    %1810 = vmatpush1.msra.mxu0 %v1688
    %1811 = vmatprep.subr.mxu0 %v1693
    %1812 = vmatpush1.msra.mxu0 %v1692
    %1813 = vmatprep.subr.mxu0 %v1697
    %1814 = vmatpush1.msra.mxu0 %v1696
    %1815 = vmatprep.subr.mxu0 %v1701
    %1816 = vmatpush1.msra.mxu0 %v1700
    %1817 = vmatprep.subr.mxu0 %v1705
    %1818 = vmatpush1.msra.mxu0 %v1704
    %1819 = vmatprep.subr.mxu0 %v1709
    %1820 = vmatpush1.msra.mxu0 %v1708
    %1821 = vmatprep.subr.mxu0 %v1713
    %1822 = vmatpush1.msra.mxu0 %v1712
    %1823 = vmatprep.subr.mxu0 %v1717
    %1824 = vmatpush1.msra.mxu0 %v1716
    %1825 = vmatprep.subr.mxu0 %v1721
    %1826 = vmatpush1.msra.mxu0 %v1720
    %1827 = vmatprep.subr.mxu0 %v1725
    %1828 = vmatpush1.msra.mxu0 %v1724
    %1829 = vmatprep.subr.mxu0 0.0
    %1830 = vmatpush1.msra.mxu0 0.0
    %1831 = vmatprep.subr.mxu0 0.0
    %1832 = vmatpush1.msra.mxu0 0.0
    %1833 = vmatprep.subr.mxu0 0.0
    %1834 = vmatpush1.msra.mxu0 0.0
    %1835 = vmatprep.subr.mxu0 0.0
    %1836 = vmatpush1.msra.mxu0 0.0
    %1837 = vmatprep.subr.mxu0 0.0
    %1838 = vmatpush1.msra.mxu0 0.0
    %1839 = vmatprep.subr.mxu0 0.0
    %1840 = vmatpush1.msra.mxu0 0.0
    %1841 = vmatprep.subr.mxu0 0.0
    %1842 = vmatpush1.msra.mxu0 0.0
    %1843 = vmatprep.subr.mxu0 0.0
    %1844 = vmatpush1.msra.mxu0 0.0
    %1845 = vmatprep.subr.mxu0 0.0
    %1846 = vmatpush1.msra.mxu0 0.0
    %1847 = vmatprep.subr.mxu0 0.0
    %1848 = vmatpush1.msra.mxu0 0.0
    %1849 = vmatprep.subr.mxu0 0.0
    %1850 = vmatpush1.msra.mxu0 0.0
    %1851 = vmatprep.subr.mxu0 0.0
    %1852 = vmatpush1.msra.mxu0 0.0
    %1853 = vmatprep.subr.mxu0 0.0
    %1854 = vmatpush1.msra.mxu0 0.0
    %1855 = vmatprep.subr.mxu0 0.0
    %1856 = vmatpush1.msra.mxu0 0.0
    %1857 = vmatprep.subr.mxu0 0.0
    %1858 = vmatpush1.msra.mxu0 0.0
    %1859 = vmatprep.subr.mxu0 0.0
    %1860 = vmatpush1.msra.mxu0 0.0
    %1861 = vmatprep.mubr.f32.mxu0 0.0
    %1862 = vmatmul.mubr.f32.gmra.mrb[0].mxu0 %v145
    %v1863 = vpop.f32.mrb[0].mxu0
    %v1864 = vadd.f32 %v223, %v1863
    %v1865 = vpop.f32.mrb[0].mxu0
    %v1866 = vadd.f32 %v227, %v1865
    %1867 = vdwg.mxu0
    %v1868 = vmax.f32 %v1793, 0.0
    %v1869 = vmax.f32 %v1795, 0.0
    %v1870 = vmax.f32 %v1864, 0.0
    %v1871 = vmax.f32 %v1866, 0.0
    %v1872 = vmax.f32 %v1658, %v1868
    %v1873 = vmax.f32 %v1659, %v1869
    %v1874 = vmax.f32 %v1660, %v1870
    %v1875 = vmax.f32 %v1661, %v1871
    %v1876 = vld [vmem:[#allocation5 + $0x100] sm:$0xff]
    %v1877 = vld [vmem:[#allocation5 + $0x108] sm:$0xff]
    %v1878 = vld [vmem:[#allocation5 + $0x110] sm:$0xff]
    %v1879 = vld [vmem:[#allocation5 + $0x118] sm:$0xff]
    %v1880 = vld [vmem:[#allocation5 + $0x220] sm:$0xff]
    %v1881 = vld [vmem:[#allocation5 + $0x228] sm:$0xff]
    %v1882 = vld [vmem:[#allocation5 + $0x230] sm:$0xff]
    %v1883 = vld [vmem:[#allocation5 + $0x238] sm:$0xff]
    %v1884 = vld [vmem:[#allocation5 + $0x340] sm:$0xff]
    %v1885 = vld [vmem:[#allocation5 + $0x348] sm:$0xff]
    %v1886 = vld [vmem:[#allocation5 + $0x350] sm:$0xff]
    %v1887 = vld [vmem:[#allocation5 + $0x358] sm:$0xff]
    %v1888 = vld [vmem:[#allocation5 + $0x460] sm:$0xff]
    %v1889 = vld [vmem:[#allocation5 + $0x468] sm:$0xff]
    %v1890 = vld [vmem:[#allocation5 + $0x470] sm:$0xff]
    %v1891 = vld [vmem:[#allocation5 + $0x478] sm:$0xff]
    %v1892 = vld [vmem:[#allocation5 + $0x580] sm:$0xff]
    %v1893 = vld [vmem:[#allocation5 + $0x588] sm:$0xff]
    %v1894 = vld [vmem:[#allocation5 + $0x590] sm:$0xff]
    %v1895 = vld [vmem:[#allocation5 + $0x598] sm:$0xff]
    %v1896 = vld [vmem:[#allocation5 + $0x6a0] sm:$0xff]
    %v1897 = vld [vmem:[#allocation5 + $0x6a8] sm:$0xff]
    %v1898 = vld [vmem:[#allocation5 + $0x6b0] sm:$0xff]
    %v1899 = vld [vmem:[#allocation5 + $0x6b8] sm:$0xff]
    %v1900 = vld [vmem:[#allocation5 + $0x7c0] sm:$0xff]
    %v1901 = vld [vmem:[#allocation5 + $0x7c8] sm:$0xff]
    %v1902 = vld [vmem:[#allocation5 + $0x7d0] sm:$0xff]
    %v1903 = vld [vmem:[#allocation5 + $0x7d8] sm:$0xff]
    %v1904 = vld [vmem:[#allocation5 + $0x8e0] sm:$0xff]
    %v1905 = vld [vmem:[#allocation5 + $0x8e8] sm:$0xff]
    %v1906 = vld [vmem:[#allocation5 + $0x8f0] sm:$0xff]
    %v1907 = vld [vmem:[#allocation5 + $0x8f8] sm:$0xff]
    %v1908 = vld [vmem:[#allocation5 + $0xa00] sm:$0xff]
    %v1909 = vld [vmem:[#allocation5 + $0xa08] sm:$0xff]
    %v1910 = vld [vmem:[#allocation5 + $0xa10] sm:$0xff]
    %v1911 = vld [vmem:[#allocation5 + $0xa18] sm:$0xff]
    %v1912 = vld [vmem:[#allocation5 + $0xb20] sm:$0xff]
    %v1913 = vld [vmem:[#allocation5 + $0xb28] sm:$0xff]
    %v1914 = vld [vmem:[#allocation5 + $0xb30] sm:$0xff]
    %v1915 = vld [vmem:[#allocation5 + $0xb38] sm:$0xff]
    %v1916 = vld [vmem:[#allocation5 + $0xc40] sm:$0xff]
    %v1917 = vld [vmem:[#allocation5 + $0xc48] sm:$0xff]
    %v1918 = vld [vmem:[#allocation5 + $0xc50] sm:$0xff]
    %v1919 = vld [vmem:[#allocation5 + $0xc58] sm:$0xff]
    %v1920 = vld [vmem:[#allocation5 + $0xd60] sm:$0xff]
    %v1921 = vld [vmem:[#allocation5 + $0xd68] sm:$0xff]
    %v1922 = vld [vmem:[#allocation5 + $0xd70] sm:$0xff]
    %v1923 = vld [vmem:[#allocation5 + $0xd78] sm:$0xff]
    %v1924 = vld [vmem:[#allocation5 + $0xe80] sm:$0xff]
    %v1925 = vld [vmem:[#allocation5 + $0xe88] sm:$0xff]
    %v1926 = vld [vmem:[#allocation5 + $0xe90] sm:$0xff]
    %v1927 = vld [vmem:[#allocation5 + $0xe98] sm:$0xff]
    %v1928 = vld [vmem:[#allocation5 + $0xfa0] sm:$0xff]
    %v1929 = vld [vmem:[#allocation5 + $0xfa8] sm:$0xff]
    %v1930 = vld [vmem:[#allocation5 + $0xfb0] sm:$0xff]
    %v1931 = vld [vmem:[#allocation5 + $0xfb8] sm:$0xff]
    %v1932 = vld [vmem:[#allocation5 + $0x10c0] sm:$0xff]
    %v1933 = vld [vmem:[#allocation5 + $0x10c8] sm:$0xff]
    %v1934 = vld [vmem:[#allocation5 + $0x10d0] sm:$0xff]
    %v1935 = vld [vmem:[#allocation5 + $0x10d8] sm:$0xff]
    %v1936 = vld [vmem:[#allocation5 + $0x11e0] sm:$0xff]
    %v1937 = vld [vmem:[#allocation5 + $0x11e8] sm:$0xff]
    %v1938 = vld [vmem:[#allocation5 + $0x11f0] sm:$0xff]
    %v1939 = vld [vmem:[#allocation5 + $0x11f8] sm:$0xff]
    %1940 = vmatprep.subr.mxu0 %v1877
    %1941 = vmatpush1.msra.mxu0 %v1876
    %1942 = vmatprep.subr.mxu0 %v1881
    %1943 = vmatpush1.msra.mxu0 %v1880
    %1944 = vmatprep.subr.mxu0 %v1885
    %1945 = vmatpush1.msra.mxu0 %v1884
    %1946 = vmatprep.subr.mxu0 %v1889
    %1947 = vmatpush1.msra.mxu0 %v1888
    %1948 = vmatprep.subr.mxu0 %v1893
    %1949 = vmatpush1.msra.mxu0 %v1892
    %1950 = vmatprep.subr.mxu0 %v1897
    %1951 = vmatpush1.msra.mxu0 %v1896
    %1952 = vmatprep.subr.mxu0 %v1901
    %1953 = vmatpush1.msra.mxu0 %v1900
    %1954 = vmatprep.subr.mxu0 %v1905
    %1955 = vmatpush1.msra.mxu0 %v1904
    %1956 = vmatprep.subr.mxu0 %v1909
    %1957 = vmatpush1.msra.mxu0 %v1908
    %1958 = vmatprep.subr.mxu0 %v1913
    %1959 = vmatpush1.msra.mxu0 %v1912
    %1960 = vmatprep.subr.mxu0 %v1917
    %1961 = vmatpush1.msra.mxu0 %v1916
    %1962 = vmatprep.subr.mxu0 %v1921
    %1963 = vmatpush1.msra.mxu0 %v1920
    %1964 = vmatprep.subr.mxu0 %v1925
    %1965 = vmatpush1.msra.mxu0 %v1924
    %1966 = vmatprep.subr.mxu0 %v1929
    %1967 = vmatpush1.msra.mxu0 %v1928
    %1968 = vmatprep.subr.mxu0 %v1933
    %1969 = vmatpush1.msra.mxu0 %v1932
    %1970 = vmatprep.subr.mxu0 %v1937
    %1971 = vmatpush1.msra.mxu0 %v1936
    %1972 = vmatprep.subr.mxu0 0.0
    %1973 = vmatpush1.msra.mxu0 0.0
    %1974 = vmatprep.subr.mxu0 0.0
    %1975 = vmatpush1.msra.mxu0 0.0
    %1976 = vmatprep.subr.mxu0 0.0
    %1977 = vmatpush1.msra.mxu0 0.0
    %1978 = vmatprep.subr.mxu0 0.0
    %1979 = vmatpush1.msra.mxu0 0.0
    %1980 = vmatprep.subr.mxu0 0.0
    %1981 = vmatpush1.msra.mxu0 0.0
    %1982 = vmatprep.subr.mxu0 0.0
    %1983 = vmatpush1.msra.mxu0 0.0
    %1984 = vmatprep.subr.mxu0 0.0
    %1985 = vmatpush1.msra.mxu0 0.0
    %1986 = vmatprep.subr.mxu0 0.0
    %1987 = vmatpush1.msra.mxu0 0.0
    %1988 = vmatprep.subr.mxu0 0.0
    %1989 = vmatpush1.msra.mxu0 0.0
    %1990 = vmatprep.subr.mxu0 0.0
    %1991 = vmatpush1.msra.mxu0 0.0
    %1992 = vmatprep.subr.mxu0 0.0
    %1993 = vmatpush1.msra.mxu0 0.0
    %1994 = vmatprep.subr.mxu0 0.0
    %1995 = vmatpush1.msra.mxu0 0.0
    %1996 = vmatprep.subr.mxu0 0.0
    %1997 = vmatpush1.msra.mxu0 0.0
    %1998 = vmatprep.subr.mxu0 0.0
    %1999 = vmatpush1.msra.mxu0 0.0
    %2000 = vmatprep.subr.mxu0 0.0
    %2001 = vmatpush1.msra.mxu0 0.0
    %2002 = vmatprep.subr.mxu0 0.0
    %2003 = vmatpush1.msra.mxu0 0.0
    %2004 = vmatprep.mubr.f32.mxu0 0.0
    %2005 = vmatmul.mubr.f32.gmra.mrb[0].mxu0 %v145
    %v2006 = vpop.f32.mrb[0].mxu0
    %v2007 = vadd.f32 %v215, %v2006
    %v2008 = vpop.f32.mrb[0].mxu0
    %v2009 = vadd.f32 %v219, %v2008
    %2010 = vdwg.mxu0
    %2011 = vmatprep.subr.mxu0 %v1879
    %2012 = vmatpush1.msra.mxu0 %v1878
    %2013 = vmatprep.subr.mxu0 %v1883
    %2014 = vmatpush1.msra.mxu0 %v1882
    %2015 = vmatprep.subr.mxu0 %v1887
    %2016 = vmatpush1.msra.mxu0 %v1886
    %2017 = vmatprep.subr.mxu0 %v1891
    %2018 = vmatpush1.msra.mxu0 %v1890
    %2019 = vmatprep.subr.mxu0 %v1895
    %2020 = vmatpush1.msra.mxu0 %v1894
    %2021 = vmatprep.subr.mxu0 %v1899
    %2022 = vmatpush1.msra.mxu0 %v1898
    %2023 = vmatprep.subr.mxu0 %v1903
    %2024 = vmatpush1.msra.mxu0 %v1902
    %2025 = vmatprep.subr.mxu0 %v1907
    %2026 = vmatpush1.msra.mxu0 %v1906
    %2027 = vmatprep.subr.mxu0 %v1911
    %2028 = vmatpush1.msra.mxu0 %v1910
    %2029 = vmatprep.subr.mxu0 %v1915
    %2030 = vmatpush1.msra.mxu0 %v1914
    %2031 = vmatprep.subr.mxu0 %v1919
    %2032 = vmatpush1.msra.mxu0 %v1918
    %2033 = vmatprep.subr.mxu0 %v1923
    %2034 = vmatpush1.msra.mxu0 %v1922
    %2035 = vmatprep.subr.mxu0 %v1927
    %2036 = vmatpush1.msra.mxu0 %v1926
    %2037 = vmatprep.subr.mxu0 %v1931
    %2038 = vmatpush1.msra.mxu0 %v1930
    %2039 = vmatprep.subr.mxu0 %v1935
    %2040 = vmatpush1.msra.mxu0 %v1934
    %2041 = vmatprep.subr.mxu0 %v1939
    %2042 = vmatpush1.msra.mxu0 %v1938
    %2043 = vmatprep.subr.mxu0 0.0
    %2044 = vmatpush1.msra.mxu0 0.0
    %2045 = vmatprep.subr.mxu0 0.0
    %2046 = vmatpush1.msra.mxu0 0.0
    %2047 = vmatprep.subr.mxu0 0.0
    %2048 = vmatpush1.msra.mxu0 0.0
    %2049 = vmatprep.subr.mxu0 0.0
    %2050 = vmatpush1.msra.mxu0 0.0
    %2051 = vmatprep.subr.mxu0 0.0
    %2052 = vmatpush1.msra.mxu0 0.0
    %2053 = vmatprep.subr.mxu0 0.0
    %2054 = vmatpush1.msra.mxu0 0.0
    %2055 = vmatprep.subr.mxu0 0.0
    %2056 = vmatpush1.msra.mxu0 0.0
    %2057 = vmatprep.subr.mxu0 0.0
    %2058 = vmatpush1.msra.mxu0 0.0
    %2059 = vmatprep.subr.mxu0 0.0
    %2060 = vmatpush1.msra.mxu0 0.0
    %2061 = vmatprep.subr.mxu0 0.0
    %2062 = vmatpush1.msra.mxu0 0.0
    %2063 = vmatprep.subr.mxu0 0.0
    %2064 = vmatpush1.msra.mxu0 0.0
    %2065 = vmatprep.subr.mxu0 0.0
    %2066 = vmatpush1.msra.mxu0 0.0
    %2067 = vmatprep.subr.mxu0 0.0
    %2068 = vmatpush1.msra.mxu0 0.0
    %2069 = vmatprep.subr.mxu0 0.0
    %2070 = vmatpush1.msra.mxu0 0.0
    %2071 = vmatprep.subr.mxu0 0.0
    %2072 = vmatpush1.msra.mxu0 0.0
    %2073 = vmatprep.subr.mxu0 0.0
    %2074 = vmatpush1.msra.mxu0 0.0
    %2075 = vmatprep.mubr.f32.mxu0 0.0
    %2076 = vmatmul.mubr.f32.gmra.mrb[0].mxu0 %v145
    %v2077 = vpop.f32.mrb[0].mxu0
    %v2078 = vadd.f32 %v223, %v2077
    %v2079 = vpop.f32.mrb[0].mxu0
    %v2080 = vadd.f32 %v227, %v2079
    %2081 = vdwg.mxu0
    %v2082 = vmax.f32 %v2007, 0.0
    %v2083 = vmax.f32 %v2009, 0.0
    %v2084 = vmax.f32 %v2078, 0.0
    %v2085 = vmax.f32 %v2080, 0.0
    %v2086 = vmax.f32 %v1872, %v2082
    %v2087 = vmax.f32 %v1873, %v2083
    %v2088 = vmax.f32 %v1874, %v2084
    %v2089 = vmax.f32 %v1875, %v2085
    %v2090 = vld [vmem:[#allocation10] sm:$0x1]
    %v2091 = vld [vmem:[#allocation8] sm:$0xff]
    %v2092 = vld [vmem:[#allocation8 + $0x20] sm:$0xff]
    %v2093 = vld [vmem:[#allocation8 + $0x40] sm:$0xff]
    %v2094 = vld [vmem:[#allocation8 + $0x60] sm:$0xff]
    %v2095 = vld [vmem:[#allocation8 + $0x80] sm:$0xff]
    %v2096 = vld [vmem:[#allocation8 + $0xa0] sm:$0xff]
    %v2097 = vld [vmem:[#allocation8 + $0xc0] sm:$0xff]
    %v2098 = vld [vmem:[#allocation8 + $0xe0] sm:$0xff]
    %v2099 = vld [vmem:[#allocation8 + $0x100] sm:$0xff]
    %v2100 = vld [vmem:[#allocation8 + $0x120] sm:$0xff]
    %v2101 = vld [vmem:[#allocation8 + $0x140] sm:$0xff]
    %v2102 = vld [vmem:[#allocation8 + $0x160] sm:$0xff]
    %v2103 = vld [vmem:[#allocation8 + $0x180] sm:$0xff]
    %v2104 = vld [vmem:[#allocation8 + $0x1a0] sm:$0xff]
    %v2105 = vld [vmem:[#allocation8 + $0x1c0] sm:$0xff]
    %v2106 = vld [vmem:[#allocation8 + $0x1e0] sm:$0xff]
    %v2107 = vld [vmem:[#allocation8 + $0x200] sm:$0xff]
    %v2108 = vld [vmem:[#allocation8 + $0x220] sm:$0xff]
    %v2109 = vld [vmem:[#allocation8 + $0x240] sm:$0xff]
    %v2110 = vld [vmem:[#allocation8 + $0x260] sm:$0xff]
    %v2111 = vld [vmem:[#allocation8 + $0x280] sm:$0xff]
    %v2112 = vld [vmem:[#allocation8 + $0x2a0] sm:$0xff]
    %v2113 = vld [vmem:[#allocation8 + $0x2c0] sm:$0xff]
    %v2114 = vld [vmem:[#allocation8 + $0x2e0] sm:$0xff]
    %v2115 = vld [vmem:[#allocation8 + $0x300] sm:$0xff]
    %v2116 = vld [vmem:[#allocation8 + $0x320] sm:$0xff]
    %v2117 = vld [vmem:[#allocation8 + $0x340] sm:$0xff]
    %v2118 = vld [vmem:[#allocation8 + $0x360] sm:$0xff]
    %v2119 = vld [vmem:[#allocation8 + $0x380] sm:$0xff]
    %v2120 = vld [vmem:[#allocation8 + $0x3a0] sm:$0xff]
    %v2121 = vld [vmem:[#allocation8 + $0x3c0] sm:$0xff]
    %v2122 = vld [vmem:[#allocation8 + $0x3e0] sm:$0xff]
    %v2123 = vld [vmem:[#allocation8 + $0x400] sm:$0xff]
    %v2124 = vld [vmem:[#allocation8 + $0x420] sm:$0xff]
    %v2125 = vld [vmem:[#allocation8 + $0x440] sm:$0xff]
    %v2126 = vld [vmem:[#allocation8 + $0x460] sm:$0xff]
    %v2127 = vld [vmem:[#allocation8 + $0x480] sm:$0xff]
    %v2128 = vld [vmem:[#allocation8 + $0x4a0] sm:$0xff]
    %v2129 = vld [vmem:[#allocation8 + $0x4c0] sm:$0xff]
    %v2130 = vld [vmem:[#allocation8 + $0x4e0] sm:$0xff]
    %v2131 = vld [vmem:[#allocation8 + $0x500] sm:$0xff]
    %v2132 = vld [vmem:[#allocation8 + $0x520] sm:$0xff]
    %v2133 = vld [vmem:[#allocation8 + $0x540] sm:$0xff]
    %v2134 = vld [vmem:[#allocation8 + $0x560] sm:$0xff]
    %v2135 = vld [vmem:[#allocation8 + $0x580] sm:$0xff]
    %v2136 = vld [vmem:[#allocation8 + $0x5a0] sm:$0xff]
    %v2137 = vld [vmem:[#allocation8 + $0x5c0] sm:$0xff]
    %v2138 = vld [vmem:[#allocation8 + $0x5e0] sm:$0xff]
    %v2139 = vld [vmem:[#allocation8 + $0x600] sm:$0xff]
    %v2140 = vld [vmem:[#allocation8 + $0x620] sm:$0xff]
    %v2141 = vld [vmem:[#allocation8 + $0x640] sm:$0xff]
    %v2142 = vld [vmem:[#allocation8 + $0x660] sm:$0xff]
    %v2143 = vld [vmem:[#allocation8 + $0x680] sm:$0xff]
    %v2144 = vld [vmem:[#allocation8 + $0x6a0] sm:$0xff]
    %v2145 = vld [vmem:[#allocation8 + $0x6c0] sm:$0xff]
    %v2146 = vld [vmem:[#allocation8 + $0x6e0] sm:$0xff]
    %v2147 = vld [vmem:[#allocation8 + $0x700] sm:$0xff]
    %v2148 = vld [vmem:[#allocation8 + $0x720] sm:$0xff]
    %v2149 = vld [vmem:[#allocation8 + $0x740] sm:$0xff]
    %v2150 = vld [vmem:[#allocation8 + $0x760] sm:$0xff]
    %v2151 = vld [vmem:[#allocation8 + $0x780] sm:$0xff]
    %v2152 = vld [vmem:[#allocation8 + $0x7a0] sm:$0xff]
    %v2153 = vld [vmem:[#allocation8 + $0x7c0] sm:$0xff]
    %v2154 = vld [vmem:[#allocation8 + $0x7e0] sm:$0xff]
    %v2156 = vlaneseq
    %v2157 = vshrl.u32 %v2156, 7
    %v2158 = vsub.s32 0, %v2157
    %v2159 = vrot.slane %v2090, %v2158
    %2161 = vmatprep.subr.mxu0 0.0
    %2162 = vmatpush1.msra.mxu0 %v2091
    %2163 = vmatprep.subr.mxu0 0.0
    %2164 = vmatpush1.msra.mxu0 %v2092
    %2165 = vmatprep.subr.mxu0 0.0
    %2166 = vmatpush1.msra.mxu0 %v2093
    %2167 = vmatprep.subr.mxu0 0.0
    %2168 = vmatpush1.msra.mxu0 %v2094
    %2169 = vmatprep.subr.mxu0 0.0
    %2170 = vmatpush1.msra.mxu0 %v2095
    %2171 = vmatprep.subr.mxu0 0.0
    %2172 = vmatpush1.msra.mxu0 %v2096
    %2173 = vmatprep.subr.mxu0 0.0
    %2174 = vmatpush1.msra.mxu0 %v2097
    %2175 = vmatprep.subr.mxu0 0.0
    %2176 = vmatpush1.msra.mxu0 %v2098
    %2177 = vmatprep.subr.mxu0 0.0
    %2178 = vmatpush1.msra.mxu0 %v2099
    %2179 = vmatprep.subr.mxu0 0.0
    %2180 = vmatpush1.msra.mxu0 %v2100
    %2181 = vmatprep.subr.mxu0 0.0
    %2182 = vmatpush1.msra.mxu0 %v2101
    %2183 = vmatprep.subr.mxu0 0.0
    %2184 = vmatpush1.msra.mxu0 %v2102
    %2185 = vmatprep.subr.mxu0 0.0
    %2186 = vmatpush1.msra.mxu0 %v2103
    %2187 = vmatprep.subr.mxu0 0.0
    %2188 = vmatpush1.msra.mxu0 %v2104
    %2189 = vmatprep.subr.mxu0 0.0
    %2190 = vmatpush1.msra.mxu0 %v2105
    %2191 = vmatprep.subr.mxu0 0.0
    %2192 = vmatpush1.msra.mxu0 %v2106
    %2193 = vmatprep.subr.mxu0 0.0
    %2194 = vmatpush1.msra.mxu0 %v2107
    %2195 = vmatprep.subr.mxu0 0.0
    %2196 = vmatpush1.msra.mxu0 %v2108
    %2197 = vmatprep.subr.mxu0 0.0
    %2198 = vmatpush1.msra.mxu0 %v2109
    %2199 = vmatprep.subr.mxu0 0.0
    %2200 = vmatpush1.msra.mxu0 %v2110
    %2201 = vmatprep.subr.mxu0 0.0
    %2202 = vmatpush1.msra.mxu0 %v2111
    %2203 = vmatprep.subr.mxu0 0.0
    %2204 = vmatpush1.msra.mxu0 %v2112
    %2205 = vmatprep.subr.mxu0 0.0
    %2206 = vmatpush1.msra.mxu0 %v2113
    %2207 = vmatprep.subr.mxu0 0.0
    %2208 = vmatpush1.msra.mxu0 %v2114
    %2209 = vmatprep.subr.mxu0 0.0
    %2210 = vmatpush1.msra.mxu0 %v2115
    %2211 = vmatprep.subr.mxu0 0.0
    %2212 = vmatpush1.msra.mxu0 %v2116
    %2213 = vmatprep.subr.mxu0 0.0
    %2214 = vmatpush1.msra.mxu0 %v2117
    %2215 = vmatprep.subr.mxu0 0.0
    %2216 = vmatpush1.msra.mxu0 %v2118
    %2217 = vmatprep.subr.mxu0 0.0
    %2218 = vmatpush1.msra.mxu0 %v2119
    %2219 = vmatprep.subr.mxu0 0.0
    %2220 = vmatpush1.msra.mxu0 %v2120
    %2221 = vmatprep.subr.mxu0 0.0
    %2222 = vmatpush1.msra.mxu0 %v2121
    %2223 = vmatprep.subr.mxu0 0.0
    %2224 = vmatpush1.msra.mxu0 %v2122
    %2225 = vmatprep.mubr.f32.mxu0 %v2087
    %2226 = vmatmul.mubr.f32.gmra.mrb[0].mxu0 %v2086
    %v2227 = vpop.f32.mrb[0].mxu0
    %v2228 = vadd.f32 %v2159, %v2227
    %v2229 = vpop.f32.mrb[0].mxu0
    %2230 = vdwg.mxu0
    %2231 = vmatprep.subr.mxu0 0.0
    %2232 = vmatpush1.msra.mxu0 %v2123
    %2233 = vmatprep.subr.mxu0 0.0
    %2234 = vmatpush1.msra.mxu0 %v2124
    %2235 = vmatprep.subr.mxu0 0.0
    %2236 = vmatpush1.msra.mxu0 %v2125
    %2237 = vmatprep.subr.mxu0 0.0
    %2238 = vmatpush1.msra.mxu0 %v2126
    %2239 = vmatprep.subr.mxu0 0.0
    %2240 = vmatpush1.msra.mxu0 %v2127
    %2241 = vmatprep.subr.mxu0 0.0
    %2242 = vmatpush1.msra.mxu0 %v2128
    %2243 = vmatprep.subr.mxu0 0.0
    %2244 = vmatpush1.msra.mxu0 %v2129
    %2245 = vmatprep.subr.mxu0 0.0
    %2246 = vmatpush1.msra.mxu0 %v2130
    %2247 = vmatprep.subr.mxu0 0.0
    %2248 = vmatpush1.msra.mxu0 %v2131
    %2249 = vmatprep.subr.mxu0 0.0
    %2250 = vmatpush1.msra.mxu0 %v2132
    %2251 = vmatprep.subr.mxu0 0.0
    %2252 = vmatpush1.msra.mxu0 %v2133
    %2253 = vmatprep.subr.mxu0 0.0
    %2254 = vmatpush1.msra.mxu0 %v2134
    %2255 = vmatprep.subr.mxu0 0.0
    %2256 = vmatpush1.msra.mxu0 %v2135
    %2257 = vmatprep.subr.mxu0 0.0
    %2258 = vmatpush1.msra.mxu0 %v2136
    %2259 = vmatprep.subr.mxu0 0.0
    %2260 = vmatpush1.msra.mxu0 %v2137
    %2261 = vmatprep.subr.mxu0 0.0
    %2262 = vmatpush1.msra.mxu0 %v2138
    %2263 = vmatprep.subr.mxu0 0.0
    %2264 = vmatpush1.msra.mxu0 %v2139
    %2265 = vmatprep.subr.mxu0 0.0
    %2266 = vmatpush1.msra.mxu0 %v2140
    %2267 = vmatprep.subr.mxu0 0.0
    %2268 = vmatpush1.msra.mxu0 %v2141
    %2269 = vmatprep.subr.mxu0 0.0
    %2270 = vmatpush1.msra.mxu0 %v2142
    %2271 = vmatprep.subr.mxu0 0.0
    %2272 = vmatpush1.msra.mxu0 %v2143
    %2273 = vmatprep.subr.mxu0 0.0
    %2274 = vmatpush1.msra.mxu0 %v2144
    %2275 = vmatprep.subr.mxu0 0.0
    %2276 = vmatpush1.msra.mxu0 %v2145
    %2277 = vmatprep.subr.mxu0 0.0
    %2278 = vmatpush1.msra.mxu0 %v2146
    %2279 = vmatprep.subr.mxu0 0.0
    %2280 = vmatpush1.msra.mxu0 %v2147
    %2281 = vmatprep.subr.mxu0 0.0
    %2282 = vmatpush1.msra.mxu0 %v2148
    %2283 = vmatprep.subr.mxu0 0.0
    %2284 = vmatpush1.msra.mxu0 %v2149
    %2285 = vmatprep.subr.mxu0 0.0
    %2286 = vmatpush1.msra.mxu0 %v2150
    %2287 = vmatprep.subr.mxu0 0.0
    %2288 = vmatpush1.msra.mxu0 %v2151
    %2289 = vmatprep.subr.mxu0 0.0
    %2290 = vmatpush1.msra.mxu0 %v2152
    %2291 = vmatprep.subr.mxu0 0.0
    %2292 = vmatpush1.msra.mxu0 %v2153
    %2293 = vmatprep.subr.mxu0 0.0
    %2294 = vmatpush1.msra.mxu0 %v2154
    %2295 = vmatprep.mubr.f32.mxu0 %v2089
    %2296 = vmatmul.mubr.f32.gmra.mrb[0].mxu0 %v2088
    %v2297 = vpop.f32.mrb[0].mxu0
    %v2298 = vadd.f32 %v2228, %v2297
    %v2299 = vpop.f32.mrb[0].mxu0
    %2300 = vdwg.mxu0
    %v2301 = vmax.f32 %v2298, 0.0
    %v2302 = vld [vmem:[#allocation8 + $0x8] sm:$0xff]
    %v2303 = vld [vmem:[#allocation8 + $0x28] sm:$0xff]
    %v2304 = vld [vmem:[#allocation8 + $0x48] sm:$0xff]
    %v2305 = vld [vmem:[#allocation8 + $0x68] sm:$0xff]
    %v2306 = vld [vmem:[#allocation8 + $0x88] sm:$0xff]
    %v2307 = vld [vmem:[#allocation8 + $0xa8] sm:$0xff]
    %v2308 = vld [vmem:[#allocation8 + $0xc8] sm:$0xff]
    %v2309 = vld [vmem:[#allocation8 + $0xe8] sm:$0xff]
    %v2310 = vld [vmem:[#allocation8 + $0x108] sm:$0xff]
    %v2311 = vld [vmem:[#allocation8 + $0x128] sm:$0xff]
    %v2312 = vld [vmem:[#allocation8 + $0x148] sm:$0xff]
    %v2313 = vld [vmem:[#allocation8 + $0x168] sm:$0xff]
    %v2314 = vld [vmem:[#allocation8 + $0x188] sm:$0xff]
    %v2315 = vld [vmem:[#allocation8 + $0x1a8] sm:$0xff]
    %v2316 = vld [vmem:[#allocation8 + $0x1c8] sm:$0xff]
    %v2317 = vld [vmem:[#allocation8 + $0x1e8] sm:$0xff]
    %v2318 = vld [vmem:[#allocation8 + $0x208] sm:$0xff]
    %v2319 = vld [vmem:[#allocation8 + $0x228] sm:$0xff]
    %v2320 = vld [vmem:[#allocation8 + $0x248] sm:$0xff]
    %v2321 = vld [vmem:[#allocation8 + $0x268] sm:$0xff]
    %v2322 = vld [vmem:[#allocation8 + $0x288] sm:$0xff]
    %v2323 = vld [vmem:[#allocation8 + $0x2a8] sm:$0xff]
    %v2324 = vld [vmem:[#allocation8 + $0x2c8] sm:$0xff]
    %v2325 = vld [vmem:[#allocation8 + $0x2e8] sm:$0xff]
    %v2326 = vld [vmem:[#allocation8 + $0x308] sm:$0xff]
    %v2327 = vld [vmem:[#allocation8 + $0x328] sm:$0xff]
    %v2328 = vld [vmem:[#allocation8 + $0x348] sm:$0xff]
    %v2329 = vld [vmem:[#allocation8 + $0x368] sm:$0xff]
    %v2330 = vld [vmem:[#allocation8 + $0x388] sm:$0xff]
    %v2331 = vld [vmem:[#allocation8 + $0x3a8] sm:$0xff]
    %v2332 = vld [vmem:[#allocation8 + $0x3c8] sm:$0xff]
    %v2333 = vld [vmem:[#allocation8 + $0x3e8] sm:$0xff]
    %v2334 = vld [vmem:[#allocation8 + $0x408] sm:$0xff]
    %v2335 = vld [vmem:[#allocation8 + $0x428] sm:$0xff]
    %v2336 = vld [vmem:[#allocation8 + $0x448] sm:$0xff]
    %v2337 = vld [vmem:[#allocation8 + $0x468] sm:$0xff]
    %v2338 = vld [vmem:[#allocation8 + $0x488] sm:$0xff]
    %v2339 = vld [vmem:[#allocation8 + $0x4a8] sm:$0xff]
    %v2340 = vld [vmem:[#allocation8 + $0x4c8] sm:$0xff]
    %v2341 = vld [vmem:[#allocation8 + $0x4e8] sm:$0xff]
    %v2342 = vld [vmem:[#allocation8 + $0x508] sm:$0xff]
    %v2343 = vld [vmem:[#allocation8 + $0x528] sm:$0xff]
    %v2344 = vld [vmem:[#allocation8 + $0x548] sm:$0xff]
    %v2345 = vld [vmem:[#allocation8 + $0x568] sm:$0xff]
    %v2346 = vld [vmem:[#allocation8 + $0x588] sm:$0xff]
    %v2347 = vld [vmem:[#allocation8 + $0x5a8] sm:$0xff]
    %v2348 = vld [vmem:[#allocation8 + $0x5c8] sm:$0xff]
    %v2349 = vld [vmem:[#allocation8 + $0x5e8] sm:$0xff]
    %v2350 = vld [vmem:[#allocation8 + $0x608] sm:$0xff]
    %v2351 = vld [vmem:[#allocation8 + $0x628] sm:$0xff]
    %v2352 = vld [vmem:[#allocation8 + $0x648] sm:$0xff]
    %v2353 = vld [vmem:[#allocation8 + $0x668] sm:$0xff]
    %v2354 = vld [vmem:[#allocation8 + $0x688] sm:$0xff]
    %v2355 = vld [vmem:[#allocation8 + $0x6a8] sm:$0xff]
    %v2356 = vld [vmem:[#allocation8 + $0x6c8] sm:$0xff]
    %v2357 = vld [vmem:[#allocation8 + $0x6e8] sm:$0xff]
    %v2358 = vld [vmem:[#allocation8 + $0x708] sm:$0xff]
    %v2359 = vld [vmem:[#allocation8 + $0x728] sm:$0xff]
    %v2360 = vld [vmem:[#allocation8 + $0x748] sm:$0xff]
    %v2361 = vld [vmem:[#allocation8 + $0x768] sm:$0xff]
    %v2362 = vld [vmem:[#allocation8 + $0x788] sm:$0xff]
    %v2363 = vld [vmem:[#allocation8 + $0x7a8] sm:$0xff]
    %v2364 = vld [vmem:[#allocation8 + $0x7c8] sm:$0xff]
    %v2365 = vld [vmem:[#allocation8 + $0x7e8] sm:$0xff]
    %2366 = vmatprep.subr.mxu0 0.0
    %2367 = vmatpush1.msra.mxu0 %v2302
    %2368 = vmatprep.subr.mxu0 0.0
    %2369 = vmatpush1.msra.mxu0 %v2303
    %2370 = vmatprep.subr.mxu0 0.0
    %2371 = vmatpush1.msra.mxu0 %v2304
    %2372 = vmatprep.subr.mxu0 0.0
    %2373 = vmatpush1.msra.mxu0 %v2305
    %2374 = vmatprep.subr.mxu0 0.0
    %2375 = vmatpush1.msra.mxu0 %v2306
    %2376 = vmatprep.subr.mxu0 0.0
    %2377 = vmatpush1.msra.mxu0 %v2307
    %2378 = vmatprep.subr.mxu0 0.0
    %2379 = vmatpush1.msra.mxu0 %v2308
    %2380 = vmatprep.subr.mxu0 0.0
    %2381 = vmatpush1.msra.mxu0 %v2309
    %2382 = vmatprep.subr.mxu0 0.0
    %2383 = vmatpush1.msra.mxu0 %v2310
    %2384 = vmatprep.subr.mxu0 0.0
    %2385 = vmatpush1.msra.mxu0 %v2311
    %2386 = vmatprep.subr.mxu0 0.0
    %2387 = vmatpush1.msra.mxu0 %v2312
    %2388 = vmatprep.subr.mxu0 0.0
    %2389 = vmatpush1.msra.mxu0 %v2313
    %2390 = vmatprep.subr.mxu0 0.0
    %2391 = vmatpush1.msra.mxu0 %v2314
    %2392 = vmatprep.subr.mxu0 0.0
    %2393 = vmatpush1.msra.mxu0 %v2315
    %2394 = vmatprep.subr.mxu0 0.0
    %2395 = vmatpush1.msra.mxu0 %v2316
    %2396 = vmatprep.subr.mxu0 0.0
    %2397 = vmatpush1.msra.mxu0 %v2317
    %2398 = vmatprep.subr.mxu0 0.0
    %2399 = vmatpush1.msra.mxu0 %v2318
    %2400 = vmatprep.subr.mxu0 0.0
    %2401 = vmatpush1.msra.mxu0 %v2319
    %2402 = vmatprep.subr.mxu0 0.0
    %2403 = vmatpush1.msra.mxu0 %v2320
    %2404 = vmatprep.subr.mxu0 0.0
    %2405 = vmatpush1.msra.mxu0 %v2321
    %2406 = vmatprep.subr.mxu0 0.0
    %2407 = vmatpush1.msra.mxu0 %v2322
    %2408 = vmatprep.subr.mxu0 0.0
    %2409 = vmatpush1.msra.mxu0 %v2323
    %2410 = vmatprep.subr.mxu0 0.0
    %2411 = vmatpush1.msra.mxu0 %v2324
    %2412 = vmatprep.subr.mxu0 0.0
    %2413 = vmatpush1.msra.mxu0 %v2325
    %2414 = vmatprep.subr.mxu0 0.0
    %2415 = vmatpush1.msra.mxu0 %v2326
    %2416 = vmatprep.subr.mxu0 0.0
    %2417 = vmatpush1.msra.mxu0 %v2327
    %2418 = vmatprep.subr.mxu0 0.0
    %2419 = vmatpush1.msra.mxu0 %v2328
    %2420 = vmatprep.subr.mxu0 0.0
    %2421 = vmatpush1.msra.mxu0 %v2329
    %2422 = vmatprep.subr.mxu0 0.0
    %2423 = vmatpush1.msra.mxu0 %v2330
    %2424 = vmatprep.subr.mxu0 0.0
    %2425 = vmatpush1.msra.mxu0 %v2331
    %2426 = vmatprep.subr.mxu0 0.0
    %2427 = vmatpush1.msra.mxu0 %v2332
    %2428 = vmatprep.subr.mxu0 0.0
    %2429 = vmatpush1.msra.mxu0 %v2333
    %2430 = vmatprep.mubr.f32.mxu0 %v2087
    %2431 = vmatmul.mubr.f32.gmra.mrb[0].mxu0 %v2086
    %v2432 = vpop.f32.mrb[0].mxu0
    %v2433 = vadd.f32 %v2159, %v2432
    %v2434 = vpop.f32.mrb[0].mxu0
    %2435 = vdwg.mxu0
    %2436 = vmatprep.subr.mxu0 0.0
    %2437 = vmatpush1.msra.mxu0 %v2334
    %2438 = vmatprep.subr.mxu0 0.0
    %2439 = vmatpush1.msra.mxu0 %v2335
    %2440 = vmatprep.subr.mxu0 0.0
    %2441 = vmatpush1.msra.mxu0 %v2336
    %2442 = vmatprep.subr.mxu0 0.0
    %2443 = vmatpush1.msra.mxu0 %v2337
    %2444 = vmatprep.subr.mxu0 0.0
    %2445 = vmatpush1.msra.mxu0 %v2338
    %2446 = vmatprep.subr.mxu0 0.0
    %2447 = vmatpush1.msra.mxu0 %v2339
    %2448 = vmatprep.subr.mxu0 0.0
    %2449 = vmatpush1.msra.mxu0 %v2340
    %2450 = vmatprep.subr.mxu0 0.0
    %2451 = vmatpush1.msra.mxu0 %v2341
    %2452 = vmatprep.subr.mxu0 0.0
    %2453 = vmatpush1.msra.mxu0 %v2342
    %2454 = vmatprep.subr.mxu0 0.0
    %2455 = vmatpush1.msra.mxu0 %v2343
    %2456 = vmatprep.subr.mxu0 0.0
    %2457 = vmatpush1.msra.mxu0 %v2344
    %2458 = vmatprep.subr.mxu0 0.0
    %2459 = vmatpush1.msra.mxu0 %v2345
    %2460 = vmatprep.subr.mxu0 0.0
    %2461 = vmatpush1.msra.mxu0 %v2346
    %2462 = vmatprep.subr.mxu0 0.0
    %2463 = vmatpush1.msra.mxu0 %v2347
    %2464 = vmatprep.subr.mxu0 0.0
    %2465 = vmatpush1.msra.mxu0 %v2348
    %2466 = vmatprep.subr.mxu0 0.0
    %2467 = vmatpush1.msra.mxu0 %v2349
    %2468 = vmatprep.subr.mxu0 0.0
    %2469 = vmatpush1.msra.mxu0 %v2350
    %2470 = vmatprep.subr.mxu0 0.0
    %2471 = vmatpush1.msra.mxu0 %v2351
    %2472 = vmatprep.subr.mxu0 0.0
    %2473 = vmatpush1.msra.mxu0 %v2352
    %2474 = vmatprep.subr.mxu0 0.0
    %2475 = vmatpush1.msra.mxu0 %v2353
    %2476 = vmatprep.subr.mxu0 0.0
    %2477 = vmatpush1.msra.mxu0 %v2354
    %2478 = vmatprep.subr.mxu0 0.0
    %2479 = vmatpush1.msra.mxu0 %v2355
    %2480 = vmatprep.subr.mxu0 0.0
    %2481 = vmatpush1.msra.mxu0 %v2356
    %2482 = vmatprep.subr.mxu0 0.0
    %2483 = vmatpush1.msra.mxu0 %v2357
    %2484 = vmatprep.subr.mxu0 0.0
    %2485 = vmatpush1.msra.mxu0 %v2358
    %2486 = vmatprep.subr.mxu0 0.0
    %2487 = vmatpush1.msra.mxu0 %v2359
    %2488 = vmatprep.subr.mxu0 0.0
    %2489 = vmatpush1.msra.mxu0 %v2360
    %2490 = vmatprep.subr.mxu0 0.0
    %2491 = vmatpush1.msra.mxu0 %v2361
    %2492 = vmatprep.subr.mxu0 0.0
    %2493 = vmatpush1.msra.mxu0 %v2362
    %2494 = vmatprep.subr.mxu0 0.0
    %2495 = vmatpush1.msra.mxu0 %v2363
    %2496 = vmatprep.subr.mxu0 0.0
    %2497 = vmatpush1.msra.mxu0 %v2364
    %2498 = vmatprep.subr.mxu0 0.0
    %2499 = vmatpush1.msra.mxu0 %v2365
    %2500 = vmatprep.mubr.f32.mxu0 %v2089
    %2501 = vmatmul.mubr.f32.gmra.mrb[0].mxu0 %v2088
    %v2502 = vpop.f32.mrb[0].mxu0
    %v2503 = vadd.f32 %v2433, %v2502
    %v2504 = vpop.f32.mrb[0].mxu0
    %2505 = vdwg.mxu0
    %v2506 = vmax.f32 %v2503, 0.0
    %v2507 = vmax.f32 %v2301, %v2506
    %v2508 = vld [vmem:[#allocation8 + $0x10] sm:$0xff]
    %v2509 = vld [vmem:[#allocation8 + $0x30] sm:$0xff]
    %v2510 = vld [vmem:[#allocation8 + $0x50] sm:$0xff]
    %v2511 = vld [vmem:[#allocation8 + $0x70] sm:$0xff]
    %v2512 = vld [vmem:[#allocation8 + $0x90] sm:$0xff]
    %v2513 = vld [vmem:[#allocation8 + $0xb0] sm:$0xff]
    %v2514 = vld [vmem:[#allocation8 + $0xd0] sm:$0xff]
    %v2515 = vld [vmem:[#allocation8 + $0xf0] sm:$0xff]
    %v2516 = vld [vmem:[#allocation8 + $0x110] sm:$0xff]
    %v2517 = vld [vmem:[#allocation8 + $0x130] sm:$0xff]
    %v2518 = vld [vmem:[#allocation8 + $0x150] sm:$0xff]
    %v2519 = vld [vmem:[#allocation8 + $0x170] sm:$0xff]
    %v2520 = vld [vmem:[#allocation8 + $0x190] sm:$0xff]
    %v2521 = vld [vmem:[#allocation8 + $0x1b0] sm:$0xff]
    %v2522 = vld [vmem:[#allocation8 + $0x1d0] sm:$0xff]
    %v2523 = vld [vmem:[#allocation8 + $0x1f0] sm:$0xff]
    %v2524 = vld [vmem:[#allocation8 + $0x210] sm:$0xff]
    %v2525 = vld [vmem:[#allocation8 + $0x230] sm:$0xff]
    %v2526 = vld [vmem:[#allocation8 + $0x250] sm:$0xff]
    %v2527 = vld [vmem:[#allocation8 + $0x270] sm:$0xff]
    %v2528 = vld [vmem:[#allocation8 + $0x290] sm:$0xff]
    %v2529 = vld [vmem:[#allocation8 + $0x2b0] sm:$0xff]
    %v2530 = vld [vmem:[#allocation8 + $0x2d0] sm:$0xff]
    %v2531 = vld [vmem:[#allocation8 + $0x2f0] sm:$0xff]
    %v2532 = vld [vmem:[#allocation8 + $0x310] sm:$0xff]
    %v2533 = vld [vmem:[#allocation8 + $0x330] sm:$0xff]
    %v2534 = vld [vmem:[#allocation8 + $0x350] sm:$0xff]
    %v2535 = vld [vmem:[#allocation8 + $0x370] sm:$0xff]
    %v2536 = vld [vmem:[#allocation8 + $0x390] sm:$0xff]
    %v2537 = vld [vmem:[#allocation8 + $0x3b0] sm:$0xff]
    %v2538 = vld [vmem:[#allocation8 + $0x3d0] sm:$0xff]
    %v2539 = vld [vmem:[#allocation8 + $0x3f0] sm:$0xff]
    %v2540 = vld [vmem:[#allocation8 + $0x410] sm:$0xff]
    %v2541 = vld [vmem:[#allocation8 + $0x430] sm:$0xff]
    %v2542 = vld [vmem:[#allocation8 + $0x450] sm:$0xff]
    %v2543 = vld [vmem:[#allocation8 + $0x470] sm:$0xff]
    %v2544 = vld [vmem:[#allocation8 + $0x490] sm:$0xff]
    %v2545 = vld [vmem:[#allocation8 + $0x4b0] sm:$0xff]
    %v2546 = vld [vmem:[#allocation8 + $0x4d0] sm:$0xff]
    %v2547 = vld [vmem:[#allocation8 + $0x4f0] sm:$0xff]
    %v2548 = vld [vmem:[#allocation8 + $0x510] sm:$0xff]
    %v2549 = vld [vmem:[#allocation8 + $0x530] sm:$0xff]
    %v2550 = vld [vmem:[#allocation8 + $0x550] sm:$0xff]
    %v2551 = vld [vmem:[#allocation8 + $0x570] sm:$0xff]
    %v2552 = vld [vmem:[#allocation8 + $0x590] sm:$0xff]
    %v2553 = vld [vmem:[#allocation8 + $0x5b0] sm:$0xff]
    %v2554 = vld [vmem:[#allocation8 + $0x5d0] sm:$0xff]
    %v2555 = vld [vmem:[#allocation8 + $0x5f0] sm:$0xff]
    %v2556 = vld [vmem:[#allocation8 + $0x610] sm:$0xff]
    %v2557 = vld [vmem:[#allocation8 + $0x630] sm:$0xff]
    %v2558 = vld [vmem:[#allocation8 + $0x650] sm:$0xff]
    %v2559 = vld [vmem:[#allocation8 + $0x670] sm:$0xff]
    %v2560 = vld [vmem:[#allocation8 + $0x690] sm:$0xff]
    %v2561 = vld [vmem:[#allocation8 + $0x6b0] sm:$0xff]
    %v2562 = vld [vmem:[#allocation8 + $0x6d0] sm:$0xff]
    %v2563 = vld [vmem:[#allocation8 + $0x6f0] sm:$0xff]
    %v2564 = vld [vmem:[#allocation8 + $0x710] sm:$0xff]
    %v2565 = vld [vmem:[#allocation8 + $0x730] sm:$0xff]
    %v2566 = vld [vmem:[#allocation8 + $0x750] sm:$0xff]
    %v2567 = vld [vmem:[#allocation8 + $0x770] sm:$0xff]
    %v2568 = vld [vmem:[#allocation8 + $0x790] sm:$0xff]
    %v2569 = vld [vmem:[#allocation8 + $0x7b0] sm:$0xff]
    %v2570 = vld [vmem:[#allocation8 + $0x7d0] sm:$0xff]
    %v2571 = vld [vmem:[#allocation8 + $0x7f0] sm:$0xff]
    %2572 = vmatprep.subr.mxu0 0.0
    %2573 = vmatpush1.msra.mxu0 %v2508
    %2574 = vmatprep.subr.mxu0 0.0
    %2575 = vmatpush1.msra.mxu0 %v2509
    %2576 = vmatprep.subr.mxu0 0.0
    %2577 = vmatpush1.msra.mxu0 %v2510
    %2578 = vmatprep.subr.mxu0 0.0
    %2579 = vmatpush1.msra.mxu0 %v2511
    %2580 = vmatprep.subr.mxu0 0.0
    %2581 = vmatpush1.msra.mxu0 %v2512
    %2582 = vmatprep.subr.mxu0 0.0
    %2583 = vmatpush1.msra.mxu0 %v2513
    %2584 = vmatprep.subr.mxu0 0.0
    %2585 = vmatpush1.msra.mxu0 %v2514
    %2586 = vmatprep.subr.mxu0 0.0
    %2587 = vmatpush1.msra.mxu0 %v2515
    %2588 = vmatprep.subr.mxu0 0.0
    %2589 = vmatpush1.msra.mxu0 %v2516
    %2590 = vmatprep.subr.mxu0 0.0
    %2591 = vmatpush1.msra.mxu0 %v2517
    %2592 = vmatprep.subr.mxu0 0.0
    %2593 = vmatpush1.msra.mxu0 %v2518
    %2594 = vmatprep.subr.mxu0 0.0
    %2595 = vmatpush1.msra.mxu0 %v2519
    %2596 = vmatprep.subr.mxu0 0.0
    %2597 = vmatpush1.msra.mxu0 %v2520
    %2598 = vmatprep.subr.mxu0 0.0
    %2599 = vmatpush1.msra.mxu0 %v2521
    %2600 = vmatprep.subr.mxu0 0.0
    %2601 = vmatpush1.msra.mxu0 %v2522
    %2602 = vmatprep.subr.mxu0 0.0
    %2603 = vmatpush1.msra.mxu0 %v2523
    %2604 = vmatprep.subr.mxu0 0.0
    %2605 = vmatpush1.msra.mxu0 %v2524
    %2606 = vmatprep.subr.mxu0 0.0
    %2607 = vmatpush1.msra.mxu0 %v2525
    %2608 = vmatprep.subr.mxu0 0.0
    %2609 = vmatpush1.msra.mxu0 %v2526
    %2610 = vmatprep.subr.mxu0 0.0
    %2611 = vmatpush1.msra.mxu0 %v2527
    %2612 = vmatprep.subr.mxu0 0.0
    %2613 = vmatpush1.msra.mxu0 %v2528
    %2614 = vmatprep.subr.mxu0 0.0
    %2615 = vmatpush1.msra.mxu0 %v2529
    %2616 = vmatprep.subr.mxu0 0.0
    %2617 = vmatpush1.msra.mxu0 %v2530
    %2618 = vmatprep.subr.mxu0 0.0
    %2619 = vmatpush1.msra.mxu0 %v2531
    %2620 = vmatprep.subr.mxu0 0.0
    %2621 = vmatpush1.msra.mxu0 %v2532
    %2622 = vmatprep.subr.mxu0 0.0
    %2623 = vmatpush1.msra.mxu0 %v2533
    %2624 = vmatprep.subr.mxu0 0.0
    %2625 = vmatpush1.msra.mxu0 %v2534
    %2626 = vmatprep.subr.mxu0 0.0
    %2627 = vmatpush1.msra.mxu0 %v2535
    %2628 = vmatprep.subr.mxu0 0.0
    %2629 = vmatpush1.msra.mxu0 %v2536
    %2630 = vmatprep.subr.mxu0 0.0
    %2631 = vmatpush1.msra.mxu0 %v2537
    %2632 = vmatprep.subr.mxu0 0.0
    %2633 = vmatpush1.msra.mxu0 %v2538
    %2634 = vmatprep.subr.mxu0 0.0
    %2635 = vmatpush1.msra.mxu0 %v2539
    %2636 = vmatprep.mubr.f32.mxu0 %v2087
    %2637 = vmatmul.mubr.f32.gmra.mrb[0].mxu0 %v2086
    %v2638 = vpop.f32.mrb[0].mxu0
    %v2639 = vadd.f32 %v2159, %v2638
    %v2640 = vpop.f32.mrb[0].mxu0
    %2641 = vdwg.mxu0
    %2642 = vmatprep.subr.mxu0 0.0
    %2643 = vmatpush1.msra.mxu0 %v2540
    %2644 = vmatprep.subr.mxu0 0.0
    %2645 = vmatpush1.msra.mxu0 %v2541
    %2646 = vmatprep.subr.mxu0 0.0
    %2647 = vmatpush1.msra.mxu0 %v2542
    %2648 = vmatprep.subr.mxu0 0.0
    %2649 = vmatpush1.msra.mxu0 %v2543
    %2650 = vmatprep.subr.mxu0 0.0
    %2651 = vmatpush1.msra.mxu0 %v2544
    %2652 = vmatprep.subr.mxu0 0.0
    %2653 = vmatpush1.msra.mxu0 %v2545
    %2654 = vmatprep.subr.mxu0 0.0
    %2655 = vmatpush1.msra.mxu0 %v2546
    %2656 = vmatprep.subr.mxu0 0.0
    %2657 = vmatpush1.msra.mxu0 %v2547
    %2658 = vmatprep.subr.mxu0 0.0
    %2659 = vmatpush1.msra.mxu0 %v2548
    %2660 = vmatprep.subr.mxu0 0.0
    %2661 = vmatpush1.msra.mxu0 %v2549
    %2662 = vmatprep.subr.mxu0 0.0
    %2663 = vmatpush1.msra.mxu0 %v2550
    %2664 = vmatprep.subr.mxu0 0.0
    %2665 = vmatpush1.msra.mxu0 %v2551
    %2666 = vmatprep.subr.mxu0 0.0
    %2667 = vmatpush1.msra.mxu0 %v2552
    %2668 = vmatprep.subr.mxu0 0.0
    %2669 = vmatpush1.msra.mxu0 %v2553
    %2670 = vmatprep.subr.mxu0 0.0
    %2671 = vmatpush1.msra.mxu0 %v2554
    %2672 = vmatprep.subr.mxu0 0.0
    %2673 = vmatpush1.msra.mxu0 %v2555
    %2674 = vmatprep.subr.mxu0 0.0
    %2675 = vmatpush1.msra.mxu0 %v2556
    %2676 = vmatprep.subr.mxu0 0.0
    %2677 = vmatpush1.msra.mxu0 %v2557
    %2678 = vmatprep.subr.mxu0 0.0
    %2679 = vmatpush1.msra.mxu0 %v2558
    %2680 = vmatprep.subr.mxu0 0.0
    %2681 = vmatpush1.msra.mxu0 %v2559
    %2682 = vmatprep.subr.mxu0 0.0
    %2683 = vmatpush1.msra.mxu0 %v2560
    %2684 = vmatprep.subr.mxu0 0.0
    %2685 = vmatpush1.msra.mxu0 %v2561
    %2686 = vmatprep.subr.mxu0 0.0
    %2687 = vmatpush1.msra.mxu0 %v2562
    %2688 = vmatprep.subr.mxu0 0.0
    %2689 = vmatpush1.msra.mxu0 %v2563
    %2690 = vmatprep.subr.mxu0 0.0
    %2691 = vmatpush1.msra.mxu0 %v2564
    %2692 = vmatprep.subr.mxu0 0.0
    %2693 = vmatpush1.msra.mxu0 %v2565
    %2694 = vmatprep.subr.mxu0 0.0
    %2695 = vmatpush1.msra.mxu0 %v2566
    %2696 = vmatprep.subr.mxu0 0.0
    %2697 = vmatpush1.msra.mxu0 %v2567
    %2698 = vmatprep.subr.mxu0 0.0
    %2699 = vmatpush1.msra.mxu0 %v2568
    %2700 = vmatprep.subr.mxu0 0.0
    %2701 = vmatpush1.msra.mxu0 %v2569
    %2702 = vmatprep.subr.mxu0 0.0
    %2703 = vmatpush1.msra.mxu0 %v2570
    %2704 = vmatprep.subr.mxu0 0.0
    %2705 = vmatpush1.msra.mxu0 %v2571
    %2706 = vmatprep.mubr.f32.mxu0 %v2089
    %2707 = vmatmul.mubr.f32.gmra.mrb[0].mxu0 %v2088
    %v2708 = vpop.f32.mrb[0].mxu0
    %v2709 = vadd.f32 %v2639, %v2708
    %v2710 = vpop.f32.mrb[0].mxu0
    %2711 = vdwg.mxu0
    %v2712 = vmax.f32 %v2709, 0.0
    %v2713 = vmax.f32 %v2507, %v2712
    %v2714 = vld [vmem:[#allocation8 + $0x18] sm:$0xff]
    %v2715 = vld [vmem:[#allocation8 + $0x38] sm:$0xff]
    %v2716 = vld [vmem:[#allocation8 + $0x58] sm:$0xff]
    %v2717 = vld [vmem:[#allocation8 + $0x78] sm:$0xff]
    %v2718 = vld [vmem:[#allocation8 + $0x98] sm:$0xff]
    %v2719 = vld [vmem:[#allocation8 + $0xb8] sm:$0xff]
    %v2720 = vld [vmem:[#allocation8 + $0xd8] sm:$0xff]
    %v2721 = vld [vmem:[#allocation8 + $0xf8] sm:$0xff]
    %v2722 = vld [vmem:[#allocation8 + $0x118] sm:$0xff]
    %v2723 = vld [vmem:[#allocation8 + $0x138] sm:$0xff]
    %v2724 = vld [vmem:[#allocation8 + $0x158] sm:$0xff]
    %v2725 = vld [vmem:[#allocation8 + $0x178] sm:$0xff]
    %v2726 = vld [vmem:[#allocation8 + $0x198] sm:$0xff]
    %v2727 = vld [vmem:[#allocation8 + $0x1b8] sm:$0xff]
    %v2728 = vld [vmem:[#allocation8 + $0x1d8] sm:$0xff]
    %v2729 = vld [vmem:[#allocation8 + $0x1f8] sm:$0xff]
    %v2730 = vld [vmem:[#allocation8 + $0x218] sm:$0xff]
    %v2731 = vld [vmem:[#allocation8 + $0x238] sm:$0xff]
    %v2732 = vld [vmem:[#allocation8 + $0x258] sm:$0xff]
    %v2733 = vld [vmem:[#allocation8 + $0x278] sm:$0xff]
    %v2734 = vld [vmem:[#allocation8 + $0x298] sm:$0xff]
    %v2735 = vld [vmem:[#allocation8 + $0x2b8] sm:$0xff]
    %v2736 = vld [vmem:[#allocation8 + $0x2d8] sm:$0xff]
    %v2737 = vld [vmem:[#allocation8 + $0x2f8] sm:$0xff]
    %v2738 = vld [vmem:[#allocation8 + $0x318] sm:$0xff]
    %v2739 = vld [vmem:[#allocation8 + $0x338] sm:$0xff]
    %v2740 = vld [vmem:[#allocation8 + $0x358] sm:$0xff]
    %v2741 = vld [vmem:[#allocation8 + $0x378] sm:$0xff]
    %v2742 = vld [vmem:[#allocation8 + $0x398] sm:$0xff]
    %v2743 = vld [vmem:[#allocation8 + $0x3b8] sm:$0xff]
    %v2744 = vld [vmem:[#allocation8 + $0x3d8] sm:$0xff]
    %v2745 = vld [vmem:[#allocation8 + $0x3f8] sm:$0xff]
    %v2746 = vld [vmem:[#allocation8 + $0x418] sm:$0xff]
    %v2747 = vld [vmem:[#allocation8 + $0x438] sm:$0xff]
    %v2748 = vld [vmem:[#allocation8 + $0x458] sm:$0xff]
    %v2749 = vld [vmem:[#allocation8 + $0x478] sm:$0xff]
    %v2750 = vld [vmem:[#allocation8 + $0x498] sm:$0xff]
    %v2751 = vld [vmem:[#allocation8 + $0x4b8] sm:$0xff]
    %v2752 = vld [vmem:[#allocation8 + $0x4d8] sm:$0xff]
    %v2753 = vld [vmem:[#allocation8 + $0x4f8] sm:$0xff]
    %v2754 = vld [vmem:[#allocation8 + $0x518] sm:$0xff]
    %v2755 = vld [vmem:[#allocation8 + $0x538] sm:$0xff]
    %v2756 = vld [vmem:[#allocation8 + $0x558] sm:$0xff]
    %v2757 = vld [vmem:[#allocation8 + $0x578] sm:$0xff]
    %v2758 = vld [vmem:[#allocation8 + $0x598] sm:$0xff]
    %v2759 = vld [vmem:[#allocation8 + $0x5b8] sm:$0xff]
    %v2760 = vld [vmem:[#allocation8 + $0x5d8] sm:$0xff]
    %v2761 = vld [vmem:[#allocation8 + $0x5f8] sm:$0xff]
    %v2762 = vld [vmem:[#allocation8 + $0x618] sm:$0xff]
    %v2763 = vld [vmem:[#allocation8 + $0x638] sm:$0xff]
    %v2764 = vld [vmem:[#allocation8 + $0x658] sm:$0xff]
    %v2765 = vld [vmem:[#allocation8 + $0x678] sm:$0xff]
    %v2766 = vld [vmem:[#allocation8 + $0x698] sm:$0xff]
    %v2767 = vld [vmem:[#allocation8 + $0x6b8] sm:$0xff]
    %v2768 = vld [vmem:[#allocation8 + $0x6d8] sm:$0xff]
    %v2769 = vld [vmem:[#allocation8 + $0x6f8] sm:$0xff]
    %v2770 = vld [vmem:[#allocation8 + $0x718] sm:$0xff]
    %v2771 = vld [vmem:[#allocation8 + $0x738] sm:$0xff]
    %v2772 = vld [vmem:[#allocation8 + $0x758] sm:$0xff]
    %v2773 = vld [vmem:[#allocation8 + $0x778] sm:$0xff]
    %v2774 = vld [vmem:[#allocation8 + $0x798] sm:$0xff]
    %v2775 = vld [vmem:[#allocation8 + $0x7b8] sm:$0xff]
    %v2776 = vld [vmem:[#allocation8 + $0x7d8] sm:$0xff]
    %v2777 = vld [vmem:[#allocation8 + $0x7f8] sm:$0xff]
    %2778 = vmatprep.subr.mxu0 0.0
    %2779 = vmatpush1.msra.mxu0 %v2714
    %2780 = vmatprep.subr.mxu0 0.0
    %2781 = vmatpush1.msra.mxu0 %v2715
    %2782 = vmatprep.subr.mxu0 0.0
    %2783 = vmatpush1.msra.mxu0 %v2716
    %2784 = vmatprep.subr.mxu0 0.0
    %2785 = vmatpush1.msra.mxu0 %v2717
    %2786 = vmatprep.subr.mxu0 0.0
    %2787 = vmatpush1.msra.mxu0 %v2718
    %2788 = vmatprep.subr.mxu0 0.0
    %2789 = vmatpush1.msra.mxu0 %v2719
    %2790 = vmatprep.subr.mxu0 0.0
    %2791 = vmatpush1.msra.mxu0 %v2720
    %2792 = vmatprep.subr.mxu0 0.0
    %2793 = vmatpush1.msra.mxu0 %v2721
    %2794 = vmatprep.subr.mxu0 0.0
    %2795 = vmatpush1.msra.mxu0 %v2722
    %2796 = vmatprep.subr.mxu0 0.0
    %2797 = vmatpush1.msra.mxu0 %v2723
    %2798 = vmatprep.subr.mxu0 0.0
    %2799 = vmatpush1.msra.mxu0 %v2724
    %2800 = vmatprep.subr.mxu0 0.0
    %2801 = vmatpush1.msra.mxu0 %v2725
    %2802 = vmatprep.subr.mxu0 0.0
    %2803 = vmatpush1.msra.mxu0 %v2726
    %2804 = vmatprep.subr.mxu0 0.0
    %2805 = vmatpush1.msra.mxu0 %v2727
    %2806 = vmatprep.subr.mxu0 0.0
    %2807 = vmatpush1.msra.mxu0 %v2728
    %2808 = vmatprep.subr.mxu0 0.0
    %2809 = vmatpush1.msra.mxu0 %v2729
    %2810 = vmatprep.subr.mxu0 0.0
    %2811 = vmatpush1.msra.mxu0 %v2730
    %2812 = vmatprep.subr.mxu0 0.0
    %2813 = vmatpush1.msra.mxu0 %v2731
    %2814 = vmatprep.subr.mxu0 0.0
    %2815 = vmatpush1.msra.mxu0 %v2732
    %2816 = vmatprep.subr.mxu0 0.0
    %2817 = vmatpush1.msra.mxu0 %v2733
    %2818 = vmatprep.subr.mxu0 0.0
    %2819 = vmatpush1.msra.mxu0 %v2734
    %2820 = vmatprep.subr.mxu0 0.0
    %2821 = vmatpush1.msra.mxu0 %v2735
    %2822 = vmatprep.subr.mxu0 0.0
    %2823 = vmatpush1.msra.mxu0 %v2736
    %2824 = vmatprep.subr.mxu0 0.0
    %2825 = vmatpush1.msra.mxu0 %v2737
    %2826 = vmatprep.subr.mxu0 0.0
    %2827 = vmatpush1.msra.mxu0 %v2738
    %2828 = vmatprep.subr.mxu0 0.0
    %2829 = vmatpush1.msra.mxu0 %v2739
    %2830 = vmatprep.subr.mxu0 0.0
    %2831 = vmatpush1.msra.mxu0 %v2740
    %2832 = vmatprep.subr.mxu0 0.0
    %2833 = vmatpush1.msra.mxu0 %v2741
    %2834 = vmatprep.subr.mxu0 0.0
    %2835 = vmatpush1.msra.mxu0 %v2742
    %2836 = vmatprep.subr.mxu0 0.0
    %2837 = vmatpush1.msra.mxu0 %v2743
    %2838 = vmatprep.subr.mxu0 0.0
    %2839 = vmatpush1.msra.mxu0 %v2744
    %2840 = vmatprep.subr.mxu0 0.0
    %2841 = vmatpush1.msra.mxu0 %v2745
    %2842 = vmatprep.mubr.f32.mxu0 %v2087
    %2843 = vmatmul.mubr.f32.gmra.mrb[0].mxu0 %v2086
    %v2844 = vpop.f32.mrb[0].mxu0
    %v2845 = vadd.f32 %v2159, %v2844
    %v2846 = vpop.f32.mrb[0].mxu0
    %2847 = vdwg.mxu0
    %2848 = vmatprep.subr.mxu0 0.0
    %2849 = vmatpush1.msra.mxu0 %v2746
    %2850 = vmatprep.subr.mxu0 0.0
    %2851 = vmatpush1.msra.mxu0 %v2747
    %2852 = vmatprep.subr.mxu0 0.0
    %2853 = vmatpush1.msra.mxu0 %v2748
    %2854 = vmatprep.subr.mxu0 0.0
    %2855 = vmatpush1.msra.mxu0 %v2749
    %2856 = vmatprep.subr.mxu0 0.0
    %2857 = vmatpush1.msra.mxu0 %v2750
    %2858 = vmatprep.subr.mxu0 0.0
    %2859 = vmatpush1.msra.mxu0 %v2751
    %2860 = vmatprep.subr.mxu0 0.0
    %2861 = vmatpush1.msra.mxu0 %v2752
    %2862 = vmatprep.subr.mxu0 0.0
    %2863 = vmatpush1.msra.mxu0 %v2753
    %2864 = vmatprep.subr.mxu0 0.0
    %2865 = vmatpush1.msra.mxu0 %v2754
    %2866 = vmatprep.subr.mxu0 0.0
    %2867 = vmatpush1.msra.mxu0 %v2755
    %2868 = vmatprep.subr.mxu0 0.0
    %2869 = vmatpush1.msra.mxu0 %v2756
    %2870 = vmatprep.subr.mxu0 0.0
    %2871 = vmatpush1.msra.mxu0 %v2757
    %2872 = vmatprep.subr.mxu0 0.0
    %2873 = vmatpush1.msra.mxu0 %v2758
    %2874 = vmatprep.subr.mxu0 0.0
    %2875 = vmatpush1.msra.mxu0 %v2759
    %2876 = vmatprep.subr.mxu0 0.0
    %2877 = vmatpush1.msra.mxu0 %v2760
    %2878 = vmatprep.subr.mxu0 0.0
    %2879 = vmatpush1.msra.mxu0 %v2761
    %2880 = vmatprep.subr.mxu0 0.0
    %2881 = vmatpush1.msra.mxu0 %v2762
    %2882 = vmatprep.subr.mxu0 0.0
    %2883 = vmatpush1.msra.mxu0 %v2763
    %2884 = vmatprep.subr.mxu0 0.0
    %2885 = vmatpush1.msra.mxu0 %v2764
    %2886 = vmatprep.subr.mxu0 0.0
    %2887 = vmatpush1.msra.mxu0 %v2765
    %2888 = vmatprep.subr.mxu0 0.0
    %2889 = vmatpush1.msra.mxu0 %v2766
    %2890 = vmatprep.subr.mxu0 0.0
    %2891 = vmatpush1.msra.mxu0 %v2767
    %2892 = vmatprep.subr.mxu0 0.0
    %2893 = vmatpush1.msra.mxu0 %v2768
    %2894 = vmatprep.subr.mxu0 0.0
    %2895 = vmatpush1.msra.mxu0 %v2769
    %2896 = vmatprep.subr.mxu0 0.0
    %2897 = vmatpush1.msra.mxu0 %v2770
    %2898 = vmatprep.subr.mxu0 0.0
    %2899 = vmatpush1.msra.mxu0 %v2771
    %2900 = vmatprep.subr.mxu0 0.0
    %2901 = vmatpush1.msra.mxu0 %v2772
    %2902 = vmatprep.subr.mxu0 0.0
    %2903 = vmatpush1.msra.mxu0 %v2773
    %2904 = vmatprep.subr.mxu0 0.0
    %2905 = vmatpush1.msra.mxu0 %v2774
    %2906 = vmatprep.subr.mxu0 0.0
    %2907 = vmatpush1.msra.mxu0 %v2775
    %2908 = vmatprep.subr.mxu0 0.0
    %2909 = vmatpush1.msra.mxu0 %v2776
    %2910 = vmatprep.subr.mxu0 0.0
    %2911 = vmatpush1.msra.mxu0 %v2777
    %2912 = vmatprep.mubr.f32.mxu0 %v2089
    %2913 = vmatmul.mubr.f32.gmra.mrb[0].mxu0 %v2088
    %v2914 = vpop.f32.mrb[0].mxu0
    %v2915 = vadd.f32 %v2845, %v2914
    %v2916 = vpop.f32.mrb[0].mxu0
    %2917 = vdwg.mxu0
    %v2918 = vmax.f32 %v2915, 0.0
    %v2919 = vmax.f32 %v2713, %v2918
    %v2920 = vld [vmem:[#allocation11] sm:$0xff]
    %v2921 = vld [vmem:[#allocation11 + $0x8] sm:$0xff]
    %v2922 = vld [vmem:[#allocation11 + $0x10] sm:$0xff]
    %v2923 = vld [vmem:[#allocation11 + $0x18] sm:$0xff]
    %v2924 = vld [vmem:[#allocation11 + $0x20] sm:$0xff]
    %v2925 = vld [vmem:[#allocation11 + $0x28] sm:$0xff]
    %v2926 = vld [vmem:[#allocation11 + $0x30] sm:$0xff]
    %v2927 = vld [vmem:[#allocation11 + $0x38] sm:$0xff]
    %v2928 = vld [vmem:[#allocation11 + $0x40] sm:$0xff]
    %v2929 = vld [vmem:[#allocation11 + $0x48] sm:$0xff]
    %v2930 = vld [vmem:[#allocation11 + $0x50] sm:$0xff]
    %v2931 = vld [vmem:[#allocation11 + $0x58] sm:$0xff]
    %v2932 = vld [vmem:[#allocation11 + $0x60] sm:$0xff]
    %v2933 = vld [vmem:[#allocation11 + $0x68] sm:$0xff]
    %v2934 = vld [vmem:[#allocation11 + $0x70] sm:$0xff]
    %v2935 = vld [vmem:[#allocation11 + $0x78] sm:$0xff]
    %v2936 = vld [vmem:[#allocation13] sm:$0x1]
    %v2938 = vlaneseq
    %v2939 = vshrl.u32 %v2938, 7
    %v2940 = vsub.s32 0, %v2939
    %v2941 = vrot.slane %v2936, %v2940
    %2943 = vmatprep.subr.mxu0 0.0
    %2944 = vmatpush1.msra.mxu0 %v2920
    %2945 = vmatprep.subr.mxu0 0.0
    %2946 = vmatpush1.msra.mxu0 %v2921
    %2947 = vmatprep.subr.mxu0 0.0
    %2948 = vmatpush1.msra.mxu0 %v2922
    %2949 = vmatprep.subr.mxu0 0.0
    %2950 = vmatpush1.msra.mxu0 %v2923
    %2951 = vmatprep.subr.mxu0 0.0
    %2952 = vmatpush1.msra.mxu0 %v2924
    %2953 = vmatprep.subr.mxu0 0.0
    %2954 = vmatpush1.msra.mxu0 %v2925
    %2955 = vmatprep.subr.mxu0 0.0
    %2956 = vmatpush1.msra.mxu0 %v2926
    %2957 = vmatprep.subr.mxu0 0.0
    %2958 = vmatpush1.msra.mxu0 %v2927
    %2959 = vmatprep.subr.mxu0 0.0
    %2960 = vmatpush1.msra.mxu0 %v2928
    %2961 = vmatprep.subr.mxu0 0.0
    %2962 = vmatpush1.msra.mxu0 %v2929
    %2963 = vmatprep.subr.mxu0 0.0
    %2964 = vmatpush1.msra.mxu0 %v2930
    %2965 = vmatprep.subr.mxu0 0.0
    %2966 = vmatpush1.msra.mxu0 %v2931
    %2967 = vmatprep.subr.mxu0 0.0
    %2968 = vmatpush1.msra.mxu0 %v2932
    %2969 = vmatprep.subr.mxu0 0.0
    %2970 = vmatpush1.msra.mxu0 %v2933
    %2971 = vmatprep.subr.mxu0 0.0
    %2972 = vmatpush1.msra.mxu0 %v2934
    %2973 = vmatprep.subr.mxu0 0.0
    %2974 = vmatpush1.msra.mxu0 %v2935
    %2975 = vmatprep.subr.mxu0 0.0
    %2976 = vmatpush1.msra.mxu0 0.0
    %2977 = vmatprep.subr.mxu0 0.0
    %2978 = vmatpush1.msra.mxu0 0.0
    %2979 = vmatprep.subr.mxu0 0.0
    %2980 = vmatpush1.msra.mxu0 0.0
    %2981 = vmatprep.subr.mxu0 0.0
    %2982 = vmatpush1.msra.mxu0 0.0
    %2983 = vmatprep.subr.mxu0 0.0
    %2984 = vmatpush1.msra.mxu0 0.0
    %2985 = vmatprep.subr.mxu0 0.0
    %2986 = vmatpush1.msra.mxu0 0.0
    %2987 = vmatprep.subr.mxu0 0.0
    %2988 = vmatpush1.msra.mxu0 0.0
    %2989 = vmatprep.subr.mxu0 0.0
    %2990 = vmatpush1.msra.mxu0 0.0
    %2991 = vmatprep.subr.mxu0 0.0
    %2992 = vmatpush1.msra.mxu0 0.0
    %2993 = vmatprep.subr.mxu0 0.0
    %2994 = vmatpush1.msra.mxu0 0.0
    %2995 = vmatprep.subr.mxu0 0.0
    %2996 = vmatpush1.msra.mxu0 0.0
    %2997 = vmatprep.subr.mxu0 0.0
    %2998 = vmatpush1.msra.mxu0 0.0
    %2999 = vmatprep.subr.mxu0 0.0
    %3000 = vmatpush1.msra.mxu0 0.0
    %3001 = vmatprep.subr.mxu0 0.0
    %3002 = vmatpush1.msra.mxu0 0.0
    %3003 = vmatprep.subr.mxu0 0.0
    %3004 = vmatpush1.msra.mxu0 0.0
    %3005 = vmatprep.subr.mxu0 0.0
    %3006 = vmatpush1.msra.mxu0 0.0
    %3007 = vmatprep.mubr.f32.mxu0 0.0
    %3008 = vmatmul.mubr.f32.gmra.mrb[0].mxu0 %v2919
    %v3009 = vpop.f32.mrb[0].mxu0
    %v3010 = vadd.f32 %v2941, %v3009
    %v3011 = vpop.f32.mrb[0].mxu0
    %3012 = vdwg.mxu0
    %v3013 = vmax.f32 %v3010, 0.0
    %v3014 = vld [vmem:[#allocation14] sm:$0xff]
    %v3015 = vld [vmem:[#allocation14 + $0x8] sm:$0xff]
    %v3016 = vld [vmem:[#allocation14 + $0x10] sm:$0xff]
    %v3017 = vld [vmem:[#allocation14 + $0x18] sm:$0xff]
    %v3018 = vld [vmem:[#allocation14 + $0x20] sm:$0xff]
    %v3019 = vld [vmem:[#allocation14 + $0x28] sm:$0xff]
    %v3020 = vld [vmem:[#allocation14 + $0x30] sm:$0xff]
    %v3021 = vld [vmem:[#allocation14 + $0x38] sm:$0xff]
    %v3022 = vld [vmem:[#allocation14 + $0x40] sm:$0xff]
    %v3023 = vld [vmem:[#allocation14 + $0x48] sm:$0xff]
    %v3024 = vld [vmem:[#allocation14 + $0x50] sm:$0xff]
    %v3025 = vld [vmem:[#allocation14 + $0x58] sm:$0xff]
    %v3026 = vld [vmem:[#allocation14 + $0x60] sm:$0xff]
    %v3027 = vld [vmem:[#allocation14 + $0x68] sm:$0xff]
    %v3028 = vld [vmem:[#allocation14 + $0x70] sm:$0xff]
    %v3029 = vld [vmem:[#allocation14 + $0x78] sm:$0xff]
    %v3030 = vld [vmem:[#allocation16] sm:$0x1]
    %v3032 = vlaneseq
    %v3033 = vshrl.u32 %v3032, 7
    %v3034 = vsub.s32 0, %v3033
    %v3035 = vrot.slane %v3030, %v3034
    %3037 = vmatprep.subr.mxu0 0.0
    %3038 = vmatpush1.msra.mxu0 %v3014
    %3039 = vmatprep.subr.mxu0 0.0
    %3040 = vmatpush1.msra.mxu0 %v3015
    %3041 = vmatprep.subr.mxu0 0.0
    %3042 = vmatpush1.msra.mxu0 %v3016
    %3043 = vmatprep.subr.mxu0 0.0
    %3044 = vmatpush1.msra.mxu0 %v3017
    %3045 = vmatprep.subr.mxu0 0.0
    %3046 = vmatpush1.msra.mxu0 %v3018
    %3047 = vmatprep.subr.mxu0 0.0
    %3048 = vmatpush1.msra.mxu0 %v3019
    %3049 = vmatprep.subr.mxu0 0.0
    %3050 = vmatpush1.msra.mxu0 %v3020
    %3051 = vmatprep.subr.mxu0 0.0
    %3052 = vmatpush1.msra.mxu0 %v3021
    %3053 = vmatprep.subr.mxu0 0.0
    %3054 = vmatpush1.msra.mxu0 %v3022
    %3055 = vmatprep.subr.mxu0 0.0
    %3056 = vmatpush1.msra.mxu0 %v3023
    %3057 = vmatprep.subr.mxu0 0.0
    %3058 = vmatpush1.msra.mxu0 %v3024
    %3059 = vmatprep.subr.mxu0 0.0
    %3060 = vmatpush1.msra.mxu0 %v3025
    %3061 = vmatprep.subr.mxu0 0.0
    %3062 = vmatpush1.msra.mxu0 %v3026
    %3063 = vmatprep.subr.mxu0 0.0
    %3064 = vmatpush1.msra.mxu0 %v3027
    %3065 = vmatprep.subr.mxu0 0.0
    %3066 = vmatpush1.msra.mxu0 %v3028
    %3067 = vmatprep.subr.mxu0 0.0
    %3068 = vmatpush1.msra.mxu0 %v3029
    %3069 = vmatprep.subr.mxu0 0.0
    %3070 = vmatpush1.msra.mxu0 0.0
    %3071 = vmatprep.subr.mxu0 0.0
    %3072 = vmatpush1.msra.mxu0 0.0
    %3073 = vmatprep.subr.mxu0 0.0
    %3074 = vmatpush1.msra.mxu0 0.0
    %3075 = vmatprep.subr.mxu0 0.0
    %3076 = vmatpush1.msra.mxu0 0.0
    %3077 = vmatprep.subr.mxu0 0.0
    %3078 = vmatpush1.msra.mxu0 0.0
    %3079 = vmatprep.subr.mxu0 0.0
    %3080 = vmatpush1.msra.mxu0 0.0
    %3081 = vmatprep.subr.mxu0 0.0
    %3082 = vmatpush1.msra.mxu0 0.0
    %3083 = vmatprep.subr.mxu0 0.0
    %3084 = vmatpush1.msra.mxu0 0.0
    %3085 = vmatprep.subr.mxu0 0.0
    %3086 = vmatpush1.msra.mxu0 0.0
    %3087 = vmatprep.subr.mxu0 0.0
    %3088 = vmatpush1.msra.mxu0 0.0
    %3089 = vmatprep.subr.mxu0 0.0
    %3090 = vmatpush1.msra.mxu0 0.0
    %3091 = vmatprep.subr.mxu0 0.0
    %3092 = vmatpush1.msra.mxu0 0.0
    %3093 = vmatprep.subr.mxu0 0.0
    %3094 = vmatpush1.msra.mxu0 0.0
    %3095 = vmatprep.subr.mxu0 0.0
    %3096 = vmatpush1.msra.mxu0 0.0
    %3097 = vmatprep.subr.mxu0 0.0
    %3098 = vmatpush1.msra.mxu0 0.0
    %3099 = vmatprep.subr.mxu0 0.0
    %3100 = vmatpush1.msra.mxu0 0.0
    %3101 = vmatprep.mubr.f32.mxu0 0.0
    %3102 = vmatmul.mubr.f32.gmra.mrb[0].mxu0 %v3013
    %v3103 = vpop.f32.mrb[0].mxu0
    %v3104 = vadd.f32 %v3035, %v3103
    %v3105 = vpop.f32.mrb[0].mxu0
    %3106 = vdwg.mxu0
    %3107 = vst [vmem:[#allocation17] sm:$0xff] %v3104
    // Predicated region
    $region74: #{tpu_custom_call.1} parent=1 // pred_check
      _
    $region75: #{tpu_custom_call.1} parent=1 // pred_check_branch
      %3109 = sbr.rel (0) target = $region77
    $region76: #{tpu_custom_call.1} parent=1 // pred_region
      %s3111 = ssub.s32 128, 128
      %3112 = vsyncadd [#allocation4], %s3111
      %s3114 = sshll.u32 [#allocation17], 4
      %s3115 = int_to_ptr.vmem [resolvable:$true] %s3114
      %3117 = dma.vmem_to_hbm [thread:$0]  %s3115, 128, %s9, [#allocation4]
    $region77: #{tpu_custom_call.1} parent=1 // pred_fallthru
      _
    // Predicated region
    $region78: #{tpu_custom_call.1} parent=1 // pred_check
      _
    $region79: #{tpu_custom_call.1} parent=1 // pred_check_branch
      %3119 = sbr.rel (0) target = $region81
    $region80: #{tpu_custom_call.1} parent=1 // pred_region
      %3120 = dma.done [#allocation4], 128
    $region81: #{tpu_custom_call.1} parent=1 // pred_fallthru
      _
    %3121 = vsyncpa [#allocation3], 1
    %3122 = vsyncpa [#allocation6], 1
    %3123 = vsyncpa [#allocation9], 1
    %3124 = vsyncpa [#allocation12], 1
    %3125 = vsyncpa [#allocation15], 1
    %3126 = vsyncpa [#allocation4], 1

// kernel: tpu_custom_call.1
$region0: #{tpu_custom_call.1}
  #allocation0 [shape = 'u32[]', space=smem, size = 0x4, offset = 0x4, fixed_abs, tag = 'smem constant byte address 0x4 - core index']
  #allocation1 [shape = 'u32[144,128]{1,0:T(1,128)}', space=vmem, size = 0x12000, scoped, tag = 'internal scratch']
  %s0 = inlined_call_operand.hbm [shape: f32[8,128], index: 0, kind: input, shape index: {}]
  %s1 = inlined_call_operand.hbm [shape: f32[128,4608], index: 1, kind: input, shape index: {}]
  %s2 = inlined_call_operand.hbm [shape: f32[1,512], index: 2, kind: input, shape index: {}]
  %s3 = inlined_call_operand.hbm [shape: f32[512,512], index: 3, kind: input, shape index: {}]
  %s4 = inlined_call_operand.hbm [shape: f32[1,128], index: 4, kind: input, shape index: {}]
  %s5 = inlined_call_operand.hbm [shape: f32[128,128], index: 5, kind: input, shape index: {}]
  %s6 = inlined_call_operand.hbm [shape: f32[1,128], index: 6, kind: input, shape index: {}]
  %s7 = inlined_call_operand.hbm [shape: f32[128,128], index: 7, kind: input, shape index: {}]
  %s8 = inlined_call_operand.hbm [shape: f32[1,128], index: 8, kind: input, shape index: {}]
  %s9 = inlined_call_operand.hbm [shape: f32[8,128], index: 9, kind: output, shape index: {}]
  %s10 = sld [smem:[#allocation0]]
  $region82: #{tpu_custom_call.1} parent=0
    _
  %s12 = ssub.s32 1, %s10
  %s13 = scalar_select 0, %s12, %s10
  $region1: #{tpu_custom_call.1} parent=0
    #allocation2 [shape = 'u8[4096]{0}', space=vmem, size = 0x1000, scoped, tag = 'input window, operand 0, single buffered']
    #allocation3 [shape = 's32[1]{0}', space=sflag, size = 0x4, scoped, tag = 'scoped memory for tpu_custom_call.1']
    #allocation4 [shape = 's32[1]{0}', space=sflag, size = 0x4, scoped, tag = 'scoped memory for tpu_custom_call.1']
    #allocation5 [shape = 'u8[2359296]{0}', space=vmem, size = 0x240000, scoped, tag = 'input window, operand 1, single buffered']
    #allocation6 [shape = 's32[1]{0}', space=sflag, size = 0x4, scoped, tag = 'scoped memory for tpu_custom_call.1']
    #allocation7 [shape = 'u8[2048]{0}', space=vmem, size = 0x800, scoped, tag = 'input window, operand 2, single buffered']
    #allocation8 [shape = 'u8[1048576]{0}', space=vmem, size = 0x100000, scoped, tag = 'input window, operand 3, single buffered']
    #allocation9 [shape = 's32[1]{0}', space=sflag, size = 0x4, scoped, tag = 'scoped memory for tpu_custom_call.1']
    #allocation10 [shape = 'u8[512]{0}', space=vmem, size = 0x400, scoped, tag = 'input window, operand 4, single buffered']
    #allocation11 [shape = 'u8[65536]{0}', space=vmem, size = 0x10000, scoped, tag = 'input window, operand 5, single buffered']
    #allocation12 [shape = 's32[1]{0}', space=sflag, size = 0x4, scoped, tag = 'scoped memory for tpu_custom_call.1']
    #allocation13 [shape = 'u8[512]{0}', space=vmem, size = 0x400, scoped, tag = 'input window, operand 6, single buffered']
    #allocation14 [shape = 'u8[65536]{0}', space=vmem, size = 0x10000, scoped, tag = 'input window, operand 7, single buffered']
    #allocation15 [shape = 's32[1]{0}', space=sflag, size = 0x4, scoped, tag = 'scoped memory for tpu_custom_call.1']
    #allocation16 [shape = 'u8[512]{0}', space=vmem, size = 0x400, scoped, tag = 'input window, operand 8, single buffered']
    #allocation17 [shape = 'u8[4096]{0}', space=vmem, size = 0x1000, scoped, tag = 'output window, operand 0, single buffered']
    %14 = vsyncpa [#allocation3], 0
    %15 = vsyncpa [#allocation6], 0
    %16 = vsyncpa [#allocation9], 0
    %17 = vsyncpa [#allocation12], 0
    %18 = vsyncpa [#allocation15], 0
    %19 = vsyncpa [#allocation4], 0
    // Predicated region
    $region2: #{tpu_custom_call.1} parent=1 // pred_check
      _
    $region3: #{tpu_custom_call.1} parent=1 // pred_check_branch
      %21 = sbr.rel (0) target = $region5
    $region4: #{tpu_custom_call.1} parent=1 // pred_region
      %s23 = ssub.s32 128, 128
      %24 = vsyncadd [#allocation3], %s23
      %s26 = sshll.u32 [#allocation2], 4
      %s27 = int_to_ptr.vmem [resolvable:$true] %s26
      %29 = dma.hbm_to_vmem [thread:$0]  %s0, 128, %s27, [#allocation3]
    $region5: #{tpu_custom_call.1} parent=1 // pred_fallthru
      _
    // Predicated region
    $region6: #{tpu_custom_call.1} parent=1 // pred_check
      _
    $region7: #{tpu_custom_call.1} parent=1 // pred_check_branch
      %31 = sbr.rel (0) target = $region9
    $region8: #{tpu_custom_call.1} parent=1 // pred_region
      %s33 = ssub.s32 73728, 73728
      %34 = vsyncadd [#allocation6], %s33
      %s35 = sshll.u32 [#allocation5], 4
      %s36 = int_to_ptr.vmem [resolvable:$true] %s35
      %41 = dma.hbm_to_vmem [thread:$0]  %s1, 73728, %s36, [#allocation6], 4608, 4608, 288
    $region9: #{tpu_custom_call.1} parent=1 // pred_fallthru
      _
    // Predicated region
    $region10: #{tpu_custom_call.1} parent=1 // pred_check
      _
    $region11: #{tpu_custom_call.1} parent=1 // pred_check_branch
      %43 = sbr.rel (0) target = $region13
    $region12: #{tpu_custom_call.1} parent=1 // pred_region
      %s45 = ssub.s32 64, 64
      %46 = vsyncadd [#allocation6], %s45
      %s48 = sshll.u32 [#allocation7], 4
      %s49 = int_to_ptr.vmem [resolvable:$true] %s48
      %51 = dma.hbm_to_vmem [thread:$0]  %s2, 64, %s49, [#allocation6]
    $region13: #{tpu_custom_call.1} parent=1 // pred_fallthru
      _
    // Predicated region
    $region14: #{tpu_custom_call.1} parent=1 // pred_check
      _
    $region15: #{tpu_custom_call.1} parent=1 // pred_check_branch
      %53 = sbr.rel (0) target = $region17
    $region16: #{tpu_custom_call.1} parent=1 // pred_region
      %s55 = ssub.s32 32768, 32768
      %56 = vsyncadd [#allocation9], %s55
      %s57 = sshll.u32 [#allocation8], 4
      %s58 = int_to_ptr.vmem [resolvable:$true] %s57
      %63 = dma.hbm_to_vmem [thread:$0]  %s3, 32768, %s58, [#allocation9], 512, 512, 32
    $region17: #{tpu_custom_call.1} parent=1 // pred_fallthru
      _
    // Predicated region
    $region18: #{tpu_custom_call.1} parent=1 // pred_check
      _
    $region19: #{tpu_custom_call.1} parent=1 // pred_check_branch
      %65 = sbr.rel (0) target = $region21
    $region20: #{tpu_custom_call.1} parent=1 // pred_region
      %s67 = ssub.s32 16, 16
      %68 = vsyncadd [#allocation9], %s67
      %s70 = sshll.u32 [#allocation10], 4
      %s71 = int_to_ptr.vmem [resolvable:$true] %s70
      %73 = dma.hbm_to_vmem [thread:$0]  %s4, 16, %s71, [#allocation9]
    $region21: #{tpu_custom_call.1} parent=1 // pred_fallthru
      _
    // Predicated region
    $region22: #{tpu_custom_call.1} parent=1 // pred_check
      _
    $region23: #{tpu_custom_call.1} parent=1 // pred_check_branch
      %75 = sbr.rel (0) target = $region25
    $region24: #{tpu_custom_call.1} parent=1 // pred_region
      %s77 = ssub.s32 2048, 2048
      %78 = vsyncadd [#allocation12], %s77
      %s79 = sshll.u32 [#allocation11], 4
      %s80 = int_to_ptr.vmem [resolvable:$true] %s79
      %85 = dma.hbm_to_vmem [thread:$0]  %s5, 2048, %s80, [#allocation12], 128, 128, 8
    $region25: #{tpu_custom_call.1} parent=1 // pred_fallthru
      _
    // Predicated region
    $region26: #{tpu_custom_call.1} parent=1 // pred_check
      _
    $region27: #{tpu_custom_call.1} parent=1 // pred_check_branch
      %87 = sbr.rel (0) target = $region29
    $region28: #{tpu_custom_call.1} parent=1 // pred_region
      %s89 = ssub.s32 16, 16
      %90 = vsyncadd [#allocation12], %s89
      %s92 = sshll.u32 [#allocation13], 4
      %s93 = int_to_ptr.vmem [resolvable:$true] %s92
      %95 = dma.hbm_to_vmem [thread:$0]  %s6, 16, %s93, [#allocation12]
    $region29: #{tpu_custom_call.1} parent=1 // pred_fallthru
      _
    // Predicated region
    $region30: #{tpu_custom_call.1} parent=1 // pred_check
      _
    $region31: #{tpu_custom_call.1} parent=1 // pred_check_branch
      %97 = sbr.rel (0) target = $region33
    $region32: #{tpu_custom_call.1} parent=1 // pred_region
      %s99 = ssub.s32 2048, 2048
      %100 = vsyncadd [#allocation15], %s99
      %s101 = sshll.u32 [#allocation14], 4
      %s102 = int_to_ptr.vmem [resolvable:$true] %s101
      %107 = dma.hbm_to_vmem [thread:$0]  %s7, 2048, %s102, [#allocation15], 128, 128, 8
    $region33: #{tpu_custom_call.1} parent=1 // pred_fallthru
      _
    // Predicated region
    $region34: #{tpu_custom_call.1} parent=1 // pred_check
      _
    $region35: #{tpu_custom_call.1} parent=1 // pred_check_branch
      %109 = sbr.rel (0) target = $region37
    $region36: #{tpu_custom_call.1} parent=1 // pred_region
      %s111 = ssub.s32 16, 16
      %112 = vsyncadd [#allocation15], %s111
      %s114 = sshll.u32 [#allocation16], 4
      %s115 = int_to_ptr.vmem [resolvable:$true] %s114
      %117 = dma.hbm_to_vmem [thread:$0]  %s8, 16, %s115, [#allocation15]
    $region37: #{tpu_custom_call.1} parent=1 // pred_fallthru
      _
    // Predicated region
    $region38: #{tpu_custom_call.1} parent=1 // pred_check
      _
    $region39: #{tpu_custom_call.1} parent=1 // pred_check_branch
      %119 = sbr.rel (0) target = $region41
    $region40: #{tpu_custom_call.1} parent=1 // pred_region
      %120 = dma.done [#allocation3], 128
    $region41: #{tpu_custom_call.1} parent=1 // pred_fallthru
      _
    // Predicated region
    $region42: #{tpu_custom_call.1} parent=1 // pred_check
      _
    $region43: #{tpu_custom_call.1} parent=1 // pred_check_branch
      %122 = sbr.rel (0) target = $region45
    $region44: #{tpu_custom_call.1} parent=1 // pred_region
      %123 = dma.done [#allocation6], 73728
    $region45: #{tpu_custom_call.1} parent=1 // pred_fallthru
      _
    // Predicated region
    $region46: #{tpu_custom_call.1} parent=1 // pred_check
      _
    $region47: #{tpu_custom_call.1} parent=1 // pred_check_branch
      %125 = sbr.rel (0) target = $region49
    $region48: #{tpu_custom_call.1} parent=1 // pred_region
      %126 = dma.done [#allocation6], 64
    $region49: #{tpu_custom_call.1} parent=1 // pred_fallthru
      _
    // Predicated region
    $region50: #{tpu_custom_call.1} parent=1 // pred_check
      _
    $region51: #{tpu_custom_call.1} parent=1 // pred_check_branch
      %128 = sbr.rel (0) target = $region53
    $region52: #{tpu_custom_call.1} parent=1 // pred_region
      %129 = dma.done [#allocation9], 32768
    $region53: #{tpu_custom_call.1} parent=1 // pred_fallthru
      _
    // Predicated region
    $region54: #{tpu_custom_call.1} parent=1 // pred_check
      _
    $region55: #{tpu_custom_call.1} parent=1 // pred_check_branch
      %131 = sbr.rel (0) target = $region57
    $region56: #{tpu_custom_call.1} parent=1 // pred_region
      %132 = dma.done [#allocation9], 16
    $region57: #{tpu_custom_call.1} parent=1 // pred_fallthru
      _
    // Predicated region
    $region58: #{tpu_custom_call.1} parent=1 // pred_check
      _
    $region59: #{tpu_custom_call.1} parent=1 // pred_check_branch
      %134 = sbr.rel (0) target = $region61
    $region60: #{tpu_custom_call.1} parent=1 // pred_region
      %135 = dma.done [#allocation12], 2048
    $region61: #{tpu_custom_call.1} parent=1 // pred_fallthru
      _
    // Predicated region
    $region62: #{tpu_custom_call.1} parent=1 // pred_check
      _
    $region63: #{tpu_custom_call.1} parent=1 // pred_check_branch
      %137 = sbr.rel (0) target = $region65
    $region64: #{tpu_custom_call.1} parent=1 // pred_region
      %138 = dma.done [#allocation12], 16
    $region65: #{tpu_custom_call.1} parent=1 // pred_fallthru
      _
    // Predicated region
    $region66: #{tpu_custom_call.1} parent=1 // pred_check
      _
    $region67: #{tpu_custom_call.1} parent=1 // pred_check_branch
      %140 = sbr.rel (0) target = $region69
    $region68: #{tpu_custom_call.1} parent=1 // pred_region
      %141 = dma.done [#allocation15], 2048
    $region69: #{tpu_custom_call.1} parent=1 // pred_fallthru
      _
    // Predicated region
    $region70: #{tpu_custom_call.1} parent=1 // pred_check
      _
    $region71: #{tpu_custom_call.1} parent=1 // pred_check_branch
      %143 = sbr.rel (0) target = $region73
    $region72: #{tpu_custom_call.1} parent=1 // pred_region
      %144 = dma.done [#allocation15], 16
    $region73: #{tpu_custom_call.1} parent=1 // pred_fallthru
      _
    %v145 = vld [vmem:[#allocation2] sm:$0xff]
    %v146 = vld [vmem:[#allocation7] sm:$0xf]
    %v147 = vld [vmem:[#allocation5] sm:$0xff]
    %v148 = vld [vmem:[#allocation5 + $0x8] sm:$0xff]
    %v149 = vld [vmem:[#allocation5 + $0x10] sm:$0xff]
    %v150 = vld [vmem:[#allocation5 + $0x18] sm:$0xff]
    %v151 = vld [vmem:[#allocation5 + $0x120] sm:$0xff]
    %v152 = vld [vmem:[#allocation5 + $0x128] sm:$0xff]
    %v153 = vld [vmem:[#allocation5 + $0x130] sm:$0xff]
    %v154 = vld [vmem:[#allocation5 + $0x138] sm:$0xff]
    %v155 = vld [vmem:[#allocation5 + $0x240] sm:$0xff]
    %v156 = vld [vmem:[#allocation5 + $0x248] sm:$0xff]
    %v157 = vld [vmem:[#allocation5 + $0x250] sm:$0xff]
    %v158 = vld [vmem:[#allocation5 + $0x258] sm:$0xff]
    %v159 = vld [vmem:[#allocation5 + $0x360] sm:$0xff]
    %v160 = vld [vmem:[#allocation5 + $0x368] sm:$0xff]
    %v161 = vld [vmem:[#allocation5 + $0x370] sm:$0xff]
    %v162 = vld [vmem:[#allocation5 + $0x378] sm:$0xff]
    %v163 = vld [vmem:[#allocation5 + $0x480] sm:$0xff]
    %v164 = vld [vmem:[#allocation5 + $0x488] sm:$0xff]
    %v165 = vld [vmem:[#allocation5 + $0x490] sm:$0xff]
    %v166 = vld [vmem:[#allocation5 + $0x498] sm:$0xff]
    %v167 = vld [vmem:[#allocation5 + $0x5a0] sm:$0xff]
    %v168 = vld [vmem:[#allocation5 + $0x5a8] sm:$0xff]
    %v169 = vld [vmem:[#allocation5 + $0x5b0] sm:$0xff]
    %v170 = vld [vmem:[#allocation5 + $0x5b8] sm:$0xff]
    %v171 = vld [vmem:[#allocation5 + $0x6c0] sm:$0xff]
    %v172 = vld [vmem:[#allocation5 + $0x6c8] sm:$0xff]
    %v173 = vld [vmem:[#allocation5 + $0x6d0] sm:$0xff]
    %v174 = vld [vmem:[#allocation5 + $0x6d8] sm:$0xff]
    %v175 = vld [vmem:[#allocation5 + $0x7e0] sm:$0xff]
    %v176 = vld [vmem:[#allocation5 + $0x7e8] sm:$0xff]
    %v177 = vld [vmem:[#allocation5 + $0x7f0] sm:$0xff]
    %v178 = vld [vmem:[#allocation5 + $0x7f8] sm:$0xff]
    %v179 = vld [vmem:[#allocation5 + $0x900] sm:$0xff]
    %v180 = vld [vmem:[#allocation5 + $0x908] sm:$0xff]
    %v181 = vld [vmem:[#allocation5 + $0x910] sm:$0xff]
    %v182 = vld [vmem:[#allocation5 + $0x918] sm:$0xff]
    %v183 = vld [vmem:[#allocation5 + $0xa20] sm:$0xff]
    %v184 = vld [vmem:[#allocation5 + $0xa28] sm:$0xff]
    %v185 = vld [vmem:[#allocation5 + $0xa30] sm:$0xff]
    %v186 = vld [vmem:[#allocation5 + $0xa38] sm:$0xff]
    %v187 = vld [vmem:[#allocation5 + $0xb40] sm:$0xff]
    %v188 = vld [vmem:[#allocation5 + $0xb48] sm:$0xff]
    %v189 = vld [vmem:[#allocation5 + $0xb50] sm:$0xff]
    %v190 = vld [vmem:[#allocation5 + $0xb58] sm:$0xff]
    %v191 = vld [vmem:[#allocation5 + $0xc60] sm:$0xff]
    %v192 = vld [vmem:[#allocation5 + $0xc68] sm:$0xff]
    %v193 = vld [vmem:[#allocation5 + $0xc70] sm:$0xff]
    %v194 = vld [vmem:[#allocation5 + $0xc78] sm:$0xff]
    %v195 = vld [vmem:[#allocation5 + $0xd80] sm:$0xff]
    %v196 = vld [vmem:[#allocation5 + $0xd88] sm:$0xff]
    %v197 = vld [vmem:[#allocation5 + $0xd90] sm:$0xff]
    %v198 = vld [vmem:[#allocation5 + $0xd98] sm:$0xff]
    %v199 = vld [vmem:[#allocation5 + $0xea0] sm:$0xff]
    %v200 = vld [vmem:[#allocation5 + $0xea8] sm:$0xff]
    %v201 = vld [vmem:[#allocation5 + $0xeb0] sm:$0xff]
    %v202 = vld [vmem:[#allocation5 + $0xeb8] sm:$0xff]
    %v203 = vld [vmem:[#allocation5 + $0xfc0] sm:$0xff]
    %v204 = vld [vmem:[#allocation5 + $0xfc8] sm:$0xff]
    %v205 = vld [vmem:[#allocation5 + $0xfd0] sm:$0xff]
    %v206 = vld [vmem:[#allocation5 + $0xfd8] sm:$0xff]
    %v207 = vld [vmem:[#allocation5 + $0x10e0] sm:$0xff]
    %v208 = vld [vmem:[#allocation5 + $0x10e8] sm:$0xff]
    %v209 = vld [vmem:[#allocation5 + $0x10f0] sm:$0xff]
    %v210 = vld [vmem:[#allocation5 + $0x10f8] sm:$0xff]
    %v212 = vlaneseq
    %v213 = vshrl.u32 %v212, 7
    %v214 = vsub.s32 0, %v213
    %v215 = vrot.slane %v146, %v214
    %v216 = vlaneseq
    %v217 = vshrl.u32 %v216, 7
    %v218 = vsub.s32 1, %v217
    %v219 = vrot.slane %v146, %v218
    %v220 = vlaneseq
    %v221 = vshrl.u32 %v220, 7
    %v222 = vsub.s32 2, %v221
    %v223 = vrot.slane %v146, %v222
    %v224 = vlaneseq
    %v225 = vshrl.u32 %v224, 7
    %v226 = vsub.s32 3, %v225
    %v227 = vrot.slane %v146, %v226
    %232 = vmatprep.subr.mxu0 %v148
    %233 = vmatpush1.msra.mxu0 %v147
    %234 = vmatprep.subr.mxu0 %v152
    %235 = vmatpush1.msra.mxu0 %v151
    %236 = vmatprep.subr.mxu0 %v156
    %237 = vmatpush1.msra.mxu0 %v155
    %238 = vmatprep.subr.mxu0 %v160
    %239 = vmatpush1.msra.mxu0 %v159
    %240 = vmatprep.subr.mxu0 %v164
    %241 = vmatpush1.msra.mxu0 %v163
    %242 = vmatprep.subr.mxu0 %v168
    %243 = vmatpush1.msra.mxu0 %v167
    %244 = vmatprep.subr.mxu0 %v172
    %245 = vmatpush1.msra.mxu0 %v171
    %246 = vmatprep.subr.mxu0 %v176
    %247 = vmatpush1.msra.mxu0 %v175
    %248 = vmatprep.subr.mxu0 %v180
    %249 = vmatpush1.msra.mxu0 %v179
    %250 = vmatprep.subr.mxu0 %v184
    %251 = vmatpush1.msra.mxu0 %v183
    %252 = vmatprep.subr.mxu0 %v188
    %253 = vmatpush1.msra.mxu0 %v187
    %254 = vmatprep.subr.mxu0 %v192
    %255 = vmatpush1.msra.mxu0 %v191
    %256 = vmatprep.subr.mxu0 %v196
    %257 = vmatpush1.msra.mxu0 %v195
    %258 = vmatprep.subr.mxu0 %v200
    %259 = vmatpush1.msra.mxu0 %v199
    %260 = vmatprep.subr.mxu0 %v204
    %261 = vmatpush1.msra.mxu0 %v203
    %262 = vmatprep.subr.mxu0 %v208
    %263 = vmatpush1.msra.mxu0 %v207
    %264 = vmatprep.subr.mxu0 0.0
    %265 = vmatpush1.msra.mxu0 0.0
    %266 = vmatprep.subr.mxu0 0.0
    %267 = vmatpush1.msra.mxu0 0.0
    %268 = vmatprep.subr.mxu0 0.0
    %269 = vmatpush1.msra.mxu0 0.0
    %270 = vmatprep.subr.mxu0 0.0
    %271 = vmatpush1.msra.mxu0 0.0
    %272 = vmatprep.subr.mxu0 0.0
    %273 = vmatpush1.msra.mxu0 0.0
    %274 = vmatprep.subr.mxu0 0.0
    %275 = vmatpush1.msra.mxu0 0.0
    %276 = vmatprep.subr.mxu0 0.0
    %277 = vmatpush1.msra.mxu0 0.0
    %278 = vmatprep.subr.mxu0 0.0
    %279 = vmatpush1.msra.mxu0 0.0
    %280 = vmatprep.subr.mxu0 0.0
    %281 = vmatpush1.msra.mxu0 0.0
    %282 = vmatprep.subr.mxu0 0.0
    %283 = vmatpush1.msra.mxu0 0.0
    %284 = vmatprep.subr.mxu0 0.0
    %285 = vmatpush1.msra.mxu0 0.0
    %286 = vmatprep.subr.mxu0 0.0
    %287 = vmatpush1.msra.mxu0 0.0
    %288 = vmatprep.subr.mxu0 0.0
    %289 = vmatpush1.msra.mxu0 0.0
    %290 = vmatprep.subr.mxu0 0.0
    %291 = vmatpush1.msra.mxu0 0.0
    %292 = vmatprep.subr.mxu0 0.0
    %293 = vmatpush1.msra.mxu0 0.0
    %294 = vmatprep.subr.mxu0 0.0
    %295 = vmatpush1.msra.mxu0 0.0
    %296 = vmatprep.mubr.f32.mxu0 0.0
    %297 = vmatmul.mubr.f32.gmra.mrb[0].mxu0 %v145
    %v298 = vpop.f32.mrb[0].mxu0
    %v299 = vadd.f32 %v215, %v298
    %v300 = vpop.f32.mrb[0].mxu0
    %v301 = vadd.f32 %v219, %v300
    %302 = vdwg.mxu0
    %303 = vmatprep.subr.mxu0 %v150
    %304 = vmatpush1.msra.mxu0 %v149
    %305 = vmatprep.subr.mxu0 %v154
    %306 = vmatpush1.msra.mxu0 %v153
    %307 = vmatprep.subr.mxu0 %v158
    %308 = vmatpush1.msra.mxu0 %v157
    %309 = vmatprep.subr.mxu0 %v162
    %310 = vmatpush1.msra.mxu0 %v161
    %311 = vmatprep.subr.mxu0 %v166
    %312 = vmatpush1.msra.mxu0 %v165
    %313 = vmatprep.subr.mxu0 %v170
    %314 = vmatpush1.msra.mxu0 %v169
    %315 = vmatprep.subr.mxu0 %v174
    %316 = vmatpush1.msra.mxu0 %v173
    %317 = vmatprep.subr.mxu0 %v178
    %318 = vmatpush1.msra.mxu0 %v177
    %319 = vmatprep.subr.mxu0 %v182
    %320 = vmatpush1.msra.mxu0 %v181
    %321 = vmatprep.subr.mxu0 %v186
    %322 = vmatpush1.msra.mxu0 %v185
    %323 = vmatprep.subr.mxu0 %v190
    %324 = vmatpush1.msra.mxu0 %v189
    %325 = vmatprep.subr.mxu0 %v194
    %326 = vmatpush1.msra.mxu0 %v193
    %327 = vmatprep.subr.mxu0 %v198
    %328 = vmatpush1.msra.mxu0 %v197
    %329 = vmatprep.subr.mxu0 %v202
    %330 = vmatpush1.msra.mxu0 %v201
    %331 = vmatprep.subr.mxu0 %v206
    %332 = vmatpush1.msra.mxu0 %v205
    %333 = vmatprep.subr.mxu0 %v210
    %334 = vmatpush1.msra.mxu0 %v209
    %335 = vmatprep.subr.mxu0 0.0
    %336 = vmatpush1.msra.mxu0 0.0
    %337 = vmatprep.subr.mxu0 0.0
    %338 = vmatpush1.msra.mxu0 0.0
    %339 = vmatprep.subr.mxu0 0.0
    %340 = vmatpush1.msra.mxu0 0.0
    %341 = vmatprep.subr.mxu0 0.0
    %342 = vmatpush1.msra.mxu0 0.0
    %343 = vmatprep.subr.mxu0 0.0
    %344 = vmatpush1.msra.mxu0 0.0
    %345 = vmatprep.subr.mxu0 0.0
    %346 = vmatpush1.msra.mxu0 0.0
    %347 = vmatprep.subr.mxu0 0.0
    %348 = vmatpush1.msra.mxu0 0.0
    %349 = vmatprep.subr.mxu0 0.0
    %350 = vmatpush1.msra.mxu0 0.0
    %351 = vmatprep.subr.mxu0 0.0
    %352 = vmatpush1.msra.mxu0 0.0
    %353 = vmatprep.subr.mxu0 0.0
    %354 = vmatpush1.msra.mxu0 0.0
    %355 = vmatprep.subr.mxu0 0.0
    %356 = vmatpush1.msra.mxu0 0.0
    %357 = vmatprep.subr.mxu0 0.0
    %358 = vmatpush1.msra.mxu0 0.0
    %359 = vmatprep.subr.mxu0 0.0
    %360 = vmatpush1.msra.mxu0 0.0
    %361 = vmatprep.subr.mxu0 0.0
    %362 = vmatpush1.msra.mxu0 0.0
    %363 = vmatprep.subr.mxu0 0.0
    %364 = vmatpush1.msra.mxu0 0.0
    %365 = vmatprep.subr.mxu0 0.0
    %366 = vmatpush1.msra.mxu0 0.0
    %367 = vmatprep.mubr.f32.mxu0 0.0
    %368 = vmatmul.mubr.f32.gmra.mrb[0].mxu0 %v145
    %v369 = vpop.f32.mrb[0].mxu0
    %v370 = vadd.f32 %v223, %v369
    %v371 = vpop.f32.mrb[0].mxu0
    %v372 = vadd.f32 %v227, %v371
    %373 = vdwg.mxu0
    %v374 = vmax.f32 %v299, 0.0
    %v375 = vmax.f32 %v301, 0.0
    %v376 = vmax.f32 %v370, 0.0
    %v377 = vmax.f32 %v372, 0.0
    %v378 = vld [vmem:[#allocation5 + $0x20] sm:$0xff]
    %v379 = vld [vmem:[#allocation5 + $0x28] sm:$0xff]
    %v380 = vld [vmem:[#allocation5 + $0x30] sm:$0xff]
    %v381 = vld [vmem:[#allocation5 + $0x38] sm:$0xff]
    %v382 = vld [vmem:[#allocation5 + $0x140] sm:$0xff]
    %v383 = vld [vmem:[#allocation5 + $0x148] sm:$0xff]
    %v384 = vld [vmem:[#allocation5 + $0x150] sm:$0xff]
    %v385 = vld [vmem:[#allocation5 + $0x158] sm:$0xff]
    %v386 = vld [vmem:[#allocation5 + $0x260] sm:$0xff]
    %v387 = vld [vmem:[#allocation5 + $0x268] sm:$0xff]
    %v388 = vld [vmem:[#allocation5 + $0x270] sm:$0xff]
    %v389 = vld [vmem:[#allocation5 + $0x278] sm:$0xff]
    %v390 = vld [vmem:[#allocation5 + $0x380] sm:$0xff]
    %v391 = vld [vmem:[#allocation5 + $0x388] sm:$0xff]
    %v392 = vld [vmem:[#allocation5 + $0x390] sm:$0xff]
    %v393 = vld [vmem:[#allocation5 + $0x398] sm:$0xff]
    %v394 = vld [vmem:[#allocation5 + $0x4a0] sm:$0xff]
    %v395 = vld [vmem:[#allocation5 + $0x4a8] sm:$0xff]
    %v396 = vld [vmem:[#allocation5 + $0x4b0] sm:$0xff]
    %v397 = vld [vmem:[#allocation5 + $0x4b8] sm:$0xff]
    %v398 = vld [vmem:[#allocation5 + $0x5c0] sm:$0xff]
    %v399 = vld [vmem:[#allocation5 + $0x5c8] sm:$0xff]
    %v400 = vld [vmem:[#allocation5 + $0x5d0] sm:$0xff]
    %v401 = vld [vmem:[#allocation5 + $0x5d8] sm:$0xff]
    %v402 = vld [vmem:[#allocation5 + $0x6e0] sm:$0xff]
    %v403 = vld [vmem:[#allocation5 + $0x6e8] sm:$0xff]
    %v404 = vld [vmem:[#allocation5 + $0x6f0] sm:$0xff]
    %v405 = vld [vmem:[#allocation5 + $0x6f8] sm:$0xff]
    %v406 = vld [vmem:[#allocation5 + $0x800] sm:$0xff]
    %v407 = vld [vmem:[#allocation5 + $0x808] sm:$0xff]
    %v408 = vld [vmem:[#allocation5 + $0x810] sm:$0xff]
    %v409 = vld [vmem:[#allocation5 + $0x818] sm:$0xff]
    %v410 = vld [vmem:[#allocation5 + $0x920] sm:$0xff]
    %v411 = vld [vmem:[#allocation5 + $0x928] sm:$0xff]
    %v412 = vld [vmem:[#allocation5 + $0x930] sm:$0xff]
    %v413 = vld [vmem:[#allocation5 + $0x938] sm:$0xff]
    %v414 = vld [vmem:[#allocation5 + $0xa40] sm:$0xff]
    %v415 = vld [vmem:[#allocation5 + $0xa48] sm:$0xff]
    %v416 = vld [vmem:[#allocation5 + $0xa50] sm:$0xff]
    %v417 = vld [vmem:[#allocation5 + $0xa58] sm:$0xff]
    %v418 = vld [vmem:[#allocation5 + $0xb60] sm:$0xff]
    %v419 = vld [vmem:[#allocation5 + $0xb68] sm:$0xff]
    %v420 = vld [vmem:[#allocation5 + $0xb70] sm:$0xff]
    %v421 = vld [vmem:[#allocation5 + $0xb78] sm:$0xff]
    %v422 = vld [vmem:[#allocation5 + $0xc80] sm:$0xff]
    %v423 = vld [vmem:[#allocation5 + $0xc88] sm:$0xff]
    %v424 = vld [vmem:[#allocation5 + $0xc90] sm:$0xff]
    %v425 = vld [vmem:[#allocation5 + $0xc98] sm:$0xff]
    %v426 = vld [vmem:[#allocation5 + $0xda0] sm:$0xff]
    %v427 = vld [vmem:[#allocation5 + $0xda8] sm:$0xff]
    %v428 = vld [vmem:[#allocation5 + $0xdb0] sm:$0xff]
    %v429 = vld [vmem:[#allocation5 + $0xdb8] sm:$0xff]
    %v430 = vld [vmem:[#allocation5 + $0xec0] sm:$0xff]
    %v431 = vld [vmem:[#allocation5 + $0xec8] sm:$0xff]
    %v432 = vld [vmem:[#allocation5 + $0xed0] sm:$0xff]
    %v433 = vld [vmem:[#allocation5 + $0xed8] sm:$0xff]
    %v434 = vld [vmem:[#allocation5 + $0xfe0] sm:$0xff]
    %v435 = vld [vmem:[#allocation5 + $0xfe8] sm:$0xff]
    %v436 = vld [vmem:[#allocation5 + $0xff0] sm:$0xff]
    %v437 = vld [vmem:[#allocation5 + $0xff8] sm:$0xff]
    %v438 = vld [vmem:[#allocation5 + $0x1100] sm:$0xff]
    %v439 = vld [vmem:[#allocation5 + $0x1108] sm:$0xff]
    %v440 = vld [vmem:[#allocation5 + $0x1110] sm:$0xff]
    %v441 = vld [vmem:[#allocation5 + $0x1118] sm:$0xff]
    %442 = vmatprep.subr.mxu0 %v379
    %443 = vmatpush1.msra.mxu0 %v378
    %444 = vmatprep.subr.mxu0 %v383
    %445 = vmatpush1.msra.mxu0 %v382
    %446 = vmatprep.subr.mxu0 %v387
    %447 = vmatpush1.msra.mxu0 %v386
    %448 = vmatprep.subr.mxu0 %v391
    %449 = vmatpush1.msra.mxu0 %v390
    %450 = vmatprep.subr.mxu0 %v395
    %451 = vmatpush1.msra.mxu0 %v394
    %452 = vmatprep.subr.mxu0 %v399
    %453 = vmatpush1.msra.mxu0 %v398
    %454 = vmatprep.subr.mxu0 %v403
    %455 = vmatpush1.msra.mxu0 %v402
    %456 = vmatprep.subr.mxu0 %v407
    %457 = vmatpush1.msra.mxu0 %v406
    %458 = vmatprep.subr.mxu0 %v411
    %459 = vmatpush1.msra.mxu0 %v410
    %460 = vmatprep.subr.mxu0 %v415
    %461 = vmatpush1.msra.mxu0 %v414
    %462 = vmatprep.subr.mxu0 %v419
    %463 = vmatpush1.msra.mxu0 %v418
    %464 = vmatprep.subr.mxu0 %v423
    %465 = vmatpush1.msra.mxu0 %v422
    %466 = vmatprep.subr.mxu0 %v427
    %467 = vmatpush1.msra.mxu0 %v426
    %468 = vmatprep.subr.mxu0 %v431
    %469 = vmatpush1.msra.mxu0 %v430
    %470 = vmatprep.subr.mxu0 %v435
    %471 = vmatpush1.msra.mxu0 %v434
    %472 = vmatprep.subr.mxu0 %v439
    %473 = vmatpush1.msra.mxu0 %v438
    %474 = vmatprep.subr.mxu0 0.0
    %475 = vmatpush1.msra.mxu0 0.0
    %476 = vmatprep.subr.mxu0 0.0
    %477 = vmatpush1.msra.mxu0 0.0
    %478 = vmatprep.subr.mxu0 0.0
    %479 = vmatpush1.msra.mxu0 0.0
    %480 = vmatprep.subr.mxu0 0.0
    %481 = vmatpush1.msra.mxu0 0.0
    %482 = vmatprep.subr.mxu0 0.0
    %483 = vmatpush1.msra.mxu0 0.0
    %484 = vmatprep.subr.mxu0 0.0
    %485 = vmatpush1.msra.mxu0 0.0
    %486 = vmatprep.subr.mxu0 0.0
    %487 = vmatpush1.msra.mxu0 0.0
    %488 = vmatprep.subr.mxu0 0.0
    %489 = vmatpush1.msra.mxu0 0.0
    %490 = vmatprep.subr.mxu0 0.0
    %491 = vmatpush1.msra.mxu0 0.0
    %492 = vmatprep.subr.mxu0 0.0
    %493 = vmatpush1.msra.mxu0 0.0
    %494 = vmatprep.subr.mxu0 0.0
    %495 = vmatpush1.msra.mxu0 0.0
    %496 = vmatprep.subr.mxu0 0.0
    %497 = vmatpush1.msra.mxu0 0.0
    %498 = vmatprep.subr.mxu0 0.0
    %499 = vmatpush1.msra.mxu0 0.0
    %500 = vmatprep.subr.mxu0 0.0
    %501 = vmatpush1.msra.mxu0 0.0
    %502 = vmatprep.subr.mxu0 0.0
    %503 = vmatpush1.msra.mxu0 0.0
    %504 = vmatprep.subr.mxu0 0.0
    %505 = vmatpush1.msra.mxu0 0.0
    %506 = vmatprep.mubr.f32.mxu0 0.0
    %507 = vmatmul.mubr.f32.gmra.mrb[0].mxu0 %v145
    %v508 = vpop.f32.mrb[0].mxu0
    %v509 = vadd.f32 %v215, %v508
    %v510 = vpop.f32.mrb[0].mxu0
    %v511 = vadd.f32 %v219, %v510
    %512 = vdwg.mxu0
    %513 = vmatprep.subr.mxu0 %v381
    %514 = vmatpush1.msra.mxu0 %v380
    %515 = vmatprep.subr.mxu0 %v385
    %516 = vmatpush1.msra.mxu0 %v384
    %517 = vmatprep.subr.mxu0 %v389
    %518 = vmatpush1.msra.mxu0 %v388
    %519 = vmatprep.subr.mxu0 %v393
    %520 = vmatpush1.msra.mxu0 %v392
    %521 = vmatprep.subr.mxu0 %v397
    %522 = vmatpush1.msra.mxu0 %v396
    %523 = vmatprep.subr.mxu0 %v401
    %524 = vmatpush1.msra.mxu0 %v400
    %525 = vmatprep.subr.mxu0 %v405
    %526 = vmatpush1.msra.mxu0 %v404
    %527 = vmatprep.subr.mxu0 %v409
    %528 = vmatpush1.msra.mxu0 %v408
    %529 = vmatprep.subr.mxu0 %v413
    %530 = vmatpush1.msra.mxu0 %v412
    %531 = vmatprep.subr.mxu0 %v417
    %532 = vmatpush1.msra.mxu0 %v416
    %533 = vmatprep.subr.mxu0 %v421
    %534 = vmatpush1.msra.mxu0 %v420
    %535 = vmatprep.subr.mxu0 %v425
    %536 = vmatpush1.msra.mxu0 %v424
    %537 = vmatprep.subr.mxu0 %v429
    %538 = vmatpush1.msra.mxu0 %v428
    %539 = vmatprep.subr.mxu0 %v433
    %540 = vmatpush1.msra.mxu0 %v432
    %541 = vmatprep.subr.mxu0 %v437
    %542 = vmatpush1.msra.mxu0 %v436
    %543 = vmatprep.subr.mxu0 %v441
    %544 = vmatpush1.msra.mxu0 %v440
    %545 = vmatprep.subr.mxu0 0.0
    %546 = vmatpush1.msra.mxu0 0.0
    %547 = vmatprep.subr.mxu0 0.0
    %548 = vmatpush1.msra.mxu0 0.0
    %549 = vmatprep.subr.mxu0 0.0
    %550 = vmatpush1.msra.mxu0 0.0
    %551 = vmatprep.subr.mxu0 0.0
    %552 = vmatpush1.msra.mxu0 0.0
    %553 = vmatprep.subr.mxu0 0.0
    %554 = vmatpush1.msra.mxu0 0.0
    %555 = vmatprep.subr.mxu0 0.0
    %556 = vmatpush1.msra.mxu0 0.0
    %557 = vmatprep.subr.mxu0 0.0
    %558 = vmatpush1.msra.mxu0 0.0
    %559 = vmatprep.subr.mxu0 0.0
    %560 = vmatpush1.msra.mxu0 0.0
    %561 = vmatprep.subr.mxu0 0.0
    %562 = vmatpush1.msra.mxu0 0.0
    %563 = vmatprep.subr.mxu0 0.0
    %564 = vmatpush1.msra.mxu0 0.0
    %565 = vmatprep.subr.mxu0 0.0
    %566 = vmatpush1.msra.mxu0 0.0
    %567 = vmatprep.subr.mxu0 0.0
    %568 = vmatpush1.msra.mxu0 0.0
    %569 = vmatprep.subr.mxu0 0.0
    %570 = vmatpush1.msra.mxu0 0.0
    %571 = vmatprep.subr.mxu0 0.0
    %572 = vmatpush1.msra.mxu0 0.0
    %573 = vmatprep.subr.mxu0 0.0
    %574 = vmatpush1.msra.mxu0 0.0
    %575 = vmatprep.subr.mxu0 0.0
    %576 = vmatpush1.msra.mxu0 0.0
    %577 = vmatprep.mubr.f32.mxu0 0.0
    %578 = vmatmul.mubr.f32.gmra.mrb[0].mxu0 %v145
    %v579 = vpop.f32.mrb[0].mxu0
    %v580 = vadd.f32 %v223, %v579
    %v581 = vpop.f32.mrb[0].mxu0
    %v582 = vadd.f32 %v227, %v581
    %583 = vdwg.mxu0
    %v584 = vmax.f32 %v509, 0.0
    %v585 = vmax.f32 %v511, 0.0
    %v586 = vmax.f32 %v580, 0.0
    %v587 = vmax.f32 %v582, 0.0
    %v588 = vmax.f32 %v374, %v584
    %v589 = vmax.f32 %v375, %v585
    %v590 = vmax.f32 %v376, %v586
    %v591 = vmax.f32 %v377, %v587
    %v592 = vld [vmem:[#allocation5 + $0x40] sm:$0xff]
    %v593 = vld [vmem:[#allocation5 + $0x48] sm:$0xff]
    %v594 = vld [vmem:[#allocation5 + $0x50] sm:$0xff]
    %v595 = vld [vmem:[#allocation5 + $0x58] sm:$0xff]
    %v596 = vld [vmem:[#allocation5 + $0x160] sm:$0xff]
    %v597 = vld [vmem:[#allocation5 + $0x168] sm:$0xff]
    %v598 = vld [vmem:[#allocation5 + $0x170] sm:$0xff]
    %v599 = vld [vmem:[#allocation5 + $0x178] sm:$0xff]
    %v600 = vld [vmem:[#allocation5 + $0x280] sm:$0xff]
    %v601 = vld [vmem:[#allocation5 + $0x288] sm:$0xff]
    %v602 = vld [vmem:[#allocation5 + $0x290] sm:$0xff]
    %v603 = vld [vmem:[#allocation5 + $0x298] sm:$0xff]
    %v604 = vld [vmem:[#allocation5 + $0x3a0] sm:$0xff]
    %v605 = vld [vmem:[#allocation5 + $0x3a8] sm:$0xff]
    %v606 = vld [vmem:[#allocation5 + $0x3b0] sm:$0xff]
    %v607 = vld [vmem:[#allocation5 + $0x3b8] sm:$0xff]
    %v608 = vld [vmem:[#allocation5 + $0x4c0] sm:$0xff]
    %v609 = vld [vmem:[#allocation5 + $0x4c8] sm:$0xff]
    %v610 = vld [vmem:[#allocation5 + $0x4d0] sm:$0xff]
    %v611 = vld [vmem:[#allocation5 + $0x4d8] sm:$0xff]
    %v612 = vld [vmem:[#allocation5 + $0x5e0] sm:$0xff]
    %v613 = vld [vmem:[#allocation5 + $0x5e8] sm:$0xff]
    %v614 = vld [vmem:[#allocation5 + $0x5f0] sm:$0xff]
    %v615 = vld [vmem:[#allocation5 + $0x5f8] sm:$0xff]
    %v616 = vld [vmem:[#allocation5 + $0x700] sm:$0xff]
    %v617 = vld [vmem:[#allocation5 + $0x708] sm:$0xff]
    %v618 = vld [vmem:[#allocation5 + $0x710] sm:$0xff]
    %v619 = vld [vmem:[#allocation5 + $0x718] sm:$0xff]
    %v620 = vld [vmem:[#allocation5 + $0x820] sm:$0xff]
    %v621 = vld [vmem:[#allocation5 + $0x828] sm:$0xff]
    %v622 = vld [vmem:[#allocation5 + $0x830] sm:$0xff]
    %v623 = vld [vmem:[#allocation5 + $0x838] sm:$0xff]
    %v624 = vld [vmem:[#allocation5 + $0x940] sm:$0xff]
    %v625 = vld [vmem:[#allocation5 + $0x948] sm:$0xff]
    %v626 = vld [vmem:[#allocation5 + $0x950] sm:$0xff]
    %v627 = vld [vmem:[#allocation5 + $0x958] sm:$0xff]
    %v628 = vld [vmem:[#allocation5 + $0xa60] sm:$0xff]
    %v629 = vld [vmem:[#allocation5 + $0xa68] sm:$0xff]
    %v630 = vld [vmem:[#allocation5 + $0xa70] sm:$0xff]
    %v631 = vld [vmem:[#allocation5 + $0xa78] sm:$0xff]
    %v632 = vld [vmem:[#allocation5 + $0xb80] sm:$0xff]
    %v633 = vld [vmem:[#allocation5 + $0xb88] sm:$0xff]
    %v634 = vld [vmem:[#allocation5 + $0xb90] sm:$0xff]
    %v635 = vld [vmem:[#allocation5 + $0xb98] sm:$0xff]
    %v636 = vld [vmem:[#allocation5 + $0xca0] sm:$0xff]
    %v637 = vld [vmem:[#allocation5 + $0xca8] sm:$0xff]
    %v638 = vld [vmem:[#allocation5 + $0xcb0] sm:$0xff]
    %v639 = vld [vmem:[#allocation5 + $0xcb8] sm:$0xff]
    %v640 = vld [vmem:[#allocation5 + $0xdc0] sm:$0xff]
    %v641 = vld [vmem:[#allocation5 + $0xdc8] sm:$0xff]
    %v642 = vld [vmem:[#allocation5 + $0xdd0] sm:$0xff]
    %v643 = vld [vmem:[#allocation5 + $0xdd8] sm:$0xff]
    %v644 = vld [vmem:[#allocation5 + $0xee0] sm:$0xff]
    %v645 = vld [vmem:[#allocation5 + $0xee8] sm:$0xff]
    %v646 = vld [vmem:[#allocation5 + $0xef0] sm:$0xff]
    %v647 = vld [vmem:[#allocation5 + $0xef8] sm:$0xff]
    %v648 = vld [vmem:[#allocation5 + $0x1000] sm:$0xff]
    %v649 = vld [vmem:[#allocation5 + $0x1008] sm:$0xff]
    %v650 = vld [vmem:[#allocation5 + $0x1010] sm:$0xff]
    %v651 = vld [vmem:[#allocation5 + $0x1018] sm:$0xff]
    %v652 = vld [vmem:[#allocation5 + $0x1120] sm:$0xff]
    %v653 = vld [vmem:[#allocation5 + $0x1128] sm:$0xff]
    %v654 = vld [vmem:[#allocation5 + $0x1130] sm:$0xff]
    %v655 = vld [vmem:[#allocation5 + $0x1138] sm:$0xff]
    %656 = vmatprep.subr.mxu0 %v593
    %657 = vmatpush1.msra.mxu0 %v592
    %658 = vmatprep.subr.mxu0 %v597
    %659 = vmatpush1.msra.mxu0 %v596
    %660 = vmatprep.subr.mxu0 %v601
    %661 = vmatpush1.msra.mxu0 %v600
    %662 = vmatprep.subr.mxu0 %v605
    %663 = vmatpush1.msra.mxu0 %v604
    %664 = vmatprep.subr.mxu0 %v609
    %665 = vmatpush1.msra.mxu0 %v608
    %666 = vmatprep.subr.mxu0 %v613
    %667 = vmatpush1.msra.mxu0 %v612
    %668 = vmatprep.subr.mxu0 %v617
    %669 = vmatpush1.msra.mxu0 %v616
    %670 = vmatprep.subr.mxu0 %v621
    %671 = vmatpush1.msra.mxu0 %v620
    %672 = vmatprep.subr.mxu0 %v625
    %673 = vmatpush1.msra.mxu0 %v624
    %674 = vmatprep.subr.mxu0 %v629
    %675 = vmatpush1.msra.mxu0 %v628
    %676 = vmatprep.subr.mxu0 %v633
    %677 = vmatpush1.msra.mxu0 %v632
    %678 = vmatprep.subr.mxu0 %v637
    %679 = vmatpush1.msra.mxu0 %v636
    %680 = vmatprep.subr.mxu0 %v641
    %681 = vmatpush1.msra.mxu0 %v640
    %682 = vmatprep.subr.mxu0 %v645
    %683 = vmatpush1.msra.mxu0 %v644
    %684 = vmatprep.subr.mxu0 %v649
    %685 = vmatpush1.msra.mxu0 %v648
    %686 = vmatprep.subr.mxu0 %v653
    %687 = vmatpush1.msra.mxu0 %v652
    %688 = vmatprep.subr.mxu0 0.0
    %689 = vmatpush1.msra.mxu0 0.0
    %690 = vmatprep.subr.mxu0 0.0
    %691 = vmatpush1.msra.mxu0 0.0
    %692 = vmatprep.subr.mxu0 0.0
    %693 = vmatpush1.msra.mxu0 0.0
    %694 = vmatprep.subr.mxu0 0.0
    %695 = vmatpush1.msra.mxu0 0.0
    %696 = vmatprep.subr.mxu0 0.0
    %697 = vmatpush1.msra.mxu0 0.0
    %698 = vmatprep.subr.mxu0 0.0
    %699 = vmatpush1.msra.mxu0 0.0
    %700 = vmatprep.subr.mxu0 0.0
    %701 = vmatpush1.msra.mxu0 0.0
    %702 = vmatprep.subr.mxu0 0.0
    %703 = vmatpush1.msra.mxu0 0.0
    %704 = vmatprep.subr.mxu0 0.0
    %705 = vmatpush1.msra.mxu0 0.0
    %706 = vmatprep.subr.mxu0 0.0
    %707 = vmatpush1.msra.mxu0 0.0
    %708 = vmatprep.subr.mxu0 0.0
    %709 = vmatpush1.msra.mxu0 0.0
    %710 = vmatprep.subr.mxu0 0.0
    %711 = vmatpush1.msra.mxu0 0.0
    %712 = vmatprep.subr.mxu0 0.0
    %713 = vmatpush1.msra.mxu0 0.0
    %714 = vmatprep.subr.mxu0 0.0
    %715 = vmatpush1.msra.mxu0 0.0
    %716 = vmatprep.subr.mxu0 0.0
    %717 = vmatpush1.msra.mxu0 0.0
    %718 = vmatprep.subr.mxu0 0.0
    %719 = vmatpush1.msra.mxu0 0.0
    %720 = vmatprep.mubr.f32.mxu0 0.0
    %721 = vmatmul.mubr.f32.gmra.mrb[0].mxu0 %v145
    %v722 = vpop.f32.mrb[0].mxu0
    %v723 = vadd.f32 %v215, %v722
    %v724 = vpop.f32.mrb[0].mxu0
    %v725 = vadd.f32 %v219, %v724
    %726 = vdwg.mxu0
    %727 = vmatprep.subr.mxu0 %v595
    %728 = vmatpush1.msra.mxu0 %v594
    %729 = vmatprep.subr.mxu0 %v599
    %730 = vmatpush1.msra.mxu0 %v598
    %731 = vmatprep.subr.mxu0 %v603
    %732 = vmatpush1.msra.mxu0 %v602
    %733 = vmatprep.subr.mxu0 %v607
    %734 = vmatpush1.msra.mxu0 %v606
    %735 = vmatprep.subr.mxu0 %v611
    %736 = vmatpush1.msra.mxu0 %v610
    %737 = vmatprep.subr.mxu0 %v615
    %738 = vmatpush1.msra.mxu0 %v614
    %739 = vmatprep.subr.mxu0 %v619
    %740 = vmatpush1.msra.mxu0 %v618
    %741 = vmatprep.subr.mxu0 %v623
    %742 = vmatpush1.msra.mxu0 %v622
    %743 = vmatprep.subr.mxu0 %v627
    %744 = vmatpush1.msra.mxu0 %v626
    %745 = vmatprep.subr.mxu0 %v631
    %746 = vmatpush1.msra.mxu0 %v630
    %747 = vmatprep.subr.mxu0 %v635
    %748 = vmatpush1.msra.mxu0 %v634
    %749 = vmatprep.subr.mxu0 %v639
    %750 = vmatpush1.msra.mxu0 %v638
    %751 = vmatprep.subr.mxu0 %v643
    %752 = vmatpush1.msra.mxu0 %v642
    %753 = vmatprep.subr.mxu0 %v647
    %754 = vmatpush1.msra.mxu0 %v646
    %755 = vmatprep.subr.mxu0 %v651
    %756 = vmatpush1.msra.mxu0 %v650
    %757 = vmatprep.subr.mxu0 %v655
    %758 = vmatpush1.msra.mxu0 %v654
    %759 = vmatprep.subr.mxu0 0.0
    %760 = vmatpush1.msra.mxu0 0.0
    %761 = vmatprep.subr.mxu0 0.0
    %762 = vmatpush1.msra.mxu0 0.0
    %763 = vmatprep.subr.mxu0 0.0
    %764 = vmatpush1.msra.mxu0 0.0
    %765 = vmatprep.subr.mxu0 0.0
    %766 = vmatpush1.msra.mxu0 0.0
    %767 = vmatprep.subr.mxu0 0.0
    %768 = vmatpush1.msra.mxu0 0.0
    %769 = vmatprep.subr.mxu0 0.0
    %770 = vmatpush1.msra.mxu0 0.0
    %771 = vmatprep.subr.mxu0 0.0
    %772 = vmatpush1.msra.mxu0 0.0
    %773 = vmatprep.subr.mxu0 0.0
    %774 = vmatpush1.msra.mxu0 0.0
    %775 = vmatprep.subr.mxu0 0.0
    %776 = vmatpush1.msra.mxu0 0.0
    %777 = vmatprep.subr.mxu0 0.0
    %778 = vmatpush1.msra.mxu0 0.0
    %779 = vmatprep.subr.mxu0 0.0
    %780 = vmatpush1.msra.mxu0 0.0
    %781 = vmatprep.subr.mxu0 0.0
    %782 = vmatpush1.msra.mxu0 0.0
    %783 = vmatprep.subr.mxu0 0.0
    %784 = vmatpush1.msra.mxu0 0.0
    %785 = vmatprep.subr.mxu0 0.0
    %786 = vmatpush1.msra.mxu0 0.0
    %787 = vmatprep.subr.mxu0 0.0
    %788 = vmatpush1.msra.mxu0 0.0
    %789 = vmatprep.subr.mxu0 0.0
    %790 = vmatpush1.msra.mxu0 0.0
    %791 = vmatprep.mubr.f32.mxu0 0.0
    %792 = vmatmul.mubr.f32.gmra.mrb[0].mxu0 %v145
    %v793 = vpop.f32.mrb[0].mxu0
    %v794 = vadd.f32 %v223, %v793
    %v795 = vpop.f32.mrb[0].mxu0
    %v796 = vadd.f32 %v227, %v795
    %797 = vdwg.mxu0
    %v798 = vmax.f32 %v723, 0.0
    %v799 = vmax.f32 %v725, 0.0
    %v800 = vmax.f32 %v794, 0.0
    %v801 = vmax.f32 %v796, 0.0
    %v802 = vmax.f32 %v588, %v798
    %v803 = vmax.f32 %v589, %v799
    %v804 = vmax.f32 %v590, %v800
    %v805 = vmax.f32 %v591, %v801
    %v806 = vld [vmem:[#allocation5 + $0x60] sm:$0xff]
    %v807 = vld [vmem:[#allocation5 + $0x68] sm:$0xff]
    %v808 = vld [vmem:[#allocation5 + $0x70] sm:$0xff]
    %v809 = vld [vmem:[#allocation5 + $0x78] sm:$0xff]
    %v810 = vld [vmem:[#allocation5 + $0x180] sm:$0xff]
    %v811 = vld [vmem:[#allocation5 + $0x188] sm:$0xff]
    %v812 = vld [vmem:[#allocation5 + $0x190] sm:$0xff]
    %v813 = vld [vmem:[#allocation5 + $0x198] sm:$0xff]
    %v814 = vld [vmem:[#allocation5 + $0x2a0] sm:$0xff]
    %v815 = vld [vmem:[#allocation5 + $0x2a8] sm:$0xff]
    %v816 = vld [vmem:[#allocation5 + $0x2b0] sm:$0xff]
    %v817 = vld [vmem:[#allocation5 + $0x2b8] sm:$0xff]
    %v818 = vld [vmem:[#allocation5 + $0x3c0] sm:$0xff]
    %v819 = vld [vmem:[#allocation5 + $0x3c8] sm:$0xff]
    %v820 = vld [vmem:[#allocation5 + $0x3d0] sm:$0xff]
    %v821 = vld [vmem:[#allocation5 + $0x3d8] sm:$0xff]
    %v822 = vld [vmem:[#allocation5 + $0x4e0] sm:$0xff]
    %v823 = vld [vmem:[#allocation5 + $0x4e8] sm:$0xff]
    %v824 = vld [vmem:[#allocation5 + $0x4f0] sm:$0xff]
    %v825 = vld [vmem:[#allocation5 + $0x4f8] sm:$0xff]
    %v826 = vld [vmem:[#allocation5 + $0x600] sm:$0xff]
    %v827 = vld [vmem:[#allocation5 + $0x608] sm:$0xff]
    %v828 = vld [vmem:[#allocation5 + $0x610] sm:$0xff]
    %v829 = vld [vmem:[#allocation5 + $0x618] sm:$0xff]
    %v830 = vld [vmem:[#allocation5 + $0x720] sm:$0xff]
    %v831 = vld [vmem:[#allocation5 + $0x728] sm:$0xff]
    %v832 = vld [vmem:[#allocation5 + $0x730] sm:$0xff]
    %v833 = vld [vmem:[#allocation5 + $0x738] sm:$0xff]
    %v834 = vld [vmem:[#allocation5 + $0x840] sm:$0xff]
    %v835 = vld [vmem:[#allocation5 + $0x848] sm:$0xff]
    %v836 = vld [vmem:[#allocation5 + $0x850] sm:$0xff]
    %v837 = vld [vmem:[#allocation5 + $0x858] sm:$0xff]
    %v838 = vld [vmem:[#allocation5 + $0x960] sm:$0xff]
    %v839 = vld [vmem:[#allocation5 + $0x968] sm:$0xff]
    %v840 = vld [vmem:[#allocation5 + $0x970] sm:$0xff]
    %v841 = vld [vmem:[#allocation5 + $0x978] sm:$0xff]
    %v842 = vld [vmem:[#allocation5 + $0xa80] sm:$0xff]
    %v843 = vld [vmem:[#allocation5 + $0xa88] sm:$0xff]
    %v844 = vld [vmem:[#allocation5 + $0xa90] sm:$0xff]
    %v845 = vld [vmem:[#allocation5 + $0xa98] sm:$0xff]
    %v846 = vld [vmem:[#allocation5 + $0xba0] sm:$0xff]
    %v847 = vld [vmem:[#allocation5 + $0xba8] sm:$0xff]
    %v848 = vld [vmem:[#allocation5 + $0xbb0] sm:$0xff]
    %v849 = vld [vmem:[#allocation5 + $0xbb8] sm:$0xff]
    %v850 = vld [vmem:[#allocation5 + $0xcc0] sm:$0xff]
    %v851 = vld [vmem:[#allocation5 + $0xcc8] sm:$0xff]
    %v852 = vld [vmem:[#allocation5 + $0xcd0] sm:$0xff]
    %v853 = vld [vmem:[#allocation5 + $0xcd8] sm:$0xff]
    %v854 = vld [vmem:[#allocation5 + $0xde0] sm:$0xff]
    %v855 = vld [vmem:[#allocation5 + $0xde8] sm:$0xff]
    %v856 = vld [vmem:[#allocation5 + $0xdf0] sm:$0xff]
    %v857 = vld [vmem:[#allocation5 + $0xdf8] sm:$0xff]
    %v858 = vld [vmem:[#allocation5 + $0xf00] sm:$0xff]
    %v859 = vld [vmem:[#allocation5 + $0xf08] sm:$0xff]
    %v860 = vld [vmem:[#allocation5 + $0xf10] sm:$0xff]
    %v861 = vld [vmem:[#allocation5 + $0xf18] sm:$0xff]
    %v862 = vld [vmem:[#allocation5 + $0x1020] sm:$0xff]
    %v863 = vld [vmem:[#allocation5 + $0x1028] sm:$0xff]
    %v864 = vld [vmem:[#allocation5 + $0x1030] sm:$0xff]
    %v865 = vld [vmem:[#allocation5 + $0x1038] sm:$0xff]
    %v866 = vld [vmem:[#allocation5 + $0x1140] sm:$0xff]
    %v867 = vld [vmem:[#allocation5 + $0x1148] sm:$0xff]
    %v868 = vld [vmem:[#allocation5 + $0x1150] sm:$0xff]
    %v869 = vld [vmem:[#allocation5 + $0x1158] sm:$0xff]
    %870 = vmatprep.subr.mxu0 %v807
    %871 = vmatpush1.msra.mxu0 %v806
    %872 = vmatprep.subr.mxu0 %v811
    %873 = vmatpush1.msra.mxu0 %v810
    %874 = vmatprep.subr.mxu0 %v815
    %875 = vmatpush1.msra.mxu0 %v814
    %876 = vmatprep.subr.mxu0 %v819
    %877 = vmatpush1.msra.mxu0 %v818
    %878 = vmatprep.subr.mxu0 %v823
    %879 = vmatpush1.msra.mxu0 %v822
    %880 = vmatprep.subr.mxu0 %v827
    %881 = vmatpush1.msra.mxu0 %v826
    %882 = vmatprep.subr.mxu0 %v831
    %883 = vmatpush1.msra.mxu0 %v830
    %884 = vmatprep.subr.mxu0 %v835
    %885 = vmatpush1.msra.mxu0 %v834
    %886 = vmatprep.subr.mxu0 %v839
    %887 = vmatpush1.msra.mxu0 %v838
    %888 = vmatprep.subr.mxu0 %v843
    %889 = vmatpush1.msra.mxu0 %v842
    %890 = vmatprep.subr.mxu0 %v847
    %891 = vmatpush1.msra.mxu0 %v846
    %892 = vmatprep.subr.mxu0 %v851
    %893 = vmatpush1.msra.mxu0 %v850
    %894 = vmatprep.subr.mxu0 %v855
    %895 = vmatpush1.msra.mxu0 %v854
    %896 = vmatprep.subr.mxu0 %v859
    %897 = vmatpush1.msra.mxu0 %v858
    %898 = vmatprep.subr.mxu0 %v863
    %899 = vmatpush1.msra.mxu0 %v862
    %900 = vmatprep.subr.mxu0 %v867
    %901 = vmatpush1.msra.mxu0 %v866
    %902 = vmatprep.subr.mxu0 0.0
    %903 = vmatpush1.msra.mxu0 0.0
    %904 = vmatprep.subr.mxu0 0.0
    %905 = vmatpush1.msra.mxu0 0.0
    %906 = vmatprep.subr.mxu0 0.0
    %907 = vmatpush1.msra.mxu0 0.0
    %908 = vmatprep.subr.mxu0 0.0
    %909 = vmatpush1.msra.mxu0 0.0
    %910 = vmatprep.subr.mxu0 0.0
    %911 = vmatpush1.msra.mxu0 0.0
    %912 = vmatprep.subr.mxu0 0.0
    %913 = vmatpush1.msra.mxu0 0.0
    %914 = vmatprep.subr.mxu0 0.0
    %915 = vmatpush1.msra.mxu0 0.0
    %916 = vmatprep.subr.mxu0 0.0
    %917 = vmatpush1.msra.mxu0 0.0
    %918 = vmatprep.subr.mxu0 0.0
    %919 = vmatpush1.msra.mxu0 0.0
    %920 = vmatprep.subr.mxu0 0.0
    %921 = vmatpush1.msra.mxu0 0.0
    %922 = vmatprep.subr.mxu0 0.0
    %923 = vmatpush1.msra.mxu0 0.0
    %924 = vmatprep.subr.mxu0 0.0
    %925 = vmatpush1.msra.mxu0 0.0
    %926 = vmatprep.subr.mxu0 0.0
    %927 = vmatpush1.msra.mxu0 0.0
    %928 = vmatprep.subr.mxu0 0.0
    %929 = vmatpush1.msra.mxu0 0.0
    %930 = vmatprep.subr.mxu0 0.0
    %931 = vmatpush1.msra.mxu0 0.0
    %932 = vmatprep.subr.mxu0 0.0
    %933 = vmatpush1.msra.mxu0 0.0
    %934 = vmatprep.mubr.f32.mxu0 0.0
    %935 = vmatmul.mubr.f32.gmra.mrb[0].mxu0 %v145
    %v936 = vpop.f32.mrb[0].mxu0
    %v937 = vadd.f32 %v215, %v936
    %v938 = vpop.f32.mrb[0].mxu0
    %v939 = vadd.f32 %v219, %v938
    %940 = vdwg.mxu0
    %941 = vmatprep.subr.mxu0 %v809
    %942 = vmatpush1.msra.mxu0 %v808
    %943 = vmatprep.subr.mxu0 %v813
    %944 = vmatpush1.msra.mxu0 %v812
    %945 = vmatprep.subr.mxu0 %v817
    %946 = vmatpush1.msra.mxu0 %v816
    %947 = vmatprep.subr.mxu0 %v821
    %948 = vmatpush1.msra.mxu0 %v820
    %949 = vmatprep.subr.mxu0 %v825
    %950 = vmatpush1.msra.mxu0 %v824
    %951 = vmatprep.subr.mxu0 %v829
    %952 = vmatpush1.msra.mxu0 %v828
    %953 = vmatprep.subr.mxu0 %v833
    %954 = vmatpush1.msra.mxu0 %v832
    %955 = vmatprep.subr.mxu0 %v837
    %956 = vmatpush1.msra.mxu0 %v836
    %957 = vmatprep.subr.mxu0 %v841
    %958 = vmatpush1.msra.mxu0 %v840
    %959 = vmatprep.subr.mxu0 %v845
    %960 = vmatpush1.msra.mxu0 %v844
    %961 = vmatprep.subr.mxu0 %v849
    %962 = vmatpush1.msra.mxu0 %v848
    %963 = vmatprep.subr.mxu0 %v853
    %964 = vmatpush1.msra.mxu0 %v852
    %965 = vmatprep.subr.mxu0 %v857
    %966 = vmatpush1.msra.mxu0 %v856
    %967 = vmatprep.subr.mxu0 %v861
    %968 = vmatpush1.msra.mxu0 %v860
    %969 = vmatprep.subr.mxu0 %v865
    %970 = vmatpush1.msra.mxu0 %v864
    %971 = vmatprep.subr.mxu0 %v869
    %972 = vmatpush1.msra.mxu0 %v868
    %973 = vmatprep.subr.mxu0 0.0
    %974 = vmatpush1.msra.mxu0 0.0
    %975 = vmatprep.subr.mxu0 0.0
    %976 = vmatpush1.msra.mxu0 0.0
    %977 = vmatprep.subr.mxu0 0.0
    %978 = vmatpush1.msra.mxu0 0.0
    %979 = vmatprep.subr.mxu0 0.0
    %980 = vmatpush1.msra.mxu0 0.0
    %981 = vmatprep.subr.mxu0 0.0
    %982 = vmatpush1.msra.mxu0 0.0
    %983 = vmatprep.subr.mxu0 0.0
    %984 = vmatpush1.msra.mxu0 0.0
    %985 = vmatprep.subr.mxu0 0.0
    %986 = vmatpush1.msra.mxu0 0.0
    %987 = vmatprep.subr.mxu0 0.0
    %988 = vmatpush1.msra.mxu0 0.0
    %989 = vmatprep.subr.mxu0 0.0
    %990 = vmatpush1.msra.mxu0 0.0
    %991 = vmatprep.subr.mxu0 0.0
    %992 = vmatpush1.msra.mxu0 0.0
    %993 = vmatprep.subr.mxu0 0.0
    %994 = vmatpush1.msra.mxu0 0.0
    %995 = vmatprep.subr.mxu0 0.0
    %996 = vmatpush1.msra.mxu0 0.0
    %997 = vmatprep.subr.mxu0 0.0
    %998 = vmatpush1.msra.mxu0 0.0
    %999 = vmatprep.subr.mxu0 0.0
    %1000 = vmatpush1.msra.mxu0 0.0
    %1001 = vmatprep.subr.mxu0 0.0
    %1002 = vmatpush1.msra.mxu0 0.0
    %1003 = vmatprep.subr.mxu0 0.0
    %1004 = vmatpush1.msra.mxu0 0.0
    %1005 = vmatprep.mubr.f32.mxu0 0.0
    %1006 = vmatmul.mubr.f32.gmra.mrb[0].mxu0 %v145
    %v1007 = vpop.f32.mrb[0].mxu0
    %v1008 = vadd.f32 %v223, %v1007
    %v1009 = vpop.f32.mrb[0].mxu0
    %v1010 = vadd.f32 %v227, %v1009
    %1011 = vdwg.mxu0
    %v1012 = vmax.f32 %v937, 0.0
    %v1013 = vmax.f32 %v939, 0.0
    %v1014 = vmax.f32 %v1008, 0.0
    %v1015 = vmax.f32 %v1010, 0.0
    %v1016 = vmax.f32 %v802, %v1012
    %v1017 = vmax.f32 %v803, %v1013
    %v1018 = vmax.f32 %v804, %v1014
    %v1019 = vmax.f32 %v805, %v1015
    %v1020 = vld [vmem:[#allocation5 + $0x80] sm:$0xff]
    %v1021 = vld [vmem:[#allocation5 + $0x88] sm:$0xff]
    %v1022 = vld [vmem:[#allocation5 + $0x90] sm:$0xff]
    %v1023 = vld [vmem:[#allocation5 + $0x98] sm:$0xff]
    %v1024 = vld [vmem:[#allocation5 + $0x1a0] sm:$0xff]
    %v1025 = vld [vmem:[#allocation5 + $0x1a8] sm:$0xff]
    %v1026 = vld [vmem:[#allocation5 + $0x1b0] sm:$0xff]
    %v1027 = vld [vmem:[#allocation5 + $0x1b8] sm:$0xff]
    %v1028 = vld [vmem:[#allocation5 + $0x2c0] sm:$0xff]
    %v1029 = vld [vmem:[#allocation5 + $0x2c8] sm:$0xff]
    %v1030 = vld [vmem:[#allocation5 + $0x2d0] sm:$0xff]
    %v1031 = vld [vmem:[#allocation5 + $0x2d8] sm:$0xff]
    %v1032 = vld [vmem:[#allocation5 + $0x3e0] sm:$0xff]
    %v1033 = vld [vmem:[#allocation5 + $0x3e8] sm:$0xff]
    %v1034 = vld [vmem:[#allocation5 + $0x3f0] sm:$0xff]
    %v1035 = vld [vmem:[#allocation5 + $0x3f8] sm:$0xff]
    %v1036 = vld [vmem:[#allocation5 + $0x500] sm:$0xff]
    %v1037 = vld [vmem:[#allocation5 + $0x508] sm:$0xff]
    %v1038 = vld [vmem:[#allocation5 + $0x510] sm:$0xff]
    %v1039 = vld [vmem:[#allocation5 + $0x518] sm:$0xff]
    %v1040 = vld [vmem:[#allocation5 + $0x620] sm:$0xff]
    %v1041 = vld [vmem:[#allocation5 + $0x628] sm:$0xff]
    %v1042 = vld [vmem:[#allocation5 + $0x630] sm:$0xff]
    %v1043 = vld [vmem:[#allocation5 + $0x638] sm:$0xff]
    %v1044 = vld [vmem:[#allocation5 + $0x740] sm:$0xff]
    %v1045 = vld [vmem:[#allocation5 + $0x748] sm:$0xff]
    %v1046 = vld [vmem:[#allocation5 + $0x750] sm:$0xff]
    %v1047 = vld [vmem:[#allocation5 + $0x758] sm:$0xff]
    %v1048 = vld [vmem:[#allocation5 + $0x860] sm:$0xff]
    %v1049 = vld [vmem:[#allocation5 + $0x868] sm:$0xff]
    %v1050 = vld [vmem:[#allocation5 + $0x870] sm:$0xff]
    %v1051 = vld [vmem:[#allocation5 + $0x878] sm:$0xff]
    %v1052 = vld [vmem:[#allocation5 + $0x980] sm:$0xff]
    %v1053 = vld [vmem:[#allocation5 + $0x988] sm:$0xff]
    %v1054 = vld [vmem:[#allocation5 + $0x990] sm:$0xff]
    %v1055 = vld [vmem:[#allocation5 + $0x998] sm:$0xff]
    %v1056 = vld [vmem:[#allocation5 + $0xaa0] sm:$0xff]
    %v1057 = vld [vmem:[#allocation5 + $0xaa8] sm:$0xff]
    %v1058 = vld [vmem:[#allocation5 + $0xab0] sm:$0xff]
    %v1059 = vld [vmem:[#allocation5 + $0xab8] sm:$0xff]
    %v1060 = vld [vmem:[#allocation5 + $0xbc0] sm:$0xff]
    %v1061 = vld [vmem:[#allocation5 + $0xbc8] sm:$0xff]
    %v1062 = vld [vmem:[#allocation5 + $0xbd0] sm:$0xff]
    %v1063 = vld [vmem:[#allocation5 + $0xbd8] sm:$0xff]
    %v1064 = vld [vmem:[#allocation5 + $0xce0] sm:$0xff]
    %v1065 = vld [vmem:[#allocation5 + $0xce8] sm:$0xff]
    %v1066 = vld [vmem:[#allocation5 + $0xcf0] sm:$0xff]
    %v1067 = vld [vmem:[#allocation5 + $0xcf8] sm:$0xff]
    %v1068 = vld [vmem:[#allocation5 + $0xe00] sm:$0xff]
    %v1069 = vld [vmem:[#allocation5 + $0xe08] sm:$0xff]
    %v1070 = vld [vmem:[#allocation5 + $0xe10] sm:$0xff]
    %v1071 = vld [vmem:[#allocation5 + $0xe18] sm:$0xff]
    %v1072 = vld [vmem:[#allocation5 + $0xf20] sm:$0xff]
    %v1073 = vld [vmem:[#allocation5 + $0xf28] sm:$0xff]
    %v1074 = vld [vmem:[#allocation5 + $0xf30] sm:$0xff]
    %v1075 = vld [vmem:[#allocation5 + $0xf38] sm:$0xff]
    %v1076 = vld [vmem:[#allocation5 + $0x1040] sm:$0xff]
    %v1077 = vld [vmem:[#allocation5 + $0x1048] sm:$0xff]
    %v1078 = vld [vmem:[#allocation5 + $0x1050] sm:$0xff]
    %v1079 = vld [vmem:[#allocation5 + $0x1058] sm:$0xff]
    %v1080 = vld [vmem:[#allocation5 + $0x1160] sm:$0xff]
    %v1081 = vld [vmem:[#allocation5 + $0x1168] sm:$0xff]
    %v1082 = vld [vmem:[#allocation5 + $0x1170] sm:$0xff]
    %v1083 = vld [vmem:[#allocation5 + $0x1178] sm:$0xff]
    %1084 = vmatprep.subr.mxu0 %v1021
    %1085 = vmatpush1.msra.mxu0 %v1020
    %1086 = vmatprep.subr.mxu0 %v1025
    %1087 = vmatpush1.msra.mxu0 %v1024
    %1088 = vmatprep.subr.mxu0 %v1029
    %1089 = vmatpush1.msra.mxu0 %v1028
    %1090 = vmatprep.subr.mxu0 %v1033
    %1091 = vmatpush1.msra.mxu0 %v1032
    %1092 = vmatprep.subr.mxu0 %v1037
    %1093 = vmatpush1.msra.mxu0 %v1036
    %1094 = vmatprep.subr.mxu0 %v1041
    %1095 = vmatpush1.msra.mxu0 %v1040
    %1096 = vmatprep.subr.mxu0 %v1045
    %1097 = vmatpush1.msra.mxu0 %v1044
    %1098 = vmatprep.subr.mxu0 %v1049
    %1099 = vmatpush1.msra.mxu0 %v1048
    %1100 = vmatprep.subr.mxu0 %v1053
    %1101 = vmatpush1.msra.mxu0 %v1052
    %1102 = vmatprep.subr.mxu0 %v1057
    %1103 = vmatpush1.msra.mxu0 %v1056
    %1104 = vmatprep.subr.mxu0 %v1061
    %1105 = vmatpush1.msra.mxu0 %v1060
    %1106 = vmatprep.subr.mxu0 %v1065
    %1107 = vmatpush1.msra.mxu0 %v1064
    %1108 = vmatprep.subr.mxu0 %v1069
    %1109 = vmatpush1.msra.mxu0 %v1068
    %1110 = vmatprep.subr.mxu0 %v1073
    %1111 = vmatpush1.msra.mxu0 %v1072
    %1112 = vmatprep.subr.mxu0 %v1077
    %1113 = vmatpush1.msra.mxu0 %v1076
    %1114 = vmatprep.subr.mxu0 %v1081
    %1115 = vmatpush1.msra.mxu0 %v1080
    %1116 = vmatprep.subr.mxu0 0.0
    %1117 = vmatpush1.msra.mxu0 0.0
    %1118 = vmatprep.subr.mxu0 0.0
    %1119 = vmatpush1.msra.mxu0 0.0
    %1120 = vmatprep.subr.mxu0 0.0
    %1121 = vmatpush1.msra.mxu0 0.0
    %1122 = vmatprep.subr.mxu0 0.0
    %1123 = vmatpush1.msra.mxu0 0.0
    %1124 = vmatprep.subr.mxu0 0.0
    %1125 = vmatpush1.msra.mxu0 0.0
    %1126 = vmatprep.subr.mxu0 0.0
    %1127 = vmatpush1.msra.mxu0 0.0
    %1128 = vmatprep.subr.mxu0 0.0
    %1129 = vmatpush1.msra.mxu0 0.0
    %1130 = vmatprep.subr.mxu0 0.0
    %1131 = vmatpush1.msra.mxu0 0.0
    %1132 = vmatprep.subr.mxu0 0.0
    %1133 = vmatpush1.msra.mxu0 0.0
    %1134 = vmatprep.subr.mxu0 0.0
    %1135 = vmatpush1.msra.mxu0 0.0
    %1136 = vmatprep.subr.mxu0 0.0
    %1137 = vmatpush1.msra.mxu0 0.0
    %1138 = vmatprep.subr.mxu0 0.0
    %1139 = vmatpush1.msra.mxu0 0.0
    %1140 = vmatprep.subr.mxu0 0.0
    %1141 = vmatpush1.msra.mxu0 0.0
    %1142 = vmatprep.subr.mxu0 0.0
    %1143 = vmatpush1.msra.mxu0 0.0
    %1144 = vmatprep.subr.mxu0 0.0
    %1145 = vmatpush1.msra.mxu0 0.0
    %1146 = vmatprep.subr.mxu0 0.0
    %1147 = vmatpush1.msra.mxu0 0.0
    %1148 = vmatprep.mubr.f32.mxu0 0.0
    %1149 = vmatmul.mubr.f32.gmra.mrb[0].mxu0 %v145
    %v1150 = vpop.f32.mrb[0].mxu0
    %v1151 = vadd.f32 %v215, %v1150
    %v1152 = vpop.f32.mrb[0].mxu0
    %v1153 = vadd.f32 %v219, %v1152
    %1154 = vdwg.mxu0
    %1155 = vmatprep.subr.mxu0 %v1023
    %1156 = vmatpush1.msra.mxu0 %v1022
    %1157 = vmatprep.subr.mxu0 %v1027
    %1158 = vmatpush1.msra.mxu0 %v1026
    %1159 = vmatprep.subr.mxu0 %v1031
    %1160 = vmatpush1.msra.mxu0 %v1030
    %1161 = vmatprep.subr.mxu0 %v1035
    %1162 = vmatpush1.msra.mxu0 %v1034
    %1163 = vmatprep.subr.mxu0 %v1039
    %1164 = vmatpush1.msra.mxu0 %v1038
    %1165 = vmatprep.subr.mxu0 %v1043
    %1166 = vmatpush1.msra.mxu0 %v1042
    %1167 = vmatprep.subr.mxu0 %v1047
    %1168 = vmatpush1.msra.mxu0 %v1046
    %1169 = vmatprep.subr.mxu0 %v1051
    %1170 = vmatpush1.msra.mxu0 %v1050
    %1171 = vmatprep.subr.mxu0 %v1055
    %1172 = vmatpush1.msra.mxu0 %v1054
    %1173 = vmatprep.subr.mxu0 %v1059
    %1174 = vmatpush1.msra.mxu0 %v1058
    %1175 = vmatprep.subr.mxu0 %v1063
    %1176 = vmatpush1.msra.mxu0 %v1062
    %1177 = vmatprep.subr.mxu0 %v1067
    %1178 = vmatpush1.msra.mxu0 %v1066
    %1179 = vmatprep.subr.mxu0 %v1071
    %1180 = vmatpush1.msra.mxu0 %v1070
    %1181 = vmatprep.subr.mxu0 %v1075
    %1182 = vmatpush1.msra.mxu0 %v1074
    %1183 = vmatprep.subr.mxu0 %v1079
    %1184 = vmatpush1.msra.mxu0 %v1078
    %1185 = vmatprep.subr.mxu0 %v1083
    %1186 = vmatpush1.msra.mxu0 %v1082
    %1187 = vmatprep.subr.mxu0 0.0
    %1188 = vmatpush1.msra.mxu0 0.0
    %1189 = vmatprep.subr.mxu0 0.0
    %1190 = vmatpush1.msra.mxu0 0.0
    %1191 = vmatprep.subr.mxu0 0.0
    %1192 = vmatpush1.msra.mxu0 0.0
    %1193 = vmatprep.subr.mxu0 0.0
    %1194 = vmatpush1.msra.mxu0 0.0
    %1195 = vmatprep.subr.mxu0 0.0
    %1196 = vmatpush1.msra.mxu0 0.0
    %1197 = vmatprep.subr.mxu0 0.0
    %1198 = vmatpush1.msra.mxu0 0.0
    %1199 = vmatprep.subr.mxu0 0.0
    %1200 = vmatpush1.msra.mxu0 0.0
    %1201 = vmatprep.subr.mxu0 0.0
    %1202 = vmatpush1.msra.mxu0 0.0
    %1203 = vmatprep.subr.mxu0 0.0
    %1204 = vmatpush1.msra.mxu0 0.0
    %1205 = vmatprep.subr.mxu0 0.0
    %1206 = vmatpush1.msra.mxu0 0.0
    %1207 = vmatprep.subr.mxu0 0.0
    %1208 = vmatpush1.msra.mxu0 0.0
    %1209 = vmatprep.subr.mxu0 0.0
    %1210 = vmatpush1.msra.mxu0 0.0
    %1211 = vmatprep.subr.mxu0 0.0
    %1212 = vmatpush1.msra.mxu0 0.0
    %1213 = vmatprep.subr.mxu0 0.0
    %1214 = vmatpush1.msra.mxu0 0.0
    %1215 = vmatprep.subr.mxu0 0.0
    %1216 = vmatpush1.msra.mxu0 0.0
    %1217 = vmatprep.subr.mxu0 0.0
    %1218 = vmatpush1.msra.mxu0 0.0
    %1219 = vmatprep.mubr.f32.mxu0 0.0
    %1220 = vmatmul.mubr.f32.gmra.mrb[0].mxu0 %v145
    %v1221 = vpop.f32.mrb[0].mxu0
    %v1222 = vadd.f32 %v223, %v1221
    %v1223 = vpop.f32.mrb[0].mxu0
    %v1224 = vadd.f32 %v227, %v1223
    %1225 = vdwg.mxu0
    %v1226 = vmax.f32 %v1151, 0.0
    %v1227 = vmax.f32 %v1153, 0.0
    %v1228 = vmax.f32 %v1222, 0.0
    %v1229 = vmax.f32 %v1224, 0.0
    %v1230 = vmax.f32 %v1016, %v1226
    %v1231 = vmax.f32 %v1017, %v1227
    %v1232 = vmax.f32 %v1018, %v1228
    %v1233 = vmax.f32 %v1019, %v1229
    %v1234 = vld [vmem:[#allocation5 + $0xa0] sm:$0xff]
    %v1235 = vld [vmem:[#allocation5 + $0xa8] sm:$0xff]
    %v1236 = vld [vmem:[#allocation5 + $0xb0] sm:$0xff]
    %v1237 = vld [vmem:[#allocation5 + $0xb8] sm:$0xff]
    %v1238 = vld [vmem:[#allocation5 + $0x1c0] sm:$0xff]
    %v1239 = vld [vmem:[#allocation5 + $0x1c8] sm:$0xff]
    %v1240 = vld [vmem:[#allocation5 + $0x1d0] sm:$0xff]
    %v1241 = vld [vmem:[#allocation5 + $0x1d8] sm:$0xff]
    %v1242 = vld [vmem:[#allocation5 + $0x2e0] sm:$0xff]
    %v1243 = vld [vmem:[#allocation5 + $0x2e8] sm:$0xff]
    %v1244 = vld [vmem:[#allocation5 + $0x2f0] sm:$0xff]
    %v1245 = vld [vmem:[#allocation5 + $0x2f8] sm:$0xff]
    %v1246 = vld [vmem:[#allocation5 + $0x400] sm:$0xff]
    %v1247 = vld [vmem:[#allocation5 + $0x408] sm:$0xff]
    %v1248 = vld [vmem:[#allocation5 + $0x410] sm:$0xff]
    %v1249 = vld [vmem:[#allocation5 + $0x418] sm:$0xff]
    %v1250 = vld [vmem:[#allocation5 + $0x520] sm:$0xff]
    %v1251 = vld [vmem:[#allocation5 + $0x528] sm:$0xff]
    %v1252 = vld [vmem:[#allocation5 + $0x530] sm:$0xff]
    %v1253 = vld [vmem:[#allocation5 + $0x538] sm:$0xff]
    %v1254 = vld [vmem:[#allocation5 + $0x640] sm:$0xff]
    %v1255 = vld [vmem:[#allocation5 + $0x648] sm:$0xff]
    %v1256 = vld [vmem:[#allocation5 + $0x650] sm:$0xff]
    %v1257 = vld [vmem:[#allocation5 + $0x658] sm:$0xff]
    %v1258 = vld [vmem:[#allocation5 + $0x760] sm:$0xff]
    %v1259 = vld [vmem:[#allocation5 + $0x768] sm:$0xff]
    %v1260 = vld [vmem:[#allocation5 + $0x770] sm:$0xff]
    %v1261 = vld [vmem:[#allocation5 + $0x778] sm:$0xff]
    %v1262 = vld [vmem:[#allocation5 + $0x880] sm:$0xff]
    %v1263 = vld [vmem:[#allocation5 + $0x888] sm:$0xff]
    %v1264 = vld [vmem:[#allocation5 + $0x890] sm:$0xff]
    %v1265 = vld [vmem:[#allocation5 + $0x898] sm:$0xff]
    %v1266 = vld [vmem:[#allocation5 + $0x9a0] sm:$0xff]
    %v1267 = vld [vmem:[#allocation5 + $0x9a8] sm:$0xff]
    %v1268 = vld [vmem:[#allocation5 + $0x9b0] sm:$0xff]
    %v1269 = vld [vmem:[#allocation5 + $0x9b8] sm:$0xff]
    %v1270 = vld [vmem:[#allocation5 + $0xac0] sm:$0xff]
    %v1271 = vld [vmem:[#allocation5 + $0xac8] sm:$0xff]
    %v1272 = vld [vmem:[#allocation5 + $0xad0] sm:$0xff]
    %v1273 = vld [vmem:[#allocation5 + $0xad8] sm:$0xff]
    %v1274 = vld [vmem:[#allocation5 + $0xbe0] sm:$0xff]
    %v1275 = vld [vmem:[#allocation5 + $0xbe8] sm:$0xff]
    %v1276 = vld [vmem:[#allocation5 + $0xbf0] sm:$0xff]
    %v1277 = vld [vmem:[#allocation5 + $0xbf8] sm:$0xff]
    %v1278 = vld [vmem:[#allocation5 + $0xd00] sm:$0xff]
    %v1279 = vld [vmem:[#allocation5 + $0xd08] sm:$0xff]
    %v1280 = vld [vmem:[#allocation5 + $0xd10] sm:$0xff]
    %v1281 = vld [vmem:[#allocation5 + $0xd18] sm:$0xff]
    %v1282 = vld [vmem:[#allocation5 + $0xe20] sm:$0xff]
    %v1283 = vld [vmem:[#allocation5 + $0xe28] sm:$0xff]
    %v1284 = vld [vmem:[#allocation5 + $0xe30] sm:$0xff]
    %v1285 = vld [vmem:[#allocation5 + $0xe38] sm:$0xff]
    %v1286 = vld [vmem:[#allocation5 + $0xf40] sm:$0xff]
    %v1287 = vld [vmem:[#allocation5 + $0xf48] sm:$0xff]
    %v1288 = vld [vmem:[#allocation5 + $0xf50] sm:$0xff]
    %v1289 = vld [vmem:[#allocation5 + $0xf58] sm:$0xff]
    %v1290 = vld [vmem:[#allocation5 + $0x1060] sm:$0xff]
    %v1291 = vld [vmem:[#allocation5 + $0x1068] sm:$0xff]
    %v1292 = vld [vmem:[#allocation5 + $0x1070] sm:$0xff]
    %v1293 = vld [vmem:[#allocation5 + $0x1078] sm:$0xff]
    %v1294 = vld [vmem:[#allocation5 + $0x1180] sm:$0xff]
    %v1295 = vld [vmem:[#allocation5 + $0x1188] sm:$0xff]
    %v1296 = vld [vmem:[#allocation5 + $0x1190] sm:$0xff]
    %v1297 = vld [vmem:[#allocation5 + $0x1198] sm:$0xff]
    %1298 = vmatprep.subr.mxu0 %v1235
    %1299 = vmatpush1.msra.mxu0 %v1234
    %1300 = vmatprep.subr.mxu0 %v1239
    %1301 = vmatpush1.msra.mxu0 %v1238
    %1302 = vmatprep.subr.mxu0 %v1243
    %1303 = vmatpush1.msra.mxu0 %v1242
    %1304 = vmatprep.subr.mxu0 %v1247
    %1305 = vmatpush1.msra.mxu0 %v1246
    %1306 = vmatprep.subr.mxu0 %v1251
    %1307 = vmatpush1.msra.mxu0 %v1250
    %1308 = vmatprep.subr.mxu0 %v1255
    %1309 = vmatpush1.msra.mxu0 %v1254
    %1310 = vmatprep.subr.mxu0 %v1259
    %1311 = vmatpush1.msra.mxu0 %v1258
    %1312 = vmatprep.subr.mxu0 %v1263
    %1313 = vmatpush1.msra.mxu0 %v1262
    %1314 = vmatprep.subr.mxu0 %v1267
    %1315 = vmatpush1.msra.mxu0 %v1266
    %1316 = vmatprep.subr.mxu0 %v1271
    %1317 = vmatpush1.msra.mxu0 %v1270
    %1318 = vmatprep.subr.mxu0 %v1275
    %1319 = vmatpush1.msra.mxu0 %v1274
    %1320 = vmatprep.subr.mxu0 %v1279
    %1321 = vmatpush1.msra.mxu0 %v1278
    %1322 = vmatprep.subr.mxu0 %v1283
    %1323 = vmatpush1.msra.mxu0 %v1282
    %1324 = vmatprep.subr.mxu0 %v1287
    %1325 = vmatpush1.msra.mxu0 %v1286
    %1326 = vmatprep.subr.mxu0 %v1291
    %1327 = vmatpush1.msra.mxu0 %v1290
    %1328 = vmatprep.subr.mxu0 %v1295
    %1329 = vmatpush1.msra.mxu0 %v1294
    %1330 = vmatprep.subr.mxu0 0.0
    %1331 = vmatpush1.msra.mxu0 0.0
    %1332 = vmatprep.subr.mxu0 0.0
    %1333 = vmatpush1.msra.mxu0 0.0
    %1334 = vmatprep.subr.mxu0 0.0
    %1335 = vmatpush1.msra.mxu0 0.0
    %1336 = vmatprep.subr.mxu0 0.0
    %1337 = vmatpush1.msra.mxu0 0.0
    %1338 = vmatprep.subr.mxu0 0.0
    %1339 = vmatpush1.msra.mxu0 0.0
    %1340 = vmatprep.subr.mxu0 0.0
    %1341 = vmatpush1.msra.mxu0 0.0
    %1342 = vmatprep.subr.mxu0 0.0
    %1343 = vmatpush1.msra.mxu0 0.0
    %1344 = vmatprep.subr.mxu0 0.0
    %1345 = vmatpush1.msra.mxu0 0.0
    %1346 = vmatprep.subr.mxu0 0.0
    %1347 = vmatpush1.msra.mxu0 0.0
    %1348 = vmatprep.subr.mxu0 0.0
    %1349 = vmatpush1.msra.mxu0 0.0
    %1350 = vmatprep.subr.mxu0 0.0
    %1351 = vmatpush1.msra.mxu0 0.0
    %1352 = vmatprep.subr.mxu0 0.0
    %1353 = vmatpush1.msra.mxu0 0.0
    %1354 = vmatprep.subr.mxu0 0.0
    %1355 = vmatpush1.msra.mxu0 0.0
    %1356 = vmatprep.subr.mxu0 0.0
    %1357 = vmatpush1.msra.mxu0 0.0
    %1358 = vmatprep.subr.mxu0 0.0
    %1359 = vmatpush1.msra.mxu0 0.0
    %1360 = vmatprep.subr.mxu0 0.0
    %1361 = vmatpush1.msra.mxu0 0.0
    %1362 = vmatprep.mubr.f32.mxu0 0.0
    %1363 = vmatmul.mubr.f32.gmra.mrb[0].mxu0 %v145
    %v1364 = vpop.f32.mrb[0].mxu0
    %v1365 = vadd.f32 %v215, %v1364
    %v1366 = vpop.f32.mrb[0].mxu0
    %v1367 = vadd.f32 %v219, %v1366
    %1368 = vdwg.mxu0
    %1369 = vmatprep.subr.mxu0 %v1237
    %1370 = vmatpush1.msra.mxu0 %v1236
    %1371 = vmatprep.subr.mxu0 %v1241
    %1372 = vmatpush1.msra.mxu0 %v1240
    %1373 = vmatprep.subr.mxu0 %v1245
    %1374 = vmatpush1.msra.mxu0 %v1244
    %1375 = vmatprep.subr.mxu0 %v1249
    %1376 = vmatpush1.msra.mxu0 %v1248
    %1377 = vmatprep.subr.mxu0 %v1253
    %1378 = vmatpush1.msra.mxu0 %v1252
    %1379 = vmatprep.subr.mxu0 %v1257
    %1380 = vmatpush1.msra.mxu0 %v1256
    %1381 = vmatprep.subr.mxu0 %v1261
    %1382 = vmatpush1.msra.mxu0 %v1260
    %1383 = vmatprep.subr.mxu0 %v1265
    %1384 = vmatpush1.msra.mxu0 %v1264
    %1385 = vmatprep.subr.mxu0 %v1269
    %1386 = vmatpush1.msra.mxu0 %v1268
    %1387 = vmatprep.subr.mxu0 %v1273
    %1388 = vmatpush1.msra.mxu0 %v1272
    %1389 = vmatprep.subr.mxu0 %v1277
    %1390 = vmatpush1.msra.mxu0 %v1276
    %1391 = vmatprep.subr.mxu0 %v1281
    %1392 = vmatpush1.msra.mxu0 %v1280
    %1393 = vmatprep.subr.mxu0 %v1285
    %1394 = vmatpush1.msra.mxu0 %v1284
    %1395 = vmatprep.subr.mxu0 %v1289
    %1396 = vmatpush1.msra.mxu0 %v1288
    %1397 = vmatprep.subr.mxu0 %v1293
    %1398 = vmatpush1.msra.mxu0 %v1292
    %1399 = vmatprep.subr.mxu0 %v1297
    %1400 = vmatpush1.msra.mxu0 %v1296
    %1401 = vmatprep.subr.mxu0 0.0
    %1402 = vmatpush1.msra.mxu0 0.0
    %1403 = vmatprep.subr.mxu0 0.0
    %1404 = vmatpush1.msra.mxu0 0.0
    %1405 = vmatprep.subr.mxu0 0.0
    %1406 = vmatpush1.msra.mxu0 0.0
    %1407 = vmatprep.subr.mxu0 0.0
    %1408 = vmatpush1.msra.mxu0 0.0
    %1409 = vmatprep.subr.mxu0 0.0
    %1410 = vmatpush1.msra.mxu0 0.0
    %1411 = vmatprep.subr.mxu0 0.0
    %1412 = vmatpush1.msra.mxu0 0.0
    %1413 = vmatprep.subr.mxu0 0.0
    %1414 = vmatpush1.msra.mxu0 0.0
    %1415 = vmatprep.subr.mxu0 0.0
    %1416 = vmatpush1.msra.mxu0 0.0
    %1417 = vmatprep.subr.mxu0 0.0
    %1418 = vmatpush1.msra.mxu0 0.0
    %1419 = vmatprep.subr.mxu0 0.0
    %1420 = vmatpush1.msra.mxu0 0.0
    %1421 = vmatprep.subr.mxu0 0.0
    %1422 = vmatpush1.msra.mxu0 0.0
    %1423 = vmatprep.subr.mxu0 0.0
    %1424 = vmatpush1.msra.mxu0 0.0
    %1425 = vmatprep.subr.mxu0 0.0
    %1426 = vmatpush1.msra.mxu0 0.0
    %1427 = vmatprep.subr.mxu0 0.0
    %1428 = vmatpush1.msra.mxu0 0.0
    %1429 = vmatprep.subr.mxu0 0.0
    %1430 = vmatpush1.msra.mxu0 0.0
    %1431 = vmatprep.subr.mxu0 0.0
    %1432 = vmatpush1.msra.mxu0 0.0
    %1433 = vmatprep.mubr.f32.mxu0 0.0
    %1434 = vmatmul.mubr.f32.gmra.mrb[0].mxu0 %v145
    %v1435 = vpop.f32.mrb[0].mxu0
    %v1436 = vadd.f32 %v223, %v1435
    %v1437 = vpop.f32.mrb[0].mxu0
    %v1438 = vadd.f32 %v227, %v1437
    %1439 = vdwg.mxu0
    %v1440 = vmax.f32 %v1365, 0.0
    %v1441 = vmax.f32 %v1367, 0.0
    %v1442 = vmax.f32 %v1436, 0.0
    %v1443 = vmax.f32 %v1438, 0.0
    %v1444 = vmax.f32 %v1230, %v1440
    %v1445 = vmax.f32 %v1231, %v1441
    %v1446 = vmax.f32 %v1232, %v1442
    %v1447 = vmax.f32 %v1233, %v1443
    %v1448 = vld [vmem:[#allocation5 + $0xc0] sm:$0xff]
    %v1449 = vld [vmem:[#allocation5 + $0xc8] sm:$0xff]
    %v1450 = vld [vmem:[#allocation5 + $0xd0] sm:$0xff]
    %v1451 = vld [vmem:[#allocation5 + $0xd8] sm:$0xff]
    %v1452 = vld [vmem:[#allocation5 + $0x1e0] sm:$0xff]
    %v1453 = vld [vmem:[#allocation5 + $0x1e8] sm:$0xff]
    %v1454 = vld [vmem:[#allocation5 + $0x1f0] sm:$0xff]
    %v1455 = vld [vmem:[#allocation5 + $0x1f8] sm:$0xff]
    %v1456 = vld [vmem:[#allocation5 + $0x300] sm:$0xff]
    %v1457 = vld [vmem:[#allocation5 + $0x308] sm:$0xff]
    %v1458 = vld [vmem:[#allocation5 + $0x310] sm:$0xff]
    %v1459 = vld [vmem:[#allocation5 + $0x318] sm:$0xff]
    %v1460 = vld [vmem:[#allocation5 + $0x420] sm:$0xff]
    %v1461 = vld [vmem:[#allocation5 + $0x428] sm:$0xff]
    %v1462 = vld [vmem:[#allocation5 + $0x430] sm:$0xff]
    %v1463 = vld [vmem:[#allocation5 + $0x438] sm:$0xff]
    %v1464 = vld [vmem:[#allocation5 + $0x540] sm:$0xff]
    %v1465 = vld [vmem:[#allocation5 + $0x548] sm:$0xff]
    %v1466 = vld [vmem:[#allocation5 + $0x550] sm:$0xff]
    %v1467 = vld [vmem:[#allocation5 + $0x558] sm:$0xff]
    %v1468 = vld [vmem:[#allocation5 + $0x660] sm:$0xff]
    %v1469 = vld [vmem:[#allocation5 + $0x668] sm:$0xff]
    %v1470 = vld [vmem:[#allocation5 + $0x670] sm:$0xff]
    %v1471 = vld [vmem:[#allocation5 + $0x678] sm:$0xff]
    %v1472 = vld [vmem:[#allocation5 + $0x780] sm:$0xff]
    %v1473 = vld [vmem:[#allocation5 + $0x788] sm:$0xff]
    %v1474 = vld [vmem:[#allocation5 + $0x790] sm:$0xff]
    %v1475 = vld [vmem:[#allocation5 + $0x798] sm:$0xff]
    %v1476 = vld [vmem:[#allocation5 + $0x8a0] sm:$0xff]
    %v1477 = vld [vmem:[#allocation5 + $0x8a8] sm:$0xff]
    %v1478 = vld [vmem:[#allocation5 + $0x8b0] sm:$0xff]
    %v1479 = vld [vmem:[#allocation5 + $0x8b8] sm:$0xff]
    %v1480 = vld [vmem:[#allocation5 + $0x9c0] sm:$0xff]
    %v1481 = vld [vmem:[#allocation5 + $0x9c8] sm:$0xff]
    %v1482 = vld [vmem:[#allocation5 + $0x9d0] sm:$0xff]
    %v1483 = vld [vmem:[#allocation5 + $0x9d8] sm:$0xff]
    %v1484 = vld [vmem:[#allocation5 + $0xae0] sm:$0xff]
    %v1485 = vld [vmem:[#allocation5 + $0xae8] sm:$0xff]
    %v1486 = vld [vmem:[#allocation5 + $0xaf0] sm:$0xff]
    %v1487 = vld [vmem:[#allocation5 + $0xaf8] sm:$0xff]
    %v1488 = vld [vmem:[#allocation5 + $0xc00] sm:$0xff]
    %v1489 = vld [vmem:[#allocation5 + $0xc08] sm:$0xff]
    %v1490 = vld [vmem:[#allocation5 + $0xc10] sm:$0xff]
    %v1491 = vld [vmem:[#allocation5 + $0xc18] sm:$0xff]
    %v1492 = vld [vmem:[#allocation5 + $0xd20] sm:$0xff]
    %v1493 = vld [vmem:[#allocation5 + $0xd28] sm:$0xff]
    %v1494 = vld [vmem:[#allocation5 + $0xd30] sm:$0xff]
    %v1495 = vld [vmem:[#allocation5 + $0xd38] sm:$0xff]
    %v1496 = vld [vmem:[#allocation5 + $0xe40] sm:$0xff]
    %v1497 = vld [vmem:[#allocation5 + $0xe48] sm:$0xff]
    %v1498 = vld [vmem:[#allocation5 + $0xe50] sm:$0xff]
    %v1499 = vld [vmem:[#allocation5 + $0xe58] sm:$0xff]
    %v1500 = vld [vmem:[#allocation5 + $0xf60] sm:$0xff]
    %v1501 = vld [vmem:[#allocation5 + $0xf68] sm:$0xff]
    %v1502 = vld [vmem:[#allocation5 + $0xf70] sm:$0xff]
    %v1503 = vld [vmem:[#allocation5 + $0xf78] sm:$0xff]
    %v1504 = vld [vmem:[#allocation5 + $0x1080] sm:$0xff]
    %v1505 = vld [vmem:[#allocation5 + $0x1088] sm:$0xff]
    %v1506 = vld [vmem:[#allocation5 + $0x1090] sm:$0xff]
    %v1507 = vld [vmem:[#allocation5 + $0x1098] sm:$0xff]
    %v1508 = vld [vmem:[#allocation5 + $0x11a0] sm:$0xff]
    %v1509 = vld [vmem:[#allocation5 + $0x11a8] sm:$0xff]
    %v1510 = vld [vmem:[#allocation5 + $0x11b0] sm:$0xff]
    %v1511 = vld [vmem:[#allocation5 + $0x11b8] sm:$0xff]
    %1512 = vmatprep.subr.mxu0 %v1449
    %1513 = vmatpush1.msra.mxu0 %v1448
    %1514 = vmatprep.subr.mxu0 %v1453
    %1515 = vmatpush1.msra.mxu0 %v1452
    %1516 = vmatprep.subr.mxu0 %v1457
    %1517 = vmatpush1.msra.mxu0 %v1456
    %1518 = vmatprep.subr.mxu0 %v1461
    %1519 = vmatpush1.msra.mxu0 %v1460
    %1520 = vmatprep.subr.mxu0 %v1465
    %1521 = vmatpush1.msra.mxu0 %v1464
    %1522 = vmatprep.subr.mxu0 %v1469
    %1523 = vmatpush1.msra.mxu0 %v1468
    %1524 = vmatprep.subr.mxu0 %v1473
    %1525 = vmatpush1.msra.mxu0 %v1472
    %1526 = vmatprep.subr.mxu0 %v1477
    %1527 = vmatpush1.msra.mxu0 %v1476
    %1528 = vmatprep.subr.mxu0 %v1481
    %1529 = vmatpush1.msra.mxu0 %v1480
    %1530 = vmatprep.subr.mxu0 %v1485
    %1531 = vmatpush1.msra.mxu0 %v1484
    %1532 = vmatprep.subr.mxu0 %v1489
    %1533 = vmatpush1.msra.mxu0 %v1488
    %1534 = vmatprep.subr.mxu0 %v1493
    %1535 = vmatpush1.msra.mxu0 %v1492
    %1536 = vmatprep.subr.mxu0 %v1497
    %1537 = vmatpush1.msra.mxu0 %v1496
    %1538 = vmatprep.subr.mxu0 %v1501
    %1539 = vmatpush1.msra.mxu0 %v1500
    %1540 = vmatprep.subr.mxu0 %v1505
    %1541 = vmatpush1.msra.mxu0 %v1504
    %1542 = vmatprep.subr.mxu0 %v1509
    %1543 = vmatpush1.msra.mxu0 %v1508
    %1544 = vmatprep.subr.mxu0 0.0
    %1545 = vmatpush1.msra.mxu0 0.0
    %1546 = vmatprep.subr.mxu0 0.0
    %1547 = vmatpush1.msra.mxu0 0.0
    %1548 = vmatprep.subr.mxu0 0.0
    %1549 = vmatpush1.msra.mxu0 0.0
    %1550 = vmatprep.subr.mxu0 0.0
    %1551 = vmatpush1.msra.mxu0 0.0
    %1552 = vmatprep.subr.mxu0 0.0
    %1553 = vmatpush1.msra.mxu0 0.0
    %1554 = vmatprep.subr.mxu0 0.0
    %1555 = vmatpush1.msra.mxu0 0.0
    %1556 = vmatprep.subr.mxu0 0.0
    %1557 = vmatpush1.msra.mxu0 0.0
    %1558 = vmatprep.subr.mxu0 0.0
    %1559 = vmatpush1.msra.mxu0 0.0
    %1560 = vmatprep.subr.mxu0 0.0
    %1561 = vmatpush1.msra.mxu0 0.0
    %1562 = vmatprep.subr.mxu0 0.0
    %1563 = vmatpush1.msra.mxu0 0.0
    %1564 = vmatprep.subr.mxu0 0.0
    %1565 = vmatpush1.msra.mxu0 0.0
    %1566 = vmatprep.subr.mxu0 0.0
    %1567 = vmatpush1.msra.mxu0 0.0
    %1568 = vmatprep.subr.mxu0 0.0
    %1569 = vmatpush1.msra.mxu0 0.0
    %1570 = vmatprep.subr.mxu0 0.0
    %1571 = vmatpush1.msra.mxu0 0.0
    %1572 = vmatprep.subr.mxu0 0.0
    %1573 = vmatpush1.msra.mxu0 0.0
    %1574 = vmatprep.subr.mxu0 0.0
    %1575 = vmatpush1.msra.mxu0 0.0
    %1576 = vmatprep.mubr.f32.mxu0 0.0
    %1577 = vmatmul.mubr.f32.gmra.mrb[0].mxu0 %v145
    %v1578 = vpop.f32.mrb[0].mxu0
    %v1579 = vadd.f32 %v215, %v1578
    %v1580 = vpop.f32.mrb[0].mxu0
    %v1581 = vadd.f32 %v219, %v1580
    %1582 = vdwg.mxu0
    %1583 = vmatprep.subr.mxu0 %v1451
    %1584 = vmatpush1.msra.mxu0 %v1450
    %1585 = vmatprep.subr.mxu0 %v1455
    %1586 = vmatpush1.msra.mxu0 %v1454
    %1587 = vmatprep.subr.mxu0 %v1459
    %1588 = vmatpush1.msra.mxu0 %v1458
    %1589 = vmatprep.subr.mxu0 %v1463
    %1590 = vmatpush1.msra.mxu0 %v1462
    %1591 = vmatprep.subr.mxu0 %v1467
    %1592 = vmatpush1.msra.mxu0 %v1466
    %1593 = vmatprep.subr.mxu0 %v1471
    %1594 = vmatpush1.msra.mxu0 %v1470
    %1595 = vmatprep.subr.mxu0 %v1475
    %1596 = vmatpush1.msra.mxu0 %v1474
    %1597 = vmatprep.subr.mxu0 %v1479
    %1598 = vmatpush1.msra.mxu0 %v1478
    %1599 = vmatprep.subr.mxu0 %v1483
    %1600 = vmatpush1.msra.mxu0 %v1482
    %1601 = vmatprep.subr.mxu0 %v1487
    %1602 = vmatpush1.msra.mxu0 %v1486
    %1603 = vmatprep.subr.mxu0 %v1491
    %1604 = vmatpush1.msra.mxu0 %v1490
    %1605 = vmatprep.subr.mxu0 %v1495
    %1606 = vmatpush1.msra.mxu0 %v1494
    %1607 = vmatprep.subr.mxu0 %v1499
    %1608 = vmatpush1.msra.mxu0 %v1498
    %1609 = vmatprep.subr.mxu0 %v1503
    %1610 = vmatpush1.msra.mxu0 %v1502
    %1611 = vmatprep.subr.mxu0 %v1507
    %1612 = vmatpush1.msra.mxu0 %v1506
    %1613 = vmatprep.subr.mxu0 %v1511
    %1614 = vmatpush1.msra.mxu0 %v1510
    %1615 = vmatprep.subr.mxu0 0.0
    %1616 = vmatpush1.msra.mxu0 0.0
    %1617 = vmatprep.subr.mxu0 0.0
    %1618 = vmatpush1.msra.mxu0 0.0
    %1619 = vmatprep.subr.mxu0 0.0
    %1620 = vmatpush1.msra.mxu0 0.0
    %1621 = vmatprep.subr.mxu0 0.0
    %1622 = vmatpush1.msra.mxu0 0.0
    %1623 = vmatprep.subr.mxu0 0.0
    %1624 = vmatpush1.msra.mxu0 0.0
    %1625 = vmatprep.subr.mxu0 0.0
    %1626 = vmatpush1.msra.mxu0 0.0
    %1627 = vmatprep.subr.mxu0 0.0
    %1628 = vmatpush1.msra.mxu0 0.0
    %1629 = vmatprep.subr.mxu0 0.0
    %1630 = vmatpush1.msra.mxu0 0.0
    %1631 = vmatprep.subr.mxu0 0.0
    %1632 = vmatpush1.msra.mxu0 0.0
    %1633 = vmatprep.subr.mxu0 0.0
    %1634 = vmatpush1.msra.mxu0 0.0
    %1635 = vmatprep.subr.mxu0 0.0
    %1636 = vmatpush1.msra.mxu0 0.0
    %1637 = vmatprep.subr.mxu0 0.0
    %1638 = vmatpush1.msra.mxu0 0.0
    %1639 = vmatprep.subr.mxu0 0.0
    %1640 = vmatpush1.msra.mxu0 0.0
    %1641 = vmatprep.subr.mxu0 0.0
    %1642 = vmatpush1.msra.mxu0 0.0
    %1643 = vmatprep.subr.mxu0 0.0
    %1644 = vmatpush1.msra.mxu0 0.0
    %1645 = vmatprep.subr.mxu0 0.0
    %1646 = vmatpush1.msra.mxu0 0.0
    %1647 = vmatprep.mubr.f32.mxu0 0.0
    %1648 = vmatmul.mubr.f32.gmra.mrb[0].mxu0 %v145
    %v1649 = vpop.f32.mrb[0].mxu0
    %v1650 = vadd.f32 %v223, %v1649
    %v1651 = vpop.f32.mrb[0].mxu0
    %v1652 = vadd.f32 %v227, %v1651
    %1653 = vdwg.mxu0
    %v1654 = vmax.f32 %v1579, 0.0
    %v1655 = vmax.f32 %v1581, 0.0
    %v1656 = vmax.f32 %v1650, 0.0
    %v1657 = vmax.f32 %v1652, 0.0
    %v1658 = vmax.f32 %v1444, %v1654
    %v1659 = vmax.f32 %v1445, %v1655
    %v1660 = vmax.f32 %v1446, %v1656
    %v1661 = vmax.f32 %v1447, %v1657
    %v1662 = vld [vmem:[#allocation5 + $0xe0] sm:$0xff]
    %v1663 = vld [vmem:[#allocation5 + $0xe8] sm:$0xff]
    %v1664 = vld [vmem:[#allocation5 + $0xf0] sm:$0xff]
    %v1665 = vld [vmem:[#allocation5 + $0xf8] sm:$0xff]
    %v1666 = vld [vmem:[#allocation5 + $0x200] sm:$0xff]
    %v1667 = vld [vmem:[#allocation5 + $0x208] sm:$0xff]
    %v1668 = vld [vmem:[#allocation5 + $0x210] sm:$0xff]
    %v1669 = vld [vmem:[#allocation5 + $0x218] sm:$0xff]
    %v1670 = vld [vmem:[#allocation5 + $0x320] sm:$0xff]
    %v1671 = vld [vmem:[#allocation5 + $0x328] sm:$0xff]
    %v1672 = vld [vmem:[#allocation5 + $0x330] sm:$0xff]
    %v1673 = vld [vmem:[#allocation5 + $0x338] sm:$0xff]
    %v1674 = vld [vmem:[#allocation5 + $0x440] sm:$0xff]
    %v1675 = vld [vmem:[#allocation5 + $0x448] sm:$0xff]
    %v1676 = vld [vmem:[#allocation5 + $0x450] sm:$0xff]
    %v1677 = vld [vmem:[#allocation5 + $0x458] sm:$0xff]
    %v1678 = vld [vmem:[#allocation5 + $0x560] sm:$0xff]
    %v1679 = vld [vmem:[#allocation5 + $0x568] sm:$0xff]
    %v1680 = vld [vmem:[#allocation5 + $0x570] sm:$0xff]
    %v1681 = vld [vmem:[#allocation5 + $0x578] sm:$0xff]
    %v1682 = vld [vmem:[#allocation5 + $0x680] sm:$0xff]
    %v1683 = vld [vmem:[#allocation5 + $0x688] sm:$0xff]
    %v1684 = vld [vmem:[#allocation5 + $0x690] sm:$0xff]
    %v1685 = vld [vmem:[#allocation5 + $0x698] sm:$0xff]
    %v1686 = vld [vmem:[#allocation5 + $0x7a0] sm:$0xff]
    %v1687 = vld [vmem:[#allocation5 + $0x7a8] sm:$0xff]
    %v1688 = vld [vmem:[#allocation5 + $0x7b0] sm:$0xff]
    %v1689 = vld [vmem:[#allocation5 + $0x7b8] sm:$0xff]
    %v1690 = vld [vmem:[#allocation5 + $0x8c0] sm:$0xff]
    %v1691 = vld [vmem:[#allocation5 + $0x8c8] sm:$0xff]
    %v1692 = vld [vmem:[#allocation5 + $0x8d0] sm:$0xff]
    %v1693 = vld [vmem:[#allocation5 + $0x8d8] sm:$0xff]
    %v1694 = vld [vmem:[#allocation5 + $0x9e0] sm:$0xff]
    %v1695 = vld [vmem:[#allocation5 + $0x9e8] sm:$0xff]
    %v1696 = vld [vmem:[#allocation5 + $0x9f0] sm:$0xff]
    %v1697 = vld [vmem:[#allocation5 + $0x9f8] sm:$0xff]
    %v1698 = vld [vmem:[#allocation5 + $0xb00] sm:$0xff]
    %v1699 = vld [vmem:[#allocation5 + $0xb08] sm:$0xff]
    %v1700 = vld [vmem:[#allocation5 + $0xb10] sm:$0xff]
    %v1701 = vld [vmem:[#allocation5 + $0xb18] sm:$0xff]
    %v1702 = vld [vmem:[#allocation5 + $0xc20] sm:$0xff]
    %v1703 = vld [vmem:[#allocation5 + $0xc28] sm:$0xff]
    %v1704 = vld [vmem:[#allocation5 + $0xc30] sm:$0xff]
    %v1705 = vld [vmem:[#allocation5 + $0xc38] sm:$0xff]
    %v1706 = vld [vmem:[#allocation5 + $0xd40] sm:$0xff]
    %v1707 = vld [vmem:[#allocation5 + $0xd48] sm:$0xff]
    %v1708 = vld [vmem:[#allocation5 + $0xd50] sm:$0xff]
    %v1709 = vld [vmem:[#allocation5 + $0xd58] sm:$0xff]
    %v1710 = vld [vmem:[#allocation5 + $0xe60] sm:$0xff]
    %v1711 = vld [vmem:[#allocation5 + $0xe68] sm:$0xff]
    %v1712 = vld [vmem:[#allocation5 + $0xe70] sm:$0xff]
    %v1713 = vld [vmem:[#allocation5 + $0xe78] sm:$0xff]
    %v1714 = vld [vmem:[#allocation5 + $0xf80] sm:$0xff]
    %v1715 = vld [vmem:[#allocation5 + $0xf88] sm:$0xff]
    %v1716 = vld [vmem:[#allocation5 + $0xf90] sm:$0xff]
    %v1717 = vld [vmem:[#allocation5 + $0xf98] sm:$0xff]
    %v1718 = vld [vmem:[#allocation5 + $0x10a0] sm:$0xff]
    %v1719 = vld [vmem:[#allocation5 + $0x10a8] sm:$0xff]
    %v1720 = vld [vmem:[#allocation5 + $0x10b0] sm:$0xff]
    %v1721 = vld [vmem:[#allocation5 + $0x10b8] sm:$0xff]
    %v1722 = vld [vmem:[#allocation5 + $0x11c0] sm:$0xff]
    %v1723 = vld [vmem:[#allocation5 + $0x11c8] sm:$0xff]
    %v1724 = vld [vmem:[#allocation5 + $0x11d0] sm:$0xff]
    %v1725 = vld [vmem:[#allocation5 + $0x11d8] sm:$0xff]
    %1726 = vmatprep.subr.mxu0 %v1663
    %1727 = vmatpush1.msra.mxu0 %v1662
    %1728 = vmatprep.subr.mxu0 %v1667
    %1729 = vmatpush1.msra.mxu0 %v1666
    %1730 = vmatprep.subr.mxu0 %v1671
    %1731 = vmatpush1.msra.mxu0 %v1670
    %1732 = vmatprep.subr.mxu0 %v1675
    %1733 = vmatpush1.msra.mxu0 %v1674
    %1734 = vmatprep.subr.mxu0 %v1679
    %1735 = vmatpush1.msra.mxu0 %v1678
    %1736 = vmatprep.subr.mxu0 %v1683
    %1737 = vmatpush1.msra.mxu0 %v1682
    %1738 = vmatprep.subr.mxu0 %v1687
    %1739 = vmatpush1.msra.mxu0 %v1686
    %1740 = vmatprep.subr.mxu0 %v1691
    %1741 = vmatpush1.msra.mxu0 %v1690
    %1742 = vmatprep.subr.mxu0 %v1695
    %1743 = vmatpush1.msra.mxu0 %v1694
    %1744 = vmatprep.subr.mxu0 %v1699
    %1745 = vmatpush1.msra.mxu0 %v1698
    %1746 = vmatprep.subr.mxu0 %v1703
    %1747 = vmatpush1.msra.mxu0 %v1702
    %1748 = vmatprep.subr.mxu0 %v1707
    %1749 = vmatpush1.msra.mxu0 %v1706
    %1750 = vmatprep.subr.mxu0 %v1711
    %1751 = vmatpush1.msra.mxu0 %v1710
    %1752 = vmatprep.subr.mxu0 %v1715
    %1753 = vmatpush1.msra.mxu0 %v1714
    %1754 = vmatprep.subr.mxu0 %v1719
    %1755 = vmatpush1.msra.mxu0 %v1718
    %1756 = vmatprep.subr.mxu0 %v1723
    %1757 = vmatpush1.msra.mxu0 %v1722
    %1758 = vmatprep.subr.mxu0 0.0
    %1759 = vmatpush1.msra.mxu0 0.0
    %1760 = vmatprep.subr.mxu0 0.0
    %1761 = vmatpush1.msra.mxu0 0.0
    %1762 = vmatprep.subr.mxu0 0.0
    %1763 = vmatpush1.msra.mxu0 0.0
    %1764 = vmatprep.subr.mxu0 0.0
    %1765 = vmatpush1.msra.mxu0 0.0
    %1766 = vmatprep.subr.mxu0 0.0
    %1767 = vmatpush1.msra.mxu0 0.0
    %1768 = vmatprep.subr.mxu0 0.0
    %1769 = vmatpush1.msra.mxu0 0.0
    %1770 = vmatprep.subr.mxu0 0.0
    %1771 = vmatpush1.msra.mxu0 0.0
    %1772 = vmatprep.subr.mxu0 0.0
    %1773 = vmatpush1.msra.mxu0 0.0
    %1774 = vmatprep.subr.mxu0 0.0
    %1775 = vmatpush1.msra.mxu0 0.0
    %1776 = vmatprep.subr.mxu0 0.0
    %1777 = vmatpush1.msra.mxu0 0.0
    %1778 = vmatprep.subr.mxu0 0.0
    %1779 = vmatpush1.msra.mxu0 0.0
    %1780 = vmatprep.subr.mxu0 0.0
    %1781 = vmatpush1.msra.mxu0 0.0
    %1782 = vmatprep.subr.mxu0 0.0
    %1783 = vmatpush1.msra.mxu0 0.0
    %1784 = vmatprep.subr.mxu0 0.0
    %1785 = vmatpush1.msra.mxu0 0.0
    %1786 = vmatprep.subr.mxu0 0.0
    %1787 = vmatpush1.msra.mxu0 0.0
    %1788 = vmatprep.subr.mxu0 0.0
    %1789 = vmatpush1.msra.mxu0 0.0
    %1790 = vmatprep.mubr.f32.mxu0 0.0
    %1791 = vmatmul.mubr.f32.gmra.mrb[0].mxu0 %v145
    %v1792 = vpop.f32.mrb[0].mxu0
    %v1793 = vadd.f32 %v215, %v1792
    %v1794 = vpop.f32.mrb[0].mxu0
    %v1795 = vadd.f32 %v219, %v1794
    %1796 = vdwg.mxu0
    %1797 = vmatprep.subr.mxu0 %v1665
    %1798 = vmatpush1.msra.mxu0 %v1664
    %1799 = vmatprep.subr.mxu0 %v1669
    %1800 = vmatpush1.msra.mxu0 %v1668
    %1801 = vmatprep.subr.mxu0 %v1673
    %1802 = vmatpush1.msra.mxu0 %v1672
    %1803 = vmatprep.subr.mxu0 %v1677
    %1804 = vmatpush1.msra.mxu0 %v1676
    %1805 = vmatprep.subr.mxu0 %v1681
    %1806 = vmatpush1.msra.mxu0 %v1680
    %1807 = vmatprep.subr.mxu0 %v1685
    %1808 = vmatpush1.msra.mxu0 %v1684
    %1809 = vmatprep.subr.mxu0 %v1689
    %1810 = vmatpush1.msra.mxu0 %v1688
    %1811 = vmatprep.subr.mxu0 %v1693
    %1812 = vmatpush1.msra.mxu0 %v1692
    %1813 = vmatprep.subr.mxu0 %v1697
    %1814 = vmatpush1.msra.mxu0 %v1696
    %1815 = vmatprep.subr.mxu0 %v1701
    %1816 = vmatpush1.msra.mxu0 %v1700
    %1817 = vmatprep.subr.mxu0 %v1705
    %1818 = vmatpush1.msra.mxu0 %v1704
    %1819 = vmatprep.subr.mxu0 %v1709
    %1820 = vmatpush1.msra.mxu0 %v1708
    %1821 = vmatprep.subr.mxu0 %v1713
    %1822 = vmatpush1.msra.mxu0 %v1712
    %1823 = vmatprep.subr.mxu0 %v1717
    %1824 = vmatpush1.msra.mxu0 %v1716
    %1825 = vmatprep.subr.mxu0 %v1721
    %1826 = vmatpush1.msra.mxu0 %v1720
    %1827 = vmatprep.subr.mxu0 %v1725
    %1828 = vmatpush1.msra.mxu0 %v1724
    %1829 = vmatprep.subr.mxu0 0.0
    %1830 = vmatpush1.msra.mxu0 0.0
    %1831 = vmatprep.subr.mxu0 0.0
    %1832 = vmatpush1.msra.mxu0 0.0
    %1833 = vmatprep.subr.mxu0 0.0
    %1834 = vmatpush1.msra.mxu0 0.0
    %1835 = vmatprep.subr.mxu0 0.0
    %1836 = vmatpush1.msra.mxu0 0.0
    %1837 = vmatprep.subr.mxu0 0.0
    %1838 = vmatpush1.msra.mxu0 0.0
    %1839 = vmatprep.subr.mxu0 0.0
    %1840 = vmatpush1.msra.mxu0 0.0
    %1841 = vmatprep.subr.mxu0 0.0
    %1842 = vmatpush1.msra.mxu0 0.0
    %1843 = vmatprep.subr.mxu0 0.0
    %1844 = vmatpush1.msra.mxu0 0.0
    %1845 = vmatprep.subr.mxu0 0.0
    %1846 = vmatpush1.msra.mxu0 0.0
    %1847 = vmatprep.subr.mxu0 0.0
    %1848 = vmatpush1.msra.mxu0 0.0
    %1849 = vmatprep.subr.mxu0 0.0
    %1850 = vmatpush1.msra.mxu0 0.0
    %1851 = vmatprep.subr.mxu0 0.0
    %1852 = vmatpush1.msra.mxu0 0.0
    %1853 = vmatprep.subr.mxu0 0.0
    %1854 = vmatpush1.msra.mxu0 0.0
    %1855 = vmatprep.subr.mxu0 0.0
    %1856 = vmatpush1.msra.mxu0 0.0
    %1857 = vmatprep.subr.mxu0 0.0
    %1858 = vmatpush1.msra.mxu0 0.0
    %1859 = vmatprep.subr.mxu0 0.0
    %1860 = vmatpush1.msra.mxu0 0.0
    %1861 = vmatprep.mubr.f32.mxu0 0.0
    %1862 = vmatmul.mubr.f32.gmra.mrb[0].mxu0 %v145
    %v1863 = vpop.f32.mrb[0].mxu0
    %v1864 = vadd.f32 %v223, %v1863
    %v1865 = vpop.f32.mrb[0].mxu0
    %v1866 = vadd.f32 %v227, %v1865
    %1867 = vdwg.mxu0
    %v1868 = vmax.f32 %v1793, 0.0
    %v1869 = vmax.f32 %v1795, 0.0
    %v1870 = vmax.f32 %v1864, 0.0
    %v1871 = vmax.f32 %v1866, 0.0
    %v1872 = vmax.f32 %v1658, %v1868
    %v1873 = vmax.f32 %v1659, %v1869
    %v1874 = vmax.f32 %v1660, %v1870
    %v1875 = vmax.f32 %v1661, %v1871
    %v1876 = vld [vmem:[#allocation5 + $0x100] sm:$0xff]
    %v1877 = vld [vmem:[#allocation5 + $0x108] sm:$0xff]
    %v1878 = vld [vmem:[#allocation5 + $0x110] sm:$0xff]
    %v1879 = vld [vmem:[#allocation5 + $0x118] sm:$0xff]
    %v1880 = vld [vmem:[#allocation5 + $0x220] sm:$0xff]
    %v1881 = vld [vmem:[#allocation5 + $0x228] sm:$0xff]
    %v1882 = vld [vmem:[#allocation5 + $0x230] sm:$0xff]
    %v1883 = vld [vmem:[#allocation5 + $0x238] sm:$0xff]
    %v1884 = vld [vmem:[#allocation5 + $0x340] sm:$0xff]
    %v1885 = vld [vmem:[#allocation5 + $0x348] sm:$0xff]
    %v1886 = vld [vmem:[#allocation5 + $0x350] sm:$0xff]
    %v1887 = vld [vmem:[#allocation5 + $0x358] sm:$0xff]
    %v1888 = vld [vmem:[#allocation5 + $0x460] sm:$0xff]
    %v1889 = vld [vmem:[#allocation5 + $0x468] sm:$0xff]
    %v1890 = vld [vmem:[#allocation5 + $0x470] sm:$0xff]
    %v1891 = vld [vmem:[#allocation5 + $0x478] sm:$0xff]
    %v1892 = vld [vmem:[#allocation5 + $0x580] sm:$0xff]
    %v1893 = vld [vmem:[#allocation5 + $0x588] sm:$0xff]
    %v1894 = vld [vmem:[#allocation5 + $0x590] sm:$0xff]
    %v1895 = vld [vmem:[#allocation5 + $0x598] sm:$0xff]
    %v1896 = vld [vmem:[#allocation5 + $0x6a0] sm:$0xff]
    %v1897 = vld [vmem:[#allocation5 + $0x6a8] sm:$0xff]
    %v1898 = vld [vmem:[#allocation5 + $0x6b0] sm:$0xff]
    %v1899 = vld [vmem:[#allocation5 + $0x6b8] sm:$0xff]
    %v1900 = vld [vmem:[#allocation5 + $0x7c0] sm:$0xff]
    %v1901 = vld [vmem:[#allocation5 + $0x7c8] sm:$0xff]
    %v1902 = vld [vmem:[#allocation5 + $0x7d0] sm:$0xff]
    %v1903 = vld [vmem:[#allocation5 + $0x7d8] sm:$0xff]
    %v1904 = vld [vmem:[#allocation5 + $0x8e0] sm:$0xff]
    %v1905 = vld [vmem:[#allocation5 + $0x8e8] sm:$0xff]
    %v1906 = vld [vmem:[#allocation5 + $0x8f0] sm:$0xff]
    %v1907 = vld [vmem:[#allocation5 + $0x8f8] sm:$0xff]
    %v1908 = vld [vmem:[#allocation5 + $0xa00] sm:$0xff]
    %v1909 = vld [vmem:[#allocation5 + $0xa08] sm:$0xff]
    %v1910 = vld [vmem:[#allocation5 + $0xa10] sm:$0xff]
    %v1911 = vld [vmem:[#allocation5 + $0xa18] sm:$0xff]
    %v1912 = vld [vmem:[#allocation5 + $0xb20] sm:$0xff]
    %v1913 = vld [vmem:[#allocation5 + $0xb28] sm:$0xff]
    %v1914 = vld [vmem:[#allocation5 + $0xb30] sm:$0xff]
    %v1915 = vld [vmem:[#allocation5 + $0xb38] sm:$0xff]
    %v1916 = vld [vmem:[#allocation5 + $0xc40] sm:$0xff]
    %v1917 = vld [vmem:[#allocation5 + $0xc48] sm:$0xff]
    %v1918 = vld [vmem:[#allocation5 + $0xc50] sm:$0xff]
    %v1919 = vld [vmem:[#allocation5 + $0xc58] sm:$0xff]
    %v1920 = vld [vmem:[#allocation5 + $0xd60] sm:$0xff]
    %v1921 = vld [vmem:[#allocation5 + $0xd68] sm:$0xff]
    %v1922 = vld [vmem:[#allocation5 + $0xd70] sm:$0xff]
    %v1923 = vld [vmem:[#allocation5 + $0xd78] sm:$0xff]
    %v1924 = vld [vmem:[#allocation5 + $0xe80] sm:$0xff]
    %v1925 = vld [vmem:[#allocation5 + $0xe88] sm:$0xff]
    %v1926 = vld [vmem:[#allocation5 + $0xe90] sm:$0xff]
    %v1927 = vld [vmem:[#allocation5 + $0xe98] sm:$0xff]
    %v1928 = vld [vmem:[#allocation5 + $0xfa0] sm:$0xff]
    %v1929 = vld [vmem:[#allocation5 + $0xfa8] sm:$0xff]
    %v1930 = vld [vmem:[#allocation5 + $0xfb0] sm:$0xff]
    %v1931 = vld [vmem:[#allocation5 + $0xfb8] sm:$0xff]
    %v1932 = vld [vmem:[#allocation5 + $0x10c0] sm:$0xff]
    %v1933 = vld [vmem:[#allocation5 + $0x10c8] sm:$0xff]
    %v1934 = vld [vmem:[#allocation5 + $0x10d0] sm:$0xff]
    %v1935 = vld [vmem:[#allocation5 + $0x10d8] sm:$0xff]
    %v1936 = vld [vmem:[#allocation5 + $0x11e0] sm:$0xff]
    %v1937 = vld [vmem:[#allocation5 + $0x11e8] sm:$0xff]
    %v1938 = vld [vmem:[#allocation5 + $0x11f0] sm:$0xff]
    %v1939 = vld [vmem:[#allocation5 + $0x11f8] sm:$0xff]
    %1940 = vmatprep.subr.mxu0 %v1877
    %1941 = vmatpush1.msra.mxu0 %v1876
    %1942 = vmatprep.subr.mxu0 %v1881
    %1943 = vmatpush1.msra.mxu0 %v1880
    %1944 = vmatprep.subr.mxu0 %v1885
    %1945 = vmatpush1.msra.mxu0 %v1884
    %1946 = vmatprep.subr.mxu0 %v1889
    %1947 = vmatpush1.msra.mxu0 %v1888
    %1948 = vmatprep.subr.mxu0 %v1893
    %1949 = vmatpush1.msra.mxu0 %v1892
    %1950 = vmatprep.subr.mxu0 %v1897
    %1951 = vmatpush1.msra.mxu0 %v1896
    %1952 = vmatprep.subr.mxu0 %v1901
    %1953 = vmatpush1.msra.mxu0 %v1900
    %1954 = vmatprep.subr.mxu0 %v1905
    %1955 = vmatpush1.msra.mxu0 %v1904
    %1956 = vmatprep.subr.mxu0 %v1909
    %1957 = vmatpush1.msra.mxu0 %v1908
    %1958 = vmatprep.subr.mxu0 %v1913
    %1959 = vmatpush1.msra.mxu0 %v1912
    %1960 = vmatprep.subr.mxu0 %v1917
    %1961 = vmatpush1.msra.mxu0 %v1916
    %1962 = vmatprep.subr.mxu0 %v1921
    %1963 = vmatpush1.msra.mxu0 %v1920
    %1964 = vmatprep.subr.mxu0 %v1925
    %1965 = vmatpush1.msra.mxu0 %v1924
    %1966 = vmatprep.subr.mxu0 %v1929
    %1967 = vmatpush1.msra.mxu0 %v1928
    %1968 = vmatprep.subr.mxu0 %v1933
    %1969 = vmatpush1.msra.mxu0 %v1932
    %1970 = vmatprep.subr.mxu0 %v1937
    %1971 = vmatpush1.msra.mxu0 %v1936
    %1972 = vmatprep.subr.mxu0 0.0
    %1973 = vmatpush1.msra.mxu0 0.0
    %1974 = vmatprep.subr.mxu0 0.0
    %1975 = vmatpush1.msra.mxu0 0.0
    %1976 = vmatprep.subr.mxu0 0.0
    %1977 = vmatpush1.msra.mxu0 0.0
    %1978 = vmatprep.subr.mxu0 0.0
    %1979 = vmatpush1.msra.mxu0 0.0
    %1980 = vmatprep.subr.mxu0 0.0
    %1981 = vmatpush1.msra.mxu0 0.0
    %1982 = vmatprep.subr.mxu0 0.0
    %1983 = vmatpush1.msra.mxu0 0.0
    %1984 = vmatprep.subr.mxu0 0.0
    %1985 = vmatpush1.msra.mxu0 0.0
    %1986 = vmatprep.subr.mxu0 0.0
    %1987 = vmatpush1.msra.mxu0 0.0
    %1988 = vmatprep.subr.mxu0 0.0
    %1989 = vmatpush1.msra.mxu0 0.0
    %1990 = vmatprep.subr.mxu0 0.0
    %1991 = vmatpush1.msra.mxu0 0.0
    %1992 = vmatprep.subr.mxu0 0.0
    %1993 = vmatpush1.msra.mxu0 0.0
    %1994 = vmatprep.subr.mxu0 0.0
    %1995 = vmatpush1.msra.mxu0 0.0
    %1996 = vmatprep.subr.mxu0 0.0
    %1997 = vmatpush1.msra.mxu0 0.0
    %1998 = vmatprep.subr.mxu0 0.0
    %1999 = vmatpush1.msra.mxu0 0.0
    %2000 = vmatprep.subr.mxu0 0.0
    %2001 = vmatpush1.msra.mxu0 0.0
    %2002 = vmatprep.subr.mxu0 0.0
    %2003 = vmatpush1.msra.mxu0 0.0
    %2004 = vmatprep.mubr.f32.mxu0 0.0
    %2005 = vmatmul.mubr.f32.gmra.mrb[0].mxu0 %v145
    %v2006 = vpop.f32.mrb[0].mxu0
    %v2007 = vadd.f32 %v215, %v2006
    %v2008 = vpop.f32.mrb[0].mxu0
    %v2009 = vadd.f32 %v219, %v2008
    %2010 = vdwg.mxu0
    %2011 = vmatprep.subr.mxu0 %v1879
    %2012 = vmatpush1.msra.mxu0 %v1878
    %2013 = vmatprep.subr.mxu0 %v1883
    %2014 = vmatpush1.msra.mxu0 %v1882
    %2015 = vmatprep.subr.mxu0 %v1887
    %2016 = vmatpush1.msra.mxu0 %v1886
    %2017 = vmatprep.subr.mxu0 %v1891
    %2018 = vmatpush1.msra.mxu0 %v1890
    %2019 = vmatprep.subr.mxu0 %v1895
    %2020 = vmatpush1.msra.mxu0 %v1894
    %2021 = vmatprep.subr.mxu0 %v1899
    %2022 = vmatpush1.msra.mxu0 %v1898
    %2023 = vmatprep.subr.mxu0 %v1903
    %2024 = vmatpush1.msra.mxu0 %v1902
    %2025 = vmatprep.subr.mxu0 %v1907
    %2026 = vmatpush1.msra.mxu0 %v1906
    %2027 = vmatprep.subr.mxu0 %v1911
    %2028 = vmatpush1.msra.mxu0 %v1910
    %2029 = vmatprep.subr.mxu0 %v1915
    %2030 = vmatpush1.msra.mxu0 %v1914
    %2031 = vmatprep.subr.mxu0 %v1919
    %2032 = vmatpush1.msra.mxu0 %v1918
    %2033 = vmatprep.subr.mxu0 %v1923
    %2034 = vmatpush1.msra.mxu0 %v1922
    %2035 = vmatprep.subr.mxu0 %v1927
    %2036 = vmatpush1.msra.mxu0 %v1926
    %2037 = vmatprep.subr.mxu0 %v1931
    %2038 = vmatpush1.msra.mxu0 %v1930
    %2039 = vmatprep.subr.mxu0 %v1935
    %2040 = vmatpush1.msra.mxu0 %v1934
    %2041 = vmatprep.subr.mxu0 %v1939
    %2042 = vmatpush1.msra.mxu0 %v1938
    %2043 = vmatprep.subr.mxu0 0.0
    %2044 = vmatpush1.msra.mxu0 0.0
    %2045 = vmatprep.subr.mxu0 0.0
    %2046 = vmatpush1.msra.mxu0 0.0
    %2047 = vmatprep.subr.mxu0 0.0
    %2048 = vmatpush1.msra.mxu0 0.0
    %2049 = vmatprep.subr.mxu0 0.0
    %2050 = vmatpush1.msra.mxu0 0.0
    %2051 = vmatprep.subr.mxu0 0.0
    %2052 = vmatpush1.msra.mxu0 0.0
    %2053 = vmatprep.subr.mxu0 0.0
    %2054 = vmatpush1.msra.mxu0 0.0
    %2055 = vmatprep.subr.mxu0 0.0
    %2056 = vmatpush1.msra.mxu0 0.0
    %2057 = vmatprep.subr.mxu0 0.0
    %2058 = vmatpush1.msra.mxu0 0.0
    %2059 = vmatprep.subr.mxu0 0.0
    %2060 = vmatpush1.msra.mxu0 0.0
    %2061 = vmatprep.subr.mxu0 0.0
    %2062 = vmatpush1.msra.mxu0 0.0
    %2063 = vmatprep.subr.mxu0 0.0
    %2064 = vmatpush1.msra.mxu0 0.0
    %2065 = vmatprep.subr.mxu0 0.0
    %2066 = vmatpush1.msra.mxu0 0.0
    %2067 = vmatprep.subr.mxu0 0.0
    %2068 = vmatpush1.msra.mxu0 0.0
    %2069 = vmatprep.subr.mxu0 0.0
    %2070 = vmatpush1.msra.mxu0 0.0
    %2071 = vmatprep.subr.mxu0 0.0
    %2072 = vmatpush1.msra.mxu0 0.0
    %2073 = vmatprep.subr.mxu0 0.0
    %2074 = vmatpush1.msra.mxu0 0.0
    %2075 = vmatprep.mubr.f32.mxu0 0.0
    %2076 = vmatmul.mubr.f32.gmra.mrb[0].mxu0 %v145
    %v2077 = vpop.f32.mrb[0].mxu0
    %v2078 = vadd.f32 %v223, %v2077
    %v2079 = vpop.f32.mrb[0].mxu0
    %v2080 = vadd.f32 %v227, %v2079
    %2081 = vdwg.mxu0
    %v2082 = vmax.f32 %v2007, 0.0
    %v2083 = vmax.f32 %v2009, 0.0
    %v2084 = vmax.f32 %v2078, 0.0
    %v2085 = vmax.f32 %v2080, 0.0
    %v2086 = vmax.f32 %v1872, %v2082
    %v2087 = vmax.f32 %v1873, %v2083
    %v2088 = vmax.f32 %v1874, %v2084
    %v2089 = vmax.f32 %v1875, %v2085
    %v2090 = vld [vmem:[#allocation10] sm:$0x1]
    %v2091 = vld [vmem:[#allocation8] sm:$0xff]
    %v2092 = vld [vmem:[#allocation8 + $0x20] sm:$0xff]
    %v2093 = vld [vmem:[#allocation8 + $0x40] sm:$0xff]
    %v2094 = vld [vmem:[#allocation8 + $0x60] sm:$0xff]
    %v2095 = vld [vmem:[#allocation8 + $0x80] sm:$0xff]
    %v2096 = vld [vmem:[#allocation8 + $0xa0] sm:$0xff]
    %v2097 = vld [vmem:[#allocation8 + $0xc0] sm:$0xff]
    %v2098 = vld [vmem:[#allocation8 + $0xe0] sm:$0xff]
    %v2099 = vld [vmem:[#allocation8 + $0x100] sm:$0xff]
    %v2100 = vld [vmem:[#allocation8 + $0x120] sm:$0xff]
    %v2101 = vld [vmem:[#allocation8 + $0x140] sm:$0xff]
    %v2102 = vld [vmem:[#allocation8 + $0x160] sm:$0xff]
    %v2103 = vld [vmem:[#allocation8 + $0x180] sm:$0xff]
    %v2104 = vld [vmem:[#allocation8 + $0x1a0] sm:$0xff]
    %v2105 = vld [vmem:[#allocation8 + $0x1c0] sm:$0xff]
    %v2106 = vld [vmem:[#allocation8 + $0x1e0] sm:$0xff]
    %v2107 = vld [vmem:[#allocation8 + $0x200] sm:$0xff]
    %v2108 = vld [vmem:[#allocation8 + $0x220] sm:$0xff]
    %v2109 = vld [vmem:[#allocation8 + $0x240] sm:$0xff]
    %v2110 = vld [vmem:[#allocation8 + $0x260] sm:$0xff]
    %v2111 = vld [vmem:[#allocation8 + $0x280] sm:$0xff]
    %v2112 = vld [vmem:[#allocation8 + $0x2a0] sm:$0xff]
    %v2113 = vld [vmem:[#allocation8 + $0x2c0] sm:$0xff]
    %v2114 = vld [vmem:[#allocation8 + $0x2e0] sm:$0xff]
    %v2115 = vld [vmem:[#allocation8 + $0x300] sm:$0xff]
    %v2116 = vld [vmem:[#allocation8 + $0x320] sm:$0xff]
    %v2117 = vld [vmem:[#allocation8 + $0x340] sm:$0xff]
    %v2118 = vld [vmem:[#allocation8 + $0x360] sm:$0xff]
    %v2119 = vld [vmem:[#allocation8 + $0x380] sm:$0xff]
    %v2120 = vld [vmem:[#allocation8 + $0x3a0] sm:$0xff]
    %v2121 = vld [vmem:[#allocation8 + $0x3c0] sm:$0xff]
    %v2122 = vld [vmem:[#allocation8 + $0x3e0] sm:$0xff]
    %v2123 = vld [vmem:[#allocation8 + $0x400] sm:$0xff]
    %v2124 = vld [vmem:[#allocation8 + $0x420] sm:$0xff]
    %v2125 = vld [vmem:[#allocation8 + $0x440] sm:$0xff]
    %v2126 = vld [vmem:[#allocation8 + $0x460] sm:$0xff]
    %v2127 = vld [vmem:[#allocation8 + $0x480] sm:$0xff]
    %v2128 = vld [vmem:[#allocation8 + $0x4a0] sm:$0xff]
    %v2129 = vld [vmem:[#allocation8 + $0x4c0] sm:$0xff]
    %v2130 = vld [vmem:[#allocation8 + $0x4e0] sm:$0xff]
    %v2131 = vld [vmem:[#allocation8 + $0x500] sm:$0xff]
    %v2132 = vld [vmem:[#allocation8 + $0x520] sm:$0xff]
    %v2133 = vld [vmem:[#allocation8 + $0x540] sm:$0xff]
    %v2134 = vld [vmem:[#allocation8 + $0x560] sm:$0xff]
    %v2135 = vld [vmem:[#allocation8 + $0x580] sm:$0xff]
    %v2136 = vld [vmem:[#allocation8 + $0x5a0] sm:$0xff]
    %v2137 = vld [vmem:[#allocation8 + $0x5c0] sm:$0xff]
    %v2138 = vld [vmem:[#allocation8 + $0x5e0] sm:$0xff]
    %v2139 = vld [vmem:[#allocation8 + $0x600] sm:$0xff]
    %v2140 = vld [vmem:[#allocation8 + $0x620] sm:$0xff]
    %v2141 = vld [vmem:[#allocation8 + $0x640] sm:$0xff]
    %v2142 = vld [vmem:[#allocation8 + $0x660] sm:$0xff]
    %v2143 = vld [vmem:[#allocation8 + $0x680] sm:$0xff]
    %v2144 = vld [vmem:[#allocation8 + $0x6a0] sm:$0xff]
    %v2145 = vld [vmem:[#allocation8 + $0x6c0] sm:$0xff]
    %v2146 = vld [vmem:[#allocation8 + $0x6e0] sm:$0xff]
    %v2147 = vld [vmem:[#allocation8 + $0x700] sm:$0xff]
    %v2148 = vld [vmem:[#allocation8 + $0x720] sm:$0xff]
    %v2149 = vld [vmem:[#allocation8 + $0x740] sm:$0xff]
    %v2150 = vld [vmem:[#allocation8 + $0x760] sm:$0xff]
    %v2151 = vld [vmem:[#allocation8 + $0x780] sm:$0xff]
    %v2152 = vld [vmem:[#allocation8 + $0x7a0] sm:$0xff]
    %v2153 = vld [vmem:[#allocation8 + $0x7c0] sm:$0xff]
    %v2154 = vld [vmem:[#allocation8 + $0x7e0] sm:$0xff]
    %v2156 = vlaneseq
    %v2157 = vshrl.u32 %v2156, 7
    %v2158 = vsub.s32 0, %v2157
    %v2159 = vrot.slane %v2090, %v2158
    %2161 = vmatprep.subr.mxu0 0.0
    %2162 = vmatpush1.msra.mxu0 %v2091
    %2163 = vmatprep.subr.mxu0 0.0
    %2164 = vmatpush1.msra.mxu0 %v2092
    %2165 = vmatprep.subr.mxu0 0.0
    %2166 = vmatpush1.msra.mxu0 %v2093
    %2167 = vmatprep.subr.mxu0 0.0
    %2168 = vmatpush1.msra.mxu0 %v2094
    %2169 = vmatprep.subr.mxu0 0.0
    %2170 = vmatpush1.msra.mxu0 %v2095
    %2171 = vmatprep.subr.mxu0 0.0
    %2172 = vmatpush1.msra.mxu0 %v2096
    %2173 = vmatprep.subr.mxu0 0.0
    %2174 = vmatpush1.msra.mxu0 %v2097
    %2175 = vmatprep.subr.mxu0 0.0
    %2176 = vmatpush1.msra.mxu0 %v2098
    %2177 = vmatprep.subr.mxu0 0.0
    %2178 = vmatpush1.msra.mxu0 %v2099
    %2179 = vmatprep.subr.mxu0 0.0
    %2180 = vmatpush1.msra.mxu0 %v2100
    %2181 = vmatprep.subr.mxu0 0.0
    %2182 = vmatpush1.msra.mxu0 %v2101
    %2183 = vmatprep.subr.mxu0 0.0
    %2184 = vmatpush1.msra.mxu0 %v2102
    %2185 = vmatprep.subr.mxu0 0.0
    %2186 = vmatpush1.msra.mxu0 %v2103
    %2187 = vmatprep.subr.mxu0 0.0
    %2188 = vmatpush1.msra.mxu0 %v2104
    %2189 = vmatprep.subr.mxu0 0.0
    %2190 = vmatpush1.msra.mxu0 %v2105
    %2191 = vmatprep.subr.mxu0 0.0
    %2192 = vmatpush1.msra.mxu0 %v2106
    %2193 = vmatprep.subr.mxu0 0.0
    %2194 = vmatpush1.msra.mxu0 %v2107
    %2195 = vmatprep.subr.mxu0 0.0
    %2196 = vmatpush1.msra.mxu0 %v2108
    %2197 = vmatprep.subr.mxu0 0.0
    %2198 = vmatpush1.msra.mxu0 %v2109
    %2199 = vmatprep.subr.mxu0 0.0
    %2200 = vmatpush1.msra.mxu0 %v2110
    %2201 = vmatprep.subr.mxu0 0.0
    %2202 = vmatpush1.msra.mxu0 %v2111
    %2203 = vmatprep.subr.mxu0 0.0
    %2204 = vmatpush1.msra.mxu0 %v2112
    %2205 = vmatprep.subr.mxu0 0.0
    %2206 = vmatpush1.msra.mxu0 %v2113
    %2207 = vmatprep.subr.mxu0 0.0
    %2208 = vmatpush1.msra.mxu0 %v2114
    %2209 = vmatprep.subr.mxu0 0.0
    %2210 = vmatpush1.msra.mxu0 %v2115
    %2211 = vmatprep.subr.mxu0 0.0
    %2212 = vmatpush1.msra.mxu0 %v2116
    %2213 = vmatprep.subr.mxu0 0.0
    %2214 = vmatpush1.msra.mxu0 %v2117
    %2215 = vmatprep.subr.mxu0 0.0
    %2216 = vmatpush1.msra.mxu0 %v2118
    %2217 = vmatprep.subr.mxu0 0.0
    %2218 = vmatpush1.msra.mxu0 %v2119
    %2219 = vmatprep.subr.mxu0 0.0
    %2220 = vmatpush1.msra.mxu0 %v2120
    %2221 = vmatprep.subr.mxu0 0.0
    %2222 = vmatpush1.msra.mxu0 %v2121
    %2223 = vmatprep.subr.mxu0 0.0
    %2224 = vmatpush1.msra.mxu0 %v2122
    %2225 = vmatprep.mubr.f32.mxu0 %v2087
    %2226 = vmatmul.mubr.f32.gmra.mrb[0].mxu0 %v2086
    %v2227 = vpop.f32.mrb[0].mxu0
    %v2228 = vadd.f32 %v2159, %v2227
    %v2229 = vpop.f32.mrb[0].mxu0
    %2230 = vdwg.mxu0
    %2231 = vmatprep.subr.mxu0 0.0
    %2232 = vmatpush1.msra.mxu0 %v2123
    %2233 = vmatprep.subr.mxu0 0.0
    %2234 = vmatpush1.msra.mxu0 %v2124
    %2235 = vmatprep.subr.mxu0 0.0
    %2236 = vmatpush1.msra.mxu0 %v2125
    %2237 = vmatprep.subr.mxu0 0.0
    %2238 = vmatpush1.msra.mxu0 %v2126
    %2239 = vmatprep.subr.mxu0 0.0
    %2240 = vmatpush1.msra.mxu0 %v2127
    %2241 = vmatprep.subr.mxu0 0.0
    %2242 = vmatpush1.msra.mxu0 %v2128
    %2243 = vmatprep.subr.mxu0 0.0
    %2244 = vmatpush1.msra.mxu0 %v2129
    %2245 = vmatprep.subr.mxu0 0.0
    %2246 = vmatpush1.msra.mxu0 %v2130
    %2247 = vmatprep.subr.mxu0 0.0
    %2248 = vmatpush1.msra.mxu0 %v2131
    %2249 = vmatprep.subr.mxu0 0.0
    %2250 = vmatpush1.msra.mxu0 %v2132
    %2251 = vmatprep.subr.mxu0 0.0
    %2252 = vmatpush1.msra.mxu0 %v2133
    %2253 = vmatprep.subr.mxu0 0.0
    %2254 = vmatpush1.msra.mxu0 %v2134
    %2255 = vmatprep.subr.mxu0 0.0
    %2256 = vmatpush1.msra.mxu0 %v2135
    %2257 = vmatprep.subr.mxu0 0.0
    %2258 = vmatpush1.msra.mxu0 %v2136
    %2259 = vmatprep.subr.mxu0 0.0
    %2260 = vmatpush1.msra.mxu0 %v2137
    %2261 = vmatprep.subr.mxu0 0.0
    %2262 = vmatpush1.msra.mxu0 %v2138
    %2263 = vmatprep.subr.mxu0 0.0
    %2264 = vmatpush1.msra.mxu0 %v2139
    %2265 = vmatprep.subr.mxu0 0.0
    %2266 = vmatpush1.msra.mxu0 %v2140
    %2267 = vmatprep.subr.mxu0 0.0
    %2268 = vmatpush1.msra.mxu0 %v2141
    %2269 = vmatprep.subr.mxu0 0.0
    %2270 = vmatpush1.msra.mxu0 %v2142
    %2271 = vmatprep.subr.mxu0 0.0
    %2272 = vmatpush1.msra.mxu0 %v2143
    %2273 = vmatprep.subr.mxu0 0.0
    %2274 = vmatpush1.msra.mxu0 %v2144
    %2275 = vmatprep.subr.mxu0 0.0
    %2276 = vmatpush1.msra.mxu0 %v2145
    %2277 = vmatprep.subr.mxu0 0.0
    %2278 = vmatpush1.msra.mxu0 %v2146
    %2279 = vmatprep.subr.mxu0 0.0
    %2280 = vmatpush1.msra.mxu0 %v2147
    %2281 = vmatprep.subr.mxu0 0.0
    %2282 = vmatpush1.msra.mxu0 %v2148
    %2283 = vmatprep.subr.mxu0 0.0
    %2284 = vmatpush1.msra.mxu0 %v2149
    %2285 = vmatprep.subr.mxu0 0.0
    %2286 = vmatpush1.msra.mxu0 %v2150
    %2287 = vmatprep.subr.mxu0 0.0
    %2288 = vmatpush1.msra.mxu0 %v2151
    %2289 = vmatprep.subr.mxu0 0.0
    %2290 = vmatpush1.msra.mxu0 %v2152
    %2291 = vmatprep.subr.mxu0 0.0
    %2292 = vmatpush1.msra.mxu0 %v2153
    %2293 = vmatprep.subr.mxu0 0.0
    %2294 = vmatpush1.msra.mxu0 %v2154
    %2295 = vmatprep.mubr.f32.mxu0 %v2089
    %2296 = vmatmul.mubr.f32.gmra.mrb[0].mxu0 %v2088
    %v2297 = vpop.f32.mrb[0].mxu0
    %v2298 = vadd.f32 %v2228, %v2297
    %v2299 = vpop.f32.mrb[0].mxu0
    %2300 = vdwg.mxu0
    %v2301 = vmax.f32 %v2298, 0.0
    %v2302 = vld [vmem:[#allocation8 + $0x8] sm:$0xff]
    %v2303 = vld [vmem:[#allocation8 + $0x28] sm:$0xff]
    %v2304 = vld [vmem:[#allocation8 + $0x48] sm:$0xff]
    %v2305 = vld [vmem:[#allocation8 + $0x68] sm:$0xff]
    %v2306 = vld [vmem:[#allocation8 + $0x88] sm:$0xff]
    %v2307 = vld [vmem:[#allocation8 + $0xa8] sm:$0xff]
    %v2308 = vld [vmem:[#allocation8 + $0xc8] sm:$0xff]
    %v2309 = vld [vmem:[#allocation8 + $0xe8] sm:$0xff]
    %v2310 = vld [vmem:[#allocation8 + $0x108] sm:$0xff]
    %v2311 = vld [vmem:[#allocation8 + $0x128] sm:$0xff]
    %v2312 = vld [vmem:[#allocation8 + $0x148] sm:$0xff]
    %v2313 = vld [vmem:[#allocation8 + $0x168] sm:$0xff]
    %v2314 = vld [vmem:[#allocation8 + $0x188] sm:$0xff]
    %v2315 = vld [vmem:[#allocation8 + $0x1a8] sm:$0xff]
    %v2316 = vld [vmem:[#allocation8 + $0x1c8] sm:$0xff]
    %v2317 = vld [vmem:[#allocation8 + $0x1e8] sm:$0xff]
    %v2318 = vld [vmem:[#allocation8 + $0x208] sm:$0xff]
    %v2319 = vld [vmem:[#allocation8 + $0x228] sm:$0xff]
    %v2320 = vld [vmem:[#allocation8 + $0x248] sm:$0xff]
    %v2321 = vld [vmem:[#allocation8 + $0x268] sm:$0xff]
    %v2322 = vld [vmem:[#allocation8 + $0x288] sm:$0xff]
    %v2323 = vld [vmem:[#allocation8 + $0x2a8] sm:$0xff]
    %v2324 = vld [vmem:[#allocation8 + $0x2c8] sm:$0xff]
    %v2325 = vld [vmem:[#allocation8 + $0x2e8] sm:$0xff]
    %v2326 = vld [vmem:[#allocation8 + $0x308] sm:$0xff]
    %v2327 = vld [vmem:[#allocation8 + $0x328] sm:$0xff]
    %v2328 = vld [vmem:[#allocation8 + $0x348] sm:$0xff]
    %v2329 = vld [vmem:[#allocation8 + $0x368] sm:$0xff]
    %v2330 = vld [vmem:[#allocation8 + $0x388] sm:$0xff]
    %v2331 = vld [vmem:[#allocation8 + $0x3a8] sm:$0xff]
    %v2332 = vld [vmem:[#allocation8 + $0x3c8] sm:$0xff]
    %v2333 = vld [vmem:[#allocation8 + $0x3e8] sm:$0xff]
    %v2334 = vld [vmem:[#allocation8 + $0x408] sm:$0xff]
    %v2335 = vld [vmem:[#allocation8 + $0x428] sm:$0xff]
    %v2336 = vld [vmem:[#allocation8 + $0x448] sm:$0xff]
    %v2337 = vld [vmem:[#allocation8 + $0x468] sm:$0xff]
    %v2338 = vld [vmem:[#allocation8 + $0x488] sm:$0xff]
    %v2339 = vld [vmem:[#allocation8 + $0x4a8] sm:$0xff]
    %v2340 = vld [vmem:[#allocation8 + $0x4c8] sm:$0xff]
    %v2341 = vld [vmem:[#allocation8 + $0x4e8] sm:$0xff]
    %v2342 = vld [vmem:[#allocation8 + $0x508] sm:$0xff]
    %v2343 = vld [vmem:[#allocation8 + $0x528] sm:$0xff]
    %v2344 = vld [vmem:[#allocation8 + $0x548] sm:$0xff]
    %v2345 = vld [vmem:[#allocation8 + $0x568] sm:$0xff]
    %v2346 = vld [vmem:[#allocation8 + $0x588] sm:$0xff]
    %v2347 = vld [vmem:[#allocation8 + $0x5a8] sm:$0xff]
    %v2348 = vld [vmem:[#allocation8 + $0x5c8] sm:$0xff]
    %v2349 = vld [vmem:[#allocation8 + $0x5e8] sm:$0xff]
    %v2350 = vld [vmem:[#allocation8 + $0x608] sm:$0xff]
    %v2351 = vld [vmem:[#allocation8 + $0x628] sm:$0xff]
    %v2352 = vld [vmem:[#allocation8 + $0x648] sm:$0xff]
    %v2353 = vld [vmem:[#allocation8 + $0x668] sm:$0xff]
    %v2354 = vld [vmem:[#allocation8 + $0x688] sm:$0xff]
    %v2355 = vld [vmem:[#allocation8 + $0x6a8] sm:$0xff]
    %v2356 = vld [vmem:[#allocation8 + $0x6c8] sm:$0xff]
    %v2357 = vld [vmem:[#allocation8 + $0x6e8] sm:$0xff]
    %v2358 = vld [vmem:[#allocation8 + $0x708] sm:$0xff]
    %v2359 = vld [vmem:[#allocation8 + $0x728] sm:$0xff]
    %v2360 = vld [vmem:[#allocation8 + $0x748] sm:$0xff]
    %v2361 = vld [vmem:[#allocation8 + $0x768] sm:$0xff]
    %v2362 = vld [vmem:[#allocation8 + $0x788] sm:$0xff]
    %v2363 = vld [vmem:[#allocation8 + $0x7a8] sm:$0xff]
    %v2364 = vld [vmem:[#allocation8 + $0x7c8] sm:$0xff]
    %v2365 = vld [vmem:[#allocation8 + $0x7e8] sm:$0xff]
    %2366 = vmatprep.subr.mxu0 0.0
    %2367 = vmatpush1.msra.mxu0 %v2302
    %2368 = vmatprep.subr.mxu0 0.0
    %2369 = vmatpush1.msra.mxu0 %v2303
    %2370 = vmatprep.subr.mxu0 0.0
    %2371 = vmatpush1.msra.mxu0 %v2304
    %2372 = vmatprep.subr.mxu0 0.0
    %2373 = vmatpush1.msra.mxu0 %v2305
    %2374 = vmatprep.subr.mxu0 0.0
    %2375 = vmatpush1.msra.mxu0 %v2306
    %2376 = vmatprep.subr.mxu0 0.0
    %2377 = vmatpush1.msra.mxu0 %v2307
    %2378 = vmatprep.subr.mxu0 0.0
    %2379 = vmatpush1.msra.mxu0 %v2308
    %2380 = vmatprep.subr.mxu0 0.0
    %2381 = vmatpush1.msra.mxu0 %v2309
    %2382 = vmatprep.subr.mxu0 0.0
    %2383 = vmatpush1.msra.mxu0 %v2310
    %2384 = vmatprep.subr.mxu0 0.0
    %2385 = vmatpush1.msra.mxu0 %v2311
    %2386 = vmatprep.subr.mxu0 0.0
    %2387 = vmatpush1.msra.mxu0 %v2312
    %2388 = vmatprep.subr.mxu0 0.0
    %2389 = vmatpush1.msra.mxu0 %v2313
    %2390 = vmatprep.subr.mxu0 0.0
    %2391 = vmatpush1.msra.mxu0 %v2314
    %2392 = vmatprep.subr.mxu0 0.0
    %2393 = vmatpush1.msra.mxu0 %v2315
    %2394 = vmatprep.subr.mxu0 0.0
    %2395 = vmatpush1.msra.mxu0 %v2316
    %2396 = vmatprep.subr.mxu0 0.0
    %2397 = vmatpush1.msra.mxu0 %v2317
    %2398 = vmatprep.subr.mxu0 0.0
    %2399 = vmatpush1.msra.mxu0 %v2318
    %2400 = vmatprep.subr.mxu0 0.0
    %2401 = vmatpush1.msra.mxu0 %v2319
    %2402 = vmatprep.subr.mxu0 0.0
    %2403 = vmatpush1.msra.mxu0 %v2320
    %2404 = vmatprep.subr.mxu0 0.0
    %2405 = vmatpush1.msra.mxu0 %v2321
    %2406 = vmatprep.subr.mxu0 0.0
    %2407 = vmatpush1.msra.mxu0 %v2322
    %2408 = vmatprep.subr.mxu0 0.0
    %2409 = vmatpush1.msra.mxu0 %v2323
    %2410 = vmatprep.subr.mxu0 0.0
    %2411 = vmatpush1.msra.mxu0 %v2324
    %2412 = vmatprep.subr.mxu0 0.0
    %2413 = vmatpush1.msra.mxu0 %v2325
    %2414 = vmatprep.subr.mxu0 0.0
    %2415 = vmatpush1.msra.mxu0 %v2326
    %2416 = vmatprep.subr.mxu0 0.0
    %2417 = vmatpush1.msra.mxu0 %v2327
    %2418 = vmatprep.subr.mxu0 0.0
    %2419 = vmatpush1.msra.mxu0 %v2328
    %2420 = vmatprep.subr.mxu0 0.0
    %2421 = vmatpush1.msra.mxu0 %v2329
    %2422 = vmatprep.subr.mxu0 0.0
    %2423 = vmatpush1.msra.mxu0 %v2330
    %2424 = vmatprep.subr.mxu0 0.0
    %2425 = vmatpush1.msra.mxu0 %v2331
    %2426 = vmatprep.subr.mxu0 0.0
    %2427 = vmatpush1.msra.mxu0 %v2332
    %2428 = vmatprep.subr.mxu0 0.0
    %2429 = vmatpush1.msra.mxu0 %v2333
    %2430 = vmatprep.mubr.f32.mxu0 %v2087
    %2431 = vmatmul.mubr.f32.gmra.mrb[0].mxu0 %v2086
    %v2432 = vpop.f32.mrb[0].mxu0
    %v2433 = vadd.f32 %v2159, %v2432
    %v2434 = vpop.f32.mrb[0].mxu0
    %2435 = vdwg.mxu0
    %2436 = vmatprep.subr.mxu0 0.0
    %2437 = vmatpush1.msra.mxu0 %v2334
    %2438 = vmatprep.subr.mxu0 0.0
    %2439 = vmatpush1.msra.mxu0 %v2335
    %2440 = vmatprep.subr.mxu0 0.0
    %2441 = vmatpush1.msra.mxu0 %v2336
    %2442 = vmatprep.subr.mxu0 0.0
    %2443 = vmatpush1.msra.mxu0 %v2337
    %2444 = vmatprep.subr.mxu0 0.0
    %2445 = vmatpush1.msra.mxu0 %v2338
    %2446 = vmatprep.subr.mxu0 0.0
    %2447 = vmatpush1.msra.mxu0 %v2339
    %2448 = vmatprep.subr.mxu0 0.0
    %2449 = vmatpush1.msra.mxu0 %v2340
    %2450 = vmatprep.subr.mxu0 0.0
    %2451 = vmatpush1.msra.mxu0 %v2341
    %2452 = vmatprep.subr.mxu0 0.0
    %2453 = vmatpush1.msra.mxu0 %v2342
    %2454 = vmatprep.subr.mxu0 0.0
    %2455 = vmatpush1.msra.mxu0 %v2343
    %2456 = vmatprep.subr.mxu0 0.0
    %2457 = vmatpush1.msra.mxu0 %v2344
    %2458 = vmatprep.subr.mxu0 0.0
    %2459 = vmatpush1.msra.mxu0 %v2345
    %2460 = vmatprep.subr.mxu0 0.0
    %2461 = vmatpush1.msra.mxu0 %v2346
    %2462 = vmatprep.subr.mxu0 0.0
    %2463 = vmatpush1.msra.mxu0 %v2347
    %2464 = vmatprep.subr.mxu0 0.0
    %2465 = vmatpush1.msra.mxu0 %v2348
    %2466 = vmatprep.subr.mxu0 0.0
    %2467 = vmatpush1.msra.mxu0 %v2349
    %2468 = vmatprep.subr.mxu0 0.0
    %2469 = vmatpush1.msra.mxu0 %v2350
    %2470 = vmatprep.subr.mxu0 0.0
    %2471 = vmatpush1.msra.mxu0 %v2351
    %2472 = vmatprep.subr.mxu0 0.0
    %2473 = vmatpush1.msra.mxu0 %v2352
    %2474 = vmatprep.subr.mxu0 0.0
    %2475 = vmatpush1.msra.mxu0 %v2353
    %2476 = vmatprep.subr.mxu0 0.0
    %2477 = vmatpush1.msra.mxu0 %v2354
    %2478 = vmatprep.subr.mxu0 0.0
    %2479 = vmatpush1.msra.mxu0 %v2355
    %2480 = vmatprep.subr.mxu0 0.0
    %2481 = vmatpush1.msra.mxu0 %v2356
    %2482 = vmatprep.subr.mxu0 0.0
    %2483 = vmatpush1.msra.mxu0 %v2357
    %2484 = vmatprep.subr.mxu0 0.0
    %2485 = vmatpush1.msra.mxu0 %v2358
    %2486 = vmatprep.subr.mxu0 0.0
    %2487 = vmatpush1.msra.mxu0 %v2359
    %2488 = vmatprep.subr.mxu0 0.0
    %2489 = vmatpush1.msra.mxu0 %v2360
    %2490 = vmatprep.subr.mxu0 0.0
    %2491 = vmatpush1.msra.mxu0 %v2361
    %2492 = vmatprep.subr.mxu0 0.0
    %2493 = vmatpush1.msra.mxu0 %v2362
    %2494 = vmatprep.subr.mxu0 0.0
    %2495 = vmatpush1.msra.mxu0 %v2363
    %2496 = vmatprep.subr.mxu0 0.0
    %2497 = vmatpush1.msra.mxu0 %v2364
    %2498 = vmatprep.subr.mxu0 0.0
    %2499 = vmatpush1.msra.mxu0 %v2365
    %2500 = vmatprep.mubr.f32.mxu0 %v2089
    %2501 = vmatmul.mubr.f32.gmra.mrb[0].mxu0 %v2088
    %v2502 = vpop.f32.mrb[0].mxu0
    %v2503 = vadd.f32 %v2433, %v2502
    %v2504 = vpop.f32.mrb[0].mxu0
    %2505 = vdwg.mxu0
    %v2506 = vmax.f32 %v2503, 0.0
    %v2507 = vmax.f32 %v2301, %v2506
    %v2508 = vld [vmem:[#allocation8 + $0x10] sm:$0xff]
    %v2509 = vld [vmem:[#allocation8 + $0x30] sm:$0xff]
    %v2510 = vld [vmem:[#allocation8 + $0x50] sm:$0xff]
    %v2511 = vld [vmem:[#allocation8 + $0x70] sm:$0xff]
    %v2512 = vld [vmem:[#allocation8 + $0x90] sm:$0xff]
    %v2513 = vld [vmem:[#allocation8 + $0xb0] sm:$0xff]
    %v2514 = vld [vmem:[#allocation8 + $0xd0] sm:$0xff]
    %v2515 = vld [vmem:[#allocation8 + $0xf0] sm:$0xff]
    %v2516 = vld [vmem:[#allocation8 + $0x110] sm:$0xff]
    %v2517 = vld [vmem:[#allocation8 + $0x130] sm:$0xff]
    %v2518 = vld [vmem:[#allocation8 + $0x150] sm:$0xff]
    %v2519 = vld [vmem:[#allocation8 + $0x170] sm:$0xff]
    %v2520 = vld [vmem:[#allocation8 + $0x190] sm:$0xff]
    %v2521 = vld [vmem:[#allocation8 + $0x1b0] sm:$0xff]
    %v2522 = vld [vmem:[#allocation8 + $0x1d0] sm:$0xff]
    %v2523 = vld [vmem:[#allocation8 + $0x1f0] sm:$0xff]
    %v2524 = vld [vmem:[#allocation8 + $0x210] sm:$0xff]
    %v2525 = vld [vmem:[#allocation8 + $0x230] sm:$0xff]
    %v2526 = vld [vmem:[#allocation8 + $0x250] sm:$0xff]
    %v2527 = vld [vmem:[#allocation8 + $0x270] sm:$0xff]
    %v2528 = vld [vmem:[#allocation8 + $0x290] sm:$0xff]
    %v2529 = vld [vmem:[#allocation8 + $0x2b0] sm:$0xff]
    %v2530 = vld [vmem:[#allocation8 + $0x2d0] sm:$0xff]
    %v2531 = vld [vmem:[#allocation8 + $0x2f0] sm:$0xff]
    %v2532 = vld [vmem:[#allocation8 + $0x310] sm:$0xff]
    %v2533 = vld [vmem:[#allocation8 + $0x330] sm:$0xff]
    %v2534 = vld [vmem:[#allocation8 + $0x350] sm:$0xff]
    %v2535 = vld [vmem:[#allocation8 + $0x370] sm:$0xff]
    %v2536 = vld [vmem:[#allocation8 + $0x390] sm:$0xff]
    %v2537 = vld [vmem:[#allocation8 + $0x3b0] sm:$0xff]
    %v2538 = vld [vmem:[#allocation8 + $0x3d0] sm:$0xff]
    %v2539 = vld [vmem:[#allocation8 + $0x3f0] sm:$0xff]
    %v2540 = vld [vmem:[#allocation8 + $0x410] sm:$0xff]
    %v2541 = vld [vmem:[#allocation8 + $0x430] sm:$0xff]
    %v2542 = vld [vmem:[#allocation8 + $0x450] sm:$0xff]
    %v2543 = vld [vmem:[#allocation8 + $0x470] sm:$0xff]
    %v2544 = vld [vmem:[#allocation8 + $0x490] sm:$0xff]
    %v2545 = vld [vmem:[#allocation8 + $0x4b0] sm:$0xff]
    %v2546 = vld [vmem:[#allocation8 + $0x4d0] sm:$0xff]
    %v2547 = vld [vmem:[#allocation8 + $0x4f0] sm:$0xff]
    %v2548 = vld [vmem:[#allocation8 + $0x510] sm:$0xff]
    %v2549 = vld [vmem:[#allocation8 + $0x530] sm:$0xff]
    %v2550 = vld [vmem:[#allocation8 + $0x550] sm:$0xff]
    %v2551 = vld [vmem:[#allocation8 + $0x570] sm:$0xff]
    %v2552 = vld [vmem:[#allocation8 + $0x590] sm:$0xff]
    %v2553 = vld [vmem:[#allocation8 + $0x5b0] sm:$0xff]
    %v2554 = vld [vmem:[#allocation8 + $0x5d0] sm:$0xff]
    %v2555 = vld [vmem:[#allocation8 + $0x5f0] sm:$0xff]
    %v2556 = vld [vmem:[#allocation8 + $0x610] sm:$0xff]
    %v2557 = vld [vmem:[#allocation8 + $0x630] sm:$0xff]
    %v2558 = vld [vmem:[#allocation8 + $0x650] sm:$0xff]
    %v2559 = vld [vmem:[#allocation8 + $0x670] sm:$0xff]
    %v2560 = vld [vmem:[#allocation8 + $0x690] sm:$0xff]
    %v2561 = vld [vmem:[#allocation8 + $0x6b0] sm:$0xff]
    %v2562 = vld [vmem:[#allocation8 + $0x6d0] sm:$0xff]
    %v2563 = vld [vmem:[#allocation8 + $0x6f0] sm:$0xff]
    %v2564 = vld [vmem:[#allocation8 + $0x710] sm:$0xff]
    %v2565 = vld [vmem:[#allocation8 + $0x730] sm:$0xff]
    %v2566 = vld [vmem:[#allocation8 + $0x750] sm:$0xff]
    %v2567 = vld [vmem:[#allocation8 + $0x770] sm:$0xff]
    %v2568 = vld [vmem:[#allocation8 + $0x790] sm:$0xff]
    %v2569 = vld [vmem:[#allocation8 + $0x7b0] sm:$0xff]
    %v2570 = vld [vmem:[#allocation8 + $0x7d0] sm:$0xff]
    %v2571 = vld [vmem:[#allocation8 + $0x7f0] sm:$0xff]
    %2572 = vmatprep.subr.mxu0 0.0
    %2573 = vmatpush1.msra.mxu0 %v2508
    %2574 = vmatprep.subr.mxu0 0.0
    %2575 = vmatpush1.msra.mxu0 %v2509
    %2576 = vmatprep.subr.mxu0 0.0
    %2577 = vmatpush1.msra.mxu0 %v2510
    %2578 = vmatprep.subr.mxu0 0.0
    %2579 = vmatpush1.msra.mxu0 %v2511
    %2580 = vmatprep.subr.mxu0 0.0
    %2581 = vmatpush1.msra.mxu0 %v2512
    %2582 = vmatprep.subr.mxu0 0.0
    %2583 = vmatpush1.msra.mxu0 %v2513
    %2584 = vmatprep.subr.mxu0 0.0
    %2585 = vmatpush1.msra.mxu0 %v2514
    %2586 = vmatprep.subr.mxu0 0.0
    %2587 = vmatpush1.msra.mxu0 %v2515
    %2588 = vmatprep.subr.mxu0 0.0
    %2589 = vmatpush1.msra.mxu0 %v2516
    %2590 = vmatprep.subr.mxu0 0.0
    %2591 = vmatpush1.msra.mxu0 %v2517
    %2592 = vmatprep.subr.mxu0 0.0
    %2593 = vmatpush1.msra.mxu0 %v2518
    %2594 = vmatprep.subr.mxu0 0.0
    %2595 = vmatpush1.msra.mxu0 %v2519
    %2596 = vmatprep.subr.mxu0 0.0
    %2597 = vmatpush1.msra.mxu0 %v2520
    %2598 = vmatprep.subr.mxu0 0.0
    %2599 = vmatpush1.msra.mxu0 %v2521
    %2600 = vmatprep.subr.mxu0 0.0
    %2601 = vmatpush1.msra.mxu0 %v2522
    %2602 = vmatprep.subr.mxu0 0.0
    %2603 = vmatpush1.msra.mxu0 %v2523
    %2604 = vmatprep.subr.mxu0 0.0
    %2605 = vmatpush1.msra.mxu0 %v2524
    %2606 = vmatprep.subr.mxu0 0.0
    %2607 = vmatpush1.msra.mxu0 %v2525
    %2608 = vmatprep.subr.mxu0 0.0
    %2609 = vmatpush1.msra.mxu0 %v2526
    %2610 = vmatprep.subr.mxu0 0.0
    %2611 = vmatpush1.msra.mxu0 %v2527
    %2612 = vmatprep.subr.mxu0 0.0
    %2613 = vmatpush1.msra.mxu0 %v2528
    %2614 = vmatprep.subr.mxu0 0.0
    %2615 = vmatpush1.msra.mxu0 %v2529
    %2616 = vmatprep.subr.mxu0 0.0
    %2617 = vmatpush1.msra.mxu0 %v2530
    %2618 = vmatprep.subr.mxu0 0.0
    %2619 = vmatpush1.msra.mxu0 %v2531
    %2620 = vmatprep.subr.mxu0 0.0
    %2621 = vmatpush1.msra.mxu0 %v2532
    %2622 = vmatprep.subr.mxu0 0.0
    %2623 = vmatpush1.msra.mxu0 %v2533
    %2624 = vmatprep.subr.mxu0 0.0
    %2625 = vmatpush1.msra.mxu0 %v2534
    %2626 = vmatprep.subr.mxu0 0.0
    %2627 = vmatpush1.msra.mxu0 %v2535
    %2628 = vmatprep.subr.mxu0 0.0
    %2629 = vmatpush1.msra.mxu0 %v2536
    %2630 = vmatprep.subr.mxu0 0.0
    %2631 = vmatpush1.msra.mxu0 %v2537
    %2632 = vmatprep.subr.mxu0 0.0
    %2633 = vmatpush1.msra.mxu0 %v2538
    %2634 = vmatprep.subr.mxu0 0.0
    %2635 = vmatpush1.msra.mxu0 %v2539
    %2636 = vmatprep.mubr.f32.mxu0 %v2087
    %2637 = vmatmul.mubr.f32.gmra.mrb[0].mxu0 %v2086
    %v2638 = vpop.f32.mrb[0].mxu0
    %v2639 = vadd.f32 %v2159, %v2638
    %v2640 = vpop.f32.mrb[0].mxu0
    %2641 = vdwg.mxu0
    %2642 = vmatprep.subr.mxu0 0.0
    %2643 = vmatpush1.msra.mxu0 %v2540
    %2644 = vmatprep.subr.mxu0 0.0
    %2645 = vmatpush1.msra.mxu0 %v2541
    %2646 = vmatprep.subr.mxu0 0.0
    %2647 = vmatpush1.msra.mxu0 %v2542
    %2648 = vmatprep.subr.mxu0 0.0
    %2649 = vmatpush1.msra.mxu0 %v2543
    %2650 = vmatprep.subr.mxu0 0.0
    %2651 = vmatpush1.msra.mxu0 %v2544
    %2652 = vmatprep.subr.mxu0 0.0
    %2653 = vmatpush1.msra.mxu0 %v2545
    %2654 = vmatprep.subr.mxu0 0.0
    %2655 = vmatpush1.msra.mxu0 %v2546
    %2656 = vmatprep.subr.mxu0 0.0
    %2657 = vmatpush1.msra.mxu0 %v2547
    %2658 = vmatprep.subr.mxu0 0.0
    %2659 = vmatpush1.msra.mxu0 %v2548
    %2660 = vmatprep.subr.mxu0 0.0
    %2661 = vmatpush1.msra.mxu0 %v2549
    %2662 = vmatprep.subr.mxu0 0.0
    %2663 = vmatpush1.msra.mxu0 %v2550
    %2664 = vmatprep.subr.mxu0 0.0
    %2665 = vmatpush1.msra.mxu0 %v2551
    %2666 = vmatprep.subr.mxu0 0.0
    %2667 = vmatpush1.msra.mxu0 %v2552
    %2668 = vmatprep.subr.mxu0 0.0
    %2669 = vmatpush1.msra.mxu0 %v2553
    %2670 = vmatprep.subr.mxu0 0.0
    %2671 = vmatpush1.msra.mxu0 %v2554
    %2672 = vmatprep.subr.mxu0 0.0
    %2673 = vmatpush1.msra.mxu0 %v2555
    %2674 = vmatprep.subr.mxu0 0.0
    %2675 = vmatpush1.msra.mxu0 %v2556
    %2676 = vmatprep.subr.mxu0 0.0
    %2677 = vmatpush1.msra.mxu0 %v2557
    %2678 = vmatprep.subr.mxu0 0.0
    %2679 = vmatpush1.msra.mxu0 %v2558
    %2680 = vmatprep.subr.mxu0 0.0
    %2681 = vmatpush1.msra.mxu0 %v2559
    %2682 = vmatprep.subr.mxu0 0.0
    %2683 = vmatpush1.msra.mxu0 %v2560
    %2684 = vmatprep.subr.mxu0 0.0
    %2685 = vmatpush1.msra.mxu0 %v2561
    %2686 = vmatprep.subr.mxu0 0.0
    %2687 = vmatpush1.msra.mxu0 %v2562
    %2688 = vmatprep.subr.mxu0 0.0
    %2689 = vmatpush1.msra.mxu0 %v2563
    %2690 = vmatprep.subr.mxu0 0.0
    %2691 = vmatpush1.msra.mxu0 %v2564
    %2692 = vmatprep.subr.mxu0 0.0
    %2693 = vmatpush1.msra.mxu0 %v2565
    %2694 = vmatprep.subr.mxu0 0.0
    %2695 = vmatpush1.msra.mxu0 %v2566
    %2696 = vmatprep.subr.mxu0 0.0
    %2697 = vmatpush1.msra.mxu0 %v2567
    %2698 = vmatprep.subr.mxu0 0.0
    %2699 = vmatpush1.msra.mxu0 %v2568
    %2700 = vmatprep.subr.mxu0 0.0
    %2701 = vmatpush1.msra.mxu0 %v2569
    %2702 = vmatprep.subr.mxu0 0.0
    %2703 = vmatpush1.msra.mxu0 %v2570
    %2704 = vmatprep.subr.mxu0 0.0
    %2705 = vmatpush1.msra.mxu0 %v2571
    %2706 = vmatprep.mubr.f32.mxu0 %v2089
    %2707 = vmatmul.mubr.f32.gmra.mrb[0].mxu0 %v2088
    %v2708 = vpop.f32.mrb[0].mxu0
    %v2709 = vadd.f32 %v2639, %v2708
    %v2710 = vpop.f32.mrb[0].mxu0
    %2711 = vdwg.mxu0
    %v2712 = vmax.f32 %v2709, 0.0
    %v2713 = vmax.f32 %v2507, %v2712
    %v2714 = vld [vmem:[#allocation8 + $0x18] sm:$0xff]
    %v2715 = vld [vmem:[#allocation8 + $0x38] sm:$0xff]
    %v2716 = vld [vmem:[#allocation8 + $0x58] sm:$0xff]
    %v2717 = vld [vmem:[#allocation8 + $0x78] sm:$0xff]
    %v2718 = vld [vmem:[#allocation8 + $0x98] sm:$0xff]
    %v2719 = vld [vmem:[#allocation8 + $0xb8] sm:$0xff]
    %v2720 = vld [vmem:[#allocation8 + $0xd8] sm:$0xff]
    %v2721 = vld [vmem:[#allocation8 + $0xf8] sm:$0xff]
    %v2722 = vld [vmem:[#allocation8 + $0x118] sm:$0xff]
    %v2723 = vld [vmem:[#allocation8 + $0x138] sm:$0xff]
    %v2724 = vld [vmem:[#allocation8 + $0x158] sm:$0xff]
    %v2725 = vld [vmem:[#allocation8 + $0x178] sm:$0xff]
    %v2726 = vld [vmem:[#allocation8 + $0x198] sm:$0xff]
    %v2727 = vld [vmem:[#allocation8 + $0x1b8] sm:$0xff]
    %v2728 = vld [vmem:[#allocation8 + $0x1d8] sm:$0xff]
    %v2729 = vld [vmem:[#allocation8 + $0x1f8] sm:$0xff]
    %v2730 = vld [vmem:[#allocation8 + $0x218] sm:$0xff]
    %v2731 = vld [vmem:[#allocation8 + $0x238] sm:$0xff]
    %v2732 = vld [vmem:[#allocation8 + $0x258] sm:$0xff]
    %v2733 = vld [vmem:[#allocation8 + $0x278] sm:$0xff]
    %v2734 = vld [vmem:[#allocation8 + $0x298] sm:$0xff]
    %v2735 = vld [vmem:[#allocation8 + $0x2b8] sm:$0xff]
    %v2736 = vld [vmem:[#allocation8 + $0x2d8] sm:$0xff]
    %v2737 = vld [vmem:[#allocation8 + $0x2f8] sm:$0xff]
    %v2738 = vld [vmem:[#allocation8 + $0x318] sm:$0xff]
    %v2739 = vld [vmem:[#allocation8 + $0x338] sm:$0xff]
    %v2740 = vld [vmem:[#allocation8 + $0x358] sm:$0xff]
    %v2741 = vld [vmem:[#allocation8 + $0x378] sm:$0xff]
    %v2742 = vld [vmem:[#allocation8 + $0x398] sm:$0xff]
    %v2743 = vld [vmem:[#allocation8 + $0x3b8] sm:$0xff]
    %v2744 = vld [vmem:[#allocation8 + $0x3d8] sm:$0xff]
    %v2745 = vld [vmem:[#allocation8 + $0x3f8] sm:$0xff]
    %v2746 = vld [vmem:[#allocation8 + $0x418] sm:$0xff]
    %v2747 = vld [vmem:[#allocation8 + $0x438] sm:$0xff]
    %v2748 = vld [vmem:[#allocation8 + $0x458] sm:$0xff]
    %v2749 = vld [vmem:[#allocation8 + $0x478] sm:$0xff]
    %v2750 = vld [vmem:[#allocation8 + $0x498] sm:$0xff]
    %v2751 = vld [vmem:[#allocation8 + $0x4b8] sm:$0xff]
    %v2752 = vld [vmem:[#allocation8 + $0x4d8] sm:$0xff]
    %v2753 = vld [vmem:[#allocation8 + $0x4f8] sm:$0xff]
    %v2754 = vld [vmem:[#allocation8 + $0x518] sm:$0xff]
    %v2755 = vld [vmem:[#allocation8 + $0x538] sm:$0xff]
    %v2756 = vld [vmem:[#allocation8 + $0x558] sm:$0xff]
    %v2757 = vld [vmem:[#allocation8 + $0x578] sm:$0xff]
    %v2758 = vld [vmem:[#allocation8 + $0x598] sm:$0xff]
    %v2759 = vld [vmem:[#allocation8 + $0x5b8] sm:$0xff]
    %v2760 = vld [vmem:[#allocation8 + $0x5d8] sm:$0xff]
    %v2761 = vld [vmem:[#allocation8 + $0x5f8] sm:$0xff]
    %v2762 = vld [vmem:[#allocation8 + $0x618] sm:$0xff]
    %v2763 = vld [vmem:[#allocation8 + $0x638] sm:$0xff]
    %v2764 = vld [vmem:[#allocation8 + $0x658] sm:$0xff]
    %v2765 = vld [vmem:[#allocation8 + $0x678] sm:$0xff]
    %v2766 = vld [vmem:[#allocation8 + $0x698] sm:$0xff]
    %v2767 = vld [vmem:[#allocation8 + $0x6b8] sm:$0xff]
    %v2768 = vld [vmem:[#allocation8 + $0x6d8] sm:$0xff]
    %v2769 = vld [vmem:[#allocation8 + $0x6f8] sm:$0xff]
    %v2770 = vld [vmem:[#allocation8 + $0x718] sm:$0xff]
    %v2771 = vld [vmem:[#allocation8 + $0x738] sm:$0xff]
    %v2772 = vld [vmem:[#allocation8 + $0x758] sm:$0xff]
    %v2773 = vld [vmem:[#allocation8 + $0x778] sm:$0xff]
    %v2774 = vld [vmem:[#allocation8 + $0x798] sm:$0xff]
    %v2775 = vld [vmem:[#allocation8 + $0x7b8] sm:$0xff]
    %v2776 = vld [vmem:[#allocation8 + $0x7d8] sm:$0xff]
    %v2777 = vld [vmem:[#allocation8 + $0x7f8] sm:$0xff]
    %2778 = vmatprep.subr.mxu0 0.0
    %2779 = vmatpush1.msra.mxu0 %v2714
    %2780 = vmatprep.subr.mxu0 0.0
    %2781 = vmatpush1.msra.mxu0 %v2715
    %2782 = vmatprep.subr.mxu0 0.0
    %2783 = vmatpush1.msra.mxu0 %v2716
    %2784 = vmatprep.subr.mxu0 0.0
    %2785 = vmatpush1.msra.mxu0 %v2717
    %2786 = vmatprep.subr.mxu0 0.0
    %2787 = vmatpush1.msra.mxu0 %v2718
    %2788 = vmatprep.subr.mxu0 0.0
    %2789 = vmatpush1.msra.mxu0 %v2719
    %2790 = vmatprep.subr.mxu0 0.0
    %2791 = vmatpush1.msra.mxu0 %v2720
    %2792 = vmatprep.subr.mxu0 0.0
    %2793 = vmatpush1.msra.mxu0 %v2721
    %2794 = vmatprep.subr.mxu0 0.0
    %2795 = vmatpush1.msra.mxu0 %v2722
    %2796 = vmatprep.subr.mxu0 0.0
    %2797 = vmatpush1.msra.mxu0 %v2723
    %2798 = vmatprep.subr.mxu0 0.0
    %2799 = vmatpush1.msra.mxu0 %v2724
    %2800 = vmatprep.subr.mxu0 0.0
    %2801 = vmatpush1.msra.mxu0 %v2725
    %2802 = vmatprep.subr.mxu0 0.0
    %2803 = vmatpush1.msra.mxu0 %v2726
    %2804 = vmatprep.subr.mxu0 0.0
    %2805 = vmatpush1.msra.mxu0 %v2727
    %2806 = vmatprep.subr.mxu0 0.0
    %2807 = vmatpush1.msra.mxu0 %v2728
    %2808 = vmatprep.subr.mxu0 0.0
    %2809 = vmatpush1.msra.mxu0 %v2729
    %2810 = vmatprep.subr.mxu0 0.0
    %2811 = vmatpush1.msra.mxu0 %v2730
    %2812 = vmatprep.subr.mxu0 0.0
    %2813 = vmatpush1.msra.mxu0 %v2731
    %2814 = vmatprep.subr.mxu0 0.0
    %2815 = vmatpush1.msra.mxu0 %v2732
    %2816 = vmatprep.subr.mxu0 0.0
    %2817 = vmatpush1.msra.mxu0 %v2733
    %2818 = vmatprep.subr.mxu0 0.0
    %2819 = vmatpush1.msra.mxu0 %v2734
    %2820 = vmatprep.subr.mxu0 0.0
    %2821 = vmatpush1.msra.mxu0 %v2735
    %2822 = vmatprep.subr.mxu0 0.0
    %2823 = vmatpush1.msra.mxu0 %v2736
    %2824 = vmatprep.subr.mxu0 0.0
    %2825 = vmatpush1.msra.mxu0 %v2737
    %2826 = vmatprep.subr.mxu0 0.0
    %2827 = vmatpush1.msra.mxu0 %v2738
    %2828 = vmatprep.subr.mxu0 0.0
    %2829 = vmatpush1.msra.mxu0 %v2739
    %2830 = vmatprep.subr.mxu0 0.0
    %2831 = vmatpush1.msra.mxu0 %v2740
    %2832 = vmatprep.subr.mxu0 0.0
    %2833 = vmatpush1.msra.mxu0 %v2741
    %2834 = vmatprep.subr.mxu0 0.0
    %2835 = vmatpush1.msra.mxu0 %v2742
    %2836 = vmatprep.subr.mxu0 0.0
    %2837 = vmatpush1.msra.mxu0 %v2743
    %2838 = vmatprep.subr.mxu0 0.0
    %2839 = vmatpush1.msra.mxu0 %v2744
    %2840 = vmatprep.subr.mxu0 0.0
    %2841 = vmatpush1.msra.mxu0 %v2745
    %2842 = vmatprep.mubr.f32.mxu0 %v2087
    %2843 = vmatmul.mubr.f32.gmra.mrb[0].mxu0 %v2086
    %v2844 = vpop.f32.mrb[0].mxu0
    %v2845 = vadd.f32 %v2159, %v2844
    %v2846 = vpop.f32.mrb[0].mxu0
    %2847 = vdwg.mxu0
    %2848 = vmatprep.subr.mxu0 0.0
    %2849 = vmatpush1.msra.mxu0 %v2746
    %2850 = vmatprep.subr.mxu0 0.0
    %2851 = vmatpush1.msra.mxu0 %v2747
    %2852 = vmatprep.subr.mxu0 0.0
    %2853 = vmatpush1.msra.mxu0 %v2748
    %2854 = vmatprep.subr.mxu0 0.0
    %2855 = vmatpush1.msra.mxu0 %v2749
    %2856 = vmatprep.subr.mxu0 0.0
    %2857 = vmatpush1.msra.mxu0 %v2750
    %2858 = vmatprep.subr.mxu0 0.0
    %2859 = vmatpush1.msra.mxu0 %v2751
    %2860 = vmatprep.subr.mxu0 0.0
    %2861 = vmatpush1.msra.mxu0 %v2752
    %2862 = vmatprep.subr.mxu0 0.0
    %2863 = vmatpush1.msra.mxu0 %v2753
    %2864 = vmatprep.subr.mxu0 0.0
    %2865 = vmatpush1.msra.mxu0 %v2754
    %2866 = vmatprep.subr.mxu0 0.0
    %2867 = vmatpush1.msra.mxu0 %v2755
    %2868 = vmatprep.subr.mxu0 0.0
    %2869 = vmatpush1.msra.mxu0 %v2756
    %2870 = vmatprep.subr.mxu0 0.0
    %2871 = vmatpush1.msra.mxu0 %v2757
    %2872 = vmatprep.subr.mxu0 0.0
    %2873 = vmatpush1.msra.mxu0 %v2758
    %2874 = vmatprep.subr.mxu0 0.0
    %2875 = vmatpush1.msra.mxu0 %v2759
    %2876 = vmatprep.subr.mxu0 0.0
    %2877 = vmatpush1.msra.mxu0 %v2760
    %2878 = vmatprep.subr.mxu0 0.0
    %2879 = vmatpush1.msra.mxu0 %v2761
    %2880 = vmatprep.subr.mxu0 0.0
    %2881 = vmatpush1.msra.mxu0 %v2762
    %2882 = vmatprep.subr.mxu0 0.0
    %2883 = vmatpush1.msra.mxu0 %v2763
    %2884 = vmatprep.subr.mxu0 0.0
    %2885 = vmatpush1.msra.mxu0 %v2764
    %2886 = vmatprep.subr.mxu0 0.0
    %2887 = vmatpush1.msra.mxu0 %v2765
    %2888 = vmatprep.subr.mxu0 0.0
    %2889 = vmatpush1.msra.mxu0 %v2766
    %2890 = vmatprep.subr.mxu0 0.0
    %2891 = vmatpush1.msra.mxu0 %v2767
    %2892 = vmatprep.subr.mxu0 0.0
    %2893 = vmatpush1.msra.mxu0 %v2768
    %2894 = vmatprep.subr.mxu0 0.0
    %2895 = vmatpush1.msra.mxu0 %v2769
    %2896 = vmatprep.subr.mxu0 0.0
    %2897 = vmatpush1.msra.mxu0 %v2770
    %2898 = vmatprep.subr.mxu0 0.0
    %2899 = vmatpush1.msra.mxu0 %v2771
    %2900 = vmatprep.subr.mxu0 0.0
    %2901 = vmatpush1.msra.mxu0 %v2772
    %2902 = vmatprep.subr.mxu0 0.0
    %2903 = vmatpush1.msra.mxu0 %v2773
    %2904 = vmatprep.subr.mxu0 0.0
    %2905 = vmatpush1.msra.mxu0 %v2774
    %2906 = vmatprep.subr.mxu0 0.0
    %2907 = vmatpush1.msra.mxu0 %v2775
    %2908 = vmatprep.subr.mxu0 0.0
    %2909 = vmatpush1.msra.mxu0 %v2776
    %2910 = vmatprep.subr.mxu0 0.0
    %2911 = vmatpush1.msra.mxu0 %v2777
    %2912 = vmatprep.mubr.f32.mxu0 %v2089
    %2913 = vmatmul.mubr.f32.gmra.mrb[0].mxu0 %v2088
    %v2914 = vpop.f32.mrb[0].mxu0
    %v2915 = vadd.f32 %v2845, %v2914
    %v2916 = vpop.f32.mrb[0].mxu0
    %2917 = vdwg.mxu0
    %v2918 = vmax.f32 %v2915, 0.0
    %v2919 = vmax.f32 %v2713, %v2918
    %v2920 = vld [vmem:[#allocation11] sm:$0xff]
    %v2921 = vld [vmem:[#allocation11 + $0x8] sm:$0xff]
    %v2922 = vld [vmem:[#allocation11 + $0x10] sm:$0xff]
    %v2923 = vld [vmem:[#allocation11 + $0x18] sm:$0xff]
    %v2924 = vld [vmem:[#allocation11 + $0x20] sm:$0xff]
    %v2925 = vld [vmem:[#allocation11 + $0x28] sm:$0xff]
    %v2926 = vld [vmem:[#allocation11 + $0x30] sm:$0xff]
    %v2927 = vld [vmem:[#allocation11 + $0x38] sm:$0xff]
    %v2928 = vld [vmem:[#allocation11 + $0x40] sm:$0xff]
    %v2929 = vld [vmem:[#allocation11 + $0x48] sm:$0xff]
    %v2930 = vld [vmem:[#allocation11 + $0x50] sm:$0xff]
    %v2931 = vld [vmem:[#allocation11 + $0x58] sm:$0xff]
    %v2932 = vld [vmem:[#allocation11 + $0x60] sm:$0xff]
    %v2933 = vld [vmem:[#allocation11 + $0x68] sm:$0xff]
    %v2934 = vld [vmem:[#allocation11 + $0x70] sm:$0xff]
    %v2935 = vld [vmem:[#allocation11 + $0x78] sm:$0xff]
    %v2936 = vld [vmem:[#allocation13] sm:$0x1]
    %v2938 = vlaneseq
    %v2939 = vshrl.u32 %v2938, 7
    %v2940 = vsub.s32 0, %v2939
    %v2941 = vrot.slane %v2936, %v2940
    %2943 = vmatprep.subr.mxu0 0.0
    %2944 = vmatpush1.msra.mxu0 %v2920
    %2945 = vmatprep.subr.mxu0 0.0
    %2946 = vmatpush1.msra.mxu0 %v2921
    %2947 = vmatprep.subr.mxu0 0.0
    %2948 = vmatpush1.msra.mxu0 %v2922
    %2949 = vmatprep.subr.mxu0 0.0
    %2950 = vmatpush1.msra.mxu0 %v2923
    %2951 = vmatprep.subr.mxu0 0.0
    %2952 = vmatpush1.msra.mxu0 %v2924
    %2953 = vmatprep.subr.mxu0 0.0
    %2954 = vmatpush1.msra.mxu0 %v2925
    %2955 = vmatprep.subr.mxu0 0.0
    %2956 = vmatpush1.msra.mxu0 %v2926
    %2957 = vmatprep.subr.mxu0 0.0
    %2958 = vmatpush1.msra.mxu0 %v2927
    %2959 = vmatprep.subr.mxu0 0.0
    %2960 = vmatpush1.msra.mxu0 %v2928
    %2961 = vmatprep.subr.mxu0 0.0
    %2962 = vmatpush1.msra.mxu0 %v2929
    %2963 = vmatprep.subr.mxu0 0.0
    %2964 = vmatpush1.msra.mxu0 %v2930
    %2965 = vmatprep.subr.mxu0 0.0
    %2966 = vmatpush1.msra.mxu0 %v2931
    %2967 = vmatprep.subr.mxu0 0.0
    %2968 = vmatpush1.msra.mxu0 %v2932
    %2969 = vmatprep.subr.mxu0 0.0
    %2970 = vmatpush1.msra.mxu0 %v2933
    %2971 = vmatprep.subr.mxu0 0.0
    %2972 = vmatpush1.msra.mxu0 %v2934
    %2973 = vmatprep.subr.mxu0 0.0
    %2974 = vmatpush1.msra.mxu0 %v2935
    %2975 = vmatprep.subr.mxu0 0.0
    %2976 = vmatpush1.msra.mxu0 0.0
    %2977 = vmatprep.subr.mxu0 0.0
    %2978 = vmatpush1.msra.mxu0 0.0
    %2979 = vmatprep.subr.mxu0 0.0
    %2980 = vmatpush1.msra.mxu0 0.0
    %2981 = vmatprep.subr.mxu0 0.0
    %2982 = vmatpush1.msra.mxu0 0.0
    %2983 = vmatprep.subr.mxu0 0.0
    %2984 = vmatpush1.msra.mxu0 0.0
    %2985 = vmatprep.subr.mxu0 0.0
    %2986 = vmatpush1.msra.mxu0 0.0
    %2987 = vmatprep.subr.mxu0 0.0
    %2988 = vmatpush1.msra.mxu0 0.0
    %2989 = vmatprep.subr.mxu0 0.0
    %2990 = vmatpush1.msra.mxu0 0.0
    %2991 = vmatprep.subr.mxu0 0.0
    %2992 = vmatpush1.msra.mxu0 0.0
    %2993 = vmatprep.subr.mxu0 0.0
    %2994 = vmatpush1.msra.mxu0 0.0
    %2995 = vmatprep.subr.mxu0 0.0
    %2996 = vmatpush1.msra.mxu0 0.0
    %2997 = vmatprep.subr.mxu0 0.0
    %2998 = vmatpush1.msra.mxu0 0.0
    %2999 = vmatprep.subr.mxu0 0.0
    %3000 = vmatpush1.msra.mxu0 0.0
    %3001 = vmatprep.subr.mxu0 0.0
    %3002 = vmatpush1.msra.mxu0 0.0
    %3003 = vmatprep.subr.mxu0 0.0
    %3004 = vmatpush1.msra.mxu0 0.0
    %3005 = vmatprep.subr.mxu0 0.0
    %3006 = vmatpush1.msra.mxu0 0.0
    %3007 = vmatprep.mubr.f32.mxu0 0.0
    %3008 = vmatmul.mubr.f32.gmra.mrb[0].mxu0 %v2919
    %v3009 = vpop.f32.mrb[0].mxu0
    %v3010 = vadd.f32 %v2941, %v3009
    %v3011 = vpop.f32.mrb[0].mxu0
    %3012 = vdwg.mxu0
    %v3013 = vmax.f32 %v3010, 0.0
    %v3014 = vld [vmem:[#allocation14] sm:$0xff]
    %v3015 = vld [vmem:[#allocation14 + $0x8] sm:$0xff]
    %v3016 = vld [vmem:[#allocation14 + $0x10] sm:$0xff]
    %v3017 = vld [vmem:[#allocation14 + $0x18] sm:$0xff]
    %v3018 = vld [vmem:[#allocation14 + $0x20] sm:$0xff]
    %v3019 = vld [vmem:[#allocation14 + $0x28] sm:$0xff]
    %v3020 = vld [vmem:[#allocation14 + $0x30] sm:$0xff]
    %v3021 = vld [vmem:[#allocation14 + $0x38] sm:$0xff]
    %v3022 = vld [vmem:[#allocation14 + $0x40] sm:$0xff]
    %v3023 = vld [vmem:[#allocation14 + $0x48] sm:$0xff]
    %v3024 = vld [vmem:[#allocation14 + $0x50] sm:$0xff]
    %v3025 = vld [vmem:[#allocation14 + $0x58] sm:$0xff]
    %v3026 = vld [vmem:[#allocation14 + $0x60] sm:$0xff]
    %v3027 = vld [vmem:[#allocation14 + $0x68] sm:$0xff]
    %v3028 = vld [vmem:[#allocation14 + $0x70] sm:$0xff]
    %v3029 = vld [vmem:[#allocation14 + $0x78] sm:$0xff]
    %v3030 = vld [vmem:[#allocation16] sm:$0x1]
    %v3032 = vlaneseq
    %v3033 = vshrl.u32 %v3032, 7
    %v3034 = vsub.s32 0, %v3033
    %v3035 = vrot.slane %v3030, %v3034
    %3037 = vmatprep.subr.mxu0 0.0
    %3038 = vmatpush1.msra.mxu0 %v3014
    %3039 = vmatprep.subr.mxu0 0.0
    %3040 = vmatpush1.msra.mxu0 %v3015
    %3041 = vmatprep.subr.mxu0 0.0
    %3042 = vmatpush1.msra.mxu0 %v3016
    %3043 = vmatprep.subr.mxu0 0.0
    %3044 = vmatpush1.msra.mxu0 %v3017
    %3045 = vmatprep.subr.mxu0 0.0
    %3046 = vmatpush1.msra.mxu0 %v3018
    %3047 = vmatprep.subr.mxu0 0.0
    %3048 = vmatpush1.msra.mxu0 %v3019
    %3049 = vmatprep.subr.mxu0 0.0
    %3050 = vmatpush1.msra.mxu0 %v3020
    %3051 = vmatprep.subr.mxu0 0.0
    %3052 = vmatpush1.msra.mxu0 %v3021
    %3053 = vmatprep.subr.mxu0 0.0
    %3054 = vmatpush1.msra.mxu0 %v3022
    %3055 = vmatprep.subr.mxu0 0.0
    %3056 = vmatpush1.msra.mxu0 %v3023
    %3057 = vmatprep.subr.mxu0 0.0
    %3058 = vmatpush1.msra.mxu0 %v3024
    %3059 = vmatprep.subr.mxu0 0.0
    %3060 = vmatpush1.msra.mxu0 %v3025
    %3061 = vmatprep.subr.mxu0 0.0
    %3062 = vmatpush1.msra.mxu0 %v3026
    %3063 = vmatprep.subr.mxu0 0.0
    %3064 = vmatpush1.msra.mxu0 %v3027
    %3065 = vmatprep.subr.mxu0 0.0
    %3066 = vmatpush1.msra.mxu0 %v3028
    %3067 = vmatprep.subr.mxu0 0.0
    %3068 = vmatpush1.msra.mxu0 %v3029
    %3069 = vmatprep.subr.mxu0 0.0
    %3070 = vmatpush1.msra.mxu0 0.0
    %3071 = vmatprep.subr.mxu0 0.0
    %3072 = vmatpush1.msra.mxu0 0.0
    %3073 = vmatprep.subr.mxu0 0.0
    %3074 = vmatpush1.msra.mxu0 0.0
    %3075 = vmatprep.subr.mxu0 0.0
    %3076 = vmatpush1.msra.mxu0 0.0
    %3077 = vmatprep.subr.mxu0 0.0
    %3078 = vmatpush1.msra.mxu0 0.0
    %3079 = vmatprep.subr.mxu0 0.0
    %3080 = vmatpush1.msra.mxu0 0.0
    %3081 = vmatprep.subr.mxu0 0.0
    %3082 = vmatpush1.msra.mxu0 0.0
    %3083 = vmatprep.subr.mxu0 0.0
    %3084 = vmatpush1.msra.mxu0 0.0
    %3085 = vmatprep.subr.mxu0 0.0
    %3086 = vmatpush1.msra.mxu0 0.0
    %3087 = vmatprep.subr.mxu0 0.0
    %3088 = vmatpush1.msra.mxu0 0.0
    %3089 = vmatprep.subr.mxu0 0.0
    %3090 = vmatpush1.msra.mxu0 0.0
    %3091 = vmatprep.subr.mxu0 0.0
    %3092 = vmatpush1.msra.mxu0 0.0
    %3093 = vmatprep.subr.mxu0 0.0
    %3094 = vmatpush1.msra.mxu0 0.0
    %3095 = vmatprep.subr.mxu0 0.0
    %3096 = vmatpush1.msra.mxu0 0.0
    %3097 = vmatprep.subr.mxu0 0.0
    %3098 = vmatpush1.msra.mxu0 0.0
    %3099 = vmatprep.subr.mxu0 0.0
    %3100 = vmatpush1.msra.mxu0 0.0
    %3101 = vmatprep.mubr.f32.mxu0 0.0
    %3102 = vmatmul.mubr.f32.gmra.mrb[0].mxu0 %v3013
    %v3103 = vpop.f32.mrb[0].mxu0
    %v3104 = vadd.f32 %v3035, %v3103
    %v3105 = vpop.f32.mrb[0].mxu0
    %3106 = vdwg.mxu0
    %3107 = vst [vmem:[#allocation17] sm:$0xff] %v3104
    // Predicated region
    $region74: #{tpu_custom_call.1} parent=1 // pred_check
      _
    $region75: #{tpu_custom_call.1} parent=1 // pred_check_branch
      %3109 = sbr.rel (0) target = $region77
    $region76: #{tpu_custom_call.1} parent=1 // pred_region
      %s3111 = ssub.s32 128, 128
      %3112 = vsyncadd [#allocation4], %s3111
      %s3114 = sshll.u32 [#allocation17], 4
      %s3115 = int_to_ptr.vmem [resolvable:$true] %s3114
      %3117 = dma.vmem_to_hbm [thread:$0]  %s3115, 128, %s9, [#allocation4]
    $region77: #{tpu_custom_call.1} parent=1 // pred_fallthru
      _
    // Predicated region
    $region78: #{tpu_custom_call.1} parent=1 // pred_check
      _
    $region79: #{tpu_custom_call.1} parent=1 // pred_check_branch
      %3119 = sbr.rel (0) target = $region81
    $region80: #{tpu_custom_call.1} parent=1 // pred_region
      %3120 = dma.done [#allocation4], 128
    $region81: #{tpu_custom_call.1} parent=1 // pred_fallthru
      _
    %3121 = vsyncpa [#allocation3], 1
    %3122 = vsyncpa [#allocation6], 1
    %3123 = vsyncpa [#allocation9], 1
    %3124 = vsyncpa [#allocation12], 1
    %3125 = vsyncpa [#allocation15], 1
    %3126 = vsyncpa [#allocation4], 1

</llo_original>
